<compile_context>
chip_gen: v7x
topology: tpu7x:2x2x1
jax: 0.10.0
libtpu: 0.0.40
codegen_flags: <defaults>
</compile_context>

<pallas_src>
import functools

import jax
import jax.numpy as jnp
from jax import lax
from jax.experimental import pallas as pl
from jax.experimental.pallas import tpu as pltpu


# ----------------------------------------------------------------------------
# Kernel 1: fused conv1 + ReLU + pool  ->  conv2 + ReLU + pool   (per image)
# ----------------------------------------------------------------------------

def _fused_conv_kernel(a1_ref, w1_ref, b1_ref, w2_ref, b2_ref, o_ref, lhs2_ref,
                       *, hh, wh):
    """One image per grid step.

    a1_ref  : (1, hh*wh, 128) bf16  conv1 im2col, 4 pool positions x (27 taps pad 32)
              a1[m, p*32 + (ky*3+kx)*3 + ci] = xpad[2r+ph+ky, 2c+pw+kx, ci], m = r*wh+c
    w1_ref  : (32, 32)  bf16   conv1 weight rows in (ky,kx,ci) order, padded 27->32
    b1_ref  : (1, 32)   f32
    w2_ref  : (288, 64) bf16   conv2 weight rows in (ky,kx,ci) order
    b2_ref  : (1, 64)   f32
    o_ref   : (1, hq*wq, 64) bf16   pooled conv2 output, pixel-major
    lhs2_ref: (hh, wh, 288) bf16 VMEM scratch -- conv2 K-fused im2col
    """
    hq, wq = hh // 2, wh // 2
    m1 = hh * wh
    c1 = 32

    # ---- conv1: 4 matmuls (one per 2x2 pool position), bf16 x bf16 -> f32 ----
    z = None
    for p in range(4):
        lhs = a1_ref[0, :, p * 32:(p + 1) * 32]                   # (m1, 32) bf16
        acc = jnp.dot(lhs, w1_ref[...], preferred_element_type=jnp.float32)
        z = acc if z is None else jnp.maximum(z, acc)             # maxpool over p
    z1 = jnp.maximum(z + b1_ref[...], 0.0).astype(jnp.bfloat16)   # (m1, 32)
    z1s = z1.reshape(hh, wh, c1)

    # ---- conv2 im2col with fused K=288, assembled in VMEM (no HBM round trip) --
    lhs2_ref[...] = jnp.zeros_like(lhs2_ref)
    for ky in range(3):
        for kx in range(3):
            dy, dx = ky - 1, kx - 1
            rs0, rs1 = max(0, dy), hh + min(0, dy)
            cs0, cs1 = max(0, dx), wh + min(0, dx)
            t = ky * 3 + kx
            lhs2_ref[rs0 - dy:rs1 - dy, cs0 - dx:cs1 - dx,
                     t * c1:(t + 1) * c1] = z1s[rs0:rs1, cs0:cs1, :]

    # ---- conv2: single matmul M=hh*wh, K=288, N=64 ----
    y = jnp.dot(lhs2_ref[...].reshape(m1, 9 * c1), w2_ref[...],
                preferred_element_type=jnp.float32)               # (m1, 64)
    y = jnp.maximum(y + b2_ref[...], 0.0)

    # ---- 2x2 max pool (leading-dim splits only; lane dim stays 64) ----
    yc = y.reshape(m1 // 2, 2, 64)
    yc = jnp.maximum(yc[:, 0], yc[:, 1])                          # pool over width
    yr = yc.reshape(hq, 2, wq, 64)
    yp = jnp.maximum(yr[:, 0], yr[:, 1])                          # pool over height
    o_ref[0] = yp.reshape(hq * wq, 64).astype(jnp.bfloat16)


def _build_conv1_lhs(x_nhwc):
    """Wrapper-side im2col for conv1, grouped by pool position (lane-dense 128)."""
    n, h, w, _ = x_nhwc.shape
    hh, wh = h // 2, w // 2
    xp = jnp.pad(x_nhwc, ((0, 0), (1, 1), (1, 1), (0, 0)))
    groups = []
    for ph in range(2):
        for pw in range(2):
            taps = [xp[:, ph + ky:ph + ky + h:2, pw + kx:pw + kx + w:2, :]
                    for ky in range(3) for kx in range(3)]
            g = jnp.concatenate(taps, axis=-1)                        # (n,hh,wh,27)
            groups.append(jnp.pad(g, ((0, 0), (0, 0), (0, 0), (0, 5))))
    a1 = jnp.concatenate(groups, axis=-1)                             # (n,hh,wh,128)
    return a1.reshape(n, hh * wh, 128).astype(jnp.bfloat16)


def conv_stack(x_nhwc, params):
    n, h, w, _ = x_nhwc.shape
    assert h % 4 == 0 and w % 4 == 0
    hh, wh = h // 2, w // 2
    hq, wq = h // 4, w // 4

    a1 = _build_conv1_lhs(x_nhwc)
    w1k = jnp.pad(params["conv1_w"].reshape(27, 32),
                  ((0, 5), (0, 0))).astype(jnp.bfloat16)              # (32, 32)
    b1k = params["conv1_b"].reshape(1, 32).astype(jnp.float32)
    w2k = params["conv2_w"].reshape(288, 64).astype(jnp.bfloat16)     # (288, 64)
    b2k = params["conv2_b"].reshape(1, 64).astype(jnp.float32)

    kernel = functools.partial(_fused_conv_kernel, hh=hh, wh=wh)
    return pl.pallas_call(
        kernel,
        out_shape=jax.ShapeDtypeStruct((n, hq * wq, 64), jnp.bfloat16),
        grid=(n,),
        in_specs=[
            pl.BlockSpec((1, hh * wh, 128), lambda i: (i, 0, 0)),
            pl.BlockSpec((32, 32), lambda i: (0, 0)),
            pl.BlockSpec((1, 32), lambda i: (0, 0)),
            pl.BlockSpec((288, 64), lambda i: (0, 0)),
            pl.BlockSpec((1, 64), lambda i: (0, 0)),
        ],
        out_specs=pl.BlockSpec((1, hq * wq, 64), lambda i: (i, 0, 0)),
        scratch_shapes=[pltpu.VMEM((hh, wh, 9 * 32), jnp.bfloat16)],
        compiler_params=pltpu.CompilerParams(
            dimension_semantics=("parallel",),
            vmem_limit_bytes=32 * 1024 * 1024,
        ),
    )(a1, w1k, b1k, w2k, b2k)


# ----------------------------------------------------------------------------
# Kernel 2: fused fc1 + ReLU + fc2, streamed over the flatten dimension F
# ----------------------------------------------------------------------------

def _mlp_kernel(x_ref, w1_ref, b1_ref, w2_ref, b2_ref, o_ref, acc_ref):
    k = pl.program_id(0)

    @pl.when(k == 0)
    def _():
        acc_ref[...] = jnp.zeros_like(acc_ref)

    acc_ref[...] += jnp.dot(x_ref[...], w1_ref[...],
                            preferred_element_type=jnp.float32)

    @pl.when(k == pl.num_programs(0) - 1)
    def _():
        hid = jnp.maximum(acc_ref[...] + b1_ref[...], 0.0)
        o_ref[...] = jnp.dot(hid, w2_ref[...],
                             preferred_element_type=jnp.float32) + b2_ref[...]


def mlp(feat, w1, b1, w2, b2):
    n, f = feat.shape
    h1 = w1.shape[1]
    od = w2.shape[1]
    tk = f
    for cand in (8192, 4096, 2048, 1024, 512, 256, 128):   # ~2 MiB bf16 blocks max
        if f % cand == 0:
            tk = cand
            break
    nk = f // tk
    w1_spec = (pl.BlockSpec((tk, h1), lambda k: (k, 0), pipeline_mode=pl.Buffered(3))
               if nk >= 3 else pl.BlockSpec((tk, h1), lambda k: (k, 0)))

    return pl.pallas_call(
        _mlp_kernel,
        out_shape=jax.ShapeDtypeStruct((n, od), jnp.float32),
        grid=(nk,),
        in_specs=[
            pl.BlockSpec((n, tk), lambda k: (0, k)),
            w1_spec,
            pl.BlockSpec((1, h1), lambda k: (0, 0)),
            pl.BlockSpec((h1, od), lambda k: (0, 0)),
            pl.BlockSpec((1, od), lambda k: (0, 0)),
        ],
        out_specs=pl.BlockSpec((n, od), lambda k: (0, 0)),
        scratch_shapes=[pltpu.VMEM((n, h1), jnp.float32)],
        compiler_params=pltpu.CompilerParams(
            dimension_semantics=("arbitrary",),
            vmem_limit_bytes=32 * 1024 * 1024,
        ),
    )(feat.astype(jnp.bfloat16), w1.astype(jnp.bfloat16),
      b1.reshape(1, h1).astype(jnp.float32),
      w2.astype(jnp.float32),
      b2.reshape(1, od).astype(jnp.float32))


# ----------------------------------------------------------------------------
# Model glue
# ----------------------------------------------------------------------------

def init_params(key, h, w):
    ks = jax.random.split(key, 8)
    flatten = 64 * (h // 4) * (w // 4)    # same formula as CNN._get_flatten_size
    return {
        "conv1_w": jax.random.normal(ks[0], (3, 3, 3, 32), jnp.float32) / jnp.sqrt(27.0),
        "conv1_b": jax.random.normal(ks[1], (32,), jnp.float32) * 0.01,
        "conv2_w": jax.random.normal(ks[2], (3, 3, 32, 64), jnp.float32) / jnp.sqrt(288.0),
        "conv2_b": jax.random.normal(ks[3], (64,), jnp.float32) * 0.01,
        "fc1_w": jax.random.normal(ks[4], (flatten, 128), jnp.float32) / jnp.sqrt(float(flatten)),
        "fc1_b": jax.random.normal(ks[5], (128,), jnp.float32) * 0.01,
        "fc2_w": jax.random.normal(ks[6], (128, 3), jnp.float32) / jnp.sqrt(128.0),
        "fc2_b": jax.random.normal(ks[7], (3,), jnp.float32) * 0.01,
    }


def cnn_forward(x_nchw, params):
    x = jnp.transpose(x_nchw, (0, 2, 3, 1))              # NCHW -> NHWC
    n, h, w, _ = x.shape
    hq, wq = h // 4, w // 4

    z2 = conv_stack(x, params)                            # (n, hq*wq, 64) bf16
    feat = z2.reshape(n, hq * wq * 64)                    # pure reshape, no transpose

    # Permute fc1 weight ROWS (PyTorch channel-major flatten -> our pixel-major)
    # instead of transposing the activation.  In practice fold this into init.
    w1 = params["fc1_w"].reshape(64, hq * wq, 128)
    w1 = jnp.transpose(w1, (1, 0, 2)).reshape(hq * wq * 64, 128)

    return mlp(feat, w1, params["fc1_b"], params["fc2_w"], params["fc2_b"])


def cnn_reference(x_nchw, params):
    """Pure-JAX (XLA, f32) reference mirroring the PyTorch forward."""
    w1 = jnp.transpose(params["conv1_w"], (3, 2, 0, 1))  # HWIO -> OIHW
    w2 = jnp.transpose(params["conv2_w"], (3, 2, 0, 1))
    dn = ("NCHW", "OIHW", "NCHW")
    y = lax.conv_general_dilated(x_nchw, w1, (1, 1), "SAME", dimension_numbers=dn)
    y = jnp.maximum(y + params["conv1_b"][None, :, None, None], 0.0)
    y = lax.reduce_window(y, -jnp.inf, lax.max, (1, 1, 2, 2), (1, 1, 2, 2), "VALID")
    y = lax.conv_general_dilated(y, w2, (1, 1), "SAME", dimension_numbers=dn)
    y = jnp.maximum(y + params["conv2_b"][None, :, None, None], 0.0)
    y = lax.reduce_window(y, -jnp.inf, lax.max, (1, 1, 2, 2), (1, 1, 2, 2), "VALID")
    f = y.reshape(y.shape[0], -1)
    h = jnp.maximum(f @ params["fc1_w"] + params["fc1_b"], 0.0)
    return h @ params["fc2_w"] + params["fc2_b"]


if __name__ == "__main__":
    key = jax.random.PRNGKey(0)
    kx, kp = jax.random.split(key)

    N, C, H, W = 2, 3, 32, 32
    x = jax.random.normal(kx, (N, C, H, W), jnp.float32)
    params = init_params(kp, H, W)

    fwd = jax.jit(cnn_forward)
    out = jax.block_until_ready(fwd(x, params))
    assert out.shape == (N, 3) and out.dtype == jnp.float32

    ref = jax.block_until_ready(cnn_reference(x, params))
    max_err = float(jnp.max(jnp.abs(out - ref)))
    ref_scale = float(jnp.max(jnp.abs(ref)))
    assert max_err <= max(1e-1, 5e-2 * ref_scale), (
        f"mismatch vs reference: max abs err {max_err} (ref scale {ref_scale})")

    print("KERNEL_OK")
</pallas_src>

<mosaic_0001>
module attributes {stable_mosaic.version = 11 : i64} {
  func.func @_fused_conv_kernel(%arg0: i32, %arg1: memref<1x256x128xbf16, #tpu.memory_space<vmem>>, %arg2: memref<32x32xbf16, #tpu.memory_space<vmem>>, %arg3: memref<1x32xf32, #tpu.memory_space<vmem>>, %arg4: memref<288x64xbf16, #tpu.memory_space<vmem>>, %arg5: memref<1x64xf32, #tpu.memory_space<vmem>>, %arg6: memref<1x64x64xbf16, #tpu.memory_space<vmem>>, %arg7: memref<16x16x288xbf16, #tpu.memory_space<vmem>>) attributes {dimension_semantics = [#tpu.dimension_semantics<parallel>], iteration_bounds = array<i64: 2>, scalar_prefetch = 0 : i64, scratch_operands = 1 : i64, tpu.core_type = #tpu.core_type<tc>, window_params = [{transform_indices = @transform_0, window_bounds = array<i64: 1, 256, 128>}, {pipeline_mode = #tpu.pipeline_mode<synchronous>, transform_indices = @transform_1, window_bounds = array<i64: 32, 32>}, {pipeline_mode = #tpu.pipeline_mode<synchronous>, transform_indices = @transform_2, window_bounds = array<i64: 1, 32>}, {pipeline_mode = #tpu.pipeline_mode<synchronous>, transform_indices = @transform_3, window_bounds = array<i64: 288, 64>}, {pipeline_mode = #tpu.pipeline_mode<synchronous>, transform_indices = @transform_4, window_bounds = array<i64: 1, 64>}, {transform_indices = @transform_5, window_bounds = array<i64: 1, 64, 64>}]} {
    %c0 = arith.constant 0 : index
    %c0_0 = arith.constant 0 : index
    %c0_1 = arith.constant 0 : index
    %0 = vector.load %arg1[%c0, %c0_0, %c0_1] : memref<1x256x128xbf16, #tpu.memory_space<vmem>>, vector<1x256x32xbf16>
    %1 = vector.shape_cast %0 : vector<1x256x32xbf16> to vector<256x32xbf16>
    %c0_2 = arith.constant 0 : index
    %c0_3 = arith.constant 0 : index
    %2 = vector.load %arg2[%c0_2, %c0_3] : memref<32x32xbf16, #tpu.memory_space<vmem>>, vector<32x32xbf16>
    %cst = arith.constant dense<0.000000e+00> : vector<256x32xf32>
    %3 = tpu.matmul %1, %2, %cst {dimension_numbers = #tpu.dot_dimension_numbers<[1], [0], [0], [1], [0, 0, 1, 1], [], []>} : vector<256x32xbf16>, vector<32x32xbf16>, vector<256x32xf32> -> vector<256x32xf32>
    %c0_4 = arith.constant 0 : index
    %c0_5 = arith.constant 0 : index
    %c32 = arith.constant 32 : index
    %4 = vector.load %arg1[%c0_4, %c0_5, %c32] : memref<1x256x128xbf16, #tpu.memory_space<vmem>>, vector<1x256x32xbf16>
    %5 = vector.shape_cast %4 : vector<1x256x32xbf16> to vector<256x32xbf16>
    %c0_6 = arith.constant 0 : index
    %c0_7 = arith.constant 0 : index
    %6 = vector.load %arg2[%c0_6, %c0_7] : memref<32x32xbf16, #tpu.memory_space<vmem>>, vector<32x32xbf16>
    %cst_8 = arith.constant dense<0.000000e+00> : vector<256x32xf32>
    %7 = tpu.matmul %5, %6, %cst_8 {dimension_numbers = #tpu.dot_dimension_numbers<[1], [0], [0], [1], [0, 0, 1, 1], [], []>} : vector<256x32xbf16>, vector<32x32xbf16>, vector<256x32xf32> -> vector<256x32xf32>
    %8 = arith.maximumf %3, %7 : vector<256x32xf32>
    %c0_9 = arith.constant 0 : index
    %c0_10 = arith.constant 0 : index
    %c64 = arith.constant 64 : index
    %9 = vector.load %arg1[%c0_9, %c0_10, %c64] : memref<1x256x128xbf16, #tpu.memory_space<vmem>>, vector<1x256x32xbf16>
    %10 = vector.shape_cast %9 : vector<1x256x32xbf16> to vector<256x32xbf16>
    %c0_11 = arith.constant 0 : index
    %c0_12 = arith.constant 0 : index
    %11 = vector.load %arg2[%c0_11, %c0_12] : memref<32x32xbf16, #tpu.memory_space<vmem>>, vector<32x32xbf16>
    %cst_13 = arith.constant dense<0.000000e+00> : vector<256x32xf32>
    %12 = tpu.matmul %10, %11, %cst_13 {dimension_numbers = #tpu.dot_dimension_numbers<[1], [0], [0], [1], [0, 0, 1, 1], [], []>} : vector<256x32xbf16>, vector<32x32xbf16>, vector<256x32xf32> -> vector<256x32xf32>
    %13 = arith.maximumf %8, %12 : vector<256x32xf32>
    %c0_14 = arith.constant 0 : index
    %c0_15 = arith.constant 0 : index
    %c96 = arith.constant 96 : index
    %14 = vector.load %arg1[%c0_14, %c0_15, %c96] : memref<1x256x128xbf16, #tpu.memory_space<vmem>>, vector<1x256x32xbf16>
    %15 = vector.shape_cast %14 : vector<1x256x32xbf16> to vector<256x32xbf16>
    %c0_16 = arith.constant 0 : index
    %c0_17 = arith.constant 0 : index
    %16 = vector.load %arg2[%c0_16, %c0_17] : memref<32x32xbf16, #tpu.memory_space<vmem>>, vector<32x32xbf16>
    %cst_18 = arith.constant dense<0.000000e+00> : vector<256x32xf32>
    %17 = tpu.matmul %15, %16, %cst_18 {dimension_numbers = #tpu.dot_dimension_numbers<[1], [0], [0], [1], [0, 0, 1, 1], [], []>} : vector<256x32xbf16>, vector<32x32xbf16>, vector<256x32xf32> -> vector<256x32xf32>
    %18 = arith.maximumf %13, %17 : vector<256x32xf32>
    %c0_19 = arith.constant 0 : index
    %c0_20 = arith.constant 0 : index
    %19 = vector.load %arg3[%c0_19, %c0_20] : memref<1x32xf32, #tpu.memory_space<vmem>>, vector<1x32xf32>
    %20 = vector.broadcast %19 : vector<1x32xf32> to vector<256x32xf32>
    %21 = arith.addf %18, %20 : vector<256x32xf32>
    %cst_21 = arith.constant 0.000000e+00 : f32
    %22 = vector.broadcast %cst_21 : f32 to vector<256x32xf32>
    %23 = arith.maximumf %21, %22 : vector<256x32xf32>
    %24 = arith.truncf %23 : vector<256x32xf32> to vector<256x32xbf16>
    %25 = vector.shape_cast %24 : vector<256x32xbf16> to vector<16x16x32xbf16>
    %cst_22 = arith.constant 0.000000e+00 : bf16
    %26 = vector.broadcast %cst_22 : bf16 to vector<16x16x288xbf16>
    %c0_23 = arith.constant 0 : index
    %c0_24 = arith.constant 0 : index
    %c0_25 = arith.constant 0 : index
    %27 = vector.load %arg7[%c0_23, %c0_24, %c0_25] : memref<16x16x288xbf16, #tpu.memory_space<vmem>>, vector<16x16x288xbf16>
    tpu.vector_store %arg7[%c0_23, %c0_24, %c0_25], %26 {strides = array<i32>} : memref<16x16x288xbf16, #tpu.memory_space<vmem>>, vector<16x16x288xbf16>,
    %28 = vector.extract_strided_slice %25 {offsets = [0, 0, 0], sizes = [15, 15, 32], strides = [1, 1, 1]} : vector<16x16x32xbf16> to vector<15x15x32xbf16>
    %c1 = arith.constant 1 : index
    %c1_26 = arith.constant 1 : index
    %c0_27 = arith.constant 0 : index
    %29 = vector.load %arg7[%c1, %c1_26, %c0_27] : memref<16x16x288xbf16, #tpu.memory_space<vmem>>, vector<15x15x32xbf16>
    tpu.vector_store %arg7[%c1, %c1_26, %c0_27], %28 {strides = array<i32>} : memref<16x16x288xbf16, #tpu.memory_space<vmem>>, vector<15x15x32xbf16>,
    %30 = vector.extract_strided_slice %25 {offsets = [0, 0, 0], sizes = [15, 16, 32], strides = [1, 1, 1]} : vector<16x16x32xbf16> to vector<15x16x32xbf16>
    %c1_28 = arith.constant 1 : index
    %c0_29 = arith.constant 0 : index
    %c32_30 = arith.constant 32 : index
    %31 = vector.load %arg7[%c1_28, %c0_29, %c32_30] : memref<16x16x288xbf16, #tpu.memory_space<vmem>>, vector<15x16x32xbf16>
    tpu.vector_store %arg7[%c1_28, %c0_29, %c32_30], %30 {strides = array<i32>} : memref<16x16x288xbf16, #tpu.memory_space<vmem>>, vector<15x16x32xbf16>,
    %32 = vector.extract_strided_slice %25 {offsets = [0, 1, 0], sizes = [15, 15, 32], strides = [1, 1, 1]} : vector<16x16x32xbf16> to vector<15x15x32xbf16>
    %c1_31 = arith.constant 1 : index
    %c0_32 = arith.constant 0 : index
    %c64_33 = arith.constant 64 : index
    %33 = vector.load %arg7[%c1_31, %c0_32, %c64_33] : memref<16x16x288xbf16, #tpu.memory_space<vmem>>, vector<15x15x32xbf16>
    tpu.vector_store %arg7[%c1_31, %c0_32, %c64_33], %32 {strides = array<i32>} : memref<16x16x288xbf16, #tpu.memory_space<vmem>>, vector<15x15x32xbf16>,
    %34 = vector.extract_strided_slice %25 {offsets = [0, 0, 0], sizes = [16, 15, 32], strides = [1, 1, 1]} : vector<16x16x32xbf16> to vector<16x15x32xbf16>
    %c0_34 = arith.constant 0 : index
    %c1_35 = arith.constant 1 : index
    %c96_36 = arith.constant 96 : index
    %35 = vector.load %arg7[%c0_34, %c1_35, %c96_36] : memref<16x16x288xbf16, #tpu.memory_space<vmem>>, vector<16x15x32xbf16>
    tpu.vector_store %arg7[%c0_34, %c1_35, %c96_36], %34 {strides = array<i32>} : memref<16x16x288xbf16, #tpu.memory_space<vmem>>, vector<16x15x32xbf16>,
    %c0_37 = arith.constant 0 : index
    %c0_38 = arith.constant 0 : index
    %c128 = arith.constant 128 : index
    %36 = vector.load %arg7[%c0_37, %c0_38, %c128] : memref<16x16x288xbf16, #tpu.memory_space<vmem>>, vector<16x16x32xbf16>
    tpu.vector_store %arg7[%c0_37, %c0_38, %c128], %25 {strides = array<i32>} : memref<16x16x288xbf16, #tpu.memory_space<vmem>>, vector<16x16x32xbf16>,
    %37 = vector.extract_strided_slice %25 {offsets = [0, 1, 0], sizes = [16, 15, 32], strides = [1, 1, 1]} : vector<16x16x32xbf16> to vector<16x15x32xbf16>
    %c0_39 = arith.constant 0 : index
    %c0_40 = arith.constant 0 : index
    %c160 = arith.constant 160 : index
    %38 = vector.load %arg7[%c0_39, %c0_40, %c160] : memref<16x16x288xbf16, #tpu.memory_space<vmem>>, vector<16x15x32xbf16>
    tpu.vector_store %arg7[%c0_39, %c0_40, %c160], %37 {strides = array<i32>} : memref<16x16x288xbf16, #tpu.memory_space<vmem>>, vector<16x15x32xbf16>,
    %39 = vector.extract_strided_slice %25 {offsets = [1, 0, 0], sizes = [15, 15, 32], strides = [1, 1, 1]} : vector<16x16x32xbf16> to vector<15x15x32xbf16>
    %c0_41 = arith.constant 0 : index
    %c1_42 = arith.constant 1 : index
    %c192 = arith.constant 192 : index
    %40 = vector.load %arg7[%c0_41, %c1_42, %c192] : memref<16x16x288xbf16, #tpu.memory_space<vmem>>, vector<15x15x32xbf16>
    tpu.vector_store %arg7[%c0_41, %c1_42, %c192], %39 {strides = array<i32>} : memref<16x16x288xbf16, #tpu.memory_space<vmem>>, vector<15x15x32xbf16>,
    %41 = vector.extract_strided_slice %25 {offsets = [1, 0, 0], sizes = [15, 16, 32], strides = [1, 1, 1]} : vector<16x16x32xbf16> to vector<15x16x32xbf16>
    %c0_43 = arith.constant 0 : index
    %c0_44 = arith.constant 0 : index
    %c224 = arith.constant 224 : index
    %42 = vector.load %arg7[%c0_43, %c0_44, %c224] : memref<16x16x288xbf16, #tpu.memory_space<vmem>>, vector<15x16x32xbf16>
    tpu.vector_store %arg7[%c0_43, %c0_44, %c224], %41 {strides = array<i32>} : memref<16x16x288xbf16, #tpu.memory_space<vmem>>, vector<15x16x32xbf16>,
    %43 = vector.extract_strided_slice %25 {offsets = [1, 1, 0], sizes = [15, 15, 32], strides = [1, 1, 1]} : vector<16x16x32xbf16> to vector<15x15x32xbf16>
    %c0_45 = arith.constant 0 : index
    %c0_46 = arith.constant 0 : index
    %c256 = arith.constant 256 : index
    %44 = vector.load %arg7[%c0_45, %c0_46, %c256] : memref<16x16x288xbf16, #tpu.memory_space<vmem>>, vector<15x15x32xbf16>
    tpu.vector_store %arg7[%c0_45, %c0_46, %c256], %43 {strides = array<i32>} : memref<16x16x288xbf16, #tpu.memory_space<vmem>>, vector<15x15x32xbf16>,
    %c0_47 = arith.constant 0 : index
    %c0_48 = arith.constant 0 : index
    %c0_49 = arith.constant 0 : index
    %45 = vector.load %arg7[%c0_47, %c0_48, %c0_49] : memref<16x16x288xbf16, #tpu.memory_space<vmem>>, vector<16x16x288xbf16>
    %46 = vector.shape_cast %45 : vector<16x16x288xbf16> to vector<256x288xbf16>
    %c0_50 = arith.constant 0 : index
    %c0_51 = arith.constant 0 : index
    %47 = vector.load %arg4[%c0_50, %c0_51] : memref<288x64xbf16, #tpu.memory_space<vmem>>, vector<288x64xbf16>
    %cst_52 = arith.constant dense<0.000000e+00> : vector<256x64xf32>
    %48 = tpu.matmul %46, %47, %cst_52 {dimension_numbers = #tpu.dot_dimension_numbers<[1], [0], [0], [1], [0, 0, 1, 1], [], []>} : vector<256x288xbf16>, vector<288x64xbf16>, vector<256x64xf32> -> vector<256x64xf32>
    %c0_53 = arith.constant 0 : index
    %c0_54 = arith.constant 0 : index
    %49 = vector.load %arg5[%c0_53, %c0_54] : memref<1x64xf32, #tpu.memory_space<vmem>>, vector<1x64xf32>
    %50 = vector.broadcast %49 : vector<1x64xf32> to vector<256x64xf32>
    %51 = arith.addf %48, %50 : vector<256x64xf32>
    %cst_55 = arith.constant 0.000000e+00 : f32
    %52 = vector.broadcast %cst_55 : f32 to vector<256x64xf32>
    %53 = arith.maximumf %51, %52 : vector<256x64xf32>
    %54 = vector.shape_cast %53 : vector<256x64xf32> to vector<128x2x64xf32>
    %55 = vector.extract_strided_slice %54 {offsets = [0, 0, 0], sizes = [128, 1, 64], strides = [1, 1, 1]} : vector<128x2x64xf32> to vector<128x1x64xf32>
    %56 = vector.shape_cast %55 : vector<128x1x64xf32> to vector<128x64xf32>
    %57 = vector.extract_strided_slice %54 {offsets = [0, 1, 0], sizes = [128, 1, 64], strides = [1, 1, 1]} : vector<128x2x64xf32> to vector<128x1x64xf32>
    %58 = vector.shape_cast %57 : vector<128x1x64xf32> to vector<128x64xf32>
    %59 = arith.maximumf %56, %58 : vector<128x64xf32>
    %60 = vector.shape_cast %59 : vector<128x64xf32> to vector<8x2x8x64xf32>
    %61 = vector.extract_strided_slice %60 {offsets = [0, 0, 0, 0], sizes = [8, 1, 8, 64], strides = [1, 1, 1, 1]} : vector<8x2x8x64xf32> to vector<8x1x8x64xf32>
    %62 = vector.shape_cast %61 : vector<8x1x8x64xf32> to vector<8x8x64xf32>
    %63 = vector.extract_strided_slice %60 {offsets = [0, 1, 0, 0], sizes = [8, 1, 8, 64], strides = [1, 1, 1, 1]} : vector<8x2x8x64xf32> to vector<8x1x8x64xf32>
    %64 = vector.shape_cast %63 : vector<8x1x8x64xf32> to vector<8x8x64xf32>
    %65 = arith.maximumf %62, %64 : vector<8x8x64xf32>
    %66 = vector.shape_cast %65 : vector<8x8x64xf32> to vector<64x64xf32>
    %67 = arith.truncf %66 : vector<64x64xf32> to vector<64x64xbf16>
    %c0_56 = arith.constant 0 : index
    %c0_57 = arith.constant 0 : index
    %c0_58 = arith.constant 0 : index
    %68 = vector.load %arg6[%c0_56, %c0_57, %c0_58] : memref<1x64x64xbf16, #tpu.memory_space<vmem>>, vector<1x64x64xbf16>
    %69 = vector.shape_cast %68 : vector<1x64x64xbf16> to vector<64x64xbf16>
    %70 = vector.shape_cast %67 : vector<64x64xbf16> to vector<1x64x64xbf16>
    tpu.vector_store %arg6[%c0_56, %c0_57, %c0_58], %70 {strides = array<i32>} : memref<1x64x64xbf16, #tpu.memory_space<vmem>>, vector<1x64x64xbf16>,
    return
  }
  func.func @transform_0(%arg0: i32) -> (i32, i32, i32) {
    %c0_i32 = arith.constant 0 : i32
    %c0_i32_0 = arith.constant 0 : i32
    %c0_i32_1 = arith.constant 0 : i32
    return %arg0, %c0_i32, %c0_i32_0 : i32, i32, i32
  }
  func.func @transform_1(%arg0: i32) -> (i32, i32) {
    %c0_i32 = arith.constant 0 : i32
    %c0_i32_0 = arith.constant 0 : i32
    %c0_i32_1 = arith.constant 0 : i32
    return %c0_i32, %c0_i32_0 : i32, i32
  }
  func.func @transform_2(%arg0: i32) -> (i32, i32) {
    %c0_i32 = arith.constant 0 : i32
    %c0_i32_0 = arith.constant 0 : i32
    %c0_i32_1 = arith.constant 0 : i32
    return %c0_i32, %c0_i32_0 : i32, i32
  }
  func.func @transform_3(%arg0: i32) -> (i32, i32) {
    %c0_i32 = arith.constant 0 : i32
    %c0_i32_0 = arith.constant 0 : i32
    %c0_i32_1 = arith.constant 0 : i32
    return %c0_i32, %c0_i32_0 : i32, i32
  }
  func.func @transform_4(%arg0: i32) -> (i32, i32) {
    %c0_i32 = arith.constant 0 : i32
    %c0_i32_0 = arith.constant 0 : i32
    %c0_i32_1 = arith.constant 0 : i32
    return %c0_i32, %c0_i32_0 : i32, i32
  }
  func.func @transform_5(%arg0: i32) -> (i32, i32, i32) {
    %c0_i32 = arith.constant 0 : i32
    %c0_i32_0 = arith.constant 0 : i32
    %c0_i32_1 = arith.constant 0 : i32
    return %arg0, %c0_i32, %c0_i32_0 : i32, i32, i32
  }
}

module attributes {stable_mosaic.version = 11 : i64} {
  func.func @_mlp_kernel(%arg0: i32, %arg1: memref<2x4096xbf16, #tpu.memory_space<vmem>>, %arg2: memref<4096x128xbf16, #tpu.memory_space<vmem>>, %arg3: memref<1x128xf32, #tpu.memory_space<vmem>>, %arg4: memref<128x3xf32, #tpu.memory_space<vmem>>, %arg5: memref<1x3xf32, #tpu.memory_space<vmem>>, %arg6: memref<2x3xf32, #tpu.memory_space<vmem>>, %arg7: memref<2x128xf32, #tpu.memory_space<vmem>>) attributes {dimension_semantics = [#tpu.dimension_semantics<arbitrary>], iteration_bounds = array<i64: 1>, scalar_prefetch = 0 : i64, scratch_operands = 1 : i64, tpu.core_type = #tpu.core_type<tc>, window_params = [{transform_indices = @transform_0, window_bounds = array<i64: 2, 4096>}, {transform_indices = @transform_1, window_bounds = array<i64: 4096, 128>}, {pipeline_mode = #tpu.pipeline_mode<synchronous>, transform_indices = @transform_2, window_bounds = array<i64: 1, 128>}, {pipeline_mode = #tpu.pipeline_mode<synchronous>, transform_indices = @transform_3, window_bounds = array<i64: 128, 3>}, {pipeline_mode = #tpu.pipeline_mode<synchronous>, transform_indices = @transform_4, window_bounds = array<i64: 1, 3>}, {pipeline_mode = #tpu.pipeline_mode<synchronous>, transform_indices = @transform_5, window_bounds = array<i64: 2, 3>}]} {
    %c0_i32 = arith.constant 0 : i32
    %0 = arith.cmpi eq, %arg0, %c0_i32 : i32
    %1 = arith.extui %0 : i1 to i32
    %c0_i32_0 = arith.constant 0 : i32
    %2 = arith.cmpi ne, %1, %c0_i32_0 : i32
    scf.if %2 {
      %cst_10 = arith.constant 0.000000e+00 : f32
      %12 = vector.broadcast %cst_10 : f32 to vector<2x128xf32>
      %c0_11 = arith.constant 0 : index
      %c0_12 = arith.constant 0 : index
      %13 = vector.load %arg7[%c0_11, %c0_12] : memref<2x128xf32, #tpu.memory_space<vmem>>, vector<2x128xf32>
      tpu.vector_store %arg7[%c0_11, %c0_12], %12 {strides = array<i32>} : memref<2x128xf32, #tpu.memory_space<vmem>>, vector<2x128xf32>,
    } else {
    }
    %c0 = arith.constant 0 : index
    %c0_1 = arith.constant 0 : index
    %3 = vector.load %arg7[%c0, %c0_1] : memref<2x128xf32, #tpu.memory_space<vmem>>, vector<2x128xf32>
    %c0_2 = arith.constant 0 : index
    %c0_3 = arith.constant 0 : index
    %4 = vector.load %arg1[%c0_2, %c0_3] : memref<2x4096xbf16, #tpu.memory_space<vmem>>, vector<2x4096xbf16>
    %c0_4 = arith.constant 0 : index
    %c0_5 = arith.constant 0 : index
    %5 = vector.load %arg2[%c0_4, %c0_5] : memref<4096x128xbf16, #tpu.memory_space<vmem>>, vector<4096x128xbf16>
    %cst = arith.constant dense<0.000000e+00> : vector<2x128xf32>
    %6 = tpu.matmul %4, %5, %cst {dimension_numbers = #tpu.dot_dimension_numbers<[1], [0], [0], [1], [0, 0, 1, 1], [], []>} : vector<2x4096xbf16>, vector<4096x128xbf16>, vector<2x128xf32> -> vector<2x128xf32>
    %7 = arith.addf %3, %6 : vector<2x128xf32>
    %c0_6 = arith.constant 0 : index
    %c0_7 = arith.constant 0 : index
    %8 = vector.load %arg7[%c0_6, %c0_7] : memref<2x128xf32, #tpu.memory_space<vmem>>, vector<2x128xf32>
    tpu.vector_store %arg7[%c0_6, %c0_7], %7 {strides = array<i32>} : memref<2x128xf32, #tpu.memory_space<vmem>>, vector<2x128xf32>,
    %c0_i32_8 = arith.constant 0 : i32
    %9 = arith.cmpi eq, %arg0, %c0_i32_8 : i32
    %10 = arith.extui %9 : i1 to i32
    %c0_i32_9 = arith.constant 0 : i32
    %11 = arith.cmpi ne, %10, %c0_i32_9 : i32
    scf.if %11 {
      %c0_10 = arith.constant 0 : index
      %c0_11 = arith.constant 0 : index
      %12 = vector.load %arg7[%c0_10, %c0_11] : memref<2x128xf32, #tpu.memory_space<vmem>>, vector<2x128xf32>
      %c0_12 = arith.constant 0 : index
      %c0_13 = arith.constant 0 : index
      %13 = vector.load %arg3[%c0_12, %c0_13] : memref<1x128xf32, #tpu.memory_space<vmem>>, vector<1x128xf32>
      %14 = vector.broadcast %13 : vector<1x128xf32> to vector<2x128xf32>
      %15 = arith.addf %12, %14 : vector<2x128xf32>
      %cst_14 = arith.constant 0.000000e+00 : f32
      %16 = vector.broadcast %cst_14 : f32 to vector<2x128xf32>
      %17 = arith.maximumf %15, %16 : vector<2x128xf32>
      %c0_15 = arith.constant 0 : index
      %c0_16 = arith.constant 0 : index
      %18 = vector.load %arg4[%c0_15, %c0_16] : memref<128x3xf32, #tpu.memory_space<vmem>>, vector<128x3xf32>
      %cst_17 = arith.constant dense<0.000000e+00> : vector<2x3xf32>
      %19 = tpu.matmul %17, %18, %cst_17 {dimension_numbers = #tpu.dot_dimension_numbers<[1], [0], [0], [1], [0, 0, 1, 1], [], []>} : vector<2x128xf32>, vector<128x3xf32>, vector<2x3xf32> -> vector<2x3xf32>
      %c0_18 = arith.constant 0 : index
      %c0_19 = arith.constant 0 : index
      %20 = vector.load %arg5[%c0_18, %c0_19] : memref<1x3xf32, #tpu.memory_space<vmem>>, vector<1x3xf32>
      %21 = vector.broadcast %20 : vector<1x3xf32> to vector<2x3xf32>
      %22 = arith.addf %19, %21 : vector<2x3xf32>
      %c0_20 = arith.constant 0 : index
      %c0_21 = arith.constant 0 : index
      %23 = vector.load %arg6[%c0_20, %c0_21] : memref<2x3xf32, #tpu.memory_space<vmem>>, vector<2x3xf32>
      tpu.vector_store %arg6[%c0_20, %c0_21], %22 {strides = array<i32>} : memref<2x3xf32, #tpu.memory_space<vmem>>, vector<2x3xf32>,
    } else {
    }
    return
  }
  func.func @transform_0(%arg0: i32) -> (i32, i32) {
    %c0_i32 = arith.constant 0 : i32
    %c0_i32_0 = arith.constant 0 : i32
    return %c0_i32, %arg0 : i32, i32
  }
  func.func @transform_1(%arg0: i32) -> (i32, i32) {
    %c0_i32 = arith.constant 0 : i32
    %c0_i32_0 = arith.constant 0 : i32
    return %arg0, %c0_i32 : i32, i32
  }
  func.func @transform_2(%arg0: i32) -> (i32, i32) {
    %c0_i32 = arith.constant 0 : i32
    %c0_i32_0 = arith.constant 0 : i32
    %c0_i32_1 = arith.constant 0 : i32
    return %c0_i32, %c0_i32_0 : i32, i32
  }
  func.func @transform_3(%arg0: i32) -> (i32, i32) {
    %c0_i32 = arith.constant 0 : i32
    %c0_i32_0 = arith.constant 0 : i32
    %c0_i32_1 = arith.constant 0 : i32
    return %c0_i32, %c0_i32_0 : i32, i32
  }
  func.func @transform_4(%arg0: i32) -> (i32, i32) {
    %c0_i32 = arith.constant 0 : i32
    %c0_i32_0 = arith.constant 0 : i32
    %c0_i32_1 = arith.constant 0 : i32
    return %c0_i32, %c0_i32_0 : i32, i32
  }
  func.func @transform_5(%arg0: i32) -> (i32, i32) {
    %c0_i32 = arith.constant 0 : i32
    %c0_i32_0 = arith.constant 0 : i32
    %c0_i32_1 = arith.constant 0 : i32
    return %c0_i32, %c0_i32_0 : i32, i32
  }
}

</mosaic_0001>

<llo_original>
// kernel: cnn_forward.2
$region0: #{cnn_forward.2}
  #allocation0 [shape = 'u32[]', space=smem, size = 0x4, offset = 0x4, fixed_abs, tag = 'smem constant byte address 0x4 - core index']
  #allocation1 [shape = 'u32[144,128]{1,0:T(1,128)}', space=vmem, size = 0x12000, scoped, tag = 'internal scratch']
  #allocation2 [shape = 'bf16[16,16,288]{2,1,0:T(16,128)(2,1)}', space=vmem, size = 0x30000, scoped, tag = 'scratch operand']
  %s0 = inlined_call_operand.vmem [shape: bf16[2,256,128], index: 0, kind: input, shape index: {}]
  %s1 = inlined_call_operand.vmem [shape: bf16[32,32], index: 1, kind: input, shape index: {}]
  %s2 = inlined_call_operand.vmem [shape: f32[1,32], index: 2, kind: input, shape index: {}]
  %s3 = inlined_call_operand.vmem [shape: bf16[288,64], index: 3, kind: input, shape index: {}]
  %s4 = inlined_call_operand.vmem [shape: f32[1,64], index: 4, kind: input, shape index: {}]
  %s5 = inlined_call_operand.vmem [shape: bf16[2,64,64], index: 5, kind: output, shape index: {}]
  %s6 = sld [smem:[#allocation0]]
  $region53: #{cnn_forward.2} parent=0
    _
  %s8 = ssub.s32 1, %s6
  %s9 = scalar_select 0, %s8, %s6
  loop: start=0, step=1, limit=4
  $region2: #{cnn_forward.2} parent=0 // loop_pre_header
    _
  $region3: #{cnn_forward.2} parent=0 // loop_header
    %s11 = sphi 0, %s15
    %p12 = scmp.ge.s32.totalorder %s11, 4
    %s21 = sphi 0, %s23
    %s24 = sphi 0, %s21
    %s25 = sphi 0, %s24
    %s41 = sphi 0, %s25
    %s45 = sphi 0, %s45
    %s47 = sphi 0, %s45
    %s48 = sphi 0, %s47
    %s62 = sphi 0, %s48
    %s66 = sphi 0, %s66
    %s68 = sphi 0, %s66
    %s69 = sphi 0, %s68
    %s83 = sphi 0, %s69
    %s87 = sphi 0, %s87
    %s89 = sphi 0, %s87
    %s90 = sphi 0, %s89
    %s104 = sphi 0, %s90
    %s108 = sphi 0, %s108
    %s110 = sphi 0, %s108
    %s111 = sphi 0, %s110
    %s125 = sphi 0, %s111
    %s131 = sphi 0, %s133
    %s134 = sphi 0, %s131
    %s135 = sphi 0, %s134
    %s151 = sphi 0, %s135
  $region4: #{cnn_forward.2} parent=0 // loop_header_branch
    %14 = sbr.rel (%p12) target = $region8
  $region5: #{cnn_forward.2} parent=0 // loop_body
    %s16 = ssub.s32 %s11, 1
    %s17 = ssub.s32 %s11, 2
    %s18 = sadd.s32 %s11, 1
    %s19 = ssub.s32 %s11, %s18
    %p20 = scmp.eq.s32.totalorder %s19, 0
    %s22 = sadd.s32 %s21, 1
    %s23 = scalar_select %p20, %s21, %s22
    %p26 = pneg %p20
    %p27 = scmp.eq.s32.totalorder %s11, 1
    %p28 = por %p26, %p27
    %p29 = scmp.ne.s32.totalorder %s21, %s24
    %p30 = scmp.eq.s32.totalorder %s11, 0
    %p31 = por %p29, %p30
    %p32 = scmp.ne.s32.totalorder %s21, %s24
    %p33 = scmp.eq.s32.totalorder %s16, 1
    %p34 = por %p32, %p33
    %p35 = scmp.ne.s32.totalorder %s24, %s25
    %p36 = scmp.eq.s32.totalorder %s16, 0
    %p37 = por %p35, %p36
    %p38 = scmp.ne.s32.totalorder %s24, %s25
    %p39 = scmp.eq.s32.totalorder %s17, 1
    %p40 = por %p38, %p39
    %p42 = scmp.ne.s32.totalorder %s25, %s41
    %p43 = scmp.eq.s32.totalorder %s17, 0
    %p44 = por %p42, %p43
    %s46 = sadd.s32 %s45, 1
    %p49 = scmp.eq.s32.totalorder %s11, 1
    %p50 = scmp.ne.s32.totalorder %s45, %s47
    %p51 = scmp.eq.s32.totalorder %s11, 0
    %p52 = por %p50, %p51
    %p53 = scmp.ne.s32.totalorder %s45, %s47
    %p54 = scmp.eq.s32.totalorder %s16, 1
    %p55 = por %p53, %p54
    %p56 = scmp.ne.s32.totalorder %s47, %s48
    %p57 = scmp.eq.s32.totalorder %s16, 0
    %p58 = por %p56, %p57
    %p59 = scmp.ne.s32.totalorder %s47, %s48
    %p60 = scmp.eq.s32.totalorder %s17, 1
    %p61 = por %p59, %p60
    %p63 = scmp.ne.s32.totalorder %s48, %s62
    %p64 = scmp.eq.s32.totalorder %s17, 0
    %p65 = por %p63, %p64
    %s67 = sadd.s32 %s66, 1
    %p70 = scmp.eq.s32.totalorder %s11, 1
    %p71 = scmp.ne.s32.totalorder %s66, %s68
    %p72 = scmp.eq.s32.totalorder %s11, 0
    %p73 = por %p71, %p72
    %p74 = scmp.ne.s32.totalorder %s66, %s68
    %p75 = scmp.eq.s32.totalorder %s16, 1
    %p76 = por %p74, %p75
    %p77 = scmp.ne.s32.totalorder %s68, %s69
    %p78 = scmp.eq.s32.totalorder %s16, 0
    %p79 = por %p77, %p78
    %p80 = scmp.ne.s32.totalorder %s68, %s69
    %p81 = scmp.eq.s32.totalorder %s17, 1
    %p82 = por %p80, %p81
    %p84 = scmp.ne.s32.totalorder %s69, %s83
    %p85 = scmp.eq.s32.totalorder %s17, 0
    %p86 = por %p84, %p85
    %s88 = sadd.s32 %s87, 1
    %p91 = scmp.eq.s32.totalorder %s11, 1
    %p92 = scmp.ne.s32.totalorder %s87, %s89
    %p93 = scmp.eq.s32.totalorder %s11, 0
    %p94 = por %p92, %p93
    %p95 = scmp.ne.s32.totalorder %s87, %s89
    %p96 = scmp.eq.s32.totalorder %s16, 1
    %p97 = por %p95, %p96
    %p98 = scmp.ne.s32.totalorder %s89, %s90
    %p99 = scmp.eq.s32.totalorder %s16, 0
    %p100 = por %p98, %p99
    %p101 = scmp.ne.s32.totalorder %s89, %s90
    %p102 = scmp.eq.s32.totalorder %s17, 1
    %p103 = por %p101, %p102
    %p105 = scmp.ne.s32.totalorder %s90, %s104
    %p106 = scmp.eq.s32.totalorder %s17, 0
    %p107 = por %p105, %p106
    %s109 = sadd.s32 %s108, 1
    %p112 = scmp.eq.s32.totalorder %s11, 1
    %p113 = scmp.ne.s32.totalorder %s108, %s110
    %p114 = scmp.eq.s32.totalorder %s11, 0
    %p115 = por %p113, %p114
    %p116 = scmp.ne.s32.totalorder %s108, %s110
    %p117 = scmp.eq.s32.totalorder %s16, 1
    %p118 = por %p116, %p117
    %p119 = scmp.ne.s32.totalorder %s110, %s111
    %p120 = scmp.eq.s32.totalorder %s16, 0
    %p121 = por %p119, %p120
    %p122 = scmp.ne.s32.totalorder %s110, %s111
    %p123 = scmp.eq.s32.totalorder %s17, 1
    %p124 = por %p122, %p123
    %p126 = scmp.ne.s32.totalorder %s111, %s125
    %p127 = scmp.eq.s32.totalorder %s17, 0
    %p128 = por %p126, %p127
    %s129 = ssub.s32 %s11, %s18
    %p130 = scmp.eq.s32.totalorder %s129, 0
    %s132 = sadd.s32 %s131, 1
    %s133 = scalar_select %p130, %s131, %s132
    %p136 = pneg %p130
    %p137 = scmp.eq.s32.totalorder %s11, 1
    %p138 = por %p136, %p137
    %p139 = scmp.ne.s32.totalorder %s131, %s134
    %p140 = scmp.eq.s32.totalorder %s11, 0
    %p141 = por %p139, %p140
    %p142 = scmp.ne.s32.totalorder %s131, %s134
    %p143 = scmp.eq.s32.totalorder %s16, 1
    %p144 = por %p142, %p143
    %p145 = scmp.ne.s32.totalorder %s134, %s135
    %p146 = scmp.eq.s32.totalorder %s16, 0
    %p147 = por %p145, %p146
    %p148 = scmp.ne.s32.totalorder %s134, %s135
    %p149 = scmp.eq.s32.totalorder %s17, 1
    %p150 = por %p148, %p149
    %p152 = scmp.ne.s32.totalorder %s135, %s151
    %p153 = scmp.eq.s32.totalorder %s17, 0
    %p154 = por %p152, %p153
    %p155 = scmp.le.s32.totalorder 1, %s11
    %p156 = scmp.lt.s32.totalorder %s11, 3
    %p157 = pnand %p155, %p156
    %p158 = pneg %p157
    // Predicated region
    $region9: #{cnn_forward.2} parent=5 // pred_check
      _
    $region10: #{cnn_forward.2} parent=5 // pred_check_branch
      %160 = sbr.rel (%p157) target = $region12
    $region11: #{cnn_forward.2} parent=5 // pred_region
      %s161 = ssub.s32 %s11, 1
      // Predicated region
      $region13: #{cnn_forward.2} parent=11 // pred_check
        %p162 = pneg %p58
      $region14: #{cnn_forward.2} parent=11 // pred_check_branch
        %164 = sbr.rel (%p162) target = $region16
      $region15: #{cnn_forward.2} parent=11 // pred_region
        _
      $region16: #{cnn_forward.2} parent=11 // pred_fallthru
        _
      // Predicated region
      $region17: #{cnn_forward.2} parent=11 // pred_check
        %p165 = pneg %p79
      $region18: #{cnn_forward.2} parent=11 // pred_check_branch
        %167 = sbr.rel (%p165) target = $region20
      $region19: #{cnn_forward.2} parent=11 // pred_region
        _
      $region20: #{cnn_forward.2} parent=11 // pred_fallthru
        _
      // Predicated region
      $region21: #{cnn_forward.2} parent=11 // pred_check
        %p168 = pneg %p100
      $region22: #{cnn_forward.2} parent=11 // pred_check_branch
        %170 = sbr.rel (%p168) target = $region24
      $region23: #{cnn_forward.2} parent=11 // pred_region
        _
      $region24: #{cnn_forward.2} parent=11 // pred_fallthru
        _
      // Predicated region
      $region25: #{cnn_forward.2} parent=11 // pred_check
        %p171 = pneg %p121
      $region26: #{cnn_forward.2} parent=11 // pred_check_branch
        %173 = sbr.rel (%p171) target = $region28
      $region27: #{cnn_forward.2} parent=11 // pred_region
        _
      $region28: #{cnn_forward.2} parent=11 // pred_fallthru
        _
    $region12: #{cnn_forward.2} parent=5 // pred_fallthru
      _
    %p174 = scmp.lt.s32.totalorder %s11, 2
    // Predicated region
    $region29: #{cnn_forward.2} parent=5 // pred_check
      %p175 = pneg %p174
    $region30: #{cnn_forward.2} parent=5 // pred_check_branch
      %177 = sbr.rel (%p175) target = $region32
    $region31: #{cnn_forward.2} parent=5 // pred_region
      // Predicated region
      $region33: #{cnn_forward.2} parent=31 // pred_check
        %p178 = pneg %p31
      $region34: #{cnn_forward.2} parent=31 // pred_check_branch
        %180 = sbr.rel (%p178) target = $region36
      $region35: #{cnn_forward.2} parent=31 // pred_region
        %p181 = scmp.lt.s32.totalorder %s11, 1
        %s182 = scalar_select %p181, %s11, 1
        %s183 = smul.addr %s182, 32
        %s184 = smul.addr %s183, 4
        %s185 = scalar_lea.vmem %s0, %s184
      $region36: #{cnn_forward.2} parent=31 // pred_fallthru
        _
    $region32: #{cnn_forward.2} parent=5 // pred_fallthru
      _
    %p186 = scmp.le.s32.totalorder 1, %s11
    %p187 = scmp.lt.s32.totalorder %s11, 3
    %p188 = pnand %p186, %p187
    %p189 = pneg %p188
    // Predicated region
    $region37: #{cnn_forward.2} parent=5 // pred_check
      _
    $region38: #{cnn_forward.2} parent=5 // pred_check_branch
      %191 = sbr.rel (%p188) target = $region40
    $region39: #{cnn_forward.2} parent=5 // pred_region
      %s192 = ssub.s32 %s11, 1
      %p193 = scmp.lt.s32.totalorder %s16, 1
      %s194 = scalar_select %p193, %s16, 1
      %s195 = smul.addr %s194, 32
      %s196 = smul.addr %s195, 4
      %s197 = scalar_lea.vmem %s0, %s196
      %p198 = pneg %p37
      %p199 = pneg %p34
      %p200 = pneg %p58
      %p201 = pneg %p55
      %p202 = pneg %p79
      %p203 = pneg %p76
      %p204 = pneg %p100
      %p205 = pneg %p97
      %p206 = pneg %p121
      %p207 = pneg %p118
      %p208 = pneg %p147
      %p209 = pneg %p144
      %p210 = scmp.lt.s32.totalorder %s16, 1
      %s211 = scalar_select %p210, %s16, 1
      %s212 = smul.addr %s211, 8
      %s213 = smul.addr %s212, 4
      %s214 = scalar_lea.vmem %s5, %s213
      %p215 = scmp.lt.s32.totalorder %s16, 1
      %s216 = scalar_select %p215, %s16, 1
      %s217 = smul.addr %s216, 32
      %s218 = smul.addr %s217, 4
      %s219 = scalar_lea.vmem %s0, %s218
      %p220 = scmp.lt.s32.totalorder %s16, 1
      %s221 = scalar_select %p220, %s16, 1
      %s222 = smul.addr %s221, 8
      %s223 = smul.addr %s222, 4
      %s224 = scalar_lea.vmem %s5, %s223
      %v226 = vld [vmem:[%s219] sm:$0xf]
      %v227 = vld [vmem:[%s219 + $0x4] sm:$0xf]
      %v228 = vld [vmem:[%s219 + $0x8] sm:$0xf]
      %v229 = vld [vmem:[%s219 + $0xc] sm:$0xf]
      %v230 = vld [vmem:[%s219 + $0x10] sm:$0xf]
      %v231 = vld [vmem:[%s219 + $0x14] sm:$0xf]
      %v232 = vld [vmem:[%s219 + $0x18] sm:$0xf]
      %v233 = vld [vmem:[%s219 + $0x1c] sm:$0xf]
      %v234 = vld [vmem:[%s219 + $0x20] sm:$0xf]
      %v235 = vld [vmem:[%s219 + $0x24] sm:$0xf]
      %v236 = vld [vmem:[%s219 + $0x28] sm:$0xf]
      %v237 = vld [vmem:[%s219 + $0x2c] sm:$0xf]
      %v238 = vld [vmem:[%s219 + $0x30] sm:$0xf]
      %v239 = vld [vmem:[%s219 + $0x34] sm:$0xf]
      %v240 = vld [vmem:[%s219 + $0x38] sm:$0xf]
      %v241 = vld [vmem:[%s219 + $0x3c] sm:$0xf]
      %v242 = vld [vmem:[%s219 + $0x40] sm:$0xf]
      %v243 = vld [vmem:[%s219 + $0x44] sm:$0xf]
      %v244 = vld [vmem:[%s219 + $0x48] sm:$0xf]
      %v245 = vld [vmem:[%s219 + $0x4c] sm:$0xf]
      %v246 = vld [vmem:[%s219 + $0x50] sm:$0xf]
      %v247 = vld [vmem:[%s219 + $0x54] sm:$0xf]
      %v248 = vld [vmem:[%s219 + $0x58] sm:$0xf]
      %v249 = vld [vmem:[%s219 + $0x5c] sm:$0xf]
      %v250 = vld [vmem:[%s219 + $0x60] sm:$0xf]
      %v251 = vld [vmem:[%s219 + $0x64] sm:$0xf]
      %v252 = vld [vmem:[%s219 + $0x68] sm:$0xf]
      %v253 = vld [vmem:[%s219 + $0x6c] sm:$0xf]
      %v254 = vld [vmem:[%s219 + $0x70] sm:$0xf]
      %v255 = vld [vmem:[%s219 + $0x74] sm:$0xf]
      %v256 = vld [vmem:[%s219 + $0x78] sm:$0xf]
      %v257 = vld [vmem:[%s219 + $0x7c] sm:$0xf]
      %v258 = vld [vmem:[%s1] sm:$0xf]
      %v259 = vld [vmem:[%s1 + $0x4] sm:$0xf]
      %v260 = vld [vmem:[%s1 + $0x8] sm:$0xf]
      %v261 = vld [vmem:[%s1 + $0xc] sm:$0xf]
      %v294 = vunpack.c.l.b16 %v226
      %v295 = vunpack.c.l.b16 %v227
      %v296 = vunpack.c.l.b16 %v228
      %v297 = vunpack.c.l.b16 %v229
      %v298 = vunpack.c.l.b16 %v230
      %v299 = vunpack.c.l.b16 %v231
      %v300 = vunpack.c.l.b16 %v232
      %v301 = vunpack.c.l.b16 %v233
      %v302 = vunpack.c.l.b16 %v234
      %v303 = vunpack.c.l.b16 %v235
      %v304 = vunpack.c.l.b16 %v236
      %v305 = vunpack.c.l.b16 %v237
      %v306 = vunpack.c.l.b16 %v238
      %v307 = vunpack.c.l.b16 %v239
      %v308 = vunpack.c.l.b16 %v240
      %v309 = vunpack.c.l.b16 %v241
      %v310 = vunpack.c.l.b16 %v242
      %v311 = vunpack.c.l.b16 %v243
      %v312 = vunpack.c.l.b16 %v244
      %v313 = vunpack.c.l.b16 %v245
      %v314 = vunpack.c.l.b16 %v246
      %v315 = vunpack.c.l.b16 %v247
      %v316 = vunpack.c.l.b16 %v248
      %v317 = vunpack.c.l.b16 %v249
      %v318 = vunpack.c.l.b16 %v250
      %v319 = vunpack.c.l.b16 %v251
      %v320 = vunpack.c.l.b16 %v252
      %v321 = vunpack.c.l.b16 %v253
      %v322 = vunpack.c.l.b16 %v254
      %v323 = vunpack.c.l.b16 %v255
      %v324 = vunpack.c.l.b16 %v256
      %v325 = vunpack.c.l.b16 %v257
      %v326 = vpack.c.b16 %v295, %v294
      %v327 = vpack.c.b16 %v297, %v296
      %v328 = vpack.c.b16 %v299, %v298
      %v329 = vpack.c.b16 %v301, %v300
      %v330 = vpack.c.b16 %v303, %v302
      %v331 = vpack.c.b16 %v305, %v304
      %v332 = vpack.c.b16 %v307, %v306
      %v333 = vpack.c.b16 %v309, %v308
      %v334 = vpack.c.b16 %v311, %v310
      %v335 = vpack.c.b16 %v313, %v312
      %v336 = vpack.c.b16 %v315, %v314
      %v337 = vpack.c.b16 %v317, %v316
      %v338 = vpack.c.b16 %v319, %v318
      %v339 = vpack.c.b16 %v321, %v320
      %v340 = vpack.c.b16 %v323, %v322
      %v341 = vpack.c.b16 %v325, %v324
      %v346 = vunpack.c.l.b16 %v258
      %v347 = vunpack.c.l.b16 %v259
      %v348 = vunpack.c.l.b16 %v260
      %v349 = vunpack.c.l.b16 %v261
      %v350 = vpack.c.b16 %v347, %v346
      %v351 = vpack.c.b16 %v349, %v348
      %vm354 = vcmask 261120
      %v356 = vsel %vm354, %v326, 0
      %v359 = vsel %vm354, %v327, 0
      %v362 = vsel %vm354, %v328, 0
      %v365 = vsel %vm354, %v329, 0
      %v368 = vsel %vm354, %v330, 0
      %v371 = vsel %vm354, %v331, 0
      %v374 = vsel %vm354, %v332, 0
      %v377 = vsel %vm354, %v333, 0
      %v380 = vsel %vm354, %v334, 0
      %v383 = vsel %vm354, %v335, 0
      %v386 = vsel %vm354, %v336, 0
      %v389 = vsel %vm354, %v337, 0
      %v392 = vsel %vm354, %v338, 0
      %v395 = vsel %vm354, %v339, 0
      %v398 = vsel %vm354, %v340, 0
      %v401 = vsel %vm354, %v341, 0
      %403 = vmatprep.subr.bf16.mxu0 0
      %404 = vmatpush1.bf16.msra.mxu0 %v350
      %405 = vmatprep.subr.bf16.mxu0 0
      %406 = vmatpush1.bf16.msra.mxu0 %v351
      %407 = vmatprep.subr.bf16.mxu0 0
      %408 = vmatpush1.bf16.msra.mxu0 0
      %409 = vmatprep.subr.bf16.mxu0 0
      %410 = vmatpush1.bf16.msra.mxu0 0
      %411 = vmatprep.subr.bf16.mxu0 0
      %412 = vmatpush1.bf16.msra.mxu0 0
      %413 = vmatprep.subr.bf16.mxu0 0
      %414 = vmatpush1.bf16.msra.mxu0 0
      %415 = vmatprep.subr.bf16.mxu0 0
      %416 = vmatpush1.bf16.msra.mxu0 0
      %417 = vmatprep.subr.bf16.mxu0 0
      %418 = vmatpush1.bf16.msra.mxu0 0
      %419 = vmatprep.subr.bf16.mxu0 0
      %420 = vmatpush1.bf16.msra.mxu0 0
      %421 = vmatprep.subr.bf16.mxu0 0
      %422 = vmatpush1.bf16.msra.mxu0 0
      %423 = vmatprep.subr.bf16.mxu0 0
      %424 = vmatpush1.bf16.msra.mxu0 0
      %425 = vmatprep.subr.bf16.mxu0 0
      %426 = vmatpush1.bf16.msra.mxu0 0
      %427 = vmatprep.subr.bf16.mxu0 0
      %428 = vmatpush1.bf16.msra.mxu0 0
      %429 = vmatprep.subr.bf16.mxu0 0
      %430 = vmatpush1.bf16.msra.mxu0 0
      %431 = vmatprep.subr.bf16.mxu0 0
      %432 = vmatpush1.bf16.msra.mxu0 0
      %433 = vmatprep.subr.bf16.mxu0 0
      %434 = vmatpush1.bf16.msra.mxu0 0
      %435 = vmatprep.mubr.bf16.mxu0 0
      %436 = vmatmul.mubr.bf16.gmra.mrb[0].mxu0 %v356
      %v437 = vpop.f32.mrb[0].mxu0
      %v438 = vadd.f32 0.0, %v437
      %v439 = vpop.f32.mrb[0].mxu0
      %v440 = vpop.f32.mrb[0].mxu0
      %v441 = vadd.f32 0.0, %v440
      %v442 = vpop.f32.mrb[0].mxu0
      %443 = vmatprep.mubr.bf16.mxu0 0
      %444 = vmatmul.mubr.bf16.gmra.mrb[0].mxu0 %v359
      %v445 = vpop.f32.mrb[0].mxu0
      %v446 = vadd.f32 0.0, %v445
      %v447 = vpop.f32.mrb[0].mxu0
      %v448 = vpop.f32.mrb[0].mxu0
      %v449 = vadd.f32 0.0, %v448
      %v450 = vpop.f32.mrb[0].mxu0
      %451 = vmatprep.mubr.bf16.mxu0 0
      %452 = vmatmul.mubr.bf16.gmra.mrb[0].mxu0 %v362
      %v453 = vpop.f32.mrb[0].mxu0
      %v454 = vadd.f32 0.0, %v453
      %v455 = vpop.f32.mrb[0].mxu0
      %v456 = vpop.f32.mrb[0].mxu0
      %v457 = vadd.f32 0.0, %v456
      %v458 = vpop.f32.mrb[0].mxu0
      %459 = vmatprep.mubr.bf16.mxu0 0
      %460 = vmatmul.mubr.bf16.gmra.mrb[0].mxu0 %v365
      %v461 = vpop.f32.mrb[0].mxu0
      %v462 = vadd.f32 0.0, %v461
      %v463 = vpop.f32.mrb[0].mxu0
      %v464 = vpop.f32.mrb[0].mxu0
      %v465 = vadd.f32 0.0, %v464
      %v466 = vpop.f32.mrb[0].mxu0
      %467 = vmatprep.mubr.bf16.mxu0 0
      %468 = vmatmul.mubr.bf16.gmra.mrb[0].mxu0 %v368
      %v469 = vpop.f32.mrb[0].mxu0
      %v470 = vadd.f32 0.0, %v469
      %v471 = vpop.f32.mrb[0].mxu0
      %v472 = vpop.f32.mrb[0].mxu0
      %v473 = vadd.f32 0.0, %v472
      %v474 = vpop.f32.mrb[0].mxu0
      %475 = vmatprep.mubr.bf16.mxu0 0
      %476 = vmatmul.mubr.bf16.gmra.mrb[0].mxu0 %v371
      %v477 = vpop.f32.mrb[0].mxu0
      %v478 = vadd.f32 0.0, %v477
      %v479 = vpop.f32.mrb[0].mxu0
      %v480 = vpop.f32.mrb[0].mxu0
      %v481 = vadd.f32 0.0, %v480
      %v482 = vpop.f32.mrb[0].mxu0
      %483 = vmatprep.mubr.bf16.mxu0 0
      %484 = vmatmul.mubr.bf16.gmra.mrb[0].mxu0 %v374
      %v485 = vpop.f32.mrb[0].mxu0
      %v486 = vadd.f32 0.0, %v485
      %v487 = vpop.f32.mrb[0].mxu0
      %v488 = vpop.f32.mrb[0].mxu0
      %v489 = vadd.f32 0.0, %v488
      %v490 = vpop.f32.mrb[0].mxu0
      %491 = vmatprep.mubr.bf16.mxu0 0
      %492 = vmatmul.mubr.bf16.gmra.mrb[0].mxu0 %v377
      %v493 = vpop.f32.mrb[0].mxu0
      %v494 = vadd.f32 0.0, %v493
      %v495 = vpop.f32.mrb[0].mxu0
      %v496 = vpop.f32.mrb[0].mxu0
      %v497 = vadd.f32 0.0, %v496
      %v498 = vpop.f32.mrb[0].mxu0
      %499 = vmatprep.mubr.bf16.mxu0 0
      %500 = vmatmul.mubr.bf16.gmra.mrb[0].mxu0 %v380
      %v501 = vpop.f32.mrb[0].mxu0
      %v502 = vadd.f32 0.0, %v501
      %v503 = vpop.f32.mrb[0].mxu0
      %v504 = vpop.f32.mrb[0].mxu0
      %v505 = vadd.f32 0.0, %v504
      %v506 = vpop.f32.mrb[0].mxu0
      %507 = vmatprep.mubr.bf16.mxu0 0
      %508 = vmatmul.mubr.bf16.gmra.mrb[0].mxu0 %v383
      %v509 = vpop.f32.mrb[0].mxu0
      %v510 = vadd.f32 0.0, %v509
      %v511 = vpop.f32.mrb[0].mxu0
      %v512 = vpop.f32.mrb[0].mxu0
      %v513 = vadd.f32 0.0, %v512
      %v514 = vpop.f32.mrb[0].mxu0
      %515 = vmatprep.mubr.bf16.mxu0 0
      %516 = vmatmul.mubr.bf16.gmra.mrb[0].mxu0 %v386
      %v517 = vpop.f32.mrb[0].mxu0
      %v518 = vadd.f32 0.0, %v517
      %v519 = vpop.f32.mrb[0].mxu0
      %v520 = vpop.f32.mrb[0].mxu0
      %v521 = vadd.f32 0.0, %v520
      %v522 = vpop.f32.mrb[0].mxu0
      %523 = vmatprep.mubr.bf16.mxu0 0
      %524 = vmatmul.mubr.bf16.gmra.mrb[0].mxu0 %v389
      %v525 = vpop.f32.mrb[0].mxu0
      %v526 = vadd.f32 0.0, %v525
      %v527 = vpop.f32.mrb[0].mxu0
      %v528 = vpop.f32.mrb[0].mxu0
      %v529 = vadd.f32 0.0, %v528
      %v530 = vpop.f32.mrb[0].mxu0
      %531 = vmatprep.mubr.bf16.mxu0 0
      %532 = vmatmul.mubr.bf16.gmra.mrb[0].mxu0 %v392
      %v533 = vpop.f32.mrb[0].mxu0
      %v534 = vadd.f32 0.0, %v533
      %v535 = vpop.f32.mrb[0].mxu0
      %v536 = vpop.f32.mrb[0].mxu0
      %v537 = vadd.f32 0.0, %v536
      %v538 = vpop.f32.mrb[0].mxu0
      %539 = vmatprep.mubr.bf16.mxu0 0
      %540 = vmatmul.mubr.bf16.gmra.mrb[0].mxu0 %v395
      %v541 = vpop.f32.mrb[0].mxu0
      %v542 = vadd.f32 0.0, %v541
      %v543 = vpop.f32.mrb[0].mxu0
      %v544 = vpop.f32.mrb[0].mxu0
      %v545 = vadd.f32 0.0, %v544
      %v546 = vpop.f32.mrb[0].mxu0
      %547 = vmatprep.mubr.bf16.mxu0 0
      %548 = vmatmul.mubr.bf16.gmra.mrb[0].mxu0 %v398
      %v549 = vpop.f32.mrb[0].mxu0
      %v550 = vadd.f32 0.0, %v549
      %v551 = vpop.f32.mrb[0].mxu0
      %v552 = vpop.f32.mrb[0].mxu0
      %v553 = vadd.f32 0.0, %v552
      %v554 = vpop.f32.mrb[0].mxu0
      %555 = vmatprep.mubr.bf16.mxu0 0
      %556 = vmatmul.mubr.bf16.gmra.mrb[0].mxu0 %v401
      %v557 = vpop.f32.mrb[0].mxu0
      %v558 = vadd.f32 0.0, %v557
      %v559 = vpop.f32.mrb[0].mxu0
      %v560 = vpop.f32.mrb[0].mxu0
      %v561 = vadd.f32 0.0, %v560
      %v562 = vpop.f32.mrb[0].mxu0
      %563 = vdwg.mxu0
      %564 = vrot.lane.b32.xlu0 %v326, 96
      %v565 = vpop.permute.xlu0 %564
      %566 = vrot.lane.b32.xlu0 %v327, 96
      %v567 = vpop.permute.xlu0 %566
      %568 = vrot.lane.b32.xlu0 %v328, 96
      %v569 = vpop.permute.xlu0 %568
      %570 = vrot.lane.b32.xlu0 %v329, 96
      %v571 = vpop.permute.xlu0 %570
      %572 = vrot.lane.b32.xlu0 %v330, 96
      %v573 = vpop.permute.xlu0 %572
      %574 = vrot.lane.b32.xlu0 %v331, 96
      %v575 = vpop.permute.xlu0 %574
      %576 = vrot.lane.b32.xlu0 %v332, 96
      %v577 = vpop.permute.xlu0 %576
      %578 = vrot.lane.b32.xlu0 %v333, 96
      %v579 = vpop.permute.xlu0 %578
      %580 = vrot.lane.b32.xlu0 %v334, 96
      %v581 = vpop.permute.xlu0 %580
      %582 = vrot.lane.b32.xlu0 %v335, 96
      %v583 = vpop.permute.xlu0 %582
      %584 = vrot.lane.b32.xlu0 %v336, 96
      %v585 = vpop.permute.xlu0 %584
      %586 = vrot.lane.b32.xlu0 %v337, 96
      %v587 = vpop.permute.xlu0 %586
      %588 = vrot.lane.b32.xlu0 %v338, 96
      %v589 = vpop.permute.xlu0 %588
      %590 = vrot.lane.b32.xlu0 %v339, 96
      %v591 = vpop.permute.xlu0 %590
      %592 = vrot.lane.b32.xlu0 %v340, 96
      %v593 = vpop.permute.xlu0 %592
      %594 = vrot.lane.b32.xlu0 %v341, 96
      %v595 = vpop.permute.xlu0 %594
      %v597 = vsel %vm354, %v565, 0
      %v600 = vsel %vm354, %v567, 0
      %v603 = vsel %vm354, %v569, 0
      %v606 = vsel %vm354, %v571, 0
      %v609 = vsel %vm354, %v573, 0
      %v612 = vsel %vm354, %v575, 0
      %v615 = vsel %vm354, %v577, 0
      %v618 = vsel %vm354, %v579, 0
      %v621 = vsel %vm354, %v581, 0
      %v624 = vsel %vm354, %v583, 0
      %v627 = vsel %vm354, %v585, 0
      %v630 = vsel %vm354, %v587, 0
      %v633 = vsel %vm354, %v589, 0
      %v636 = vsel %vm354, %v591, 0
      %v639 = vsel %vm354, %v593, 0
      %v642 = vsel %vm354, %v595, 0
      %644 = vmatprep.subr.bf16.mxu0 0
      %645 = vmatpush1.bf16.msra.mxu0 %v350
      %646 = vmatprep.subr.bf16.mxu0 0
      %647 = vmatpush1.bf16.msra.mxu0 %v351
      %648 = vmatprep.subr.bf16.mxu0 0
      %649 = vmatpush1.bf16.msra.mxu0 0
      %650 = vmatprep.subr.bf16.mxu0 0
      %651 = vmatpush1.bf16.msra.mxu0 0
      %652 = vmatprep.subr.bf16.mxu0 0
      %653 = vmatpush1.bf16.msra.mxu0 0
      %654 = vmatprep.subr.bf16.mxu0 0
      %655 = vmatpush1.bf16.msra.mxu0 0
      %656 = vmatprep.subr.bf16.mxu0 0
      %657 = vmatpush1.bf16.msra.mxu0 0
      %658 = vmatprep.subr.bf16.mxu0 0
      %659 = vmatpush1.bf16.msra.mxu0 0
      %660 = vmatprep.subr.bf16.mxu0 0
      %661 = vmatpush1.bf16.msra.mxu0 0
      %662 = vmatprep.subr.bf16.mxu0 0
      %663 = vmatpush1.bf16.msra.mxu0 0
      %664 = vmatprep.subr.bf16.mxu0 0
      %665 = vmatpush1.bf16.msra.mxu0 0
      %666 = vmatprep.subr.bf16.mxu0 0
      %667 = vmatpush1.bf16.msra.mxu0 0
      %668 = vmatprep.subr.bf16.mxu0 0
      %669 = vmatpush1.bf16.msra.mxu0 0
      %670 = vmatprep.subr.bf16.mxu0 0
      %671 = vmatpush1.bf16.msra.mxu0 0
      %672 = vmatprep.subr.bf16.mxu0 0
      %673 = vmatpush1.bf16.msra.mxu0 0
      %674 = vmatprep.subr.bf16.mxu0 0
      %675 = vmatpush1.bf16.msra.mxu0 0
      %676 = vmatprep.mubr.bf16.mxu0 0
      %677 = vmatmul.mubr.bf16.gmra.mrb[0].mxu0 %v597
      %v678 = vpop.f32.mrb[0].mxu0
      %v679 = vadd.f32 0.0, %v678
      %v680 = vpop.f32.mrb[0].mxu0
      %v681 = vpop.f32.mrb[0].mxu0
      %v682 = vadd.f32 0.0, %v681
      %v683 = vpop.f32.mrb[0].mxu0
      %684 = vmatprep.mubr.bf16.mxu0 0
      %685 = vmatmul.mubr.bf16.gmra.mrb[0].mxu0 %v600
      %v686 = vpop.f32.mrb[0].mxu0
      %v687 = vadd.f32 0.0, %v686
      %v688 = vpop.f32.mrb[0].mxu0
      %v689 = vpop.f32.mrb[0].mxu0
      %v690 = vadd.f32 0.0, %v689
      %v691 = vpop.f32.mrb[0].mxu0
      %692 = vmatprep.mubr.bf16.mxu0 0
      %693 = vmatmul.mubr.bf16.gmra.mrb[0].mxu0 %v603
      %v694 = vpop.f32.mrb[0].mxu0
      %v695 = vadd.f32 0.0, %v694
      %v696 = vpop.f32.mrb[0].mxu0
      %v697 = vpop.f32.mrb[0].mxu0
      %v698 = vadd.f32 0.0, %v697
      %v699 = vpop.f32.mrb[0].mxu0
      %700 = vmatprep.mubr.bf16.mxu0 0
      %701 = vmatmul.mubr.bf16.gmra.mrb[0].mxu0 %v606
      %v702 = vpop.f32.mrb[0].mxu0
      %v703 = vadd.f32 0.0, %v702
      %v704 = vpop.f32.mrb[0].mxu0
      %v705 = vpop.f32.mrb[0].mxu0
      %v706 = vadd.f32 0.0, %v705
      %v707 = vpop.f32.mrb[0].mxu0
      %708 = vmatprep.mubr.bf16.mxu0 0
      %709 = vmatmul.mubr.bf16.gmra.mrb[0].mxu0 %v609
      %v710 = vpop.f32.mrb[0].mxu0
      %v711 = vadd.f32 0.0, %v710
      %v712 = vpop.f32.mrb[0].mxu0
      %v713 = vpop.f32.mrb[0].mxu0
      %v714 = vadd.f32 0.0, %v713
      %v715 = vpop.f32.mrb[0].mxu0
      %716 = vmatprep.mubr.bf16.mxu0 0
      %717 = vmatmul.mubr.bf16.gmra.mrb[0].mxu0 %v612
      %v718 = vpop.f32.mrb[0].mxu0
      %v719 = vadd.f32 0.0, %v718
      %v720 = vpop.f32.mrb[0].mxu0
      %v721 = vpop.f32.mrb[0].mxu0
      %v722 = vadd.f32 0.0, %v721
      %v723 = vpop.f32.mrb[0].mxu0
      %724 = vmatprep.mubr.bf16.mxu0 0
      %725 = vmatmul.mubr.bf16.gmra.mrb[0].mxu0 %v615
      %v726 = vpop.f32.mrb[0].mxu0
      %v727 = vadd.f32 0.0, %v726
      %v728 = vpop.f32.mrb[0].mxu0
      %v729 = vpop.f32.mrb[0].mxu0
      %v730 = vadd.f32 0.0, %v729
      %v731 = vpop.f32.mrb[0].mxu0
      %732 = vmatprep.mubr.bf16.mxu0 0
      %733 = vmatmul.mubr.bf16.gmra.mrb[0].mxu0 %v618
      %v734 = vpop.f32.mrb[0].mxu0
      %v735 = vadd.f32 0.0, %v734
      %v736 = vpop.f32.mrb[0].mxu0
      %v737 = vpop.f32.mrb[0].mxu0
      %v738 = vadd.f32 0.0, %v737
      %v739 = vpop.f32.mrb[0].mxu0
      %740 = vmatprep.mubr.bf16.mxu0 0
      %741 = vmatmul.mubr.bf16.gmra.mrb[0].mxu0 %v621
      %v742 = vpop.f32.mrb[0].mxu0
      %v743 = vadd.f32 0.0, %v742
      %v744 = vpop.f32.mrb[0].mxu0
      %v745 = vpop.f32.mrb[0].mxu0
      %v746 = vadd.f32 0.0, %v745
      %v747 = vpop.f32.mrb[0].mxu0
      %748 = vmatprep.mubr.bf16.mxu0 0
      %749 = vmatmul.mubr.bf16.gmra.mrb[0].mxu0 %v624
      %v750 = vpop.f32.mrb[0].mxu0
      %v751 = vadd.f32 0.0, %v750
      %v752 = vpop.f32.mrb[0].mxu0
      %v753 = vpop.f32.mrb[0].mxu0
      %v754 = vadd.f32 0.0, %v753
      %v755 = vpop.f32.mrb[0].mxu0
      %756 = vmatprep.mubr.bf16.mxu0 0
      %757 = vmatmul.mubr.bf16.gmra.mrb[0].mxu0 %v627
      %v758 = vpop.f32.mrb[0].mxu0
      %v759 = vadd.f32 0.0, %v758
      %v760 = vpop.f32.mrb[0].mxu0
      %v761 = vpop.f32.mrb[0].mxu0
      %v762 = vadd.f32 0.0, %v761
      %v763 = vpop.f32.mrb[0].mxu0
      %764 = vmatprep.mubr.bf16.mxu0 0
      %765 = vmatmul.mubr.bf16.gmra.mrb[0].mxu0 %v630
      %v766 = vpop.f32.mrb[0].mxu0
      %v767 = vadd.f32 0.0, %v766
      %v768 = vpop.f32.mrb[0].mxu0
      %v769 = vpop.f32.mrb[0].mxu0
      %v770 = vadd.f32 0.0, %v769
      %v771 = vpop.f32.mrb[0].mxu0
      %772 = vmatprep.mubr.bf16.mxu0 0
      %773 = vmatmul.mubr.bf16.gmra.mrb[0].mxu0 %v633
      %v774 = vpop.f32.mrb[0].mxu0
      %v775 = vadd.f32 0.0, %v774
      %v776 = vpop.f32.mrb[0].mxu0
      %v777 = vpop.f32.mrb[0].mxu0
      %v778 = vadd.f32 0.0, %v777
      %v779 = vpop.f32.mrb[0].mxu0
      %780 = vmatprep.mubr.bf16.mxu0 0
      %781 = vmatmul.mubr.bf16.gmra.mrb[0].mxu0 %v636
      %v782 = vpop.f32.mrb[0].mxu0
      %v783 = vadd.f32 0.0, %v782
      %v784 = vpop.f32.mrb[0].mxu0
      %v785 = vpop.f32.mrb[0].mxu0
      %v786 = vadd.f32 0.0, %v785
      %v787 = vpop.f32.mrb[0].mxu0
      %788 = vmatprep.mubr.bf16.mxu0 0
      %789 = vmatmul.mubr.bf16.gmra.mrb[0].mxu0 %v639
      %v790 = vpop.f32.mrb[0].mxu0
      %v791 = vadd.f32 0.0, %v790
      %v792 = vpop.f32.mrb[0].mxu0
      %v793 = vpop.f32.mrb[0].mxu0
      %v794 = vadd.f32 0.0, %v793
      %v795 = vpop.f32.mrb[0].mxu0
      %796 = vmatprep.mubr.bf16.mxu0 0
      %797 = vmatmul.mubr.bf16.gmra.mrb[0].mxu0 %v642
      %v798 = vpop.f32.mrb[0].mxu0
      %v799 = vadd.f32 0.0, %v798
      %v800 = vpop.f32.mrb[0].mxu0
      %v801 = vpop.f32.mrb[0].mxu0
      %v802 = vadd.f32 0.0, %v801
      %v803 = vpop.f32.mrb[0].mxu0
      %804 = vdwg.mxu0
      %v805 = vmax.f32 %v438, %v679
      %v806 = vmax.f32 %v441, %v682
      %v807 = vmax.f32 %v446, %v687
      %v808 = vmax.f32 %v449, %v690
      %v809 = vmax.f32 %v454, %v695
      %v810 = vmax.f32 %v457, %v698
      %v811 = vmax.f32 %v462, %v703
      %v812 = vmax.f32 %v465, %v706
      %v813 = vmax.f32 %v470, %v711
      %v814 = vmax.f32 %v473, %v714
      %v815 = vmax.f32 %v478, %v719
      %v816 = vmax.f32 %v481, %v722
      %v817 = vmax.f32 %v486, %v727
      %v818 = vmax.f32 %v489, %v730
      %v819 = vmax.f32 %v494, %v735
      %v820 = vmax.f32 %v497, %v738
      %v821 = vmax.f32 %v502, %v743
      %v822 = vmax.f32 %v505, %v746
      %v823 = vmax.f32 %v510, %v751
      %v824 = vmax.f32 %v513, %v754
      %v825 = vmax.f32 %v518, %v759
      %v826 = vmax.f32 %v521, %v762
      %v827 = vmax.f32 %v526, %v767
      %v828 = vmax.f32 %v529, %v770
      %v829 = vmax.f32 %v534, %v775
      %v830 = vmax.f32 %v537, %v778
      %v831 = vmax.f32 %v542, %v783
      %v832 = vmax.f32 %v545, %v786
      %v833 = vmax.f32 %v550, %v791
      %v834 = vmax.f32 %v553, %v794
      %v835 = vmax.f32 %v558, %v799
      %v836 = vmax.f32 %v561, %v802
      %837 = vrot.lane.b32.xlu0 %v326, 64
      %v838 = vpop.permute.xlu0 %837
      %839 = vrot.lane.b32.xlu0 %v327, 64
      %v840 = vpop.permute.xlu0 %839
      %841 = vrot.lane.b32.xlu0 %v328, 64
      %v842 = vpop.permute.xlu0 %841
      %843 = vrot.lane.b32.xlu0 %v329, 64
      %v844 = vpop.permute.xlu0 %843
      %845 = vrot.lane.b32.xlu0 %v330, 64
      %v846 = vpop.permute.xlu0 %845
      %847 = vrot.lane.b32.xlu0 %v331, 64
      %v848 = vpop.permute.xlu0 %847
      %849 = vrot.lane.b32.xlu0 %v332, 64
      %v850 = vpop.permute.xlu0 %849
      %851 = vrot.lane.b32.xlu0 %v333, 64
      %v852 = vpop.permute.xlu0 %851
      %853 = vrot.lane.b32.xlu0 %v334, 64
      %v854 = vpop.permute.xlu0 %853
      %855 = vrot.lane.b32.xlu0 %v335, 64
      %v856 = vpop.permute.xlu0 %855
      %857 = vrot.lane.b32.xlu0 %v336, 64
      %v858 = vpop.permute.xlu0 %857
      %859 = vrot.lane.b32.xlu0 %v337, 64
      %v860 = vpop.permute.xlu0 %859
      %861 = vrot.lane.b32.xlu0 %v338, 64
      %v862 = vpop.permute.xlu0 %861
      %863 = vrot.lane.b32.xlu0 %v339, 64
      %v864 = vpop.permute.xlu0 %863
      %865 = vrot.lane.b32.xlu0 %v340, 64
      %v866 = vpop.permute.xlu0 %865
      %867 = vrot.lane.b32.xlu0 %v341, 64
      %v868 = vpop.permute.xlu0 %867
      %v870 = vsel %vm354, %v838, 0
      %v873 = vsel %vm354, %v840, 0
      %v876 = vsel %vm354, %v842, 0
      %v879 = vsel %vm354, %v844, 0
      %v882 = vsel %vm354, %v846, 0
      %v885 = vsel %vm354, %v848, 0
      %v888 = vsel %vm354, %v850, 0
      %v891 = vsel %vm354, %v852, 0
      %v894 = vsel %vm354, %v854, 0
      %v897 = vsel %vm354, %v856, 0
      %v900 = vsel %vm354, %v858, 0
      %v903 = vsel %vm354, %v860, 0
      %v906 = vsel %vm354, %v862, 0
      %v909 = vsel %vm354, %v864, 0
      %v912 = vsel %vm354, %v866, 0
      %v915 = vsel %vm354, %v868, 0
      %917 = vmatprep.subr.bf16.mxu0 0
      %918 = vmatpush1.bf16.msra.mxu0 %v350
      %919 = vmatprep.subr.bf16.mxu0 0
      %920 = vmatpush1.bf16.msra.mxu0 %v351
      %921 = vmatprep.subr.bf16.mxu0 0
      %922 = vmatpush1.bf16.msra.mxu0 0
      %923 = vmatprep.subr.bf16.mxu0 0
      %924 = vmatpush1.bf16.msra.mxu0 0
      %925 = vmatprep.subr.bf16.mxu0 0
      %926 = vmatpush1.bf16.msra.mxu0 0
      %927 = vmatprep.subr.bf16.mxu0 0
      %928 = vmatpush1.bf16.msra.mxu0 0
      %929 = vmatprep.subr.bf16.mxu0 0
      %930 = vmatpush1.bf16.msra.mxu0 0
      %931 = vmatprep.subr.bf16.mxu0 0
      %932 = vmatpush1.bf16.msra.mxu0 0
      %933 = vmatprep.subr.bf16.mxu0 0
      %934 = vmatpush1.bf16.msra.mxu0 0
      %935 = vmatprep.subr.bf16.mxu0 0
      %936 = vmatpush1.bf16.msra.mxu0 0
      %937 = vmatprep.subr.bf16.mxu0 0
      %938 = vmatpush1.bf16.msra.mxu0 0
      %939 = vmatprep.subr.bf16.mxu0 0
      %940 = vmatpush1.bf16.msra.mxu0 0
      %941 = vmatprep.subr.bf16.mxu0 0
      %942 = vmatpush1.bf16.msra.mxu0 0
      %943 = vmatprep.subr.bf16.mxu0 0
      %944 = vmatpush1.bf16.msra.mxu0 0
      %945 = vmatprep.subr.bf16.mxu0 0
      %946 = vmatpush1.bf16.msra.mxu0 0
      %947 = vmatprep.subr.bf16.mxu0 0
      %948 = vmatpush1.bf16.msra.mxu0 0
      %949 = vmatprep.mubr.bf16.mxu0 0
      %950 = vmatmul.mubr.bf16.gmra.mrb[0].mxu0 %v870
      %v951 = vpop.f32.mrb[0].mxu0
      %v952 = vadd.f32 0.0, %v951
      %v953 = vpop.f32.mrb[0].mxu0
      %v954 = vpop.f32.mrb[0].mxu0
      %v955 = vadd.f32 0.0, %v954
      %v956 = vpop.f32.mrb[0].mxu0
      %957 = vmatprep.mubr.bf16.mxu0 0
      %958 = vmatmul.mubr.bf16.gmra.mrb[0].mxu0 %v873
      %v959 = vpop.f32.mrb[0].mxu0
      %v960 = vadd.f32 0.0, %v959
      %v961 = vpop.f32.mrb[0].mxu0
      %v962 = vpop.f32.mrb[0].mxu0
      %v963 = vadd.f32 0.0, %v962
      %v964 = vpop.f32.mrb[0].mxu0
      %965 = vmatprep.mubr.bf16.mxu0 0
      %966 = vmatmul.mubr.bf16.gmra.mrb[0].mxu0 %v876
      %v967 = vpop.f32.mrb[0].mxu0
      %v968 = vadd.f32 0.0, %v967
      %v969 = vpop.f32.mrb[0].mxu0
      %v970 = vpop.f32.mrb[0].mxu0
      %v971 = vadd.f32 0.0, %v970
      %v972 = vpop.f32.mrb[0].mxu0
      %973 = vmatprep.mubr.bf16.mxu0 0
      %974 = vmatmul.mubr.bf16.gmra.mrb[0].mxu0 %v879
      %v975 = vpop.f32.mrb[0].mxu0
      %v976 = vadd.f32 0.0, %v975
      %v977 = vpop.f32.mrb[0].mxu0
      %v978 = vpop.f32.mrb[0].mxu0
      %v979 = vadd.f32 0.0, %v978
      %v980 = vpop.f32.mrb[0].mxu0
      %981 = vmatprep.mubr.bf16.mxu0 0
      %982 = vmatmul.mubr.bf16.gmra.mrb[0].mxu0 %v882
      %v983 = vpop.f32.mrb[0].mxu0
      %v984 = vadd.f32 0.0, %v983
      %v985 = vpop.f32.mrb[0].mxu0
      %v986 = vpop.f32.mrb[0].mxu0
      %v987 = vadd.f32 0.0, %v986
      %v988 = vpop.f32.mrb[0].mxu0
      %989 = vmatprep.mubr.bf16.mxu0 0
      %990 = vmatmul.mubr.bf16.gmra.mrb[0].mxu0 %v885
      %v991 = vpop.f32.mrb[0].mxu0
      %v992 = vadd.f32 0.0, %v991
      %v993 = vpop.f32.mrb[0].mxu0
      %v994 = vpop.f32.mrb[0].mxu0
      %v995 = vadd.f32 0.0, %v994
      %v996 = vpop.f32.mrb[0].mxu0
      %997 = vmatprep.mubr.bf16.mxu0 0
      %998 = vmatmul.mubr.bf16.gmra.mrb[0].mxu0 %v888
      %v999 = vpop.f32.mrb[0].mxu0
      %v1000 = vadd.f32 0.0, %v999
      %v1001 = vpop.f32.mrb[0].mxu0
      %v1002 = vpop.f32.mrb[0].mxu0
      %v1003 = vadd.f32 0.0, %v1002
      %v1004 = vpop.f32.mrb[0].mxu0
      %1005 = vmatprep.mubr.bf16.mxu0 0
      %1006 = vmatmul.mubr.bf16.gmra.mrb[0].mxu0 %v891
      %v1007 = vpop.f32.mrb[0].mxu0
      %v1008 = vadd.f32 0.0, %v1007
      %v1009 = vpop.f32.mrb[0].mxu0
      %v1010 = vpop.f32.mrb[0].mxu0
      %v1011 = vadd.f32 0.0, %v1010
      %v1012 = vpop.f32.mrb[0].mxu0
      %1013 = vmatprep.mubr.bf16.mxu0 0
      %1014 = vmatmul.mubr.bf16.gmra.mrb[0].mxu0 %v894
      %v1015 = vpop.f32.mrb[0].mxu0
      %v1016 = vadd.f32 0.0, %v1015
      %v1017 = vpop.f32.mrb[0].mxu0
      %v1018 = vpop.f32.mrb[0].mxu0
      %v1019 = vadd.f32 0.0, %v1018
      %v1020 = vpop.f32.mrb[0].mxu0
      %1021 = vmatprep.mubr.bf16.mxu0 0
      %1022 = vmatmul.mubr.bf16.gmra.mrb[0].mxu0 %v897
      %v1023 = vpop.f32.mrb[0].mxu0
      %v1024 = vadd.f32 0.0, %v1023
      %v1025 = vpop.f32.mrb[0].mxu0
      %v1026 = vpop.f32.mrb[0].mxu0
      %v1027 = vadd.f32 0.0, %v1026
      %v1028 = vpop.f32.mrb[0].mxu0
      %1029 = vmatprep.mubr.bf16.mxu0 0
      %1030 = vmatmul.mubr.bf16.gmra.mrb[0].mxu0 %v900
      %v1031 = vpop.f32.mrb[0].mxu0
      %v1032 = vadd.f32 0.0, %v1031
      %v1033 = vpop.f32.mrb[0].mxu0
      %v1034 = vpop.f32.mrb[0].mxu0
      %v1035 = vadd.f32 0.0, %v1034
      %v1036 = vpop.f32.mrb[0].mxu0
      %1037 = vmatprep.mubr.bf16.mxu0 0
      %1038 = vmatmul.mubr.bf16.gmra.mrb[0].mxu0 %v903
      %v1039 = vpop.f32.mrb[0].mxu0
      %v1040 = vadd.f32 0.0, %v1039
      %v1041 = vpop.f32.mrb[0].mxu0
      %v1042 = vpop.f32.mrb[0].mxu0
      %v1043 = vadd.f32 0.0, %v1042
      %v1044 = vpop.f32.mrb[0].mxu0
      %1045 = vmatprep.mubr.bf16.mxu0 0
      %1046 = vmatmul.mubr.bf16.gmra.mrb[0].mxu0 %v906
      %v1047 = vpop.f32.mrb[0].mxu0
      %v1048 = vadd.f32 0.0, %v1047
      %v1049 = vpop.f32.mrb[0].mxu0
      %v1050 = vpop.f32.mrb[0].mxu0
      %v1051 = vadd.f32 0.0, %v1050
      %v1052 = vpop.f32.mrb[0].mxu0
      %1053 = vmatprep.mubr.bf16.mxu0 0
      %1054 = vmatmul.mubr.bf16.gmra.mrb[0].mxu0 %v909
      %v1055 = vpop.f32.mrb[0].mxu0
      %v1056 = vadd.f32 0.0, %v1055
      %v1057 = vpop.f32.mrb[0].mxu0
      %v1058 = vpop.f32.mrb[0].mxu0
      %v1059 = vadd.f32 0.0, %v1058
      %v1060 = vpop.f32.mrb[0].mxu0
      %1061 = vmatprep.mubr.bf16.mxu0 0
      %1062 = vmatmul.mubr.bf16.gmra.mrb[0].mxu0 %v912
      %v1063 = vpop.f32.mrb[0].mxu0
      %v1064 = vadd.f32 0.0, %v1063
      %v1065 = vpop.f32.mrb[0].mxu0
      %v1066 = vpop.f32.mrb[0].mxu0
      %v1067 = vadd.f32 0.0, %v1066
      %v1068 = vpop.f32.mrb[0].mxu0
      %1069 = vmatprep.mubr.bf16.mxu0 0
      %1070 = vmatmul.mubr.bf16.gmra.mrb[0].mxu0 %v915
      %v1071 = vpop.f32.mrb[0].mxu0
      %v1072 = vadd.f32 0.0, %v1071
      %v1073 = vpop.f32.mrb[0].mxu0
      %v1074 = vpop.f32.mrb[0].mxu0
      %v1075 = vadd.f32 0.0, %v1074
      %v1076 = vpop.f32.mrb[0].mxu0
      %1077 = vdwg.mxu0
      %v1078 = vmax.f32 %v805, %v952
      %v1079 = vmax.f32 %v806, %v955
      %v1080 = vmax.f32 %v807, %v960
      %v1081 = vmax.f32 %v808, %v963
      %v1082 = vmax.f32 %v809, %v968
      %v1083 = vmax.f32 %v810, %v971
      %v1084 = vmax.f32 %v811, %v976
      %v1085 = vmax.f32 %v812, %v979
      %v1086 = vmax.f32 %v813, %v984
      %v1087 = vmax.f32 %v814, %v987
      %v1088 = vmax.f32 %v815, %v992
      %v1089 = vmax.f32 %v816, %v995
      %v1090 = vmax.f32 %v817, %v1000
      %v1091 = vmax.f32 %v818, %v1003
      %v1092 = vmax.f32 %v819, %v1008
      %v1093 = vmax.f32 %v820, %v1011
      %v1094 = vmax.f32 %v821, %v1016
      %v1095 = vmax.f32 %v822, %v1019
      %v1096 = vmax.f32 %v823, %v1024
      %v1097 = vmax.f32 %v824, %v1027
      %v1098 = vmax.f32 %v825, %v1032
      %v1099 = vmax.f32 %v826, %v1035
      %v1100 = vmax.f32 %v827, %v1040
      %v1101 = vmax.f32 %v828, %v1043
      %v1102 = vmax.f32 %v829, %v1048
      %v1103 = vmax.f32 %v830, %v1051
      %v1104 = vmax.f32 %v831, %v1056
      %v1105 = vmax.f32 %v832, %v1059
      %v1106 = vmax.f32 %v833, %v1064
      %v1107 = vmax.f32 %v834, %v1067
      %v1108 = vmax.f32 %v835, %v1072
      %v1109 = vmax.f32 %v836, %v1075
      %1110 = vrot.lane.b32.xlu0 %v326, 32
      %v1111 = vpop.permute.xlu0 %1110
      %1112 = vrot.lane.b32.xlu0 %v327, 32
      %v1113 = vpop.permute.xlu0 %1112
      %1114 = vrot.lane.b32.xlu0 %v328, 32
      %v1115 = vpop.permute.xlu0 %1114
      %1116 = vrot.lane.b32.xlu0 %v329, 32
      %v1117 = vpop.permute.xlu0 %1116
      %1118 = vrot.lane.b32.xlu0 %v330, 32
      %v1119 = vpop.permute.xlu0 %1118
      %1120 = vrot.lane.b32.xlu0 %v331, 32
      %v1121 = vpop.permute.xlu0 %1120
      %1122 = vrot.lane.b32.xlu0 %v332, 32
      %v1123 = vpop.permute.xlu0 %1122
      %1124 = vrot.lane.b32.xlu0 %v333, 32
      %v1125 = vpop.permute.xlu0 %1124
      %1126 = vrot.lane.b32.xlu0 %v334, 32
      %v1127 = vpop.permute.xlu0 %1126
      %1128 = vrot.lane.b32.xlu0 %v335, 32
      %v1129 = vpop.permute.xlu0 %1128
      %1130 = vrot.lane.b32.xlu0 %v336, 32
      %v1131 = vpop.permute.xlu0 %1130
      %1132 = vrot.lane.b32.xlu0 %v337, 32
      %v1133 = vpop.permute.xlu0 %1132
      %1134 = vrot.lane.b32.xlu0 %v338, 32
      %v1135 = vpop.permute.xlu0 %1134
      %1136 = vrot.lane.b32.xlu0 %v339, 32
      %v1137 = vpop.permute.xlu0 %1136
      %1138 = vrot.lane.b32.xlu0 %v340, 32
      %v1139 = vpop.permute.xlu0 %1138
      %1140 = vrot.lane.b32.xlu0 %v341, 32
      %v1141 = vpop.permute.xlu0 %1140
      %v1143 = vsel %vm354, %v1111, 0
      %v1146 = vsel %vm354, %v1113, 0
      %v1149 = vsel %vm354, %v1115, 0
      %v1152 = vsel %vm354, %v1117, 0
      %v1155 = vsel %vm354, %v1119, 0
      %v1158 = vsel %vm354, %v1121, 0
      %v1161 = vsel %vm354, %v1123, 0
      %v1164 = vsel %vm354, %v1125, 0
      %v1167 = vsel %vm354, %v1127, 0
      %v1170 = vsel %vm354, %v1129, 0
      %v1173 = vsel %vm354, %v1131, 0
      %v1176 = vsel %vm354, %v1133, 0
      %v1179 = vsel %vm354, %v1135, 0
      %v1182 = vsel %vm354, %v1137, 0
      %v1185 = vsel %vm354, %v1139, 0
      %v1188 = vsel %vm354, %v1141, 0
      %1190 = vmatprep.subr.bf16.mxu0 0
      %1191 = vmatpush1.bf16.msra.mxu0 %v350
      %1192 = vmatprep.subr.bf16.mxu0 0
      %1193 = vmatpush1.bf16.msra.mxu0 %v351
      %1194 = vmatprep.subr.bf16.mxu0 0
      %1195 = vmatpush1.bf16.msra.mxu0 0
      %1196 = vmatprep.subr.bf16.mxu0 0
      %1197 = vmatpush1.bf16.msra.mxu0 0
      %1198 = vmatprep.subr.bf16.mxu0 0
      %1199 = vmatpush1.bf16.msra.mxu0 0
      %1200 = vmatprep.subr.bf16.mxu0 0
      %1201 = vmatpush1.bf16.msra.mxu0 0
      %1202 = vmatprep.subr.bf16.mxu0 0
      %1203 = vmatpush1.bf16.msra.mxu0 0
      %1204 = vmatprep.subr.bf16.mxu0 0
      %1205 = vmatpush1.bf16.msra.mxu0 0
      %1206 = vmatprep.subr.bf16.mxu0 0
      %1207 = vmatpush1.bf16.msra.mxu0 0
      %1208 = vmatprep.subr.bf16.mxu0 0
      %1209 = vmatpush1.bf16.msra.mxu0 0
      %1210 = vmatprep.subr.bf16.mxu0 0
      %1211 = vmatpush1.bf16.msra.mxu0 0
      %1212 = vmatprep.subr.bf16.mxu0 0
      %1213 = vmatpush1.bf16.msra.mxu0 0
      %1214 = vmatprep.subr.bf16.mxu0 0
      %1215 = vmatpush1.bf16.msra.mxu0 0
      %1216 = vmatprep.subr.bf16.mxu0 0
      %1217 = vmatpush1.bf16.msra.mxu0 0
      %1218 = vmatprep.subr.bf16.mxu0 0
      %1219 = vmatpush1.bf16.msra.mxu0 0
      %1220 = vmatprep.subr.bf16.mxu0 0
      %1221 = vmatpush1.bf16.msra.mxu0 0
      %1222 = vmatprep.mubr.bf16.mxu0 0
      %1223 = vmatmul.mubr.bf16.gmra.mrb[0].mxu0 %v1143
      %v1224 = vpop.f32.mrb[0].mxu0
      %v1225 = vadd.f32 0.0, %v1224
      %v1226 = vpop.f32.mrb[0].mxu0
      %v1227 = vpop.f32.mrb[0].mxu0
      %v1228 = vadd.f32 0.0, %v1227
      %v1229 = vpop.f32.mrb[0].mxu0
      %1230 = vmatprep.mubr.bf16.mxu0 0
      %1231 = vmatmul.mubr.bf16.gmra.mrb[0].mxu0 %v1146
      %v1232 = vpop.f32.mrb[0].mxu0
      %v1233 = vadd.f32 0.0, %v1232
      %v1234 = vpop.f32.mrb[0].mxu0
      %v1235 = vpop.f32.mrb[0].mxu0
      %v1236 = vadd.f32 0.0, %v1235
      %v1237 = vpop.f32.mrb[0].mxu0
      %1238 = vmatprep.mubr.bf16.mxu0 0
      %1239 = vmatmul.mubr.bf16.gmra.mrb[0].mxu0 %v1149
      %v1240 = vpop.f32.mrb[0].mxu0
      %v1241 = vadd.f32 0.0, %v1240
      %v1242 = vpop.f32.mrb[0].mxu0
      %v1243 = vpop.f32.mrb[0].mxu0
      %v1244 = vadd.f32 0.0, %v1243
      %v1245 = vpop.f32.mrb[0].mxu0
      %1246 = vmatprep.mubr.bf16.mxu0 0
      %1247 = vmatmul.mubr.bf16.gmra.mrb[0].mxu0 %v1152
      %v1248 = vpop.f32.mrb[0].mxu0
      %v1249 = vadd.f32 0.0, %v1248
      %v1250 = vpop.f32.mrb[0].mxu0
      %v1251 = vpop.f32.mrb[0].mxu0
      %v1252 = vadd.f32 0.0, %v1251
      %v1253 = vpop.f32.mrb[0].mxu0
      %1254 = vmatprep.mubr.bf16.mxu0 0
      %1255 = vmatmul.mubr.bf16.gmra.mrb[0].mxu0 %v1155
      %v1256 = vpop.f32.mrb[0].mxu0
      %v1257 = vadd.f32 0.0, %v1256
      %v1258 = vpop.f32.mrb[0].mxu0
      %v1259 = vpop.f32.mrb[0].mxu0
      %v1260 = vadd.f32 0.0, %v1259
      %v1261 = vpop.f32.mrb[0].mxu0
      %1262 = vmatprep.mubr.bf16.mxu0 0
      %1263 = vmatmul.mubr.bf16.gmra.mrb[0].mxu0 %v1158
      %v1264 = vpop.f32.mrb[0].mxu0
      %v1265 = vadd.f32 0.0, %v1264
      %v1266 = vpop.f32.mrb[0].mxu0
      %v1267 = vpop.f32.mrb[0].mxu0
      %v1268 = vadd.f32 0.0, %v1267
      %v1269 = vpop.f32.mrb[0].mxu0
      %1270 = vmatprep.mubr.bf16.mxu0 0
      %1271 = vmatmul.mubr.bf16.gmra.mrb[0].mxu0 %v1161
      %v1272 = vpop.f32.mrb[0].mxu0
      %v1273 = vadd.f32 0.0, %v1272
      %v1274 = vpop.f32.mrb[0].mxu0
      %v1275 = vpop.f32.mrb[0].mxu0
      %v1276 = vadd.f32 0.0, %v1275
      %v1277 = vpop.f32.mrb[0].mxu0
      %1278 = vmatprep.mubr.bf16.mxu0 0
      %1279 = vmatmul.mubr.bf16.gmra.mrb[0].mxu0 %v1164
      %v1280 = vpop.f32.mrb[0].mxu0
      %v1281 = vadd.f32 0.0, %v1280
      %v1282 = vpop.f32.mrb[0].mxu0
      %v1283 = vpop.f32.mrb[0].mxu0
      %v1284 = vadd.f32 0.0, %v1283
      %v1285 = vpop.f32.mrb[0].mxu0
      %1286 = vmatprep.mubr.bf16.mxu0 0
      %1287 = vmatmul.mubr.bf16.gmra.mrb[0].mxu0 %v1167
      %v1288 = vpop.f32.mrb[0].mxu0
      %v1289 = vadd.f32 0.0, %v1288
      %v1290 = vpop.f32.mrb[0].mxu0
      %v1291 = vpop.f32.mrb[0].mxu0
      %v1292 = vadd.f32 0.0, %v1291
      %v1293 = vpop.f32.mrb[0].mxu0
      %1294 = vmatprep.mubr.bf16.mxu0 0
      %1295 = vmatmul.mubr.bf16.gmra.mrb[0].mxu0 %v1170
      %v1296 = vpop.f32.mrb[0].mxu0
      %v1297 = vadd.f32 0.0, %v1296
      %v1298 = vpop.f32.mrb[0].mxu0
      %v1299 = vpop.f32.mrb[0].mxu0
      %v1300 = vadd.f32 0.0, %v1299
      %v1301 = vpop.f32.mrb[0].mxu0
      %1302 = vmatprep.mubr.bf16.mxu0 0
      %1303 = vmatmul.mubr.bf16.gmra.mrb[0].mxu0 %v1173
      %v1304 = vpop.f32.mrb[0].mxu0
      %v1305 = vadd.f32 0.0, %v1304
      %v1306 = vpop.f32.mrb[0].mxu0
      %v1307 = vpop.f32.mrb[0].mxu0
      %v1308 = vadd.f32 0.0, %v1307
      %v1309 = vpop.f32.mrb[0].mxu0
      %1310 = vmatprep.mubr.bf16.mxu0 0
      %1311 = vmatmul.mubr.bf16.gmra.mrb[0].mxu0 %v1176
      %v1312 = vpop.f32.mrb[0].mxu0
      %v1313 = vadd.f32 0.0, %v1312
      %v1314 = vpop.f32.mrb[0].mxu0
      %v1315 = vpop.f32.mrb[0].mxu0
      %v1316 = vadd.f32 0.0, %v1315
      %v1317 = vpop.f32.mrb[0].mxu0
      %1318 = vmatprep.mubr.bf16.mxu0 0
      %1319 = vmatmul.mubr.bf16.gmra.mrb[0].mxu0 %v1179
      %v1320 = vpop.f32.mrb[0].mxu0
      %v1321 = vadd.f32 0.0, %v1320
      %v1322 = vpop.f32.mrb[0].mxu0
      %v1323 = vpop.f32.mrb[0].mxu0
      %v1324 = vadd.f32 0.0, %v1323
      %v1325 = vpop.f32.mrb[0].mxu0
      %1326 = vmatprep.mubr.bf16.mxu0 0
      %1327 = vmatmul.mubr.bf16.gmra.mrb[0].mxu0 %v1182
      %v1328 = vpop.f32.mrb[0].mxu0
      %v1329 = vadd.f32 0.0, %v1328
      %v1330 = vpop.f32.mrb[0].mxu0
      %v1331 = vpop.f32.mrb[0].mxu0
      %v1332 = vadd.f32 0.0, %v1331
      %v1333 = vpop.f32.mrb[0].mxu0
      %1334 = vmatprep.mubr.bf16.mxu0 0
      %1335 = vmatmul.mubr.bf16.gmra.mrb[0].mxu0 %v1185
      %v1336 = vpop.f32.mrb[0].mxu0
      %v1337 = vadd.f32 0.0, %v1336
      %v1338 = vpop.f32.mrb[0].mxu0
      %v1339 = vpop.f32.mrb[0].mxu0
      %v1340 = vadd.f32 0.0, %v1339
      %v1341 = vpop.f32.mrb[0].mxu0
      %1342 = vmatprep.mubr.bf16.mxu0 0
      %1343 = vmatmul.mubr.bf16.gmra.mrb[0].mxu0 %v1188
      %v1344 = vpop.f32.mrb[0].mxu0
      %v1345 = vadd.f32 0.0, %v1344
      %v1346 = vpop.f32.mrb[0].mxu0
      %v1347 = vpop.f32.mrb[0].mxu0
      %v1348 = vadd.f32 0.0, %v1347
      %v1349 = vpop.f32.mrb[0].mxu0
      %1350 = vdwg.mxu0
      %v1351 = vmax.f32 %v1078, %v1225
      %v1352 = vmax.f32 %v1079, %v1228
      %v1353 = vmax.f32 %v1080, %v1233
      %v1354 = vmax.f32 %v1081, %v1236
      %v1355 = vmax.f32 %v1082, %v1241
      %v1356 = vmax.f32 %v1083, %v1244
      %v1357 = vmax.f32 %v1084, %v1249
      %v1358 = vmax.f32 %v1085, %v1252
      %v1359 = vmax.f32 %v1086, %v1257
      %v1360 = vmax.f32 %v1087, %v1260
      %v1361 = vmax.f32 %v1088, %v1265
      %v1362 = vmax.f32 %v1089, %v1268
      %v1363 = vmax.f32 %v1090, %v1273
      %v1364 = vmax.f32 %v1091, %v1276
      %v1365 = vmax.f32 %v1092, %v1281
      %v1366 = vmax.f32 %v1093, %v1284
      %v1367 = vmax.f32 %v1094, %v1289
      %v1368 = vmax.f32 %v1095, %v1292
      %v1369 = vmax.f32 %v1096, %v1297
      %v1370 = vmax.f32 %v1097, %v1300
      %v1371 = vmax.f32 %v1098, %v1305
      %v1372 = vmax.f32 %v1099, %v1308
      %v1373 = vmax.f32 %v1100, %v1313
      %v1374 = vmax.f32 %v1101, %v1316
      %v1375 = vmax.f32 %v1102, %v1321
      %v1376 = vmax.f32 %v1103, %v1324
      %v1377 = vmax.f32 %v1104, %v1329
      %v1378 = vmax.f32 %v1105, %v1332
      %v1379 = vmax.f32 %v1106, %v1337
      %v1380 = vmax.f32 %v1107, %v1340
      %v1381 = vmax.f32 %v1108, %v1345
      %v1382 = vmax.f32 %v1109, %v1348
      %v1383 = vld [vmem:[%s2] sm:$0x1]
      %v1385 = vlaneseq
      %v1386 = vshrl.u32 %v1385, 7
      %v1387 = vsub.s32 0, %v1386
      %v1388 = vrot.slane %v1383, %v1387
      %v1390 = vadd.f32 %v1351, %v1388
      %v1391 = vadd.f32 %v1352, %v1388
      %v1392 = vadd.f32 %v1353, %v1388
      %v1393 = vadd.f32 %v1354, %v1388
      %v1394 = vadd.f32 %v1355, %v1388
      %v1395 = vadd.f32 %v1356, %v1388
      %v1396 = vadd.f32 %v1357, %v1388
      %v1397 = vadd.f32 %v1358, %v1388
      %v1398 = vadd.f32 %v1359, %v1388
      %v1399 = vadd.f32 %v1360, %v1388
      %v1400 = vadd.f32 %v1361, %v1388
      %v1401 = vadd.f32 %v1362, %v1388
      %v1402 = vadd.f32 %v1363, %v1388
      %v1403 = vadd.f32 %v1364, %v1388
      %v1404 = vadd.f32 %v1365, %v1388
      %v1405 = vadd.f32 %v1366, %v1388
      %v1406 = vadd.f32 %v1367, %v1388
      %v1407 = vadd.f32 %v1368, %v1388
      %v1408 = vadd.f32 %v1369, %v1388
      %v1409 = vadd.f32 %v1370, %v1388
      %v1410 = vadd.f32 %v1371, %v1388
      %v1411 = vadd.f32 %v1372, %v1388
      %v1412 = vadd.f32 %v1373, %v1388
      %v1413 = vadd.f32 %v1374, %v1388
      %v1414 = vadd.f32 %v1375, %v1388
      %v1415 = vadd.f32 %v1376, %v1388
      %v1416 = vadd.f32 %v1377, %v1388
      %v1417 = vadd.f32 %v1378, %v1388
      %v1418 = vadd.f32 %v1379, %v1388
      %v1419 = vadd.f32 %v1380, %v1388
      %v1420 = vadd.f32 %v1381, %v1388
      %v1421 = vadd.f32 %v1382, %v1388
      %v1422 = vmax.f32 %v1390, 0.0
      %v1423 = vmax.f32 %v1391, 0.0
      %v1424 = vmax.f32 %v1392, 0.0
      %v1425 = vmax.f32 %v1393, 0.0
      %v1426 = vmax.f32 %v1394, 0.0
      %v1427 = vmax.f32 %v1395, 0.0
      %v1428 = vmax.f32 %v1396, 0.0
      %v1429 = vmax.f32 %v1397, 0.0
      %v1430 = vmax.f32 %v1398, 0.0
      %v1431 = vmax.f32 %v1399, 0.0
      %v1432 = vmax.f32 %v1400, 0.0
      %v1433 = vmax.f32 %v1401, 0.0
      %v1434 = vmax.f32 %v1402, 0.0
      %v1435 = vmax.f32 %v1403, 0.0
      %v1436 = vmax.f32 %v1404, 0.0
      %v1437 = vmax.f32 %v1405, 0.0
      %v1438 = vmax.f32 %v1406, 0.0
      %v1439 = vmax.f32 %v1407, 0.0
      %v1440 = vmax.f32 %v1408, 0.0
      %v1441 = vmax.f32 %v1409, 0.0
      %v1442 = vmax.f32 %v1410, 0.0
      %v1443 = vmax.f32 %v1411, 0.0
      %v1444 = vmax.f32 %v1412, 0.0
      %v1445 = vmax.f32 %v1413, 0.0
      %v1446 = vmax.f32 %v1414, 0.0
      %v1447 = vmax.f32 %v1415, 0.0
      %v1448 = vmax.f32 %v1416, 0.0
      %v1449 = vmax.f32 %v1417, 0.0
      %v1450 = vmax.f32 %v1418, 0.0
      %v1451 = vmax.f32 %v1419, 0.0
      %v1452 = vmax.f32 %v1420, 0.0
      %v1453 = vmax.f32 %v1421, 0.0
      %v1454 = vpack.c.bf16 %v1423, %v1422
      %v1455 = vpack.c.bf16 %v1425, %v1424
      %v1456 = vpack.c.bf16 %v1427, %v1426
      %v1457 = vpack.c.bf16 %v1429, %v1428
      %v1458 = vpack.c.bf16 %v1431, %v1430
      %v1459 = vpack.c.bf16 %v1433, %v1432
      %v1460 = vpack.c.bf16 %v1435, %v1434
      %v1461 = vpack.c.bf16 %v1437, %v1436
      %v1462 = vpack.c.bf16 %v1439, %v1438
      %v1463 = vpack.c.bf16 %v1441, %v1440
      %v1464 = vpack.c.bf16 %v1443, %v1442
      %v1465 = vpack.c.bf16 %v1445, %v1444
      %v1466 = vpack.c.bf16 %v1447, %v1446
      %v1467 = vpack.c.bf16 %v1449, %v1448
      %v1468 = vpack.c.bf16 %v1451, %v1450
      %v1469 = vpack.c.bf16 %v1453, %v1452
      %1470 = vst [vmem:[#allocation2] sm:$0xff] 0
      %1471 = vst [vmem:[#allocation2 + $0x8] sm:$0xff] 0
      %1472 = vst.msk [vmem:[#allocation2 + $0x10] sm:$0xff] %vm354, 0
      %1473 = vst [vmem:[#allocation2 + $0x18] sm:$0xff] 0
      %1474 = vst [vmem:[#allocation2 + $0x20] sm:$0xff] 0
      %1475 = vst.msk [vmem:[#allocation2 + $0x28] sm:$0xff] %vm354, 0
      %1476 = vst [vmem:[#allocation2 + $0x30] sm:$0xff] 0
      %1477 = vst [vmem:[#allocation2 + $0x38] sm:$0xff] 0
      %1478 = vst.msk [vmem:[#allocation2 + $0x40] sm:$0xff] %vm354, 0
      %1479 = vst [vmem:[#allocation2 + $0x48] sm:$0xff] 0
      %1480 = vst [vmem:[#allocation2 + $0x50] sm:$0xff] 0
      %1481 = vst.msk [vmem:[#allocation2 + $0x58] sm:$0xff] %vm354, 0
      %1482 = vst [vmem:[#allocation2 + $0x60] sm:$0xff] 0
      %1483 = vst [vmem:[#allocation2 + $0x68] sm:$0xff] 0
      %1484 = vst.msk [vmem:[#allocation2 + $0x70] sm:$0xff] %vm354, 0
      %1485 = vst [vmem:[#allocation2 + $0x78] sm:$0xff] 0
      %1486 = vst [vmem:[#allocation2 + $0x80] sm:$0xff] 0
      %1487 = vst.msk [vmem:[#allocation2 + $0x88] sm:$0xff] %vm354, 0
      %1488 = vst [vmem:[#allocation2 + $0x90] sm:$0xff] 0
      %1489 = vst [vmem:[#allocation2 + $0x98] sm:$0xff] 0
      %1490 = vst.msk [vmem:[#allocation2 + $0xa0] sm:$0xff] %vm354, 0
      %1491 = vst [vmem:[#allocation2 + $0xa8] sm:$0xff] 0
      %1492 = vst [vmem:[#allocation2 + $0xb0] sm:$0xff] 0
      %1493 = vst.msk [vmem:[#allocation2 + $0xb8] sm:$0xff] %vm354, 0
      %1494 = vst [vmem:[#allocation2 + $0xc0] sm:$0xff] 0
      %1495 = vst [vmem:[#allocation2 + $0xc8] sm:$0xff] 0
      %1496 = vst.msk [vmem:[#allocation2 + $0xd0] sm:$0xff] %vm354, 0
      %1497 = vst [vmem:[#allocation2 + $0xd8] sm:$0xff] 0
      %1498 = vst [vmem:[#allocation2 + $0xe0] sm:$0xff] 0
      %1499 = vst.msk [vmem:[#allocation2 + $0xe8] sm:$0xff] %vm354, 0
      %1500 = vst [vmem:[#allocation2 + $0xf0] sm:$0xff] 0
      %1501 = vst [vmem:[#allocation2 + $0xf8] sm:$0xff] 0
      %1502 = vst.msk [vmem:[#allocation2 + $0x100] sm:$0xff] %vm354, 0
      %1503 = vst [vmem:[#allocation2 + $0x108] sm:$0xff] 0
      %1504 = vst [vmem:[#allocation2 + $0x110] sm:$0xff] 0
      %1505 = vst.msk [vmem:[#allocation2 + $0x118] sm:$0xff] %vm354, 0
      %1506 = vst [vmem:[#allocation2 + $0x120] sm:$0xff] 0
      %1507 = vst [vmem:[#allocation2 + $0x128] sm:$0xff] 0
      %1508 = vst.msk [vmem:[#allocation2 + $0x130] sm:$0xff] %vm354, 0
      %1509 = vst [vmem:[#allocation2 + $0x138] sm:$0xff] 0
      %1510 = vst [vmem:[#allocation2 + $0x140] sm:$0xff] 0
      %1511 = vst.msk [vmem:[#allocation2 + $0x148] sm:$0xff] %vm354, 0
      %1512 = vst [vmem:[#allocation2 + $0x150] sm:$0xff] 0
      %1513 = vst [vmem:[#allocation2 + $0x158] sm:$0xff] 0
      %1514 = vst.msk [vmem:[#allocation2 + $0x160] sm:$0xff] %vm354, 0
      %1515 = vst [vmem:[#allocation2 + $0x168] sm:$0xff] 0
      %1516 = vst [vmem:[#allocation2 + $0x170] sm:$0xff] 0
      %1517 = vst.msk [vmem:[#allocation2 + $0x178] sm:$0xff] %vm354, 0
      %v1519 = vshrl.u32 %v1454, 16
      %v1521 = vrot.slane %v1519, 7
      %v1522 = vshll.u32 %v1454, 16
      %v1524 = vor.u32 %v1521, %v1522
      %v1526 = vshrl.u32 %v1455, 16
      %v1528 = vrot.slane %v1526, 7
      %v1529 = vshll.u32 %v1455, 16
      %v1531 = vor.u32 %v1528, %v1529
      %v1533 = vshrl.u32 %v1456, 16
      %v1535 = vrot.slane %v1533, 7
      %v1536 = vshll.u32 %v1456, 16
      %v1538 = vor.u32 %v1535, %v1536
      %v1540 = vshrl.u32 %v1457, 16
      %v1542 = vrot.slane %v1540, 7
      %v1543 = vshll.u32 %v1457, 16
      %v1545 = vor.u32 %v1542, %v1543
      %v1547 = vshrl.u32 %v1458, 16
      %v1549 = vrot.slane %v1547, 7
      %v1550 = vshll.u32 %v1458, 16
      %v1552 = vor.u32 %v1549, %v1550
      %v1554 = vshrl.u32 %v1459, 16
      %v1556 = vrot.slane %v1554, 7
      %v1557 = vshll.u32 %v1459, 16
      %v1559 = vor.u32 %v1556, %v1557
      %v1561 = vshrl.u32 %v1460, 16
      %v1563 = vrot.slane %v1561, 7
      %v1564 = vshll.u32 %v1460, 16
      %v1566 = vor.u32 %v1563, %v1564
      %v1568 = vshrl.u32 %v1461, 16
      %v1570 = vrot.slane %v1568, 7
      %v1571 = vshll.u32 %v1461, 16
      %v1573 = vor.u32 %v1570, %v1571
      %v1575 = vshrl.u32 %v1462, 16
      %v1577 = vrot.slane %v1575, 7
      %v1578 = vshll.u32 %v1462, 16
      %v1580 = vor.u32 %v1577, %v1578
      %v1582 = vshrl.u32 %v1463, 16
      %v1584 = vrot.slane %v1582, 7
      %v1585 = vshll.u32 %v1463, 16
      %v1587 = vor.u32 %v1584, %v1585
      %v1589 = vshrl.u32 %v1464, 16
      %v1591 = vrot.slane %v1589, 7
      %v1592 = vshll.u32 %v1464, 16
      %v1594 = vor.u32 %v1591, %v1592
      %v1596 = vshrl.u32 %v1465, 16
      %v1598 = vrot.slane %v1596, 7
      %v1599 = vshll.u32 %v1465, 16
      %v1601 = vor.u32 %v1598, %v1599
      %v1603 = vshrl.u32 %v1466, 16
      %v1605 = vrot.slane %v1603, 7
      %v1606 = vshll.u32 %v1466, 16
      %v1608 = vor.u32 %v1605, %v1606
      %v1610 = vshrl.u32 %v1467, 16
      %v1612 = vrot.slane %v1610, 7
      %v1613 = vshll.u32 %v1467, 16
      %v1615 = vor.u32 %v1612, %v1613
      %v1617 = vshrl.u32 %v1468, 16
      %v1619 = vrot.slane %v1617, 7
      %v1620 = vshll.u32 %v1468, 16
      %v1622 = vor.u32 %v1619, %v1620
      %s1638 = scalar_lea.vmem [#allocation2], 24
      %vm1639 = vcmask 261120
      %vm1640 = vsmask.f32 7938
      %vm1641 = vmand %vm1639, %vm1640
      %v1642 = vld [vmem:[%s1638] sm:$0xff]
      %v1643 = vsel %vm1641, %v1524, %v1642
      %1644 = vst [vmem:[%s1638] sm:$0xff] %v1643
      %v1645 = vld [vmem:[%s1638 + $0x18] sm:$0xff]
      %v1646 = vsel %vm1641, %v1531, %v1645
      %1647 = vst [vmem:[%s1638 + $0x18] sm:$0xff] %v1646
      %v1648 = vld [vmem:[%s1638 + $0x30] sm:$0xff]
      %v1649 = vsel %vm1641, %v1538, %v1648
      %1650 = vst [vmem:[%s1638 + $0x30] sm:$0xff] %v1649
      %v1651 = vld [vmem:[%s1638 + $0x48] sm:$0xff]
      %v1652 = vsel %vm1641, %v1545, %v1651
      %1653 = vst [vmem:[%s1638 + $0x48] sm:$0xff] %v1652
      %v1654 = vld [vmem:[%s1638 + $0x60] sm:$0xff]
      %v1655 = vsel %vm1641, %v1552, %v1654
      %1656 = vst [vmem:[%s1638 + $0x60] sm:$0xff] %v1655
      %v1657 = vld [vmem:[%s1638 + $0x78] sm:$0xff]
      %v1658 = vsel %vm1641, %v1559, %v1657
      %1659 = vst [vmem:[%s1638 + $0x78] sm:$0xff] %v1658
      %v1660 = vld [vmem:[%s1638 + $0x90] sm:$0xff]
      %v1661 = vsel %vm1641, %v1566, %v1660
      %1662 = vst [vmem:[%s1638 + $0x90] sm:$0xff] %v1661
      %v1663 = vld [vmem:[%s1638 + $0xa8] sm:$0xff]
      %v1664 = vsel %vm1641, %v1573, %v1663
      %1665 = vst [vmem:[%s1638 + $0xa8] sm:$0xff] %v1664
      %v1666 = vld [vmem:[%s1638 + $0xc0] sm:$0xff]
      %v1667 = vsel %vm1641, %v1580, %v1666
      %1668 = vst [vmem:[%s1638 + $0xc0] sm:$0xff] %v1667
      %v1669 = vld [vmem:[%s1638 + $0xd8] sm:$0xff]
      %v1670 = vsel %vm1641, %v1587, %v1669
      %1671 = vst [vmem:[%s1638 + $0xd8] sm:$0xff] %v1670
      %v1672 = vld [vmem:[%s1638 + $0xf0] sm:$0xff]
      %v1673 = vsel %vm1641, %v1594, %v1672
      %1674 = vst [vmem:[%s1638 + $0xf0] sm:$0xff] %v1673
      %v1675 = vld [vmem:[%s1638 + $0x108] sm:$0xff]
      %v1676 = vsel %vm1641, %v1601, %v1675
      %1677 = vst [vmem:[%s1638 + $0x108] sm:$0xff] %v1676
      %v1678 = vld [vmem:[%s1638 + $0x120] sm:$0xff]
      %v1679 = vsel %vm1641, %v1608, %v1678
      %1680 = vst [vmem:[%s1638 + $0x120] sm:$0xff] %v1679
      %v1681 = vld [vmem:[%s1638 + $0x138] sm:$0xff]
      %v1682 = vsel %vm1641, %v1615, %v1681
      %1683 = vst [vmem:[%s1638 + $0x138] sm:$0xff] %v1682
      %v1684 = vld [vmem:[%s1638 + $0x150] sm:$0xff]
      %v1685 = vsel %vm1641, %v1622, %v1684
      %1686 = vst [vmem:[%s1638 + $0x150] sm:$0xff] %v1685
      %1702 = vrot.lane.b32.xlu0 %v1454, 32
      %v1703 = vpop.permute.xlu0 %1702
      %1704 = vrot.lane.b32.xlu0 %v1455, 32
      %v1705 = vpop.permute.xlu0 %1704
      %1706 = vrot.lane.b32.xlu0 %v1456, 32
      %v1707 = vpop.permute.xlu0 %1706
      %1708 = vrot.lane.b32.xlu0 %v1457, 32
      %v1709 = vpop.permute.xlu0 %1708
      %1710 = vrot.lane.b32.xlu0 %v1458, 32
      %v1711 = vpop.permute.xlu0 %1710
      %1712 = vrot.lane.b32.xlu0 %v1459, 32
      %v1713 = vpop.permute.xlu0 %1712
      %1714 = vrot.lane.b32.xlu0 %v1460, 32
      %v1715 = vpop.permute.xlu0 %1714
      %1716 = vrot.lane.b32.xlu0 %v1461, 32
      %v1717 = vpop.permute.xlu0 %1716
      %1718 = vrot.lane.b32.xlu0 %v1462, 32
      %v1719 = vpop.permute.xlu0 %1718
      %1720 = vrot.lane.b32.xlu0 %v1463, 32
      %v1721 = vpop.permute.xlu0 %1720
      %1722 = vrot.lane.b32.xlu0 %v1464, 32
      %v1723 = vpop.permute.xlu0 %1722
      %1724 = vrot.lane.b32.xlu0 %v1465, 32
      %v1725 = vpop.permute.xlu0 %1724
      %1726 = vrot.lane.b32.xlu0 %v1466, 32
      %v1727 = vpop.permute.xlu0 %1726
      %1728 = vrot.lane.b32.xlu0 %v1467, 32
      %v1729 = vpop.permute.xlu0 %1728
      %1730 = vrot.lane.b32.xlu0 %v1468, 32
      %v1731 = vpop.permute.xlu0 %1730
      %vm1747 = vcmask 523520
      %1748 = vst.msk [vmem:[%s1638] sm:$0xff] %vm1747, %v1703
      %1749 = vst.msk [vmem:[%s1638 + $0x18] sm:$0xff] %vm1747, %v1705
      %1750 = vst.msk [vmem:[%s1638 + $0x30] sm:$0xff] %vm1747, %v1707
      %1751 = vst.msk [vmem:[%s1638 + $0x48] sm:$0xff] %vm1747, %v1709
      %1752 = vst.msk [vmem:[%s1638 + $0x60] sm:$0xff] %vm1747, %v1711
      %1753 = vst.msk [vmem:[%s1638 + $0x78] sm:$0xff] %vm1747, %v1713
      %1754 = vst.msk [vmem:[%s1638 + $0x90] sm:$0xff] %vm1747, %v1715
      %1755 = vst.msk [vmem:[%s1638 + $0xa8] sm:$0xff] %vm1747, %v1717
      %1756 = vst.msk [vmem:[%s1638 + $0xc0] sm:$0xff] %vm1747, %v1719
      %1757 = vst.msk [vmem:[%s1638 + $0xd8] sm:$0xff] %vm1747, %v1721
      %1758 = vst.msk [vmem:[%s1638 + $0xf0] sm:$0xff] %vm1747, %v1723
      %1759 = vst.msk [vmem:[%s1638 + $0x108] sm:$0xff] %vm1747, %v1725
      %1760 = vst.msk [vmem:[%s1638 + $0x120] sm:$0xff] %vm1747, %v1727
      %1761 = vst.msk [vmem:[%s1638 + $0x138] sm:$0xff] %vm1747, %v1729
      %1762 = vst.msk [vmem:[%s1638 + $0x150] sm:$0xff] %vm1747, %v1731
      %v1763 = vrot.slane %v1522, 1
      %v1764 = vor.u32 %v1519, %v1763
      %v1765 = vrot.slane %v1529, 1
      %v1766 = vor.u32 %v1526, %v1765
      %v1767 = vrot.slane %v1536, 1
      %v1768 = vor.u32 %v1533, %v1767
      %v1769 = vrot.slane %v1543, 1
      %v1770 = vor.u32 %v1540, %v1769
      %v1771 = vrot.slane %v1550, 1
      %v1772 = vor.u32 %v1547, %v1771
      %v1773 = vrot.slane %v1557, 1
      %v1774 = vor.u32 %v1554, %v1773
      %v1775 = vrot.slane %v1564, 1
      %v1776 = vor.u32 %v1561, %v1775
      %v1777 = vrot.slane %v1571, 1
      %v1778 = vor.u32 %v1568, %v1777
      %v1779 = vrot.slane %v1578, 1
      %v1780 = vor.u32 %v1575, %v1779
      %v1781 = vrot.slane %v1585, 1
      %v1782 = vor.u32 %v1582, %v1781
      %v1783 = vrot.slane %v1592, 1
      %v1784 = vor.u32 %v1589, %v1783
      %v1785 = vrot.slane %v1599, 1
      %v1786 = vor.u32 %v1596, %v1785
      %v1787 = vrot.slane %v1606, 1
      %v1788 = vor.u32 %v1603, %v1787
      %v1789 = vrot.slane %v1613, 1
      %v1790 = vor.u32 %v1610, %v1789
      %v1791 = vrot.slane %v1620, 1
      %v1792 = vor.u32 %v1617, %v1791
      %1793 = vrot.lane.b32.xlu0 %v1764, 64
      %v1794 = vpop.permute.xlu0 %1793
      %1795 = vrot.lane.b32.xlu0 %v1766, 64
      %v1796 = vpop.permute.xlu0 %1795
      %1797 = vrot.lane.b32.xlu0 %v1768, 64
      %v1798 = vpop.permute.xlu0 %1797
      %1799 = vrot.lane.b32.xlu0 %v1770, 64
      %v1800 = vpop.permute.xlu0 %1799
      %1801 = vrot.lane.b32.xlu0 %v1772, 64
      %v1802 = vpop.permute.xlu0 %1801
      %1803 = vrot.lane.b32.xlu0 %v1774, 64
      %v1804 = vpop.permute.xlu0 %1803
      %1805 = vrot.lane.b32.xlu0 %v1776, 64
      %v1806 = vpop.permute.xlu0 %1805
      %1807 = vrot.lane.b32.xlu0 %v1778, 64
      %v1808 = vpop.permute.xlu0 %1807
      %1809 = vrot.lane.b32.xlu0 %v1780, 64
      %v1810 = vpop.permute.xlu0 %1809
      %1811 = vrot.lane.b32.xlu0 %v1782, 64
      %v1812 = vpop.permute.xlu0 %1811
      %1813 = vrot.lane.b32.xlu0 %v1784, 64
      %v1814 = vpop.permute.xlu0 %1813
      %1815 = vrot.lane.b32.xlu0 %v1786, 64
      %v1816 = vpop.permute.xlu0 %1815
      %1817 = vrot.lane.b32.xlu0 %v1788, 64
      %v1818 = vpop.permute.xlu0 %1817
      %1819 = vrot.lane.b32.xlu0 %v1790, 64
      %v1820 = vpop.permute.xlu0 %1819
      %1821 = vrot.lane.b32.xlu0 %v1792, 64
      %v1822 = vpop.permute.xlu0 %1821
      %vm1838 = vcmask 785920
      %vm1839 = vsmask.f32 7424
      %vm1840 = vmand %vm1838, %vm1839
      %v1841 = vld [vmem:[%s1638] sm:$0xff]
      %v1842 = vsel %vm1840, %v1794, %v1841
      %1843 = vst [vmem:[%s1638] sm:$0xff] %v1842
      %v1844 = vld [vmem:[%s1638 + $0x18] sm:$0xff]
      %v1845 = vsel %vm1840, %v1796, %v1844
      %1846 = vst [vmem:[%s1638 + $0x18] sm:$0xff] %v1845
      %v1847 = vld [vmem:[%s1638 + $0x30] sm:$0xff]
      %v1848 = vsel %vm1840, %v1798, %v1847
      %1849 = vst [vmem:[%s1638 + $0x30] sm:$0xff] %v1848
      %v1850 = vld [vmem:[%s1638 + $0x48] sm:$0xff]
      %v1851 = vsel %vm1840, %v1800, %v1850
      %1852 = vst [vmem:[%s1638 + $0x48] sm:$0xff] %v1851
      %v1853 = vld [vmem:[%s1638 + $0x60] sm:$0xff]
      %v1854 = vsel %vm1840, %v1802, %v1853
      %1855 = vst [vmem:[%s1638 + $0x60] sm:$0xff] %v1854
      %v1856 = vld [vmem:[%s1638 + $0x78] sm:$0xff]
      %v1857 = vsel %vm1840, %v1804, %v1856
      %1858 = vst [vmem:[%s1638 + $0x78] sm:$0xff] %v1857
      %v1859 = vld [vmem:[%s1638 + $0x90] sm:$0xff]
      %v1860 = vsel %vm1840, %v1806, %v1859
      %1861 = vst [vmem:[%s1638 + $0x90] sm:$0xff] %v1860
      %v1862 = vld [vmem:[%s1638 + $0xa8] sm:$0xff]
      %v1863 = vsel %vm1840, %v1808, %v1862
      %1864 = vst [vmem:[%s1638 + $0xa8] sm:$0xff] %v1863
      %v1865 = vld [vmem:[%s1638 + $0xc0] sm:$0xff]
      %v1866 = vsel %vm1840, %v1810, %v1865
      %1867 = vst [vmem:[%s1638 + $0xc0] sm:$0xff] %v1866
      %v1868 = vld [vmem:[%s1638 + $0xd8] sm:$0xff]
      %v1869 = vsel %vm1840, %v1812, %v1868
      %1870 = vst [vmem:[%s1638 + $0xd8] sm:$0xff] %v1869
      %v1871 = vld [vmem:[%s1638 + $0xf0] sm:$0xff]
      %v1872 = vsel %vm1840, %v1814, %v1871
      %1873 = vst [vmem:[%s1638 + $0xf0] sm:$0xff] %v1872
      %v1874 = vld [vmem:[%s1638 + $0x108] sm:$0xff]
      %v1875 = vsel %vm1840, %v1816, %v1874
      %1876 = vst [vmem:[%s1638 + $0x108] sm:$0xff] %v1875
      %v1877 = vld [vmem:[%s1638 + $0x120] sm:$0xff]
      %v1878 = vsel %vm1840, %v1818, %v1877
      %1879 = vst [vmem:[%s1638 + $0x120] sm:$0xff] %v1878
      %v1880 = vld [vmem:[%s1638 + $0x138] sm:$0xff]
      %v1881 = vsel %vm1840, %v1820, %v1880
      %1882 = vst [vmem:[%s1638 + $0x138] sm:$0xff] %v1881
      %v1883 = vld [vmem:[%s1638 + $0x150] sm:$0xff]
      %v1884 = vsel %vm1840, %v1822, %v1883
      %1885 = vst [vmem:[%s1638 + $0x150] sm:$0xff] %v1884
      %v1887 = vshrl.u32 %v1469, 16
      %v1889 = vrot.slane %v1887, 7
      %v1890 = vshll.u32 %v1469, 16
      %v1892 = vor.u32 %v1889, %v1890
      %1893 = vrot.lane.b32.xlu0 %v1524, 96
      %v1894 = vpop.permute.xlu0 %1893
      %1895 = vrot.lane.b32.xlu0 %v1531, 96
      %v1896 = vpop.permute.xlu0 %1895
      %1897 = vrot.lane.b32.xlu0 %v1538, 96
      %v1898 = vpop.permute.xlu0 %1897
      %1899 = vrot.lane.b32.xlu0 %v1545, 96
      %v1900 = vpop.permute.xlu0 %1899
      %1901 = vrot.lane.b32.xlu0 %v1552, 96
      %v1902 = vpop.permute.xlu0 %1901
      %1903 = vrot.lane.b32.xlu0 %v1559, 96
      %v1904 = vpop.permute.xlu0 %1903
      %1905 = vrot.lane.b32.xlu0 %v1566, 96
      %v1906 = vpop.permute.xlu0 %1905
      %1907 = vrot.lane.b32.xlu0 %v1573, 96
      %v1908 = vpop.permute.xlu0 %1907
      %1909 = vrot.lane.b32.xlu0 %v1580, 96
      %v1910 = vpop.permute.xlu0 %1909
      %1911 = vrot.lane.b32.xlu0 %v1587, 96
      %v1912 = vpop.permute.xlu0 %1911
      %1913 = vrot.lane.b32.xlu0 %v1594, 96
      %v1914 = vpop.permute.xlu0 %1913
      %1915 = vrot.lane.b32.xlu0 %v1601, 96
      %v1916 = vpop.permute.xlu0 %1915
      %1917 = vrot.lane.b32.xlu0 %v1608, 96
      %v1918 = vpop.permute.xlu0 %1917
      %1919 = vrot.lane.b32.xlu0 %v1615, 96
      %v1920 = vpop.permute.xlu0 %1919
      %1921 = vrot.lane.b32.xlu0 %v1622, 96
      %v1922 = vpop.permute.xlu0 %1921
      %1923 = vrot.lane.b32.xlu0 %v1892, 96
      %v1924 = vpop.permute.xlu0 %1923
      %vm1941 = vcmask 1048320
      %vm1942 = vmand %vm1941, %vm1640
      %v1943 = vld [vmem:[#allocation2] sm:$0xff]
      %v1944 = vsel %vm1942, %v1894, %v1943
      %1945 = vst [vmem:[#allocation2] sm:$0xff] %v1944
      %v1946 = vld [vmem:[#allocation2 + $0x18] sm:$0xff]
      %v1947 = vsel %vm1942, %v1896, %v1946
      %1948 = vst [vmem:[#allocation2 + $0x18] sm:$0xff] %v1947
      %v1949 = vld [vmem:[#allocation2 + $0x30] sm:$0xff]
      %v1950 = vsel %vm1942, %v1898, %v1949
      %1951 = vst [vmem:[#allocation2 + $0x30] sm:$0xff] %v1950
      %v1952 = vld [vmem:[#allocation2 + $0x48] sm:$0xff]
      %v1953 = vsel %vm1942, %v1900, %v1952
      %1954 = vst [vmem:[#allocation2 + $0x48] sm:$0xff] %v1953
      %v1955 = vld [vmem:[#allocation2 + $0x60] sm:$0xff]
      %v1956 = vsel %vm1942, %v1902, %v1955
      %1957 = vst [vmem:[#allocation2 + $0x60] sm:$0xff] %v1956
      %v1958 = vld [vmem:[#allocation2 + $0x78] sm:$0xff]
      %v1959 = vsel %vm1942, %v1904, %v1958
      %1960 = vst [vmem:[#allocation2 + $0x78] sm:$0xff] %v1959
      %v1961 = vld [vmem:[#allocation2 + $0x90] sm:$0xff]
      %v1962 = vsel %vm1942, %v1906, %v1961
      %1963 = vst [vmem:[#allocation2 + $0x90] sm:$0xff] %v1962
      %v1964 = vld [vmem:[#allocation2 + $0xa8] sm:$0xff]
      %v1965 = vsel %vm1942, %v1908, %v1964
      %1966 = vst [vmem:[#allocation2 + $0xa8] sm:$0xff] %v1965
      %v1967 = vld [vmem:[#allocation2 + $0xc0] sm:$0xff]
      %v1968 = vsel %vm1942, %v1910, %v1967
      %1969 = vst [vmem:[#allocation2 + $0xc0] sm:$0xff] %v1968
      %v1970 = vld [vmem:[#allocation2 + $0xd8] sm:$0xff]
      %v1971 = vsel %vm1942, %v1912, %v1970
      %1972 = vst [vmem:[#allocation2 + $0xd8] sm:$0xff] %v1971
      %v1973 = vld [vmem:[#allocation2 + $0xf0] sm:$0xff]
      %v1974 = vsel %vm1942, %v1914, %v1973
      %1975 = vst [vmem:[#allocation2 + $0xf0] sm:$0xff] %v1974
      %v1976 = vld [vmem:[#allocation2 + $0x108] sm:$0xff]
      %v1977 = vsel %vm1942, %v1916, %v1976
      %1978 = vst [vmem:[#allocation2 + $0x108] sm:$0xff] %v1977
      %v1979 = vld [vmem:[#allocation2 + $0x120] sm:$0xff]
      %v1980 = vsel %vm1942, %v1918, %v1979
      %1981 = vst [vmem:[#allocation2 + $0x120] sm:$0xff] %v1980
      %v1982 = vld [vmem:[#allocation2 + $0x138] sm:$0xff]
      %v1983 = vsel %vm1942, %v1920, %v1982
      %1984 = vst [vmem:[#allocation2 + $0x138] sm:$0xff] %v1983
      %v1985 = vld [vmem:[#allocation2 + $0x150] sm:$0xff]
      %v1986 = vsel %vm1942, %v1922, %v1985
      %1987 = vst [vmem:[#allocation2 + $0x150] sm:$0xff] %v1986
      %v1988 = vld [vmem:[#allocation2 + $0x168] sm:$0xff]
      %v1989 = vsel %vm1942, %v1924, %v1988
      %1990 = vst [vmem:[#allocation2 + $0x168] sm:$0xff] %v1989
      %1991 = vst.msk [vmem:[#allocation2 + $0x8] sm:$0xff] %vm354, %v1454
      %1992 = vst.msk [vmem:[#allocation2 + $0x20] sm:$0xff] %vm354, %v1455
      %1993 = vst.msk [vmem:[#allocation2 + $0x38] sm:$0xff] %vm354, %v1456
      %1994 = vst.msk [vmem:[#allocation2 + $0x50] sm:$0xff] %vm354, %v1457
      %1995 = vst.msk [vmem:[#allocation2 + $0x68] sm:$0xff] %vm354, %v1458
      %1996 = vst.msk [vmem:[#allocation2 + $0x80] sm:$0xff] %vm354, %v1459
      %1997 = vst.msk [vmem:[#allocation2 + $0x98] sm:$0xff] %vm354, %v1460
      %1998 = vst.msk [vmem:[#allocation2 + $0xb0] sm:$0xff] %vm354, %v1461
      %1999 = vst.msk [vmem:[#allocation2 + $0xc8] sm:$0xff] %vm354, %v1462
      %2000 = vst.msk [vmem:[#allocation2 + $0xe0] sm:$0xff] %vm354, %v1463
      %2001 = vst.msk [vmem:[#allocation2 + $0xf8] sm:$0xff] %vm354, %v1464
      %2002 = vst.msk [vmem:[#allocation2 + $0x110] sm:$0xff] %vm354, %v1465
      %2003 = vst.msk [vmem:[#allocation2 + $0x128] sm:$0xff] %vm354, %v1466
      %2004 = vst.msk [vmem:[#allocation2 + $0x140] sm:$0xff] %vm354, %v1467
      %2005 = vst.msk [vmem:[#allocation2 + $0x158] sm:$0xff] %vm354, %v1468
      %2006 = vst.msk [vmem:[#allocation2 + $0x170] sm:$0xff] %vm354, %v1469
      %v2007 = vrot.slane %v1890, 1
      %v2008 = vor.u32 %v1887, %v2007
      %2009 = vrot.lane.b32.xlu0 %v1764, 32
      %v2010 = vpop.permute.xlu0 %2009
      %2011 = vrot.lane.b32.xlu0 %v1766, 32
      %v2012 = vpop.permute.xlu0 %2011
      %2013 = vrot.lane.b32.xlu0 %v1768, 32
      %v2014 = vpop.permute.xlu0 %2013
      %2015 = vrot.lane.b32.xlu0 %v1770, 32
      %v2016 = vpop.permute.xlu0 %2015
      %2017 = vrot.lane.b32.xlu0 %v1772, 32
      %v2018 = vpop.permute.xlu0 %2017
      %2019 = vrot.lane.b32.xlu0 %v1774, 32
      %v2020 = vpop.permute.xlu0 %2019
      %2021 = vrot.lane.b32.xlu0 %v1776, 32
      %v2022 = vpop.permute.xlu0 %2021
      %2023 = vrot.lane.b32.xlu0 %v1778, 32
      %v2024 = vpop.permute.xlu0 %2023
      %2025 = vrot.lane.b32.xlu0 %v1780, 32
      %v2026 = vpop.permute.xlu0 %2025
      %2027 = vrot.lane.b32.xlu0 %v1782, 32
      %v2028 = vpop.permute.xlu0 %2027
      %2029 = vrot.lane.b32.xlu0 %v1784, 32
      %v2030 = vpop.permute.xlu0 %2029
      %2031 = vrot.lane.b32.xlu0 %v1786, 32
      %v2032 = vpop.permute.xlu0 %2031
      %2033 = vrot.lane.b32.xlu0 %v1788, 32
      %v2034 = vpop.permute.xlu0 %2033
      %2035 = vrot.lane.b32.xlu0 %v1790, 32
      %v2036 = vpop.permute.xlu0 %2035
      %2037 = vrot.lane.b32.xlu0 %v1792, 32
      %v2038 = vpop.permute.xlu0 %2037
      %2039 = vrot.lane.b32.xlu0 %v2008, 32
      %v2040 = vpop.permute.xlu0 %2039
      %vm2057 = vcmask 523520
      %vm2058 = vmand %vm2057, %vm1839
      %v2059 = vld [vmem:[#allocation2 + $0x8] sm:$0xff]
      %v2060 = vsel %vm2058, %v2010, %v2059
      %2061 = vst [vmem:[#allocation2 + $0x8] sm:$0xff] %v2060
      %v2062 = vld [vmem:[#allocation2 + $0x20] sm:$0xff]
      %v2063 = vsel %vm2058, %v2012, %v2062
      %2064 = vst [vmem:[#allocation2 + $0x20] sm:$0xff] %v2063
      %v2065 = vld [vmem:[#allocation2 + $0x38] sm:$0xff]
      %v2066 = vsel %vm2058, %v2014, %v2065
      %2067 = vst [vmem:[#allocation2 + $0x38] sm:$0xff] %v2066
      %v2068 = vld [vmem:[#allocation2 + $0x50] sm:$0xff]
      %v2069 = vsel %vm2058, %v2016, %v2068
      %2070 = vst [vmem:[#allocation2 + $0x50] sm:$0xff] %v2069
      %v2071 = vld [vmem:[#allocation2 + $0x68] sm:$0xff]
      %v2072 = vsel %vm2058, %v2018, %v2071
      %2073 = vst [vmem:[#allocation2 + $0x68] sm:$0xff] %v2072
      %v2074 = vld [vmem:[#allocation2 + $0x80] sm:$0xff]
      %v2075 = vsel %vm2058, %v2020, %v2074
      %2076 = vst [vmem:[#allocation2 + $0x80] sm:$0xff] %v2075
      %v2077 = vld [vmem:[#allocation2 + $0x98] sm:$0xff]
      %v2078 = vsel %vm2058, %v2022, %v2077
      %2079 = vst [vmem:[#allocation2 + $0x98] sm:$0xff] %v2078
      %v2080 = vld [vmem:[#allocation2 + $0xb0] sm:$0xff]
      %v2081 = vsel %vm2058, %v2024, %v2080
      %2082 = vst [vmem:[#allocation2 + $0xb0] sm:$0xff] %v2081
      %v2083 = vld [vmem:[#allocation2 + $0xc8] sm:$0xff]
      %v2084 = vsel %vm2058, %v2026, %v2083
      %2085 = vst [vmem:[#allocation2 + $0xc8] sm:$0xff] %v2084
      %v2086 = vld [vmem:[#allocation2 + $0xe0] sm:$0xff]
      %v2087 = vsel %vm2058, %v2028, %v2086
      %2088 = vst [vmem:[#allocation2 + $0xe0] sm:$0xff] %v2087
      %v2089 = vld [vmem:[#allocation2 + $0xf8] sm:$0xff]
      %v2090 = vsel %vm2058, %v2030, %v2089
      %2091 = vst [vmem:[#allocation2 + $0xf8] sm:$0xff] %v2090
      %v2092 = vld [vmem:[#allocation2 + $0x110] sm:$0xff]
      %v2093 = vsel %vm2058, %v2032, %v2092
      %2094 = vst [vmem:[#allocation2 + $0x110] sm:$0xff] %v2093
      %v2095 = vld [vmem:[#allocation2 + $0x128] sm:$0xff]
      %v2096 = vsel %vm2058, %v2034, %v2095
      %2097 = vst [vmem:[#allocation2 + $0x128] sm:$0xff] %v2096
      %v2098 = vld [vmem:[#allocation2 + $0x140] sm:$0xff]
      %v2099 = vsel %vm2058, %v2036, %v2098
      %2100 = vst [vmem:[#allocation2 + $0x140] sm:$0xff] %v2099
      %v2101 = vld [vmem:[#allocation2 + $0x158] sm:$0xff]
      %v2102 = vsel %vm2058, %v2038, %v2101
      %2103 = vst [vmem:[#allocation2 + $0x158] sm:$0xff] %v2102
      %v2104 = vld [vmem:[#allocation2 + $0x170] sm:$0xff]
      %v2105 = vsel %vm2058, %v2040, %v2104
      %2106 = vst [vmem:[#allocation2 + $0x170] sm:$0xff] %v2105
      %2107 = vrot.lane.b32.xlu0 %v1531, 64
      %v2108 = vpop.permute.xlu0 %2107
      %2109 = vrot.lane.b32.xlu0 %v1538, 64
      %v2110 = vpop.permute.xlu0 %2109
      %2111 = vrot.lane.b32.xlu0 %v1545, 64
      %v2112 = vpop.permute.xlu0 %2111
      %2113 = vrot.lane.b32.xlu0 %v1552, 64
      %v2114 = vpop.permute.xlu0 %2113
      %2115 = vrot.lane.b32.xlu0 %v1559, 64
      %v2116 = vpop.permute.xlu0 %2115
      %2117 = vrot.lane.b32.xlu0 %v1566, 64
      %v2118 = vpop.permute.xlu0 %2117
      %2119 = vrot.lane.b32.xlu0 %v1573, 64
      %v2120 = vpop.permute.xlu0 %2119
      %2121 = vrot.lane.b32.xlu0 %v1580, 64
      %v2122 = vpop.permute.xlu0 %2121
      %2123 = vrot.lane.b32.xlu0 %v1587, 64
      %v2124 = vpop.permute.xlu0 %2123
      %2125 = vrot.lane.b32.xlu0 %v1594, 64
      %v2126 = vpop.permute.xlu0 %2125
      %2127 = vrot.lane.b32.xlu0 %v1601, 64
      %v2128 = vpop.permute.xlu0 %2127
      %2129 = vrot.lane.b32.xlu0 %v1608, 64
      %v2130 = vpop.permute.xlu0 %2129
      %2131 = vrot.lane.b32.xlu0 %v1615, 64
      %v2132 = vpop.permute.xlu0 %2131
      %2133 = vrot.lane.b32.xlu0 %v1622, 64
      %v2134 = vpop.permute.xlu0 %2133
      %2135 = vrot.lane.b32.xlu0 %v1892, 64
      %v2136 = vpop.permute.xlu0 %2135
      %vm2152 = vmand %vm1838, %vm1640
      %v2153 = vld [vmem:[#allocation2 + $0x8] sm:$0xff]
      %v2154 = vsel %vm2152, %v2108, %v2153
      %2155 = vst [vmem:[#allocation2 + $0x8] sm:$0xff] %v2154
      %v2156 = vld [vmem:[#allocation2 + $0x20] sm:$0xff]
      %v2157 = vsel %vm2152, %v2110, %v2156
      %2158 = vst [vmem:[#allocation2 + $0x20] sm:$0xff] %v2157
      %v2159 = vld [vmem:[#allocation2 + $0x38] sm:$0xff]
      %v2160 = vsel %vm2152, %v2112, %v2159
      %2161 = vst [vmem:[#allocation2 + $0x38] sm:$0xff] %v2160
      %v2162 = vld [vmem:[#allocation2 + $0x50] sm:$0xff]
      %v2163 = vsel %vm2152, %v2114, %v2162
      %2164 = vst [vmem:[#allocation2 + $0x50] sm:$0xff] %v2163
      %v2165 = vld [vmem:[#allocation2 + $0x68] sm:$0xff]
      %v2166 = vsel %vm2152, %v2116, %v2165
      %2167 = vst [vmem:[#allocation2 + $0x68] sm:$0xff] %v2166
      %v2168 = vld [vmem:[#allocation2 + $0x80] sm:$0xff]
      %v2169 = vsel %vm2152, %v2118, %v2168
      %2170 = vst [vmem:[#allocation2 + $0x80] sm:$0xff] %v2169
      %v2171 = vld [vmem:[#allocation2 + $0x98] sm:$0xff]
      %v2172 = vsel %vm2152, %v2120, %v2171
      %2173 = vst [vmem:[#allocation2 + $0x98] sm:$0xff] %v2172
      %v2174 = vld [vmem:[#allocation2 + $0xb0] sm:$0xff]
      %v2175 = vsel %vm2152, %v2122, %v2174
      %2176 = vst [vmem:[#allocation2 + $0xb0] sm:$0xff] %v2175
      %v2177 = vld [vmem:[#allocation2 + $0xc8] sm:$0xff]
      %v2178 = vsel %vm2152, %v2124, %v2177
      %2179 = vst [vmem:[#allocation2 + $0xc8] sm:$0xff] %v2178
      %v2180 = vld [vmem:[#allocation2 + $0xe0] sm:$0xff]
      %v2181 = vsel %vm2152, %v2126, %v2180
      %2182 = vst [vmem:[#allocation2 + $0xe0] sm:$0xff] %v2181
      %v2183 = vld [vmem:[#allocation2 + $0xf8] sm:$0xff]
      %v2184 = vsel %vm2152, %v2128, %v2183
      %2185 = vst [vmem:[#allocation2 + $0xf8] sm:$0xff] %v2184
      %v2186 = vld [vmem:[#allocation2 + $0x110] sm:$0xff]
      %v2187 = vsel %vm2152, %v2130, %v2186
      %2188 = vst [vmem:[#allocation2 + $0x110] sm:$0xff] %v2187
      %v2189 = vld [vmem:[#allocation2 + $0x128] sm:$0xff]
      %v2190 = vsel %vm2152, %v2132, %v2189
      %2191 = vst [vmem:[#allocation2 + $0x128] sm:$0xff] %v2190
      %v2192 = vld [vmem:[#allocation2 + $0x140] sm:$0xff]
      %v2193 = vsel %vm2152, %v2134, %v2192
      %2194 = vst [vmem:[#allocation2 + $0x140] sm:$0xff] %v2193
      %v2195 = vld [vmem:[#allocation2 + $0x158] sm:$0xff]
      %v2196 = vsel %vm2152, %v2136, %v2195
      %2197 = vst [vmem:[#allocation2 + $0x158] sm:$0xff] %v2196
      %2199 = vrot.lane.b32.xlu0 %v1455, 96
      %v2200 = vpop.permute.xlu0 %2199
      %2201 = vrot.lane.b32.xlu0 %v1456, 96
      %v2202 = vpop.permute.xlu0 %2201
      %2203 = vrot.lane.b32.xlu0 %v1457, 96
      %v2204 = vpop.permute.xlu0 %2203
      %2205 = vrot.lane.b32.xlu0 %v1458, 96
      %v2206 = vpop.permute.xlu0 %2205
      %2207 = vrot.lane.b32.xlu0 %v1459, 96
      %v2208 = vpop.permute.xlu0 %2207
      %2209 = vrot.lane.b32.xlu0 %v1460, 96
      %v2210 = vpop.permute.xlu0 %2209
      %2211 = vrot.lane.b32.xlu0 %v1461, 96
      %v2212 = vpop.permute.xlu0 %2211
      %2213 = vrot.lane.b32.xlu0 %v1462, 96
      %v2214 = vpop.permute.xlu0 %2213
      %2215 = vrot.lane.b32.xlu0 %v1463, 96
      %v2216 = vpop.permute.xlu0 %2215
      %2217 = vrot.lane.b32.xlu0 %v1464, 96
      %v2218 = vpop.permute.xlu0 %2217
      %2219 = vrot.lane.b32.xlu0 %v1465, 96
      %v2220 = vpop.permute.xlu0 %2219
      %2221 = vrot.lane.b32.xlu0 %v1466, 96
      %v2222 = vpop.permute.xlu0 %2221
      %2223 = vrot.lane.b32.xlu0 %v1467, 96
      %v2224 = vpop.permute.xlu0 %2223
      %2225 = vrot.lane.b32.xlu0 %v1468, 96
      %v2226 = vpop.permute.xlu0 %2225
      %2227 = vrot.lane.b32.xlu0 %v1469, 96
      %v2228 = vpop.permute.xlu0 %2227
      %vm2244 = vcmask 1048320
      %2245 = vst.msk [vmem:[#allocation2 + $0x8] sm:$0xff] %vm2244, %v2200
      %2246 = vst.msk [vmem:[#allocation2 + $0x20] sm:$0xff] %vm2244, %v2202
      %2247 = vst.msk [vmem:[#allocation2 + $0x38] sm:$0xff] %vm2244, %v2204
      %2248 = vst.msk [vmem:[#allocation2 + $0x50] sm:$0xff] %vm2244, %v2206
      %2249 = vst.msk [vmem:[#allocation2 + $0x68] sm:$0xff] %vm2244, %v2208
      %2250 = vst.msk [vmem:[#allocation2 + $0x80] sm:$0xff] %vm2244, %v2210
      %2251 = vst.msk [vmem:[#allocation2 + $0x98] sm:$0xff] %vm2244, %v2212
      %2252 = vst.msk [vmem:[#allocation2 + $0xb0] sm:$0xff] %vm2244, %v2214
      %2253 = vst.msk [vmem:[#allocation2 + $0xc8] sm:$0xff] %vm2244, %v2216
      %2254 = vst.msk [vmem:[#allocation2 + $0xe0] sm:$0xff] %vm2244, %v2218
      %2255 = vst.msk [vmem:[#allocation2 + $0xf8] sm:$0xff] %vm2244, %v2220
      %2256 = vst.msk [vmem:[#allocation2 + $0x110] sm:$0xff] %vm2244, %v2222
      %2257 = vst.msk [vmem:[#allocation2 + $0x128] sm:$0xff] %vm2244, %v2224
      %2258 = vst.msk [vmem:[#allocation2 + $0x140] sm:$0xff] %vm2244, %v2226
      %2259 = vst.msk [vmem:[#allocation2 + $0x158] sm:$0xff] %vm2244, %v2228
      %vm2275 = vmand %vm1639, %vm1839
      %v2276 = vld [vmem:[#allocation2 + $0x10] sm:$0xff]
      %v2277 = vsel %vm2275, %v1766, %v2276
      %2278 = vst [vmem:[#allocation2 + $0x10] sm:$0xff] %v2277
      %v2279 = vld [vmem:[#allocation2 + $0x28] sm:$0xff]
      %v2280 = vsel %vm2275, %v1768, %v2279
      %2281 = vst [vmem:[#allocation2 + $0x28] sm:$0xff] %v2280
      %v2282 = vld [vmem:[#allocation2 + $0x40] sm:$0xff]
      %v2283 = vsel %vm2275, %v1770, %v2282
      %2284 = vst [vmem:[#allocation2 + $0x40] sm:$0xff] %v2283
      %v2285 = vld [vmem:[#allocation2 + $0x58] sm:$0xff]
      %v2286 = vsel %vm2275, %v1772, %v2285
      %2287 = vst [vmem:[#allocation2 + $0x58] sm:$0xff] %v2286
      %v2288 = vld [vmem:[#allocation2 + $0x70] sm:$0xff]
      %v2289 = vsel %vm2275, %v1774, %v2288
      %2290 = vst [vmem:[#allocation2 + $0x70] sm:$0xff] %v2289
      %v2291 = vld [vmem:[#allocation2 + $0x88] sm:$0xff]
      %v2292 = vsel %vm2275, %v1776, %v2291
      %2293 = vst [vmem:[#allocation2 + $0x88] sm:$0xff] %v2292
      %v2294 = vld [vmem:[#allocation2 + $0xa0] sm:$0xff]
      %v2295 = vsel %vm2275, %v1778, %v2294
      %2296 = vst [vmem:[#allocation2 + $0xa0] sm:$0xff] %v2295
      %v2297 = vld [vmem:[#allocation2 + $0xb8] sm:$0xff]
      %v2298 = vsel %vm2275, %v1780, %v2297
      %2299 = vst [vmem:[#allocation2 + $0xb8] sm:$0xff] %v2298
      %v2300 = vld [vmem:[#allocation2 + $0xd0] sm:$0xff]
      %v2301 = vsel %vm2275, %v1782, %v2300
      %2302 = vst [vmem:[#allocation2 + $0xd0] sm:$0xff] %v2301
      %v2303 = vld [vmem:[#allocation2 + $0xe8] sm:$0xff]
      %v2304 = vsel %vm2275, %v1784, %v2303
      %2305 = vst [vmem:[#allocation2 + $0xe8] sm:$0xff] %v2304
      %v2306 = vld [vmem:[#allocation2 + $0x100] sm:$0xff]
      %v2307 = vsel %vm2275, %v1786, %v2306
      %2308 = vst [vmem:[#allocation2 + $0x100] sm:$0xff] %v2307
      %v2309 = vld [vmem:[#allocation2 + $0x118] sm:$0xff]
      %v2310 = vsel %vm2275, %v1788, %v2309
      %2311 = vst [vmem:[#allocation2 + $0x118] sm:$0xff] %v2310
      %v2312 = vld [vmem:[#allocation2 + $0x130] sm:$0xff]
      %v2313 = vsel %vm2275, %v1790, %v2312
      %2314 = vst [vmem:[#allocation2 + $0x130] sm:$0xff] %v2313
      %v2315 = vld [vmem:[#allocation2 + $0x148] sm:$0xff]
      %v2316 = vsel %vm2275, %v1792, %v2315
      %2317 = vst [vmem:[#allocation2 + $0x148] sm:$0xff] %v2316
      %v2318 = vld [vmem:[#allocation2 + $0x160] sm:$0xff]
      %v2319 = vsel %vm2275, %v2008, %v2318
      %2320 = vst [vmem:[#allocation2 + $0x160] sm:$0xff] %v2319
      %v2321 = vld [vmem:[#allocation2] sm:$0xff]
      %v2322 = vld [vmem:[#allocation2 + $0x8] sm:$0xff]
      %v2323 = vld [vmem:[#allocation2 + $0x10] sm:$0xff]
      %v2324 = vld [vmem:[#allocation2 + $0x18] sm:$0xff]
      %v2325 = vld [vmem:[#allocation2 + $0x20] sm:$0xff]
      %v2326 = vld [vmem:[#allocation2 + $0x28] sm:$0xff]
      %v2327 = vld [vmem:[#allocation2 + $0x30] sm:$0xff]
      %v2328 = vld [vmem:[#allocation2 + $0x38] sm:$0xff]
      %v2329 = vld [vmem:[#allocation2 + $0x40] sm:$0xff]
      %v2330 = vld [vmem:[#allocation2 + $0x48] sm:$0xff]
      %v2331 = vld [vmem:[#allocation2 + $0x50] sm:$0xff]
      %v2332 = vld [vmem:[#allocation2 + $0x58] sm:$0xff]
      %v2333 = vld [vmem:[#allocation2 + $0x60] sm:$0xff]
      %v2334 = vld [vmem:[#allocation2 + $0x68] sm:$0xff]
      %v2335 = vld [vmem:[#allocation2 + $0x70] sm:$0xff]
      %v2336 = vld [vmem:[#allocation2 + $0x78] sm:$0xff]
      %v2337 = vld [vmem:[#allocation2 + $0x80] sm:$0xff]
      %v2338 = vld [vmem:[#allocation2 + $0x88] sm:$0xff]
      %v2339 = vld [vmem:[#allocation2 + $0x90] sm:$0xff]
      %v2340 = vld [vmem:[#allocation2 + $0x98] sm:$0xff]
      %v2341 = vld [vmem:[#allocation2 + $0xa0] sm:$0xff]
      %v2342 = vld [vmem:[#allocation2 + $0xa8] sm:$0xff]
      %v2343 = vld [vmem:[#allocation2 + $0xb0] sm:$0xff]
      %v2344 = vld [vmem:[#allocation2 + $0xb8] sm:$0xff]
      %v2345 = vld [vmem:[#allocation2 + $0xc0] sm:$0xff]
      %v2346 = vld [vmem:[#allocation2 + $0xc8] sm:$0xff]
      %v2347 = vld [vmem:[#allocation2 + $0xd0] sm:$0xff]
      %v2348 = vld [vmem:[#allocation2 + $0xd8] sm:$0xff]
      %v2349 = vld [vmem:[#allocation2 + $0xe0] sm:$0xff]
      %v2350 = vld [vmem:[#allocation2 + $0xe8] sm:$0xff]
      %v2351 = vld [vmem:[#allocation2 + $0xf0] sm:$0xff]
      %v2352 = vld [vmem:[#allocation2 + $0xf8] sm:$0xff]
      %v2353 = vld [vmem:[#allocation2 + $0x100] sm:$0xff]
      %v2354 = vld [vmem:[#allocation2 + $0x108] sm:$0xff]
      %v2355 = vld [vmem:[#allocation2 + $0x110] sm:$0xff]
      %v2356 = vld [vmem:[#allocation2 + $0x118] sm:$0xff]
      %v2357 = vld [vmem:[#allocation2 + $0x120] sm:$0xff]
      %v2358 = vld [vmem:[#allocation2 + $0x128] sm:$0xff]
      %v2359 = vld [vmem:[#allocation2 + $0x130] sm:$0xff]
      %v2360 = vld [vmem:[#allocation2 + $0x138] sm:$0xff]
      %v2361 = vld [vmem:[#allocation2 + $0x140] sm:$0xff]
      %v2362 = vld [vmem:[#allocation2 + $0x148] sm:$0xff]
      %v2363 = vld [vmem:[#allocation2 + $0x150] sm:$0xff]
      %v2364 = vld [vmem:[#allocation2 + $0x158] sm:$0xff]
      %v2365 = vld [vmem:[#allocation2 + $0x160] sm:$0xff]
      %v2366 = vld [vmem:[#allocation2 + $0x168] sm:$0xff]
      %v2367 = vld [vmem:[#allocation2 + $0x170] sm:$0xff]
      %v2368 = vld [vmem:[#allocation2 + $0x178] sm:$0xff]
      %v2369 = vld [vmem:[%s3] sm:$0xf]
      %v2370 = vld [vmem:[%s3 + $0x4] sm:$0xf]
      %v2371 = vld [vmem:[%s3 + $0x8] sm:$0xf]
      %v2372 = vld [vmem:[%s3 + $0xc] sm:$0xf]
      %v2373 = vld [vmem:[%s3 + $0x10] sm:$0xf]
      %v2374 = vld [vmem:[%s3 + $0x14] sm:$0xf]
      %v2375 = vld [vmem:[%s3 + $0x18] sm:$0xf]
      %v2376 = vld [vmem:[%s3 + $0x1c] sm:$0xf]
      %v2377 = vld [vmem:[%s3 + $0x20] sm:$0xf]
      %v2378 = vld [vmem:[%s3 + $0x24] sm:$0xf]
      %v2379 = vld [vmem:[%s3 + $0x28] sm:$0xf]
      %v2380 = vld [vmem:[%s3 + $0x2c] sm:$0xf]
      %v2381 = vld [vmem:[%s3 + $0x30] sm:$0xf]
      %v2382 = vld [vmem:[%s3 + $0x34] sm:$0xf]
      %v2383 = vld [vmem:[%s3 + $0x38] sm:$0xf]
      %v2384 = vld [vmem:[%s3 + $0x3c] sm:$0xf]
      %v2385 = vld [vmem:[%s3 + $0x40] sm:$0xf]
      %v2386 = vld [vmem:[%s3 + $0x44] sm:$0xf]
      %v2387 = vld [vmem:[%s3 + $0x48] sm:$0xf]
      %v2388 = vld [vmem:[%s3 + $0x4c] sm:$0xf]
      %v2389 = vld [vmem:[%s3 + $0x50] sm:$0xf]
      %v2390 = vld [vmem:[%s3 + $0x54] sm:$0xf]
      %v2391 = vld [vmem:[%s3 + $0x58] sm:$0xf]
      %v2392 = vld [vmem:[%s3 + $0x5c] sm:$0xf]
      %v2393 = vld [vmem:[%s3 + $0x60] sm:$0xf]
      %v2394 = vld [vmem:[%s3 + $0x64] sm:$0xf]
      %v2395 = vld [vmem:[%s3 + $0x68] sm:$0xf]
      %v2396 = vld [vmem:[%s3 + $0x6c] sm:$0xf]
      %v2397 = vld [vmem:[%s3 + $0x70] sm:$0xf]
      %v2398 = vld [vmem:[%s3 + $0x74] sm:$0xf]
      %v2399 = vld [vmem:[%s3 + $0x78] sm:$0xf]
      %v2400 = vld [vmem:[%s3 + $0x7c] sm:$0xf]
      %v2401 = vld [vmem:[%s3 + $0x80] sm:$0xf]
      %v2402 = vld [vmem:[%s3 + $0x84] sm:$0xf]
      %v2403 = vld [vmem:[%s3 + $0x88] sm:$0xf]
      %v2404 = vld [vmem:[%s3 + $0x8c] sm:$0xf]
      %v2405 = vld [vmem:[%s4] sm:$0x1]
      %v2407 = vlaneseq
      %v2408 = vshrl.u32 %v2407, 7
      %v2409 = vsub.s32 0, %v2408
      %v2410 = vrot.slane %v2405, %v2409
      %v2448 = vunpack.c.l.b16 %v2369
      %v2449 = vunpack.c.l.b16 %v2370
      %v2450 = vunpack.c.l.b16 %v2371
      %v2451 = vunpack.c.l.b16 %v2372
      %v2452 = vunpack.c.l.b16 %v2373
      %v2453 = vunpack.c.l.b16 %v2374
      %v2454 = vunpack.c.l.b16 %v2375
      %v2455 = vunpack.c.l.b16 %v2376
      %v2456 = vunpack.c.l.b16 %v2377
      %v2457 = vunpack.c.l.b16 %v2378
      %v2458 = vunpack.c.l.b16 %v2379
      %v2459 = vunpack.c.l.b16 %v2380
      %v2460 = vunpack.c.l.b16 %v2381
      %v2461 = vunpack.c.l.b16 %v2382
      %v2462 = vunpack.c.l.b16 %v2383
      %v2463 = vunpack.c.l.b16 %v2384
      %v2464 = vunpack.c.l.b16 %v2385
      %v2465 = vunpack.c.l.b16 %v2386
      %v2466 = vunpack.c.l.b16 %v2387
      %v2467 = vunpack.c.l.b16 %v2388
      %v2468 = vunpack.c.l.b16 %v2389
      %v2469 = vunpack.c.l.b16 %v2390
      %v2470 = vunpack.c.l.b16 %v2391
      %v2471 = vunpack.c.l.b16 %v2392
      %v2472 = vunpack.c.l.b16 %v2393
      %v2473 = vunpack.c.l.b16 %v2394
      %v2474 = vunpack.c.l.b16 %v2395
      %v2475 = vunpack.c.l.b16 %v2396
      %v2476 = vunpack.c.l.b16 %v2397
      %v2477 = vunpack.c.l.b16 %v2398
      %v2478 = vunpack.c.l.b16 %v2399
      %v2479 = vunpack.c.l.b16 %v2400
      %v2480 = vunpack.c.l.b16 %v2401
      %v2481 = vunpack.c.l.b16 %v2402
      %v2482 = vunpack.c.l.b16 %v2403
      %v2483 = vunpack.c.l.b16 %v2404
      %v2484 = vpack.c.b16 %v2449, %v2448
      %v2485 = vpack.c.b16 %v2451, %v2450
      %v2486 = vpack.c.b16 %v2453, %v2452
      %v2487 = vpack.c.b16 %v2455, %v2454
      %v2488 = vpack.c.b16 %v2457, %v2456
      %v2489 = vpack.c.b16 %v2459, %v2458
      %v2490 = vpack.c.b16 %v2461, %v2460
      %v2491 = vpack.c.b16 %v2463, %v2462
      %v2492 = vpack.c.b16 %v2465, %v2464
      %v2493 = vpack.c.b16 %v2467, %v2466
      %v2494 = vpack.c.b16 %v2469, %v2468
      %v2495 = vpack.c.b16 %v2471, %v2470
      %v2496 = vpack.c.b16 %v2473, %v2472
      %v2497 = vpack.c.b16 %v2475, %v2474
      %v2498 = vpack.c.b16 %v2477, %v2476
      %v2499 = vpack.c.b16 %v2479, %v2478
      %v2500 = vpack.c.b16 %v2481, %v2480
      %v2501 = vpack.c.b16 %v2483, %v2482
      %v2521 = vsel %vm354, %v2323, 0
      %v2524 = vsel %vm354, %v2326, 0
      %v2527 = vsel %vm354, %v2329, 0
      %v2530 = vsel %vm354, %v2332, 0
      %v2533 = vsel %vm354, %v2335, 0
      %v2536 = vsel %vm354, %v2338, 0
      %v2539 = vsel %vm354, %v2341, 0
      %v2542 = vsel %vm354, %v2344, 0
      %v2545 = vsel %vm354, %v2347, 0
      %v2548 = vsel %vm354, %v2350, 0
      %v2551 = vsel %vm354, %v2353, 0
      %v2554 = vsel %vm354, %v2356, 0
      %v2557 = vsel %vm354, %v2359, 0
      %v2560 = vsel %vm354, %v2362, 0
      %v2563 = vsel %vm354, %v2365, 0
      %v2566 = vsel %vm354, %v2368, 0
      %2568 = vmatprep.subr.bf16.mxu0 0
      %2569 = vmatpush1.bf16.msra.mxu0 %v2484
      %2570 = vmatprep.subr.bf16.mxu0 0
      %2571 = vmatpush1.bf16.msra.mxu0 %v2485
      %2572 = vmatprep.subr.bf16.mxu0 0
      %2573 = vmatpush1.bf16.msra.mxu0 %v2486
      %2574 = vmatprep.subr.bf16.mxu0 0
      %2575 = vmatpush1.bf16.msra.mxu0 %v2487
      %2576 = vmatprep.subr.bf16.mxu0 0
      %2577 = vmatpush1.bf16.msra.mxu0 %v2488
      %2578 = vmatprep.subr.bf16.mxu0 0
      %2579 = vmatpush1.bf16.msra.mxu0 %v2489
      %2580 = vmatprep.subr.bf16.mxu0 0
      %2581 = vmatpush1.bf16.msra.mxu0 %v2490
      %2582 = vmatprep.subr.bf16.mxu0 0
      %2583 = vmatpush1.bf16.msra.mxu0 %v2491
      %2584 = vmatprep.subr.bf16.mxu0 0
      %2585 = vmatpush1.bf16.msra.mxu0 %v2492
      %2586 = vmatprep.subr.bf16.mxu0 0
      %2587 = vmatpush1.bf16.msra.mxu0 %v2493
      %2588 = vmatprep.subr.bf16.mxu0 0
      %2589 = vmatpush1.bf16.msra.mxu0 %v2494
      %2590 = vmatprep.subr.bf16.mxu0 0
      %2591 = vmatpush1.bf16.msra.mxu0 %v2495
      %2592 = vmatprep.subr.bf16.mxu0 0
      %2593 = vmatpush1.bf16.msra.mxu0 %v2496
      %2594 = vmatprep.subr.bf16.mxu0 0
      %2595 = vmatpush1.bf16.msra.mxu0 %v2497
      %2596 = vmatprep.subr.bf16.mxu0 0
      %2597 = vmatpush1.bf16.msra.mxu0 %v2498
      %2598 = vmatprep.subr.bf16.mxu0 0
      %2599 = vmatpush1.bf16.msra.mxu0 %v2499
      %2600 = vmatprep.mubr.bf16.mxu0 %v2322
      %2601 = vmatmul.mubr.bf16.gmra.mrb[0].mxu0 %v2321
      %v2602 = vpop.f32.mrb[0].mxu0
      %v2603 = vadd.f32 %v2410, %v2602
      %v2604 = vpop.f32.mrb[0].mxu0
      %v2605 = vpop.f32.mrb[0].mxu0
      %v2606 = vadd.f32 %v2410, %v2605
      %v2607 = vpop.f32.mrb[0].mxu0
      %2608 = vmatprep.mubr.bf16.mxu0 %v2325
      %2609 = vmatmul.mubr.bf16.gmra.mrb[0].mxu0 %v2324
      %v2610 = vpop.f32.mrb[0].mxu0
      %v2611 = vadd.f32 %v2410, %v2610
      %v2612 = vpop.f32.mrb[0].mxu0
      %v2613 = vpop.f32.mrb[0].mxu0
      %v2614 = vadd.f32 %v2410, %v2613
      %v2615 = vpop.f32.mrb[0].mxu0
      %2616 = vmatprep.mubr.bf16.mxu0 %v2328
      %2617 = vmatmul.mubr.bf16.gmra.mrb[0].mxu0 %v2327
      %v2618 = vpop.f32.mrb[0].mxu0
      %v2619 = vadd.f32 %v2410, %v2618
      %v2620 = vpop.f32.mrb[0].mxu0
      %v2621 = vpop.f32.mrb[0].mxu0
      %v2622 = vadd.f32 %v2410, %v2621
      %v2623 = vpop.f32.mrb[0].mxu0
      %2624 = vmatprep.mubr.bf16.mxu0 %v2331
      %2625 = vmatmul.mubr.bf16.gmra.mrb[0].mxu0 %v2330
      %v2626 = vpop.f32.mrb[0].mxu0
      %v2627 = vadd.f32 %v2410, %v2626
      %v2628 = vpop.f32.mrb[0].mxu0
      %v2629 = vpop.f32.mrb[0].mxu0
      %v2630 = vadd.f32 %v2410, %v2629
      %v2631 = vpop.f32.mrb[0].mxu0
      %2632 = vmatprep.mubr.bf16.mxu0 %v2334
      %2633 = vmatmul.mubr.bf16.gmra.mrb[0].mxu0 %v2333
      %v2634 = vpop.f32.mrb[0].mxu0
      %v2635 = vadd.f32 %v2410, %v2634
      %v2636 = vpop.f32.mrb[0].mxu0
      %v2637 = vpop.f32.mrb[0].mxu0
      %v2638 = vadd.f32 %v2410, %v2637
      %v2639 = vpop.f32.mrb[0].mxu0
      %2640 = vmatprep.mubr.bf16.mxu0 %v2337
      %2641 = vmatmul.mubr.bf16.gmra.mrb[0].mxu0 %v2336
      %v2642 = vpop.f32.mrb[0].mxu0
      %v2643 = vadd.f32 %v2410, %v2642
      %v2644 = vpop.f32.mrb[0].mxu0
      %v2645 = vpop.f32.mrb[0].mxu0
      %v2646 = vadd.f32 %v2410, %v2645
      %v2647 = vpop.f32.mrb[0].mxu0
      %2648 = vmatprep.mubr.bf16.mxu0 %v2340
      %2649 = vmatmul.mubr.bf16.gmra.mrb[0].mxu0 %v2339
      %v2650 = vpop.f32.mrb[0].mxu0
      %v2651 = vadd.f32 %v2410, %v2650
      %v2652 = vpop.f32.mrb[0].mxu0
      %v2653 = vpop.f32.mrb[0].mxu0
      %v2654 = vadd.f32 %v2410, %v2653
      %v2655 = vpop.f32.mrb[0].mxu0
      %2656 = vmatprep.mubr.bf16.mxu0 %v2343
      %2657 = vmatmul.mubr.bf16.gmra.mrb[0].mxu0 %v2342
      %v2658 = vpop.f32.mrb[0].mxu0
      %v2659 = vadd.f32 %v2410, %v2658
      %v2660 = vpop.f32.mrb[0].mxu0
      %v2661 = vpop.f32.mrb[0].mxu0
      %v2662 = vadd.f32 %v2410, %v2661
      %v2663 = vpop.f32.mrb[0].mxu0
      %2664 = vmatprep.mubr.bf16.mxu0 %v2346
      %2665 = vmatmul.mubr.bf16.gmra.mrb[0].mxu0 %v2345
      %v2666 = vpop.f32.mrb[0].mxu0
      %v2667 = vadd.f32 %v2410, %v2666
      %v2668 = vpop.f32.mrb[0].mxu0
      %v2669 = vpop.f32.mrb[0].mxu0
      %v2670 = vadd.f32 %v2410, %v2669
      %v2671 = vpop.f32.mrb[0].mxu0
      %2672 = vmatprep.mubr.bf16.mxu0 %v2349
      %2673 = vmatmul.mubr.bf16.gmra.mrb[0].mxu0 %v2348
      %v2674 = vpop.f32.mrb[0].mxu0
      %v2675 = vadd.f32 %v2410, %v2674
      %v2676 = vpop.f32.mrb[0].mxu0
      %v2677 = vpop.f32.mrb[0].mxu0
      %v2678 = vadd.f32 %v2410, %v2677
      %v2679 = vpop.f32.mrb[0].mxu0
      %2680 = vmatprep.mubr.bf16.mxu0 %v2352
      %2681 = vmatmul.mubr.bf16.gmra.mrb[0].mxu0 %v2351
      %v2682 = vpop.f32.mrb[0].mxu0
      %v2683 = vadd.f32 %v2410, %v2682
      %v2684 = vpop.f32.mrb[0].mxu0
      %v2685 = vpop.f32.mrb[0].mxu0
      %v2686 = vadd.f32 %v2410, %v2685
      %v2687 = vpop.f32.mrb[0].mxu0
      %2688 = vmatprep.mubr.bf16.mxu0 %v2355
      %2689 = vmatmul.mubr.bf16.gmra.mrb[0].mxu0 %v2354
      %v2690 = vpop.f32.mrb[0].mxu0
      %v2691 = vadd.f32 %v2410, %v2690
      %v2692 = vpop.f32.mrb[0].mxu0
      %v2693 = vpop.f32.mrb[0].mxu0
      %v2694 = vadd.f32 %v2410, %v2693
      %v2695 = vpop.f32.mrb[0].mxu0
      %2696 = vmatprep.mubr.bf16.mxu0 %v2358
      %2697 = vmatmul.mubr.bf16.gmra.mrb[0].mxu0 %v2357
      %v2698 = vpop.f32.mrb[0].mxu0
      %v2699 = vadd.f32 %v2410, %v2698
      %v2700 = vpop.f32.mrb[0].mxu0
      %v2701 = vpop.f32.mrb[0].mxu0
      %v2702 = vadd.f32 %v2410, %v2701
      %v2703 = vpop.f32.mrb[0].mxu0
      %2704 = vmatprep.mubr.bf16.mxu0 %v2361
      %2705 = vmatmul.mubr.bf16.gmra.mrb[0].mxu0 %v2360
      %v2706 = vpop.f32.mrb[0].mxu0
      %v2707 = vadd.f32 %v2410, %v2706
      %v2708 = vpop.f32.mrb[0].mxu0
      %v2709 = vpop.f32.mrb[0].mxu0
      %v2710 = vadd.f32 %v2410, %v2709
      %v2711 = vpop.f32.mrb[0].mxu0
      %2712 = vmatprep.mubr.bf16.mxu0 %v2364
      %2713 = vmatmul.mubr.bf16.gmra.mrb[0].mxu0 %v2363
      %v2714 = vpop.f32.mrb[0].mxu0
      %v2715 = vadd.f32 %v2410, %v2714
      %v2716 = vpop.f32.mrb[0].mxu0
      %v2717 = vpop.f32.mrb[0].mxu0
      %v2718 = vadd.f32 %v2410, %v2717
      %v2719 = vpop.f32.mrb[0].mxu0
      %2720 = vmatprep.mubr.bf16.mxu0 %v2367
      %2721 = vmatmul.mubr.bf16.gmra.mrb[0].mxu0 %v2366
      %v2722 = vpop.f32.mrb[0].mxu0
      %v2723 = vadd.f32 %v2410, %v2722
      %v2724 = vpop.f32.mrb[0].mxu0
      %v2725 = vpop.f32.mrb[0].mxu0
      %v2726 = vadd.f32 %v2410, %v2725
      %v2727 = vpop.f32.mrb[0].mxu0
      %2728 = vdwg.mxu0
      %2729 = vmatprep.subr.bf16.mxu0 0
      %2730 = vmatpush1.bf16.msra.mxu0 %v2500
      %2731 = vmatprep.subr.bf16.mxu0 0
      %2732 = vmatpush1.bf16.msra.mxu0 %v2501
      %2733 = vmatprep.subr.bf16.mxu0 0
      %2734 = vmatpush1.bf16.msra.mxu0 0
      %2735 = vmatprep.subr.bf16.mxu0 0
      %2736 = vmatpush1.bf16.msra.mxu0 0
      %2737 = vmatprep.subr.bf16.mxu0 0
      %2738 = vmatpush1.bf16.msra.mxu0 0
      %2739 = vmatprep.subr.bf16.mxu0 0
      %2740 = vmatpush1.bf16.msra.mxu0 0
      %2741 = vmatprep.subr.bf16.mxu0 0
      %2742 = vmatpush1.bf16.msra.mxu0 0
      %2743 = vmatprep.subr.bf16.mxu0 0
      %2744 = vmatpush1.bf16.msra.mxu0 0
      %2745 = vmatprep.subr.bf16.mxu0 0
      %2746 = vmatpush1.bf16.msra.mxu0 0
      %2747 = vmatprep.subr.bf16.mxu0 0
      %2748 = vmatpush1.bf16.msra.mxu0 0
      %2749 = vmatprep.subr.bf16.mxu0 0
      %2750 = vmatpush1.bf16.msra.mxu0 0
      %2751 = vmatprep.subr.bf16.mxu0 0
      %2752 = vmatpush1.bf16.msra.mxu0 0
      %2753 = vmatprep.subr.bf16.mxu0 0
      %2754 = vmatpush1.bf16.msra.mxu0 0
      %2755 = vmatprep.subr.bf16.mxu0 0
      %2756 = vmatpush1.bf16.msra.mxu0 0
      %2757 = vmatprep.subr.bf16.mxu0 0
      %2758 = vmatpush1.bf16.msra.mxu0 0
      %2759 = vmatprep.subr.bf16.mxu0 0
      %2760 = vmatpush1.bf16.msra.mxu0 0
      %2761 = vmatprep.mubr.bf16.mxu0 0
      %2762 = vmatmul.mubr.bf16.gmra.mrb[0].mxu0 %v2521
      %v2763 = vpop.f32.mrb[0].mxu0
      %v2764 = vadd.f32 %v2603, %v2763
      %v2765 = vpop.f32.mrb[0].mxu0
      %v2766 = vpop.f32.mrb[0].mxu0
      %v2767 = vadd.f32 %v2606, %v2766
      %v2768 = vpop.f32.mrb[0].mxu0
      %2769 = vmatprep.mubr.bf16.mxu0 0
      %2770 = vmatmul.mubr.bf16.gmra.mrb[0].mxu0 %v2524
      %v2771 = vpop.f32.mrb[0].mxu0
      %v2772 = vadd.f32 %v2611, %v2771
      %v2773 = vpop.f32.mrb[0].mxu0
      %v2774 = vpop.f32.mrb[0].mxu0
      %v2775 = vadd.f32 %v2614, %v2774
      %v2776 = vpop.f32.mrb[0].mxu0
      %2777 = vmatprep.mubr.bf16.mxu0 0
      %2778 = vmatmul.mubr.bf16.gmra.mrb[0].mxu0 %v2527
      %v2779 = vpop.f32.mrb[0].mxu0
      %v2780 = vadd.f32 %v2619, %v2779
      %v2781 = vpop.f32.mrb[0].mxu0
      %v2782 = vpop.f32.mrb[0].mxu0
      %v2783 = vadd.f32 %v2622, %v2782
      %v2784 = vpop.f32.mrb[0].mxu0
      %2785 = vmatprep.mubr.bf16.mxu0 0
      %2786 = vmatmul.mubr.bf16.gmra.mrb[0].mxu0 %v2530
      %v2787 = vpop.f32.mrb[0].mxu0
      %v2788 = vadd.f32 %v2627, %v2787
      %v2789 = vpop.f32.mrb[0].mxu0
      %v2790 = vpop.f32.mrb[0].mxu0
      %v2791 = vadd.f32 %v2630, %v2790
      %v2792 = vpop.f32.mrb[0].mxu0
      %2793 = vmatprep.mubr.bf16.mxu0 0
      %2794 = vmatmul.mubr.bf16.gmra.mrb[0].mxu0 %v2533
      %v2795 = vpop.f32.mrb[0].mxu0
      %v2796 = vadd.f32 %v2635, %v2795
      %v2797 = vpop.f32.mrb[0].mxu0
      %v2798 = vpop.f32.mrb[0].mxu0
      %v2799 = vadd.f32 %v2638, %v2798
      %v2800 = vpop.f32.mrb[0].mxu0
      %2801 = vmatprep.mubr.bf16.mxu0 0
      %2802 = vmatmul.mubr.bf16.gmra.mrb[0].mxu0 %v2536
      %v2803 = vpop.f32.mrb[0].mxu0
      %v2804 = vadd.f32 %v2643, %v2803
      %v2805 = vpop.f32.mrb[0].mxu0
      %v2806 = vpop.f32.mrb[0].mxu0
      %v2807 = vadd.f32 %v2646, %v2806
      %v2808 = vpop.f32.mrb[0].mxu0
      %2809 = vmatprep.mubr.bf16.mxu0 0
      %2810 = vmatmul.mubr.bf16.gmra.mrb[0].mxu0 %v2539
      %v2811 = vpop.f32.mrb[0].mxu0
      %v2812 = vadd.f32 %v2651, %v2811
      %v2813 = vpop.f32.mrb[0].mxu0
      %v2814 = vpop.f32.mrb[0].mxu0
      %v2815 = vadd.f32 %v2654, %v2814
      %v2816 = vpop.f32.mrb[0].mxu0
      %2817 = vmatprep.mubr.bf16.mxu0 0
      %2818 = vmatmul.mubr.bf16.gmra.mrb[0].mxu0 %v2542
      %v2819 = vpop.f32.mrb[0].mxu0
      %v2820 = vadd.f32 %v2659, %v2819
      %v2821 = vpop.f32.mrb[0].mxu0
      %v2822 = vpop.f32.mrb[0].mxu0
      %v2823 = vadd.f32 %v2662, %v2822
      %v2824 = vpop.f32.mrb[0].mxu0
      %2825 = vmatprep.mubr.bf16.mxu0 0
      %2826 = vmatmul.mubr.bf16.gmra.mrb[0].mxu0 %v2545
      %v2827 = vpop.f32.mrb[0].mxu0
      %v2828 = vadd.f32 %v2667, %v2827
      %v2829 = vpop.f32.mrb[0].mxu0
      %v2830 = vpop.f32.mrb[0].mxu0
      %v2831 = vadd.f32 %v2670, %v2830
      %v2832 = vpop.f32.mrb[0].mxu0
      %2833 = vmatprep.mubr.bf16.mxu0 0
      %2834 = vmatmul.mubr.bf16.gmra.mrb[0].mxu0 %v2548
      %v2835 = vpop.f32.mrb[0].mxu0
      %v2836 = vadd.f32 %v2675, %v2835
      %v2837 = vpop.f32.mrb[0].mxu0
      %v2838 = vpop.f32.mrb[0].mxu0
      %v2839 = vadd.f32 %v2678, %v2838
      %v2840 = vpop.f32.mrb[0].mxu0
      %2841 = vmatprep.mubr.bf16.mxu0 0
      %2842 = vmatmul.mubr.bf16.gmra.mrb[0].mxu0 %v2551
      %v2843 = vpop.f32.mrb[0].mxu0
      %v2844 = vadd.f32 %v2683, %v2843
      %v2845 = vpop.f32.mrb[0].mxu0
      %v2846 = vpop.f32.mrb[0].mxu0
      %v2847 = vadd.f32 %v2686, %v2846
      %v2848 = vpop.f32.mrb[0].mxu0
      %2849 = vmatprep.mubr.bf16.mxu0 0
      %2850 = vmatmul.mubr.bf16.gmra.mrb[0].mxu0 %v2554
      %v2851 = vpop.f32.mrb[0].mxu0
      %v2852 = vadd.f32 %v2691, %v2851
      %v2853 = vpop.f32.mrb[0].mxu0
      %v2854 = vpop.f32.mrb[0].mxu0
      %v2855 = vadd.f32 %v2694, %v2854
      %v2856 = vpop.f32.mrb[0].mxu0
      %2857 = vmatprep.mubr.bf16.mxu0 0
      %2858 = vmatmul.mubr.bf16.gmra.mrb[0].mxu0 %v2557
      %v2859 = vpop.f32.mrb[0].mxu0
      %v2860 = vadd.f32 %v2699, %v2859
      %v2861 = vpop.f32.mrb[0].mxu0
      %v2862 = vpop.f32.mrb[0].mxu0
      %v2863 = vadd.f32 %v2702, %v2862
      %v2864 = vpop.f32.mrb[0].mxu0
      %2865 = vmatprep.mubr.bf16.mxu0 0
      %2866 = vmatmul.mubr.bf16.gmra.mrb[0].mxu0 %v2560
      %v2867 = vpop.f32.mrb[0].mxu0
      %v2868 = vadd.f32 %v2707, %v2867
      %v2869 = vpop.f32.mrb[0].mxu0
      %v2870 = vpop.f32.mrb[0].mxu0
      %v2871 = vadd.f32 %v2710, %v2870
      %v2872 = vpop.f32.mrb[0].mxu0
      %2873 = vmatprep.mubr.bf16.mxu0 0
      %2874 = vmatmul.mubr.bf16.gmra.mrb[0].mxu0 %v2563
      %v2875 = vpop.f32.mrb[0].mxu0
      %v2876 = vadd.f32 %v2715, %v2875
      %v2877 = vpop.f32.mrb[0].mxu0
      %v2878 = vpop.f32.mrb[0].mxu0
      %v2879 = vadd.f32 %v2718, %v2878
      %v2880 = vpop.f32.mrb[0].mxu0
      %2881 = vmatprep.mubr.bf16.mxu0 0
      %2882 = vmatmul.mubr.bf16.gmra.mrb[0].mxu0 %v2566
      %v2883 = vpop.f32.mrb[0].mxu0
      %v2884 = vadd.f32 %v2723, %v2883
      %v2885 = vpop.f32.mrb[0].mxu0
      %v2886 = vpop.f32.mrb[0].mxu0
      %v2887 = vadd.f32 %v2726, %v2886
      %v2888 = vpop.f32.mrb[0].mxu0
      %2889 = vdwg.mxu0
      %v2890 = vmax.f32 %v2764, 0.0
      %v2891 = vmax.f32 %v2767, 0.0
      %v2892 = vmax.f32 %v2772, 0.0
      %v2893 = vmax.f32 %v2775, 0.0
      %v2894 = vmax.f32 %v2780, 0.0
      %v2895 = vmax.f32 %v2783, 0.0
      %v2896 = vmax.f32 %v2788, 0.0
      %v2897 = vmax.f32 %v2791, 0.0
      %v2898 = vmax.f32 %v2796, 0.0
      %v2899 = vmax.f32 %v2799, 0.0
      %v2900 = vmax.f32 %v2804, 0.0
      %v2901 = vmax.f32 %v2807, 0.0
      %v2902 = vmax.f32 %v2812, 0.0
      %v2903 = vmax.f32 %v2815, 0.0
      %v2904 = vmax.f32 %v2820, 0.0
      %v2905 = vmax.f32 %v2823, 0.0
      %v2906 = vmax.f32 %v2828, 0.0
      %v2907 = vmax.f32 %v2831, 0.0
      %v2908 = vmax.f32 %v2836, 0.0
      %v2909 = vmax.f32 %v2839, 0.0
      %v2910 = vmax.f32 %v2844, 0.0
      %v2911 = vmax.f32 %v2847, 0.0
      %v2912 = vmax.f32 %v2852, 0.0
      %v2913 = vmax.f32 %v2855, 0.0
      %v2914 = vmax.f32 %v2860, 0.0
      %v2915 = vmax.f32 %v2863, 0.0
      %v2916 = vmax.f32 %v2868, 0.0
      %v2917 = vmax.f32 %v2871, 0.0
      %v2918 = vmax.f32 %v2876, 0.0
      %v2919 = vmax.f32 %v2879, 0.0
      %v2920 = vmax.f32 %v2884, 0.0
      %v2921 = vmax.f32 %v2887, 0.0
      %v2954 = vcombine.high %v2890, %v2890
      %v2956 = vunpack.c.l.s4 1983009808
      %v2957 = vunpack.c.0.s8 %v2956
      %v2958 = vlaneseq
      %v2959 = vshrl.u32 %v2958, 7
      %v2960 = vsub.s32 %v2957, %v2959
      %v2961 = vrot.slane %v2890, %v2960
      %v2963 = vunpack.c.l.s4 1983009808
      %v2964 = vunpack.c.0.s8 %v2963
      %v2965 = vlaneseq
      %v2966 = vshrl.u32 %v2965, 7
      %v2967 = vsub.s32 %v2964, %v2966
      %v2968 = vrot.slane %v2954, %v2967
      %v2969 = vcombine.high %v2961, %v2961
      %v2970 = vcombine.high %v2968, %v2968
      %v2971 = vcombine.high %v2891, %v2891
      %v2973 = vunpack.c.l.s4 1983009808
      %v2974 = vunpack.c.0.s8 %v2973
      %v2975 = vlaneseq
      %v2976 = vshrl.u32 %v2975, 7
      %v2977 = vsub.s32 %v2974, %v2976
      %v2978 = vrot.slane %v2891, %v2977
      %v2980 = vunpack.c.l.s4 1983009808
      %v2981 = vunpack.c.0.s8 %v2980
      %v2982 = vlaneseq
      %v2983 = vshrl.u32 %v2982, 7
      %v2984 = vsub.s32 %v2981, %v2983
      %v2985 = vrot.slane %v2971, %v2984
      %v2986 = vcombine.high %v2978, %v2978
      %v2987 = vcombine.high %v2985, %v2985
      %v2988 = vcombine.high %v2892, %v2892
      %v2990 = vunpack.c.l.s4 1983009808
      %v2991 = vunpack.c.0.s8 %v2990
      %v2992 = vlaneseq
      %v2993 = vshrl.u32 %v2992, 7
      %v2994 = vsub.s32 %v2991, %v2993
      %v2995 = vrot.slane %v2892, %v2994
      %v2997 = vunpack.c.l.s4 1983009808
      %v2998 = vunpack.c.0.s8 %v2997
      %v2999 = vlaneseq
      %v3000 = vshrl.u32 %v2999, 7
      %v3001 = vsub.s32 %v2998, %v3000
      %v3002 = vrot.slane %v2988, %v3001
      %v3003 = vcombine.high %v2995, %v2995
      %v3004 = vcombine.high %v3002, %v3002
      %v3005 = vcombine.high %v2893, %v2893
      %v3007 = vunpack.c.l.s4 1983009808
      %v3008 = vunpack.c.0.s8 %v3007
      %v3009 = vlaneseq
      %v3010 = vshrl.u32 %v3009, 7
      %v3011 = vsub.s32 %v3008, %v3010
      %v3012 = vrot.slane %v2893, %v3011
      %v3014 = vunpack.c.l.s4 1983009808
      %v3015 = vunpack.c.0.s8 %v3014
      %v3016 = vlaneseq
      %v3017 = vshrl.u32 %v3016, 7
      %v3018 = vsub.s32 %v3015, %v3017
      %v3019 = vrot.slane %v3005, %v3018
      %v3020 = vcombine.high %v3012, %v3012
      %v3021 = vcombine.high %v3019, %v3019
      %v3022 = vcombine.high %v2894, %v2894
      %v3024 = vunpack.c.l.s4 1983009808
      %v3025 = vunpack.c.0.s8 %v3024
      %v3026 = vlaneseq
      %v3027 = vshrl.u32 %v3026, 7
      %v3028 = vsub.s32 %v3025, %v3027
      %v3029 = vrot.slane %v2894, %v3028
      %v3031 = vunpack.c.l.s4 1983009808
      %v3032 = vunpack.c.0.s8 %v3031
      %v3033 = vlaneseq
      %v3034 = vshrl.u32 %v3033, 7
      %v3035 = vsub.s32 %v3032, %v3034
      %v3036 = vrot.slane %v3022, %v3035
      %v3037 = vcombine.high %v3029, %v3029
      %v3038 = vcombine.high %v3036, %v3036
      %v3039 = vcombine.high %v2895, %v2895
      %v3041 = vunpack.c.l.s4 1983009808
      %v3042 = vunpack.c.0.s8 %v3041
      %v3043 = vlaneseq
      %v3044 = vshrl.u32 %v3043, 7
      %v3045 = vsub.s32 %v3042, %v3044
      %v3046 = vrot.slane %v2895, %v3045
      %v3048 = vunpack.c.l.s4 1983009808
      %v3049 = vunpack.c.0.s8 %v3048
      %v3050 = vlaneseq
      %v3051 = vshrl.u32 %v3050, 7
      %v3052 = vsub.s32 %v3049, %v3051
      %v3053 = vrot.slane %v3039, %v3052
      %v3054 = vcombine.high %v3046, %v3046
      %v3055 = vcombine.high %v3053, %v3053
      %v3056 = vcombine.high %v2896, %v2896
      %v3058 = vunpack.c.l.s4 1983009808
      %v3059 = vunpack.c.0.s8 %v3058
      %v3060 = vlaneseq
      %v3061 = vshrl.u32 %v3060, 7
      %v3062 = vsub.s32 %v3059, %v3061
      %v3063 = vrot.slane %v2896, %v3062
      %v3065 = vunpack.c.l.s4 1983009808
      %v3066 = vunpack.c.0.s8 %v3065
      %v3067 = vlaneseq
      %v3068 = vshrl.u32 %v3067, 7
      %v3069 = vsub.s32 %v3066, %v3068
      %v3070 = vrot.slane %v3056, %v3069
      %v3071 = vcombine.high %v3063, %v3063
      %v3072 = vcombine.high %v3070, %v3070
      %v3073 = vcombine.high %v2897, %v2897
      %v3075 = vunpack.c.l.s4 1983009808
      %v3076 = vunpack.c.0.s8 %v3075
      %v3077 = vlaneseq
      %v3078 = vshrl.u32 %v3077, 7
      %v3079 = vsub.s32 %v3076, %v3078
      %v3080 = vrot.slane %v2897, %v3079
      %v3082 = vunpack.c.l.s4 1983009808
      %v3083 = vunpack.c.0.s8 %v3082
      %v3084 = vlaneseq
      %v3085 = vshrl.u32 %v3084, 7
      %v3086 = vsub.s32 %v3083, %v3085
      %v3087 = vrot.slane %v3073, %v3086
      %v3088 = vcombine.high %v3080, %v3080
      %v3089 = vcombine.high %v3087, %v3087
      %v3090 = vcombine.high %v2898, %v2898
      %v3092 = vunpack.c.l.s4 1983009808
      %v3093 = vunpack.c.0.s8 %v3092
      %v3094 = vlaneseq
      %v3095 = vshrl.u32 %v3094, 7
      %v3096 = vsub.s32 %v3093, %v3095
      %v3097 = vrot.slane %v2898, %v3096
      %v3099 = vunpack.c.l.s4 1983009808
      %v3100 = vunpack.c.0.s8 %v3099
      %v3101 = vlaneseq
      %v3102 = vshrl.u32 %v3101, 7
      %v3103 = vsub.s32 %v3100, %v3102
      %v3104 = vrot.slane %v3090, %v3103
      %v3105 = vcombine.high %v3097, %v3097
      %v3106 = vcombine.high %v3104, %v3104
      %v3107 = vcombine.high %v2899, %v2899
      %v3109 = vunpack.c.l.s4 1983009808
      %v3110 = vunpack.c.0.s8 %v3109
      %v3111 = vlaneseq
      %v3112 = vshrl.u32 %v3111, 7
      %v3113 = vsub.s32 %v3110, %v3112
      %v3114 = vrot.slane %v2899, %v3113
      %v3116 = vunpack.c.l.s4 1983009808
      %v3117 = vunpack.c.0.s8 %v3116
      %v3118 = vlaneseq
      %v3119 = vshrl.u32 %v3118, 7
      %v3120 = vsub.s32 %v3117, %v3119
      %v3121 = vrot.slane %v3107, %v3120
      %v3122 = vcombine.high %v3114, %v3114
      %v3123 = vcombine.high %v3121, %v3121
      %v3124 = vcombine.high %v2900, %v2900
      %v3126 = vunpack.c.l.s4 1983009808
      %v3127 = vunpack.c.0.s8 %v3126
      %v3128 = vlaneseq
      %v3129 = vshrl.u32 %v3128, 7
      %v3130 = vsub.s32 %v3127, %v3129
      %v3131 = vrot.slane %v2900, %v3130
      %v3133 = vunpack.c.l.s4 1983009808
      %v3134 = vunpack.c.0.s8 %v3133
      %v3135 = vlaneseq
      %v3136 = vshrl.u32 %v3135, 7
      %v3137 = vsub.s32 %v3134, %v3136
      %v3138 = vrot.slane %v3124, %v3137
      %v3139 = vcombine.high %v3131, %v3131
      %v3140 = vcombine.high %v3138, %v3138
      %v3141 = vcombine.high %v2901, %v2901
      %v3143 = vunpack.c.l.s4 1983009808
      %v3144 = vunpack.c.0.s8 %v3143
      %v3145 = vlaneseq
      %v3146 = vshrl.u32 %v3145, 7
      %v3147 = vsub.s32 %v3144, %v3146
      %v3148 = vrot.slane %v2901, %v3147
      %v3150 = vunpack.c.l.s4 1983009808
      %v3151 = vunpack.c.0.s8 %v3150
      %v3152 = vlaneseq
      %v3153 = vshrl.u32 %v3152, 7
      %v3154 = vsub.s32 %v3151, %v3153
      %v3155 = vrot.slane %v3141, %v3154
      %v3156 = vcombine.high %v3148, %v3148
      %v3157 = vcombine.high %v3155, %v3155
      %v3158 = vcombine.high %v2902, %v2902
      %v3160 = vunpack.c.l.s4 1983009808
      %v3161 = vunpack.c.0.s8 %v3160
      %v3162 = vlaneseq
      %v3163 = vshrl.u32 %v3162, 7
      %v3164 = vsub.s32 %v3161, %v3163
      %v3165 = vrot.slane %v2902, %v3164
      %v3167 = vunpack.c.l.s4 1983009808
      %v3168 = vunpack.c.0.s8 %v3167
      %v3169 = vlaneseq
      %v3170 = vshrl.u32 %v3169, 7
      %v3171 = vsub.s32 %v3168, %v3170
      %v3172 = vrot.slane %v3158, %v3171
      %v3173 = vcombine.high %v3165, %v3165
      %v3174 = vcombine.high %v3172, %v3172
      %v3175 = vcombine.high %v2903, %v2903
      %v3177 = vunpack.c.l.s4 1983009808
      %v3178 = vunpack.c.0.s8 %v3177
      %v3179 = vlaneseq
      %v3180 = vshrl.u32 %v3179, 7
      %v3181 = vsub.s32 %v3178, %v3180
      %v3182 = vrot.slane %v2903, %v3181
      %v3184 = vunpack.c.l.s4 1983009808
      %v3185 = vunpack.c.0.s8 %v3184
      %v3186 = vlaneseq
      %v3187 = vshrl.u32 %v3186, 7
      %v3188 = vsub.s32 %v3185, %v3187
      %v3189 = vrot.slane %v3175, %v3188
      %v3190 = vcombine.high %v3182, %v3182
      %v3191 = vcombine.high %v3189, %v3189
      %v3192 = vcombine.high %v2904, %v2904
      %v3194 = vunpack.c.l.s4 1983009808
      %v3195 = vunpack.c.0.s8 %v3194
      %v3196 = vlaneseq
      %v3197 = vshrl.u32 %v3196, 7
      %v3198 = vsub.s32 %v3195, %v3197
      %v3199 = vrot.slane %v2904, %v3198
      %v3201 = vunpack.c.l.s4 1983009808
      %v3202 = vunpack.c.0.s8 %v3201
      %v3203 = vlaneseq
      %v3204 = vshrl.u32 %v3203, 7
      %v3205 = vsub.s32 %v3202, %v3204
      %v3206 = vrot.slane %v3192, %v3205
      %v3207 = vcombine.high %v3199, %v3199
      %v3208 = vcombine.high %v3206, %v3206
      %v3209 = vcombine.high %v2905, %v2905
      %v3211 = vunpack.c.l.s4 1983009808
      %v3212 = vunpack.c.0.s8 %v3211
      %v3213 = vlaneseq
      %v3214 = vshrl.u32 %v3213, 7
      %v3215 = vsub.s32 %v3212, %v3214
      %v3216 = vrot.slane %v2905, %v3215
      %v3218 = vunpack.c.l.s4 1983009808
      %v3219 = vunpack.c.0.s8 %v3218
      %v3220 = vlaneseq
      %v3221 = vshrl.u32 %v3220, 7
      %v3222 = vsub.s32 %v3219, %v3221
      %v3223 = vrot.slane %v3209, %v3222
      %v3224 = vcombine.high %v3216, %v3216
      %v3225 = vcombine.high %v3223, %v3223
      %v3226 = vcombine.high %v2906, %v2906
      %v3228 = vunpack.c.l.s4 1983009808
      %v3229 = vunpack.c.0.s8 %v3228
      %v3230 = vlaneseq
      %v3231 = vshrl.u32 %v3230, 7
      %v3232 = vsub.s32 %v3229, %v3231
      %v3233 = vrot.slane %v2906, %v3232
      %v3235 = vunpack.c.l.s4 1983009808
      %v3236 = vunpack.c.0.s8 %v3235
      %v3237 = vlaneseq
      %v3238 = vshrl.u32 %v3237, 7
      %v3239 = vsub.s32 %v3236, %v3238
      %v3240 = vrot.slane %v3226, %v3239
      %v3241 = vcombine.high %v3233, %v3233
      %v3242 = vcombine.high %v3240, %v3240
      %v3243 = vcombine.high %v2907, %v2907
      %v3245 = vunpack.c.l.s4 1983009808
      %v3246 = vunpack.c.0.s8 %v3245
      %v3247 = vlaneseq
      %v3248 = vshrl.u32 %v3247, 7
      %v3249 = vsub.s32 %v3246, %v3248
      %v3250 = vrot.slane %v2907, %v3249
      %v3252 = vunpack.c.l.s4 1983009808
      %v3253 = vunpack.c.0.s8 %v3252
      %v3254 = vlaneseq
      %v3255 = vshrl.u32 %v3254, 7
      %v3256 = vsub.s32 %v3253, %v3255
      %v3257 = vrot.slane %v3243, %v3256
      %v3258 = vcombine.high %v3250, %v3250
      %v3259 = vcombine.high %v3257, %v3257
      %v3260 = vcombine.high %v2908, %v2908
      %v3262 = vunpack.c.l.s4 1983009808
      %v3263 = vunpack.c.0.s8 %v3262
      %v3264 = vlaneseq
      %v3265 = vshrl.u32 %v3264, 7
      %v3266 = vsub.s32 %v3263, %v3265
      %v3267 = vrot.slane %v2908, %v3266
      %v3269 = vunpack.c.l.s4 1983009808
      %v3270 = vunpack.c.0.s8 %v3269
      %v3271 = vlaneseq
      %v3272 = vshrl.u32 %v3271, 7
      %v3273 = vsub.s32 %v3270, %v3272
      %v3274 = vrot.slane %v3260, %v3273
      %v3275 = vcombine.high %v3267, %v3267
      %v3276 = vcombine.high %v3274, %v3274
      %v3277 = vcombine.high %v2909, %v2909
      %v3279 = vunpack.c.l.s4 1983009808
      %v3280 = vunpack.c.0.s8 %v3279
      %v3281 = vlaneseq
      %v3282 = vshrl.u32 %v3281, 7
      %v3283 = vsub.s32 %v3280, %v3282
      %v3284 = vrot.slane %v2909, %v3283
      %v3286 = vunpack.c.l.s4 1983009808
      %v3287 = vunpack.c.0.s8 %v3286
      %v3288 = vlaneseq
      %v3289 = vshrl.u32 %v3288, 7
      %v3290 = vsub.s32 %v3287, %v3289
      %v3291 = vrot.slane %v3277, %v3290
      %v3292 = vcombine.high %v3284, %v3284
      %v3293 = vcombine.high %v3291, %v3291
      %v3294 = vcombine.high %v2910, %v2910
      %v3296 = vunpack.c.l.s4 1983009808
      %v3297 = vunpack.c.0.s8 %v3296
      %v3298 = vlaneseq
      %v3299 = vshrl.u32 %v3298, 7
      %v3300 = vsub.s32 %v3297, %v3299
      %v3301 = vrot.slane %v2910, %v3300
      %v3303 = vunpack.c.l.s4 1983009808
      %v3304 = vunpack.c.0.s8 %v3303
      %v3305 = vlaneseq
      %v3306 = vshrl.u32 %v3305, 7
      %v3307 = vsub.s32 %v3304, %v3306
      %v3308 = vrot.slane %v3294, %v3307
      %v3309 = vcombine.high %v3301, %v3301
      %v3310 = vcombine.high %v3308, %v3308
      %v3311 = vcombine.high %v2911, %v2911
      %v3313 = vunpack.c.l.s4 1983009808
      %v3314 = vunpack.c.0.s8 %v3313
      %v3315 = vlaneseq
      %v3316 = vshrl.u32 %v3315, 7
      %v3317 = vsub.s32 %v3314, %v3316
      %v3318 = vrot.slane %v2911, %v3317
      %v3320 = vunpack.c.l.s4 1983009808
      %v3321 = vunpack.c.0.s8 %v3320
      %v3322 = vlaneseq
      %v3323 = vshrl.u32 %v3322, 7
      %v3324 = vsub.s32 %v3321, %v3323
      %v3325 = vrot.slane %v3311, %v3324
      %v3326 = vcombine.high %v3318, %v3318
      %v3327 = vcombine.high %v3325, %v3325
      %v3328 = vcombine.high %v2912, %v2912
      %v3330 = vunpack.c.l.s4 1983009808
      %v3331 = vunpack.c.0.s8 %v3330
      %v3332 = vlaneseq
      %v3333 = vshrl.u32 %v3332, 7
      %v3334 = vsub.s32 %v3331, %v3333
      %v3335 = vrot.slane %v2912, %v3334
      %v3337 = vunpack.c.l.s4 1983009808
      %v3338 = vunpack.c.0.s8 %v3337
      %v3339 = vlaneseq
      %v3340 = vshrl.u32 %v3339, 7
      %v3341 = vsub.s32 %v3338, %v3340
      %v3342 = vrot.slane %v3328, %v3341
      %v3343 = vcombine.high %v3335, %v3335
      %v3344 = vcombine.high %v3342, %v3342
      %v3345 = vcombine.high %v2913, %v2913
      %v3347 = vunpack.c.l.s4 1983009808
      %v3348 = vunpack.c.0.s8 %v3347
      %v3349 = vlaneseq
      %v3350 = vshrl.u32 %v3349, 7
      %v3351 = vsub.s32 %v3348, %v3350
      %v3352 = vrot.slane %v2913, %v3351
      %v3354 = vunpack.c.l.s4 1983009808
      %v3355 = vunpack.c.0.s8 %v3354
      %v3356 = vlaneseq
      %v3357 = vshrl.u32 %v3356, 7
      %v3358 = vsub.s32 %v3355, %v3357
      %v3359 = vrot.slane %v3345, %v3358
      %v3360 = vcombine.high %v3352, %v3352
      %v3361 = vcombine.high %v3359, %v3359
      %v3362 = vcombine.high %v2914, %v2914
      %v3364 = vunpack.c.l.s4 1983009808
      %v3365 = vunpack.c.0.s8 %v3364
      %v3366 = vlaneseq
      %v3367 = vshrl.u32 %v3366, 7
      %v3368 = vsub.s32 %v3365, %v3367
      %v3369 = vrot.slane %v2914, %v3368
      %v3371 = vunpack.c.l.s4 1983009808
      %v3372 = vunpack.c.0.s8 %v3371
      %v3373 = vlaneseq
      %v3374 = vshrl.u32 %v3373, 7
      %v3375 = vsub.s32 %v3372, %v3374
      %v3376 = vrot.slane %v3362, %v3375
      %v3377 = vcombine.high %v3369, %v3369
      %v3378 = vcombine.high %v3376, %v3376
      %v3379 = vcombine.high %v2915, %v2915
      %v3381 = vunpack.c.l.s4 1983009808
      %v3382 = vunpack.c.0.s8 %v3381
      %v3383 = vlaneseq
      %v3384 = vshrl.u32 %v3383, 7
      %v3385 = vsub.s32 %v3382, %v3384
      %v3386 = vrot.slane %v2915, %v3385
      %v3388 = vunpack.c.l.s4 1983009808
      %v3389 = vunpack.c.0.s8 %v3388
      %v3390 = vlaneseq
      %v3391 = vshrl.u32 %v3390, 7
      %v3392 = vsub.s32 %v3389, %v3391
      %v3393 = vrot.slane %v3379, %v3392
      %v3394 = vcombine.high %v3386, %v3386
      %v3395 = vcombine.high %v3393, %v3393
      %v3396 = vcombine.high %v2916, %v2916
      %v3398 = vunpack.c.l.s4 1983009808
      %v3399 = vunpack.c.0.s8 %v3398
      %v3400 = vlaneseq
      %v3401 = vshrl.u32 %v3400, 7
      %v3402 = vsub.s32 %v3399, %v3401
      %v3403 = vrot.slane %v2916, %v3402
      %v3405 = vunpack.c.l.s4 1983009808
      %v3406 = vunpack.c.0.s8 %v3405
      %v3407 = vlaneseq
      %v3408 = vshrl.u32 %v3407, 7
      %v3409 = vsub.s32 %v3406, %v3408
      %v3410 = vrot.slane %v3396, %v3409
      %v3411 = vcombine.high %v3403, %v3403
      %v3412 = vcombine.high %v3410, %v3410
      %v3413 = vcombine.high %v2917, %v2917
      %v3415 = vunpack.c.l.s4 1983009808
      %v3416 = vunpack.c.0.s8 %v3415
      %v3417 = vlaneseq
      %v3418 = vshrl.u32 %v3417, 7
      %v3419 = vsub.s32 %v3416, %v3418
      %v3420 = vrot.slane %v2917, %v3419
      %v3422 = vunpack.c.l.s4 1983009808
      %v3423 = vunpack.c.0.s8 %v3422
      %v3424 = vlaneseq
      %v3425 = vshrl.u32 %v3424, 7
      %v3426 = vsub.s32 %v3423, %v3425
      %v3427 = vrot.slane %v3413, %v3426
      %v3428 = vcombine.high %v3420, %v3420
      %v3429 = vcombine.high %v3427, %v3427
      %v3430 = vcombine.high %v2918, %v2918
      %v3432 = vunpack.c.l.s4 1983009808
      %v3433 = vunpack.c.0.s8 %v3432
      %v3434 = vlaneseq
      %v3435 = vshrl.u32 %v3434, 7
      %v3436 = vsub.s32 %v3433, %v3435
      %v3437 = vrot.slane %v2918, %v3436
      %v3439 = vunpack.c.l.s4 1983009808
      %v3440 = vunpack.c.0.s8 %v3439
      %v3441 = vlaneseq
      %v3442 = vshrl.u32 %v3441, 7
      %v3443 = vsub.s32 %v3440, %v3442
      %v3444 = vrot.slane %v3430, %v3443
      %v3445 = vcombine.high %v3437, %v3437
      %v3446 = vcombine.high %v3444, %v3444
      %v3447 = vcombine.high %v2919, %v2919
      %v3449 = vunpack.c.l.s4 1983009808
      %v3450 = vunpack.c.0.s8 %v3449
      %v3451 = vlaneseq
      %v3452 = vshrl.u32 %v3451, 7
      %v3453 = vsub.s32 %v3450, %v3452
      %v3454 = vrot.slane %v2919, %v3453
      %v3456 = vunpack.c.l.s4 1983009808
      %v3457 = vunpack.c.0.s8 %v3456
      %v3458 = vlaneseq
      %v3459 = vshrl.u32 %v3458, 7
      %v3460 = vsub.s32 %v3457, %v3459
      %v3461 = vrot.slane %v3447, %v3460
      %v3462 = vcombine.high %v3454, %v3454
      %v3463 = vcombine.high %v3461, %v3461
      %v3464 = vcombine.high %v2920, %v2920
      %v3466 = vunpack.c.l.s4 1983009808
      %v3467 = vunpack.c.0.s8 %v3466
      %v3468 = vlaneseq
      %v3469 = vshrl.u32 %v3468, 7
      %v3470 = vsub.s32 %v3467, %v3469
      %v3471 = vrot.slane %v2920, %v3470
      %v3473 = vunpack.c.l.s4 1983009808
      %v3474 = vunpack.c.0.s8 %v3473
      %v3475 = vlaneseq
      %v3476 = vshrl.u32 %v3475, 7
      %v3477 = vsub.s32 %v3474, %v3476
      %v3478 = vrot.slane %v3464, %v3477
      %v3479 = vcombine.high %v3471, %v3471
      %v3480 = vcombine.high %v3478, %v3478
      %v3481 = vcombine.high %v2921, %v2921
      %v3483 = vunpack.c.l.s4 1983009808
      %v3484 = vunpack.c.0.s8 %v3483
      %v3485 = vlaneseq
      %v3486 = vshrl.u32 %v3485, 7
      %v3487 = vsub.s32 %v3484, %v3486
      %v3488 = vrot.slane %v2921, %v3487
      %v3490 = vunpack.c.l.s4 1983009808
      %v3491 = vunpack.c.0.s8 %v3490
      %v3492 = vlaneseq
      %v3493 = vshrl.u32 %v3492, 7
      %v3494 = vsub.s32 %v3491, %v3493
      %v3495 = vrot.slane %v3481, %v3494
      %v3496 = vcombine.high %v3488, %v3488
      %v3497 = vcombine.high %v3495, %v3495
      %v3626 = vrot.slane %v2961, 7
      %v3627 = vrot.slane %v3626, 2
      %v3628 = vrot.slane %v2969, 7
      %v3629 = vrot.slane %v3628, 2
      %v3630 = vrot.slane %v2968, 7
      %v3631 = vrot.slane %v3630, 2
      %v3632 = vrot.slane %v2970, 7
      %v3633 = vrot.slane %v3632, 2
      %v3634 = vrot.slane %v2978, 7
      %v3635 = vrot.slane %v3634, 2
      %v3636 = vrot.slane %v2986, 7
      %v3637 = vrot.slane %v3636, 2
      %v3638 = vrot.slane %v2985, 7
      %v3639 = vrot.slane %v3638, 2
      %v3640 = vrot.slane %v2987, 7
      %v3641 = vrot.slane %v3640, 2
      %v3642 = vrot.slane %v2995, 7
      %v3643 = vrot.slane %v3642, 2
      %v3644 = vrot.slane %v3003, 7
      %v3645 = vrot.slane %v3644, 2
      %v3646 = vrot.slane %v3002, 7
      %v3647 = vrot.slane %v3646, 2
      %v3648 = vrot.slane %v3004, 7
      %v3649 = vrot.slane %v3648, 2
      %v3650 = vrot.slane %v3012, 7
      %v3651 = vrot.slane %v3650, 2
      %v3652 = vrot.slane %v3020, 7
      %v3653 = vrot.slane %v3652, 2
      %v3654 = vrot.slane %v3019, 7
      %v3655 = vrot.slane %v3654, 2
      %v3656 = vrot.slane %v3021, 7
      %v3657 = vrot.slane %v3656, 2
      %v3658 = vrot.slane %v3029, 7
      %v3659 = vrot.slane %v3658, 2
      %v3660 = vrot.slane %v3037, 7
      %v3661 = vrot.slane %v3660, 2
      %v3662 = vrot.slane %v3036, 7
      %v3663 = vrot.slane %v3662, 2
      %v3664 = vrot.slane %v3038, 7
      %v3665 = vrot.slane %v3664, 2
      %v3666 = vrot.slane %v3046, 7
      %v3667 = vrot.slane %v3666, 2
      %v3668 = vrot.slane %v3054, 7
      %v3669 = vrot.slane %v3668, 2
      %v3670 = vrot.slane %v3053, 7
      %v3671 = vrot.slane %v3670, 2
      %v3672 = vrot.slane %v3055, 7
      %v3673 = vrot.slane %v3672, 2
      %v3674 = vrot.slane %v3063, 7
      %v3675 = vrot.slane %v3674, 2
      %v3676 = vrot.slane %v3071, 7
      %v3677 = vrot.slane %v3676, 2
      %v3678 = vrot.slane %v3070, 7
      %v3679 = vrot.slane %v3678, 2
      %v3680 = vrot.slane %v3072, 7
      %v3681 = vrot.slane %v3680, 2
      %v3682 = vrot.slane %v3080, 7
      %v3683 = vrot.slane %v3682, 2
      %v3684 = vrot.slane %v3088, 7
      %v3685 = vrot.slane %v3684, 2
      %v3686 = vrot.slane %v3087, 7
      %v3687 = vrot.slane %v3686, 2
      %v3688 = vrot.slane %v3089, 7
      %v3689 = vrot.slane %v3688, 2
      %v3690 = vrot.slane %v3097, 7
      %v3691 = vrot.slane %v3690, 2
      %v3692 = vrot.slane %v3105, 7
      %v3693 = vrot.slane %v3692, 2
      %v3694 = vrot.slane %v3104, 7
      %v3695 = vrot.slane %v3694, 2
      %v3696 = vrot.slane %v3106, 7
      %v3697 = vrot.slane %v3696, 2
      %v3698 = vrot.slane %v3114, 7
      %v3699 = vrot.slane %v3698, 2
      %v3700 = vrot.slane %v3122, 7
      %v3701 = vrot.slane %v3700, 2
      %v3702 = vrot.slane %v3121, 7
      %v3703 = vrot.slane %v3702, 2
      %v3704 = vrot.slane %v3123, 7
      %v3705 = vrot.slane %v3704, 2
      %v3706 = vrot.slane %v3131, 7
      %v3707 = vrot.slane %v3706, 2
      %v3708 = vrot.slane %v3139, 7
      %v3709 = vrot.slane %v3708, 2
      %v3710 = vrot.slane %v3138, 7
      %v3711 = vrot.slane %v3710, 2
      %v3712 = vrot.slane %v3140, 7
      %v3713 = vrot.slane %v3712, 2
      %v3714 = vrot.slane %v3148, 7
      %v3715 = vrot.slane %v3714, 2
      %v3716 = vrot.slane %v3156, 7
      %v3717 = vrot.slane %v3716, 2
      %v3718 = vrot.slane %v3155, 7
      %v3719 = vrot.slane %v3718, 2
      %v3720 = vrot.slane %v3157, 7
      %v3721 = vrot.slane %v3720, 2
      %v3722 = vrot.slane %v3165, 7
      %v3723 = vrot.slane %v3722, 2
      %v3724 = vrot.slane %v3173, 7
      %v3725 = vrot.slane %v3724, 2
      %v3726 = vrot.slane %v3172, 7
      %v3727 = vrot.slane %v3726, 2
      %v3728 = vrot.slane %v3174, 7
      %v3729 = vrot.slane %v3728, 2
      %v3730 = vrot.slane %v3182, 7
      %v3731 = vrot.slane %v3730, 2
      %v3732 = vrot.slane %v3190, 7
      %v3733 = vrot.slane %v3732, 2
      %v3734 = vrot.slane %v3189, 7
      %v3735 = vrot.slane %v3734, 2
      %v3736 = vrot.slane %v3191, 7
      %v3737 = vrot.slane %v3736, 2
      %v3738 = vrot.slane %v3199, 7
      %v3739 = vrot.slane %v3738, 2
      %v3740 = vrot.slane %v3207, 7
      %v3741 = vrot.slane %v3740, 2
      %v3742 = vrot.slane %v3206, 7
      %v3743 = vrot.slane %v3742, 2
      %v3744 = vrot.slane %v3208, 7
      %v3745 = vrot.slane %v3744, 2
      %v3746 = vrot.slane %v3216, 7
      %v3747 = vrot.slane %v3746, 2
      %v3748 = vrot.slane %v3224, 7
      %v3749 = vrot.slane %v3748, 2
      %v3750 = vrot.slane %v3223, 7
      %v3751 = vrot.slane %v3750, 2
      %v3752 = vrot.slane %v3225, 7
      %v3753 = vrot.slane %v3752, 2
      %v3754 = vrot.slane %v3233, 7
      %v3755 = vrot.slane %v3754, 2
      %v3756 = vrot.slane %v3241, 7
      %v3757 = vrot.slane %v3756, 2
      %v3758 = vrot.slane %v3240, 7
      %v3759 = vrot.slane %v3758, 2
      %v3760 = vrot.slane %v3242, 7
      %v3761 = vrot.slane %v3760, 2
      %v3762 = vrot.slane %v3250, 7
      %v3763 = vrot.slane %v3762, 2
      %v3764 = vrot.slane %v3258, 7
      %v3765 = vrot.slane %v3764, 2
      %v3766 = vrot.slane %v3257, 7
      %v3767 = vrot.slane %v3766, 2
      %v3768 = vrot.slane %v3259, 7
      %v3769 = vrot.slane %v3768, 2
      %v3770 = vrot.slane %v3267, 7
      %v3771 = vrot.slane %v3770, 2
      %v3772 = vrot.slane %v3275, 7
      %v3773 = vrot.slane %v3772, 2
      %v3774 = vrot.slane %v3274, 7
      %v3775 = vrot.slane %v3774, 2
      %v3776 = vrot.slane %v3276, 7
      %v3777 = vrot.slane %v3776, 2
      %v3778 = vrot.slane %v3284, 7
      %v3779 = vrot.slane %v3778, 2
      %v3780 = vrot.slane %v3292, 7
      %v3781 = vrot.slane %v3780, 2
      %v3782 = vrot.slane %v3291, 7
      %v3783 = vrot.slane %v3782, 2
      %v3784 = vrot.slane %v3293, 7
      %v3785 = vrot.slane %v3784, 2
      %v3786 = vrot.slane %v3301, 7
      %v3787 = vrot.slane %v3786, 2
      %v3788 = vrot.slane %v3309, 7
      %v3789 = vrot.slane %v3788, 2
      %v3790 = vrot.slane %v3308, 7
      %v3791 = vrot.slane %v3790, 2
      %v3792 = vrot.slane %v3310, 7
      %v3793 = vrot.slane %v3792, 2
      %v3794 = vrot.slane %v3318, 7
      %v3795 = vrot.slane %v3794, 2
      %v3796 = vrot.slane %v3326, 7
      %v3797 = vrot.slane %v3796, 2
      %v3798 = vrot.slane %v3325, 7
      %v3799 = vrot.slane %v3798, 2
      %v3800 = vrot.slane %v3327, 7
      %v3801 = vrot.slane %v3800, 2
      %v3802 = vrot.slane %v3335, 7
      %v3803 = vrot.slane %v3802, 2
      %v3804 = vrot.slane %v3343, 7
      %v3805 = vrot.slane %v3804, 2
      %v3806 = vrot.slane %v3342, 7
      %v3807 = vrot.slane %v3806, 2
      %v3808 = vrot.slane %v3344, 7
      %v3809 = vrot.slane %v3808, 2
      %v3810 = vrot.slane %v3352, 7
      %v3811 = vrot.slane %v3810, 2
      %v3812 = vrot.slane %v3360, 7
      %v3813 = vrot.slane %v3812, 2
      %v3814 = vrot.slane %v3359, 7
      %v3815 = vrot.slane %v3814, 2
      %v3816 = vrot.slane %v3361, 7
      %v3817 = vrot.slane %v3816, 2
      %v3818 = vrot.slane %v3369, 7
      %v3819 = vrot.slane %v3818, 2
      %v3820 = vrot.slane %v3377, 7
      %v3821 = vrot.slane %v3820, 2
      %v3822 = vrot.slane %v3376, 7
      %v3823 = vrot.slane %v3822, 2
      %v3824 = vrot.slane %v3378, 7
      %v3825 = vrot.slane %v3824, 2
      %v3826 = vrot.slane %v3386, 7
      %v3827 = vrot.slane %v3826, 2
      %v3828 = vrot.slane %v3394, 7
      %v3829 = vrot.slane %v3828, 2
      %v3830 = vrot.slane %v3393, 7
      %v3831 = vrot.slane %v3830, 2
      %v3832 = vrot.slane %v3395, 7
      %v3833 = vrot.slane %v3832, 2
      %v3834 = vrot.slane %v3403, 7
      %v3835 = vrot.slane %v3834, 2
      %v3836 = vrot.slane %v3411, 7
      %v3837 = vrot.slane %v3836, 2
      %v3838 = vrot.slane %v3410, 7
      %v3839 = vrot.slane %v3838, 2
      %v3840 = vrot.slane %v3412, 7
      %v3841 = vrot.slane %v3840, 2
      %v3842 = vrot.slane %v3420, 7
      %v3843 = vrot.slane %v3842, 2
      %v3844 = vrot.slane %v3428, 7
      %v3845 = vrot.slane %v3844, 2
      %v3846 = vrot.slane %v3427, 7
      %v3847 = vrot.slane %v3846, 2
      %v3848 = vrot.slane %v3429, 7
      %v3849 = vrot.slane %v3848, 2
      %v3850 = vrot.slane %v3437, 7
      %v3851 = vrot.slane %v3850, 2
      %v3852 = vrot.slane %v3445, 7
      %v3853 = vrot.slane %v3852, 2
      %v3854 = vrot.slane %v3444, 7
      %v3855 = vrot.slane %v3854, 2
      %v3856 = vrot.slane %v3446, 7
      %v3857 = vrot.slane %v3856, 2
      %v3858 = vrot.slane %v3454, 7
      %v3859 = vrot.slane %v3858, 2
      %v3860 = vrot.slane %v3462, 7
      %v3861 = vrot.slane %v3860, 2
      %v3862 = vrot.slane %v3461, 7
      %v3863 = vrot.slane %v3862, 2
      %v3864 = vrot.slane %v3463, 7
      %v3865 = vrot.slane %v3864, 2
      %v3866 = vrot.slane %v3471, 7
      %v3867 = vrot.slane %v3866, 2
      %v3868 = vrot.slane %v3479, 7
      %v3869 = vrot.slane %v3868, 2
      %v3870 = vrot.slane %v3478, 7
      %v3871 = vrot.slane %v3870, 2
      %v3872 = vrot.slane %v3480, 7
      %v3873 = vrot.slane %v3872, 2
      %v3874 = vrot.slane %v3488, 7
      %v3875 = vrot.slane %v3874, 2
      %v3876 = vrot.slane %v3496, 7
      %v3877 = vrot.slane %v3876, 2
      %v3878 = vrot.slane %v3495, 7
      %v3879 = vrot.slane %v3878, 2
      %v3880 = vrot.slane %v3497, 7
      %v3881 = vrot.slane %v3880, 2
      %v4010 = vmax.f32 %v2961, %v3627
      %v4011 = vmax.f32 %v2969, %v3629
      %v4012 = vmax.f32 %v2968, %v3631
      %v4013 = vmax.f32 %v2970, %v3633
      %v4014 = vmax.f32 %v2978, %v3635
      %v4015 = vmax.f32 %v2986, %v3637
      %v4016 = vmax.f32 %v2985, %v3639
      %v4017 = vmax.f32 %v2987, %v3641
      %v4018 = vmax.f32 %v2995, %v3643
      %v4019 = vmax.f32 %v3003, %v3645
      %v4020 = vmax.f32 %v3002, %v3647
      %v4021 = vmax.f32 %v3004, %v3649
      %v4022 = vmax.f32 %v3012, %v3651
      %v4023 = vmax.f32 %v3020, %v3653
      %v4024 = vmax.f32 %v3019, %v3655
      %v4025 = vmax.f32 %v3021, %v3657
      %v4026 = vmax.f32 %v3029, %v3659
      %v4027 = vmax.f32 %v3037, %v3661
      %v4028 = vmax.f32 %v3036, %v3663
      %v4029 = vmax.f32 %v3038, %v3665
      %v4030 = vmax.f32 %v3046, %v3667
      %v4031 = vmax.f32 %v3054, %v3669
      %v4032 = vmax.f32 %v3053, %v3671
      %v4033 = vmax.f32 %v3055, %v3673
      %v4034 = vmax.f32 %v3063, %v3675
      %v4035 = vmax.f32 %v3071, %v3677
      %v4036 = vmax.f32 %v3070, %v3679
      %v4037 = vmax.f32 %v3072, %v3681
      %v4038 = vmax.f32 %v3080, %v3683
      %v4039 = vmax.f32 %v3088, %v3685
      %v4040 = vmax.f32 %v3087, %v3687
      %v4041 = vmax.f32 %v3089, %v3689
      %v4042 = vmax.f32 %v3097, %v3691
      %v4043 = vmax.f32 %v3105, %v3693
      %v4044 = vmax.f32 %v3104, %v3695
      %v4045 = vmax.f32 %v3106, %v3697
      %v4046 = vmax.f32 %v3114, %v3699
      %v4047 = vmax.f32 %v3122, %v3701
      %v4048 = vmax.f32 %v3121, %v3703
      %v4049 = vmax.f32 %v3123, %v3705
      %v4050 = vmax.f32 %v3131, %v3707
      %v4051 = vmax.f32 %v3139, %v3709
      %v4052 = vmax.f32 %v3138, %v3711
      %v4053 = vmax.f32 %v3140, %v3713
      %v4054 = vmax.f32 %v3148, %v3715
      %v4055 = vmax.f32 %v3156, %v3717
      %v4056 = vmax.f32 %v3155, %v3719
      %v4057 = vmax.f32 %v3157, %v3721
      %v4058 = vmax.f32 %v3165, %v3723
      %v4059 = vmax.f32 %v3173, %v3725
      %v4060 = vmax.f32 %v3172, %v3727
      %v4061 = vmax.f32 %v3174, %v3729
      %v4062 = vmax.f32 %v3182, %v3731
      %v4063 = vmax.f32 %v3190, %v3733
      %v4064 = vmax.f32 %v3189, %v3735
      %v4065 = vmax.f32 %v3191, %v3737
      %v4066 = vmax.f32 %v3199, %v3739
      %v4067 = vmax.f32 %v3207, %v3741
      %v4068 = vmax.f32 %v3206, %v3743
      %v4069 = vmax.f32 %v3208, %v3745
      %v4070 = vmax.f32 %v3216, %v3747
      %v4071 = vmax.f32 %v3224, %v3749
      %v4072 = vmax.f32 %v3223, %v3751
      %v4073 = vmax.f32 %v3225, %v3753
      %v4074 = vmax.f32 %v3233, %v3755
      %v4075 = vmax.f32 %v3241, %v3757
      %v4076 = vmax.f32 %v3240, %v3759
      %v4077 = vmax.f32 %v3242, %v3761
      %v4078 = vmax.f32 %v3250, %v3763
      %v4079 = vmax.f32 %v3258, %v3765
      %v4080 = vmax.f32 %v3257, %v3767
      %v4081 = vmax.f32 %v3259, %v3769
      %v4082 = vmax.f32 %v3267, %v3771
      %v4083 = vmax.f32 %v3275, %v3773
      %v4084 = vmax.f32 %v3274, %v3775
      %v4085 = vmax.f32 %v3276, %v3777
      %v4086 = vmax.f32 %v3284, %v3779
      %v4087 = vmax.f32 %v3292, %v3781
      %v4088 = vmax.f32 %v3291, %v3783
      %v4089 = vmax.f32 %v3293, %v3785
      %v4090 = vmax.f32 %v3301, %v3787
      %v4091 = vmax.f32 %v3309, %v3789
      %v4092 = vmax.f32 %v3308, %v3791
      %v4093 = vmax.f32 %v3310, %v3793
      %v4094 = vmax.f32 %v3318, %v3795
      %v4095 = vmax.f32 %v3326, %v3797
      %v4096 = vmax.f32 %v3325, %v3799
      %v4097 = vmax.f32 %v3327, %v3801
      %v4098 = vmax.f32 %v3335, %v3803
      %v4099 = vmax.f32 %v3343, %v3805
      %v4100 = vmax.f32 %v3342, %v3807
      %v4101 = vmax.f32 %v3344, %v3809
      %v4102 = vmax.f32 %v3352, %v3811
      %v4103 = vmax.f32 %v3360, %v3813
      %v4104 = vmax.f32 %v3359, %v3815
      %v4105 = vmax.f32 %v3361, %v3817
      %v4106 = vmax.f32 %v3369, %v3819
      %v4107 = vmax.f32 %v3377, %v3821
      %v4108 = vmax.f32 %v3376, %v3823
      %v4109 = vmax.f32 %v3378, %v3825
      %v4110 = vmax.f32 %v3386, %v3827
      %v4111 = vmax.f32 %v3394, %v3829
      %v4112 = vmax.f32 %v3393, %v3831
      %v4113 = vmax.f32 %v3395, %v3833
      %v4114 = vmax.f32 %v3403, %v3835
      %v4115 = vmax.f32 %v3411, %v3837
      %v4116 = vmax.f32 %v3410, %v3839
      %v4117 = vmax.f32 %v3412, %v3841
      %v4118 = vmax.f32 %v3420, %v3843
      %v4119 = vmax.f32 %v3428, %v3845
      %v4120 = vmax.f32 %v3427, %v3847
      %v4121 = vmax.f32 %v3429, %v3849
      %v4122 = vmax.f32 %v3437, %v3851
      %v4123 = vmax.f32 %v3445, %v3853
      %v4124 = vmax.f32 %v3444, %v3855
      %v4125 = vmax.f32 %v3446, %v3857
      %v4126 = vmax.f32 %v3454, %v3859
      %v4127 = vmax.f32 %v3462, %v3861
      %v4128 = vmax.f32 %v3461, %v3863
      %v4129 = vmax.f32 %v3463, %v3865
      %v4130 = vmax.f32 %v3471, %v3867
      %v4131 = vmax.f32 %v3479, %v3869
      %v4132 = vmax.f32 %v3478, %v3871
      %v4133 = vmax.f32 %v3480, %v3873
      %v4134 = vmax.f32 %v3488, %v3875
      %v4135 = vmax.f32 %v3496, %v3877
      %v4136 = vmax.f32 %v3495, %v3879
      %v4137 = vmax.f32 %v3497, %v3881
      %v4138 = vmax.f32 %v4010, %v4018
      %v4139 = vmax.f32 %v4011, %v4019
      %v4140 = vmax.f32 %v4012, %v4020
      %v4141 = vmax.f32 %v4013, %v4021
      %v4142 = vmax.f32 %v4014, %v4022
      %v4143 = vmax.f32 %v4015, %v4023
      %v4144 = vmax.f32 %v4016, %v4024
      %v4145 = vmax.f32 %v4017, %v4025
      %v4146 = vmax.f32 %v4026, %v4034
      %v4147 = vmax.f32 %v4027, %v4035
      %v4148 = vmax.f32 %v4028, %v4036
      %v4149 = vmax.f32 %v4029, %v4037
      %v4150 = vmax.f32 %v4030, %v4038
      %v4151 = vmax.f32 %v4031, %v4039
      %v4152 = vmax.f32 %v4032, %v4040
      %v4153 = vmax.f32 %v4033, %v4041
      %v4154 = vmax.f32 %v4042, %v4050
      %v4155 = vmax.f32 %v4043, %v4051
      %v4156 = vmax.f32 %v4044, %v4052
      %v4157 = vmax.f32 %v4045, %v4053
      %v4158 = vmax.f32 %v4046, %v4054
      %v4159 = vmax.f32 %v4047, %v4055
      %v4160 = vmax.f32 %v4048, %v4056
      %v4161 = vmax.f32 %v4049, %v4057
      %v4162 = vmax.f32 %v4058, %v4066
      %v4163 = vmax.f32 %v4059, %v4067
      %v4164 = vmax.f32 %v4060, %v4068
      %v4165 = vmax.f32 %v4061, %v4069
      %v4166 = vmax.f32 %v4062, %v4070
      %v4167 = vmax.f32 %v4063, %v4071
      %v4168 = vmax.f32 %v4064, %v4072
      %v4169 = vmax.f32 %v4065, %v4073
      %v4170 = vmax.f32 %v4074, %v4082
      %v4171 = vmax.f32 %v4075, %v4083
      %v4172 = vmax.f32 %v4076, %v4084
      %v4173 = vmax.f32 %v4077, %v4085
      %v4174 = vmax.f32 %v4078, %v4086
      %v4175 = vmax.f32 %v4079, %v4087
      %v4176 = vmax.f32 %v4080, %v4088
      %v4177 = vmax.f32 %v4081, %v4089
      %v4178 = vmax.f32 %v4090, %v4098
      %v4179 = vmax.f32 %v4091, %v4099
      %v4180 = vmax.f32 %v4092, %v4100
      %v4181 = vmax.f32 %v4093, %v4101
      %v4182 = vmax.f32 %v4094, %v4102
      %v4183 = vmax.f32 %v4095, %v4103
      %v4184 = vmax.f32 %v4096, %v4104
      %v4185 = vmax.f32 %v4097, %v4105
      %v4186 = vmax.f32 %v4106, %v4114
      %v4187 = vmax.f32 %v4107, %v4115
      %v4188 = vmax.f32 %v4108, %v4116
      %v4189 = vmax.f32 %v4109, %v4117
      %v4190 = vmax.f32 %v4110, %v4118
      %v4191 = vmax.f32 %v4111, %v4119
      %v4192 = vmax.f32 %v4112, %v4120
      %v4193 = vmax.f32 %v4113, %v4121
      %v4194 = vmax.f32 %v4122, %v4130
      %v4195 = vmax.f32 %v4123, %v4131
      %v4196 = vmax.f32 %v4124, %v4132
      %v4197 = vmax.f32 %v4125, %v4133
      %v4198 = vmax.f32 %v4126, %v4134
      %v4199 = vmax.f32 %v4127, %v4135
      %v4200 = vmax.f32 %v4128, %v4136
      %v4201 = vmax.f32 %v4129, %v4137
      %v4202 = vpack.c.bf16 %v4138, %v4138
      %v4203 = vpack.c.bf16 %v4139, %v4139
      %v4204 = vpack.c.bf16 %v4140, %v4140
      %v4205 = vpack.c.bf16 %v4141, %v4141
      %v4206 = vpack.c.bf16 %v4142, %v4142
      %v4207 = vpack.c.bf16 %v4143, %v4143
      %v4208 = vpack.c.bf16 %v4144, %v4144
      %v4209 = vpack.c.bf16 %v4145, %v4145
      %v4210 = vpack.c.bf16 %v4146, %v4146
      %v4211 = vpack.c.bf16 %v4147, %v4147
      %v4212 = vpack.c.bf16 %v4148, %v4148
      %v4213 = vpack.c.bf16 %v4149, %v4149
      %v4214 = vpack.c.bf16 %v4150, %v4150
      %v4215 = vpack.c.bf16 %v4151, %v4151
      %v4216 = vpack.c.bf16 %v4152, %v4152
      %v4217 = vpack.c.bf16 %v4153, %v4153
      %v4218 = vpack.c.bf16 %v4154, %v4154
      %v4219 = vpack.c.bf16 %v4155, %v4155
      %v4220 = vpack.c.bf16 %v4156, %v4156
      %v4221 = vpack.c.bf16 %v4157, %v4157
      %v4222 = vpack.c.bf16 %v4158, %v4158
      %v4223 = vpack.c.bf16 %v4159, %v4159
      %v4224 = vpack.c.bf16 %v4160, %v4160
      %v4225 = vpack.c.bf16 %v4161, %v4161
      %v4226 = vpack.c.bf16 %v4162, %v4162
      %v4227 = vpack.c.bf16 %v4163, %v4163
      %v4228 = vpack.c.bf16 %v4164, %v4164
      %v4229 = vpack.c.bf16 %v4165, %v4165
      %v4230 = vpack.c.bf16 %v4166, %v4166
      %v4231 = vpack.c.bf16 %v4167, %v4167
      %v4232 = vpack.c.bf16 %v4168, %v4168
      %v4233 = vpack.c.bf16 %v4169, %v4169
      %v4234 = vpack.c.bf16 %v4170, %v4170
      %v4235 = vpack.c.bf16 %v4171, %v4171
      %v4236 = vpack.c.bf16 %v4172, %v4172
      %v4237 = vpack.c.bf16 %v4173, %v4173
      %v4238 = vpack.c.bf16 %v4174, %v4174
      %v4239 = vpack.c.bf16 %v4175, %v4175
      %v4240 = vpack.c.bf16 %v4176, %v4176
      %v4241 = vpack.c.bf16 %v4177, %v4177
      %v4242 = vpack.c.bf16 %v4178, %v4178
      %v4243 = vpack.c.bf16 %v4179, %v4179
      %v4244 = vpack.c.bf16 %v4180, %v4180
      %v4245 = vpack.c.bf16 %v4181, %v4181
      %v4246 = vpack.c.bf16 %v4182, %v4182
      %v4247 = vpack.c.bf16 %v4183, %v4183
      %v4248 = vpack.c.bf16 %v4184, %v4184
      %v4249 = vpack.c.bf16 %v4185, %v4185
      %v4250 = vpack.c.bf16 %v4186, %v4186
      %v4251 = vpack.c.bf16 %v4187, %v4187
      %v4252 = vpack.c.bf16 %v4188, %v4188
      %v4253 = vpack.c.bf16 %v4189, %v4189
      %v4254 = vpack.c.bf16 %v4190, %v4190
      %v4255 = vpack.c.bf16 %v4191, %v4191
      %v4256 = vpack.c.bf16 %v4192, %v4192
      %v4257 = vpack.c.bf16 %v4193, %v4193
      %v4258 = vpack.c.bf16 %v4194, %v4194
      %v4259 = vpack.c.bf16 %v4195, %v4195
      %v4260 = vpack.c.bf16 %v4196, %v4196
      %v4261 = vpack.c.bf16 %v4197, %v4197
      %v4262 = vpack.c.bf16 %v4198, %v4198
      %v4263 = vpack.c.bf16 %v4199, %v4199
      %v4264 = vpack.c.bf16 %v4200, %v4200
      %v4265 = vpack.c.bf16 %v4201, %v4201
      %v4330 = vunpack.c.l.b16 %v4202
      %v4331 = vunpack.c.l.b16 %v4203
      %v4332 = vunpack.c.l.b16 %v4204
      %v4333 = vunpack.c.l.b16 %v4205
      %v4334 = vunpack.c.l.b16 %v4206
      %v4335 = vunpack.c.l.b16 %v4207
      %v4336 = vunpack.c.l.b16 %v4208
      %v4337 = vunpack.c.l.b16 %v4209
      %v4338 = vunpack.c.l.b16 %v4210
      %v4339 = vunpack.c.l.b16 %v4211
      %v4340 = vunpack.c.l.b16 %v4212
      %v4341 = vunpack.c.l.b16 %v4213
      %v4342 = vunpack.c.l.b16 %v4214
      %v4343 = vunpack.c.l.b16 %v4215
      %v4344 = vunpack.c.l.b16 %v4216
      %v4345 = vunpack.c.l.b16 %v4217
      %v4346 = vunpack.c.l.b16 %v4218
      %v4347 = vunpack.c.l.b16 %v4219
      %v4348 = vunpack.c.l.b16 %v4220
      %v4349 = vunpack.c.l.b16 %v4221
      %v4350 = vunpack.c.l.b16 %v4222
      %v4351 = vunpack.c.l.b16 %v4223
      %v4352 = vunpack.c.l.b16 %v4224
      %v4353 = vunpack.c.l.b16 %v4225
      %v4354 = vunpack.c.l.b16 %v4226
      %v4355 = vunpack.c.l.b16 %v4227
      %v4356 = vunpack.c.l.b16 %v4228
      %v4357 = vunpack.c.l.b16 %v4229
      %v4358 = vunpack.c.l.b16 %v4230
      %v4359 = vunpack.c.l.b16 %v4231
      %v4360 = vunpack.c.l.b16 %v4232
      %v4361 = vunpack.c.l.b16 %v4233
      %v4362 = vunpack.c.l.b16 %v4234
      %v4363 = vunpack.c.l.b16 %v4235
      %v4364 = vunpack.c.l.b16 %v4236
      %v4365 = vunpack.c.l.b16 %v4237
      %v4366 = vunpack.c.l.b16 %v4238
      %v4367 = vunpack.c.l.b16 %v4239
      %v4368 = vunpack.c.l.b16 %v4240
      %v4369 = vunpack.c.l.b16 %v4241
      %v4370 = vunpack.c.l.b16 %v4242
      %v4371 = vunpack.c.l.b16 %v4243
      %v4372 = vunpack.c.l.b16 %v4244
      %v4373 = vunpack.c.l.b16 %v4245
      %v4374 = vunpack.c.l.b16 %v4246
      %v4375 = vunpack.c.l.b16 %v4247
      %v4376 = vunpack.c.l.b16 %v4248
      %v4377 = vunpack.c.l.b16 %v4249
      %v4378 = vunpack.c.l.b16 %v4250
      %v4379 = vunpack.c.l.b16 %v4251
      %v4380 = vunpack.c.l.b16 %v4252
      %v4381 = vunpack.c.l.b16 %v4253
      %v4382 = vunpack.c.l.b16 %v4254
      %v4383 = vunpack.c.l.b16 %v4255
      %v4384 = vunpack.c.l.b16 %v4256
      %v4385 = vunpack.c.l.b16 %v4257
      %v4386 = vunpack.c.l.b16 %v4258
      %v4387 = vunpack.c.l.b16 %v4259
      %v4388 = vunpack.c.l.b16 %v4260
      %v4389 = vunpack.c.l.b16 %v4261
      %v4390 = vunpack.c.l.b16 %v4262
      %v4391 = vunpack.c.l.b16 %v4263
      %v4392 = vunpack.c.l.b16 %v4264
      %v4393 = vunpack.c.l.b16 %v4265
      %v4394 = vpack.c.b16 %v4330, %v4330
      %v4395 = vpack.c.b16 %v4331, %v4331
      %v4396 = vpack.c.b16 %v4332, %v4332
      %v4397 = vpack.c.b16 %v4333, %v4333
      %v4398 = vpack.c.b16 %v4334, %v4334
      %v4399 = vpack.c.b16 %v4335, %v4335
      %v4400 = vpack.c.b16 %v4336, %v4336
      %v4401 = vpack.c.b16 %v4337, %v4337
      %v4402 = vpack.c.b16 %v4338, %v4338
      %v4403 = vpack.c.b16 %v4339, %v4339
      %v4404 = vpack.c.b16 %v4340, %v4340
      %v4405 = vpack.c.b16 %v4341, %v4341
      %v4406 = vpack.c.b16 %v4342, %v4342
      %v4407 = vpack.c.b16 %v4343, %v4343
      %v4408 = vpack.c.b16 %v4344, %v4344
      %v4409 = vpack.c.b16 %v4345, %v4345
      %v4410 = vpack.c.b16 %v4346, %v4346
      %v4411 = vpack.c.b16 %v4347, %v4347
      %v4412 = vpack.c.b16 %v4348, %v4348
      %v4413 = vpack.c.b16 %v4349, %v4349
      %v4414 = vpack.c.b16 %v4350, %v4350
      %v4415 = vpack.c.b16 %v4351, %v4351
      %v4416 = vpack.c.b16 %v4352, %v4352
      %v4417 = vpack.c.b16 %v4353, %v4353
      %v4418 = vpack.c.b16 %v4354, %v4354
      %v4419 = vpack.c.b16 %v4355, %v4355
      %v4420 = vpack.c.b16 %v4356, %v4356
      %v4421 = vpack.c.b16 %v4357, %v4357
      %v4422 = vpack.c.b16 %v4358, %v4358
      %v4423 = vpack.c.b16 %v4359, %v4359
      %v4424 = vpack.c.b16 %v4360, %v4360
      %v4425 = vpack.c.b16 %v4361, %v4361
      %v4426 = vpack.c.b16 %v4362, %v4362
      %v4427 = vpack.c.b16 %v4363, %v4363
      %v4428 = vpack.c.b16 %v4364, %v4364
      %v4429 = vpack.c.b16 %v4365, %v4365
      %v4430 = vpack.c.b16 %v4366, %v4366
      %v4431 = vpack.c.b16 %v4367, %v4367
      %v4432 = vpack.c.b16 %v4368, %v4368
      %v4433 = vpack.c.b16 %v4369, %v4369
      %v4434 = vpack.c.b16 %v4370, %v4370
      %v4435 = vpack.c.b16 %v4371, %v4371
      %v4436 = vpack.c.b16 %v4372, %v4372
      %v4437 = vpack.c.b16 %v4373, %v4373
      %v4438 = vpack.c.b16 %v4374, %v4374
      %v4439 = vpack.c.b16 %v4375, %v4375
      %v4440 = vpack.c.b16 %v4376, %v4376
      %v4441 = vpack.c.b16 %v4377, %v4377
      %v4442 = vpack.c.b16 %v4378, %v4378
      %v4443 = vpack.c.b16 %v4379, %v4379
      %v4444 = vpack.c.b16 %v4380, %v4380
      %v4445 = vpack.c.b16 %v4381, %v4381
      %v4446 = vpack.c.b16 %v4382, %v4382
      %v4447 = vpack.c.b16 %v4383, %v4383
      %v4448 = vpack.c.b16 %v4384, %v4384
      %v4449 = vpack.c.b16 %v4385, %v4385
      %v4450 = vpack.c.b16 %v4386, %v4386
      %v4451 = vpack.c.b16 %v4387, %v4387
      %v4452 = vpack.c.b16 %v4388, %v4388
      %v4453 = vpack.c.b16 %v4389, %v4389
      %v4454 = vpack.c.b16 %v4390, %v4390
      %v4455 = vpack.c.b16 %v4391, %v4391
      %v4456 = vpack.c.b16 %v4392, %v4392
      %v4457 = vpack.c.b16 %v4393, %v4393
      %v4458 = vunpack.c.l.b16 %v4394
      %v4459 = vunpack.c.l.b16 %v4395
      %v4460 = vunpack.c.l.b16 %v4396
      %v4461 = vunpack.c.l.b16 %v4397
      %v4462 = vunpack.c.l.b16 %v4398
      %v4463 = vunpack.c.l.b16 %v4399
      %v4464 = vunpack.c.l.b16 %v4400
      %v4465 = vunpack.c.l.b16 %v4401
      %v4466 = vunpack.c.l.b16 %v4402
      %v4467 = vunpack.c.l.b16 %v4403
      %v4468 = vunpack.c.l.b16 %v4404
      %v4469 = vunpack.c.l.b16 %v4405
      %v4470 = vunpack.c.l.b16 %v4406
      %v4471 = vunpack.c.l.b16 %v4407
      %v4472 = vunpack.c.l.b16 %v4408
      %v4473 = vunpack.c.l.b16 %v4409
      %v4474 = vunpack.c.l.b16 %v4410
      %v4475 = vunpack.c.l.b16 %v4411
      %v4476 = vunpack.c.l.b16 %v4412
      %v4477 = vunpack.c.l.b16 %v4413
      %v4478 = vunpack.c.l.b16 %v4414
      %v4479 = vunpack.c.l.b16 %v4415
      %v4480 = vunpack.c.l.b16 %v4416
      %v4481 = vunpack.c.l.b16 %v4417
      %v4482 = vunpack.c.l.b16 %v4418
      %v4483 = vunpack.c.l.b16 %v4419
      %v4484 = vunpack.c.l.b16 %v4420
      %v4485 = vunpack.c.l.b16 %v4421
      %v4486 = vunpack.c.l.b16 %v4422
      %v4487 = vunpack.c.l.b16 %v4423
      %v4488 = vunpack.c.l.b16 %v4424
      %v4489 = vunpack.c.l.b16 %v4425
      %v4490 = vunpack.c.l.b16 %v4426
      %v4491 = vunpack.c.l.b16 %v4427
      %v4492 = vunpack.c.l.b16 %v4428
      %v4493 = vunpack.c.l.b16 %v4429
      %v4494 = vunpack.c.l.b16 %v4430
      %v4495 = vunpack.c.l.b16 %v4431
      %v4496 = vunpack.c.l.b16 %v4432
      %v4497 = vunpack.c.l.b16 %v4433
      %v4498 = vunpack.c.l.b16 %v4434
      %v4499 = vunpack.c.l.b16 %v4435
      %v4500 = vunpack.c.l.b16 %v4436
      %v4501 = vunpack.c.l.b16 %v4437
      %v4502 = vunpack.c.l.b16 %v4438
      %v4503 = vunpack.c.l.b16 %v4439
      %v4504 = vunpack.c.l.b16 %v4440
      %v4505 = vunpack.c.l.b16 %v4441
      %v4506 = vunpack.c.l.b16 %v4442
      %v4507 = vunpack.c.l.b16 %v4443
      %v4508 = vunpack.c.l.b16 %v4444
      %v4509 = vunpack.c.l.b16 %v4445
      %v4510 = vunpack.c.l.b16 %v4446
      %v4511 = vunpack.c.l.b16 %v4447
      %v4512 = vunpack.c.l.b16 %v4448
      %v4513 = vunpack.c.l.b16 %v4449
      %v4514 = vunpack.c.l.b16 %v4450
      %v4515 = vunpack.c.l.b16 %v4451
      %v4516 = vunpack.c.l.b16 %v4452
      %v4517 = vunpack.c.l.b16 %v4453
      %v4518 = vunpack.c.l.b16 %v4454
      %v4519 = vunpack.c.l.b16 %v4455
      %v4520 = vunpack.c.l.b16 %v4456
      %v4521 = vunpack.c.l.b16 %v4457
      %v4522 = vrot.slane %v4459, 7
      %vm4523 = vcmask 1041409
      %v4524 = vsel %vm4523, %v4522, %v4458
      %v4525 = vrot.slane %v4460, 6
      %vm4526 = vcmask 1042434
      %v4527 = vsel %vm4526, %v4525, %v4524
      %v4528 = vrot.slane %v4461, 5
      %vm4529 = vcmask 1043459
      %v4530 = vsel %vm4529, %v4528, %v4527
      %v4531 = vrot.slane %v4462, 4
      %vm4532 = vcmask 1044484
      %v4533 = vsel %vm4532, %v4531, %v4530
      %v4534 = vrot.slane %v4463, 3
      %vm4535 = vcmask 1045509
      %v4536 = vsel %vm4535, %v4534, %v4533
      %v4537 = vrot.slane %v4464, 2
      %vm4538 = vcmask 1046534
      %v4539 = vsel %vm4538, %v4537, %v4536
      %v4540 = vrot.slane %v4465, 1
      %vm4541 = vcmask 1047559
      %v4542 = vsel %vm4541, %v4540, %v4539
      %v4543 = vrot.slane %v4467, 7
      %v4544 = vsel %vm4523, %v4543, %v4466
      %v4545 = vrot.slane %v4468, 6
      %v4546 = vsel %vm4526, %v4545, %v4544
      %v4547 = vrot.slane %v4469, 5
      %v4548 = vsel %vm4529, %v4547, %v4546
      %v4549 = vrot.slane %v4470, 4
      %v4550 = vsel %vm4532, %v4549, %v4548
      %v4551 = vrot.slane %v4471, 3
      %v4552 = vsel %vm4535, %v4551, %v4550
      %v4553 = vrot.slane %v4472, 2
      %v4554 = vsel %vm4538, %v4553, %v4552
      %v4555 = vrot.slane %v4473, 1
      %v4556 = vsel %vm4541, %v4555, %v4554
      %v4557 = vrot.slane %v4475, 7
      %v4558 = vsel %vm4523, %v4557, %v4474
      %v4559 = vrot.slane %v4476, 6
      %v4560 = vsel %vm4526, %v4559, %v4558
      %v4561 = vrot.slane %v4477, 5
      %v4562 = vsel %vm4529, %v4561, %v4560
      %v4563 = vrot.slane %v4478, 4
      %v4564 = vsel %vm4532, %v4563, %v4562
      %v4565 = vrot.slane %v4479, 3
      %v4566 = vsel %vm4535, %v4565, %v4564
      %v4567 = vrot.slane %v4480, 2
      %v4568 = vsel %vm4538, %v4567, %v4566
      %v4569 = vrot.slane %v4481, 1
      %v4570 = vsel %vm4541, %v4569, %v4568
      %v4571 = vrot.slane %v4483, 7
      %v4572 = vsel %vm4523, %v4571, %v4482
      %v4573 = vrot.slane %v4484, 6
      %v4574 = vsel %vm4526, %v4573, %v4572
      %v4575 = vrot.slane %v4485, 5
      %v4576 = vsel %vm4529, %v4575, %v4574
      %v4577 = vrot.slane %v4486, 4
      %v4578 = vsel %vm4532, %v4577, %v4576
      %v4579 = vrot.slane %v4487, 3
      %v4580 = vsel %vm4535, %v4579, %v4578
      %v4581 = vrot.slane %v4488, 2
      %v4582 = vsel %vm4538, %v4581, %v4580
      %v4583 = vrot.slane %v4489, 1
      %v4584 = vsel %vm4541, %v4583, %v4582
      %v4585 = vrot.slane %v4491, 7
      %v4586 = vsel %vm4523, %v4585, %v4490
      %v4587 = vrot.slane %v4492, 6
      %v4588 = vsel %vm4526, %v4587, %v4586
      %v4589 = vrot.slane %v4493, 5
      %v4590 = vsel %vm4529, %v4589, %v4588
      %v4591 = vrot.slane %v4494, 4
      %v4592 = vsel %vm4532, %v4591, %v4590
      %v4593 = vrot.slane %v4495, 3
      %v4594 = vsel %vm4535, %v4593, %v4592
      %v4595 = vrot.slane %v4496, 2
      %v4596 = vsel %vm4538, %v4595, %v4594
      %v4597 = vrot.slane %v4497, 1
      %v4598 = vsel %vm4541, %v4597, %v4596
      %v4599 = vrot.slane %v4499, 7
      %v4600 = vsel %vm4523, %v4599, %v4498
      %v4601 = vrot.slane %v4500, 6
      %v4602 = vsel %vm4526, %v4601, %v4600
      %v4603 = vrot.slane %v4501, 5
      %v4604 = vsel %vm4529, %v4603, %v4602
      %v4605 = vrot.slane %v4502, 4
      %v4606 = vsel %vm4532, %v4605, %v4604
      %v4607 = vrot.slane %v4503, 3
      %v4608 = vsel %vm4535, %v4607, %v4606
      %v4609 = vrot.slane %v4504, 2
      %v4610 = vsel %vm4538, %v4609, %v4608
      %v4611 = vrot.slane %v4505, 1
      %v4612 = vsel %vm4541, %v4611, %v4610
      %v4613 = vrot.slane %v4507, 7
      %v4614 = vsel %vm4523, %v4613, %v4506
      %v4615 = vrot.slane %v4508, 6
      %v4616 = vsel %vm4526, %v4615, %v4614
      %v4617 = vrot.slane %v4509, 5
      %v4618 = vsel %vm4529, %v4617, %v4616
      %v4619 = vrot.slane %v4510, 4
      %v4620 = vsel %vm4532, %v4619, %v4618
      %v4621 = vrot.slane %v4511, 3
      %v4622 = vsel %vm4535, %v4621, %v4620
      %v4623 = vrot.slane %v4512, 2
      %v4624 = vsel %vm4538, %v4623, %v4622
      %v4625 = vrot.slane %v4513, 1
      %v4626 = vsel %vm4541, %v4625, %v4624
      %v4627 = vrot.slane %v4515, 7
      %v4628 = vsel %vm4523, %v4627, %v4514
      %v4629 = vrot.slane %v4516, 6
      %v4630 = vsel %vm4526, %v4629, %v4628
      %v4631 = vrot.slane %v4517, 5
      %v4632 = vsel %vm4529, %v4631, %v4630
      %v4633 = vrot.slane %v4518, 4
      %v4634 = vsel %vm4532, %v4633, %v4632
      %v4635 = vrot.slane %v4519, 3
      %v4636 = vsel %vm4535, %v4635, %v4634
      %v4637 = vrot.slane %v4520, 2
      %v4638 = vsel %vm4538, %v4637, %v4636
      %v4639 = vrot.slane %v4521, 1
      %v4640 = vsel %vm4541, %v4639, %v4638
      %v4641 = vpack.c.b16 %v4542, %v4542
      %v4642 = vpack.c.b16 %v4556, %v4556
      %v4643 = vpack.c.b16 %v4570, %v4570
      %v4644 = vpack.c.b16 %v4584, %v4584
      %v4645 = vpack.c.b16 %v4598, %v4598
      %v4646 = vpack.c.b16 %v4612, %v4612
      %v4647 = vpack.c.b16 %v4626, %v4626
      %v4648 = vpack.c.b16 %v4640, %v4640
      %vm4657 = vcmask 519168
      %4658 = vst.msk [vmem:[%s224] sm:$0xf] %vm4657, %v4641
      %4659 = vst.msk [vmem:[%s224 + $0x4] sm:$0xf] %vm4657, %v4642
      %4660 = vst.msk [vmem:[%s224 + $0x8] sm:$0xf] %vm4657, %v4643
      %4661 = vst.msk [vmem:[%s224 + $0xc] sm:$0xf] %vm4657, %v4644
      %4662 = vst.msk [vmem:[%s224 + $0x10] sm:$0xf] %vm4657, %v4645
      %4663 = vst.msk [vmem:[%s224 + $0x14] sm:$0xf] %vm4657, %v4646
      %4664 = vst.msk [vmem:[%s224 + $0x18] sm:$0xf] %vm4657, %v4647
      %4665 = vst.msk [vmem:[%s224 + $0x1c] sm:$0xf] %vm4657, %v4648
      %p4666 = scmp.lt.s32.totalorder %s16, 1
      %s4667 = scalar_select %p4666, %s16, 1
      %s4668 = smul.addr %s4667, 8
      %s4669 = smul.addr %s4668, 4
      %s4670 = scalar_lea.vmem %s5, %s4669
      // Predicated region
      $region41: #{cnn_forward.2} parent=39 // pred_check
        %p4671 = pneg %p144
      $region42: #{cnn_forward.2} parent=39 // pred_check_branch
        %4673 = sbr.rel (%p4671) target = $region44
      $region43: #{cnn_forward.2} parent=39 // pred_region
        _
      $region44: #{cnn_forward.2} parent=39 // pred_fallthru
        _
    $region40: #{cnn_forward.2} parent=5 // pred_fallthru
      _
    %p4674 = scmp.le.s32.totalorder 2, %s11
    // Predicated region
    $region45: #{cnn_forward.2} parent=5 // pred_check
      %p4675 = pneg %p4674
    $region46: #{cnn_forward.2} parent=5 // pred_check_branch
      %4677 = sbr.rel (%p4675) target = $region48
    $region47: #{cnn_forward.2} parent=5 // pred_region
      %s4678 = ssub.s32 %s11, 2
      // Predicated region
      $region49: #{cnn_forward.2} parent=47 // pred_check
        %p4679 = pneg %p150
      $region50: #{cnn_forward.2} parent=47 // pred_check_branch
        %4681 = sbr.rel (%p4679) target = $region52
      $region51: #{cnn_forward.2} parent=47 // pred_region
        %p4682 = scmp.lt.s32.totalorder %s17, 1
        %s4683 = scalar_select %p4682, %s17, 1
        %s4684 = smul.addr %s4683, 8
        %s4685 = smul.addr %s4684, 4
        %s4686 = scalar_lea.vmem %s5, %s4685
      $region52: #{cnn_forward.2} parent=47 // pred_fallthru
        _
    $region48: #{cnn_forward.2} parent=5 // pred_fallthru
      _
  $region6: #{cnn_forward.2} parent=0 // loop_footer
    %s15 = sadd.s32 1, %s11
  $region7: #{cnn_forward.2} parent=0 // loop_footer_branch
    %10 = sbr.rel target = $region3
  $region8: #{cnn_forward.2} parent=0 // loop_exit
    _

// kernel: cnn_forward.3
$region0: #{cnn_forward.3}
  #allocation0 [shape = 'u32[]', space=smem, size = 0x4, offset = 0x4, fixed_abs, tag = 'smem constant byte address 0x4 - core index']
  #allocation1 [shape = 'u32[144,128]{1,0:T(1,128)}', space=vmem, size = 0x12000, scoped, tag = 'internal scratch']
  #allocation2 [shape = 'f32[2,128]{1,0:T(2,128)}', space=vmem, size = 0x400, scoped, tag = 'scratch operand']
  %s0 = inlined_call_operand.vmem [shape: bf16[2,4096], index: 0, kind: input, shape index: {}]
  %s1 = inlined_call_operand.vmem [shape: bf16[4096,128], index: 1, kind: input, shape index: {}]
  %s2 = inlined_call_operand.vmem [shape: f32[1,128], index: 2, kind: input, shape index: {}]
  %s3 = inlined_call_operand.vmem [shape: f32[128,3], index: 3, kind: input, shape index: {}]
  %s4 = inlined_call_operand.vmem [shape: f32[1,3], index: 4, kind: input, shape index: {}]
  %s5 = inlined_call_operand.hbm [shape: f32[2,3], index: 5, kind: output, shape index: {}]
  %s6 = sld [smem:[#allocation0]]
  $region38: #{cnn_forward.3} parent=0
    _
  %s8 = ssub.s32 1, %s6
  %s9 = scalar_select 0, %s8, %s6
  $region1: #{cnn_forward.3} parent=0
    #allocation3 [shape = 'u8[1024]{0}', space=vmem, size = 0x400, scoped, tag = 'output window, operand 0, single buffered']
    #allocation4 [shape = 's32[1]{0}', space=sflag, size = 0x4, scoped, tag = 'scoped memory for cnn_forward.3']
    %10 = vsyncpa [#allocation4], 0
    // Predicated region
    $region2: #{cnn_forward.3} parent=1 // pred_check
      _
    $region3: #{cnn_forward.3} parent=1 // pred_check_branch
      %12 = sbr.rel (0) target = $region5
    $region4: #{cnn_forward.3} parent=1 // pred_region
      _
    $region5: #{cnn_forward.3} parent=1 // pred_fallthru
      _
    // Predicated region
    $region6: #{cnn_forward.3} parent=1 // pred_check
      _
    $region7: #{cnn_forward.3} parent=1 // pred_check_branch
      %14 = sbr.rel (0) target = $region9
    $region8: #{cnn_forward.3} parent=1 // pred_region
      _
    $region9: #{cnn_forward.3} parent=1 // pred_fallthru
      _
    // Predicated region
    $region10: #{cnn_forward.3} parent=1 // pred_check
      _
    $region11: #{cnn_forward.3} parent=1 // pred_check_branch
      %16 = sbr.rel (0) target = $region13
    $region12: #{cnn_forward.3} parent=1 // pred_region
      _
    $region13: #{cnn_forward.3} parent=1 // pred_fallthru
      _
    // Predicated region
    $region14: #{cnn_forward.3} parent=1 // pred_check
      _
    $region15: #{cnn_forward.3} parent=1 // pred_check_branch
      %18 = sbr.rel (0) target = $region17
    $region16: #{cnn_forward.3} parent=1 // pred_region
      _
    $region17: #{cnn_forward.3} parent=1 // pred_fallthru
      _
    // Predicated region
    $region18: #{cnn_forward.3} parent=1 // pred_check
      _
    $region19: #{cnn_forward.3} parent=1 // pred_check_branch
      %20 = sbr.rel (0) target = $region21
    $region20: #{cnn_forward.3} parent=1 // pred_region
      _
    $region21: #{cnn_forward.3} parent=1 // pred_fallthru
      _
    %p22 = scmp.eq.s32.totalorder 0, 0
    // Predicated region
    $region22: #{cnn_forward.3} parent=1 // pred_check
      %p23 = pneg %p22
    $region23: #{cnn_forward.3} parent=1 // pred_check_branch
      %25 = sbr.rel (%p23) target = $region25
    $region24: #{cnn_forward.3} parent=1 // pred_region
      %26 = vst [vmem:[#allocation2] sm:$0x3] 0.0
    $region25: #{cnn_forward.3} parent=1 // pred_fallthru
      _
    %v27 = vld [vmem:[#allocation2] sm:$0x3]
    %v28 = vld [vmem:[%s0] sm:$0xff]
    %v29 = vld [vmem:[%s0 + $0x8] sm:$0xff]
    %v30 = vld [vmem:[%s0 + $0x10] sm:$0xff]
    %v31 = vld [vmem:[%s0 + $0x18] sm:$0xff]
    %v32 = vld [vmem:[%s1] sm:$0xf]
    %v33 = vld [vmem:[%s1 + $0x4] sm:$0xf]
    %v34 = vld [vmem:[%s1 + $0x8] sm:$0xf]
    %v35 = vld [vmem:[%s1 + $0xc] sm:$0xf]
    %v36 = vld [vmem:[%s1 + $0x10] sm:$0xf]
    %v37 = vld [vmem:[%s1 + $0x14] sm:$0xf]
    %v38 = vld [vmem:[%s1 + $0x18] sm:$0xf]
    %v39 = vld [vmem:[%s1 + $0x1c] sm:$0xf]
    %v40 = vld [vmem:[%s1 + $0x20] sm:$0xf]
    %v41 = vld [vmem:[%s1 + $0x24] sm:$0xf]
    %v42 = vld [vmem:[%s1 + $0x28] sm:$0xf]
    %v43 = vld [vmem:[%s1 + $0x2c] sm:$0xf]
    %v44 = vld [vmem:[%s1 + $0x30] sm:$0xf]
    %v45 = vld [vmem:[%s1 + $0x34] sm:$0xf]
    %v46 = vld [vmem:[%s1 + $0x38] sm:$0xf]
    %v47 = vld [vmem:[%s1 + $0x3c] sm:$0xf]
    %v48 = vld [vmem:[%s1 + $0x40] sm:$0xf]
    %v49 = vld [vmem:[%s1 + $0x44] sm:$0xf]
    %v50 = vld [vmem:[%s1 + $0x48] sm:$0xf]
    %v51 = vld [vmem:[%s1 + $0x4c] sm:$0xf]
    %v52 = vld [vmem:[%s1 + $0x50] sm:$0xf]
    %v53 = vld [vmem:[%s1 + $0x54] sm:$0xf]
    %v54 = vld [vmem:[%s1 + $0x58] sm:$0xf]
    %v55 = vld [vmem:[%s1 + $0x5c] sm:$0xf]
    %v56 = vld [vmem:[%s1 + $0x60] sm:$0xf]
    %v57 = vld [vmem:[%s1 + $0x64] sm:$0xf]
    %v58 = vld [vmem:[%s1 + $0x68] sm:$0xf]
    %v59 = vld [vmem:[%s1 + $0x6c] sm:$0xf]
    %v60 = vld [vmem:[%s1 + $0x70] sm:$0xf]
    %v61 = vld [vmem:[%s1 + $0x74] sm:$0xf]
    %v62 = vld [vmem:[%s1 + $0x78] sm:$0xf]
    %v63 = vld [vmem:[%s1 + $0x7c] sm:$0xf]
    %v64 = vld [vmem:[%s1 + $0x80] sm:$0xf]
    %v65 = vld [vmem:[%s1 + $0x84] sm:$0xf]
    %v66 = vld [vmem:[%s1 + $0x88] sm:$0xf]
    %v67 = vld [vmem:[%s1 + $0x8c] sm:$0xf]
    %v68 = vld [vmem:[%s1 + $0x90] sm:$0xf]
    %v69 = vld [vmem:[%s1 + $0x94] sm:$0xf]
    %v70 = vld [vmem:[%s1 + $0x98] sm:$0xf]
    %v71 = vld [vmem:[%s1 + $0x9c] sm:$0xf]
    %v72 = vld [vmem:[%s1 + $0xa0] sm:$0xf]
    %v73 = vld [vmem:[%s1 + $0xa4] sm:$0xf]
    %v74 = vld [vmem:[%s1 + $0xa8] sm:$0xf]
    %v75 = vld [vmem:[%s1 + $0xac] sm:$0xf]
    %v76 = vld [vmem:[%s1 + $0xb0] sm:$0xf]
    %v77 = vld [vmem:[%s1 + $0xb4] sm:$0xf]
    %v78 = vld [vmem:[%s1 + $0xb8] sm:$0xf]
    %v79 = vld [vmem:[%s1 + $0xbc] sm:$0xf]
    %v80 = vld [vmem:[%s1 + $0xc0] sm:$0xf]
    %v81 = vld [vmem:[%s1 + $0xc4] sm:$0xf]
    %v82 = vld [vmem:[%s1 + $0xc8] sm:$0xf]
    %v83 = vld [vmem:[%s1 + $0xcc] sm:$0xf]
    %v84 = vld [vmem:[%s1 + $0xd0] sm:$0xf]
    %v85 = vld [vmem:[%s1 + $0xd4] sm:$0xf]
    %v86 = vld [vmem:[%s1 + $0xd8] sm:$0xf]
    %v87 = vld [vmem:[%s1 + $0xdc] sm:$0xf]
    %v88 = vld [vmem:[%s1 + $0xe0] sm:$0xf]
    %v89 = vld [vmem:[%s1 + $0xe4] sm:$0xf]
    %v90 = vld [vmem:[%s1 + $0xe8] sm:$0xf]
    %v91 = vld [vmem:[%s1 + $0xec] sm:$0xf]
    %v92 = vld [vmem:[%s1 + $0xf0] sm:$0xf]
    %v93 = vld [vmem:[%s1 + $0xf4] sm:$0xf]
    %v94 = vld [vmem:[%s1 + $0xf8] sm:$0xf]
    %v95 = vld [vmem:[%s1 + $0xfc] sm:$0xf]
    %v96 = vld [vmem:[%s1 + $0x100] sm:$0xf]
    %v97 = vld [vmem:[%s1 + $0x104] sm:$0xf]
    %v98 = vld [vmem:[%s1 + $0x108] sm:$0xf]
    %v99 = vld [vmem:[%s1 + $0x10c] sm:$0xf]
    %v100 = vld [vmem:[%s1 + $0x110] sm:$0xf]
    %v101 = vld [vmem:[%s1 + $0x114] sm:$0xf]
    %v102 = vld [vmem:[%s1 + $0x118] sm:$0xf]
    %v103 = vld [vmem:[%s1 + $0x11c] sm:$0xf]
    %v104 = vld [vmem:[%s1 + $0x120] sm:$0xf]
    %v105 = vld [vmem:[%s1 + $0x124] sm:$0xf]
    %v106 = vld [vmem:[%s1 + $0x128] sm:$0xf]
    %v107 = vld [vmem:[%s1 + $0x12c] sm:$0xf]
    %v108 = vld [vmem:[%s1 + $0x130] sm:$0xf]
    %v109 = vld [vmem:[%s1 + $0x134] sm:$0xf]
    %v110 = vld [vmem:[%s1 + $0x138] sm:$0xf]
    %v111 = vld [vmem:[%s1 + $0x13c] sm:$0xf]
    %v112 = vld [vmem:[%s1 + $0x140] sm:$0xf]
    %v113 = vld [vmem:[%s1 + $0x144] sm:$0xf]
    %v114 = vld [vmem:[%s1 + $0x148] sm:$0xf]
    %v115 = vld [vmem:[%s1 + $0x14c] sm:$0xf]
    %v116 = vld [vmem:[%s1 + $0x150] sm:$0xf]
    %v117 = vld [vmem:[%s1 + $0x154] sm:$0xf]
    %v118 = vld [vmem:[%s1 + $0x158] sm:$0xf]
    %v119 = vld [vmem:[%s1 + $0x15c] sm:$0xf]
    %v120 = vld [vmem:[%s1 + $0x160] sm:$0xf]
    %v121 = vld [vmem:[%s1 + $0x164] sm:$0xf]
    %v122 = vld [vmem:[%s1 + $0x168] sm:$0xf]
    %v123 = vld [vmem:[%s1 + $0x16c] sm:$0xf]
    %v124 = vld [vmem:[%s1 + $0x170] sm:$0xf]
    %v125 = vld [vmem:[%s1 + $0x174] sm:$0xf]
    %v126 = vld [vmem:[%s1 + $0x178] sm:$0xf]
    %v127 = vld [vmem:[%s1 + $0x17c] sm:$0xf]
    %v128 = vld [vmem:[%s1 + $0x180] sm:$0xf]
    %v129 = vld [vmem:[%s1 + $0x184] sm:$0xf]
    %v130 = vld [vmem:[%s1 + $0x188] sm:$0xf]
    %v131 = vld [vmem:[%s1 + $0x18c] sm:$0xf]
    %v132 = vld [vmem:[%s1 + $0x190] sm:$0xf]
    %v133 = vld [vmem:[%s1 + $0x194] sm:$0xf]
    %v134 = vld [vmem:[%s1 + $0x198] sm:$0xf]
    %v135 = vld [vmem:[%s1 + $0x19c] sm:$0xf]
    %v136 = vld [vmem:[%s1 + $0x1a0] sm:$0xf]
    %v137 = vld [vmem:[%s1 + $0x1a4] sm:$0xf]
    %v138 = vld [vmem:[%s1 + $0x1a8] sm:$0xf]
    %v139 = vld [vmem:[%s1 + $0x1ac] sm:$0xf]
    %v140 = vld [vmem:[%s1 + $0x1b0] sm:$0xf]
    %v141 = vld [vmem:[%s1 + $0x1b4] sm:$0xf]
    %v142 = vld [vmem:[%s1 + $0x1b8] sm:$0xf]
    %v143 = vld [vmem:[%s1 + $0x1bc] sm:$0xf]
    %v144 = vld [vmem:[%s1 + $0x1c0] sm:$0xf]
    %v145 = vld [vmem:[%s1 + $0x1c4] sm:$0xf]
    %v146 = vld [vmem:[%s1 + $0x1c8] sm:$0xf]
    %v147 = vld [vmem:[%s1 + $0x1cc] sm:$0xf]
    %v148 = vld [vmem:[%s1 + $0x1d0] sm:$0xf]
    %v149 = vld [vmem:[%s1 + $0x1d4] sm:$0xf]
    %v150 = vld [vmem:[%s1 + $0x1d8] sm:$0xf]
    %v151 = vld [vmem:[%s1 + $0x1dc] sm:$0xf]
    %v152 = vld [vmem:[%s1 + $0x1e0] sm:$0xf]
    %v153 = vld [vmem:[%s1 + $0x1e4] sm:$0xf]
    %v154 = vld [vmem:[%s1 + $0x1e8] sm:$0xf]
    %v155 = vld [vmem:[%s1 + $0x1ec] sm:$0xf]
    %v156 = vld [vmem:[%s1 + $0x1f0] sm:$0xf]
    %v157 = vld [vmem:[%s1 + $0x1f4] sm:$0xf]
    %v158 = vld [vmem:[%s1 + $0x1f8] sm:$0xf]
    %v159 = vld [vmem:[%s1 + $0x1fc] sm:$0xf]
    %v160 = vld [vmem:[%s1 + $0x200] sm:$0xf]
    %v161 = vld [vmem:[%s1 + $0x204] sm:$0xf]
    %v162 = vld [vmem:[%s1 + $0x208] sm:$0xf]
    %v163 = vld [vmem:[%s1 + $0x20c] sm:$0xf]
    %v164 = vld [vmem:[%s1 + $0x210] sm:$0xf]
    %v165 = vld [vmem:[%s1 + $0x214] sm:$0xf]
    %v166 = vld [vmem:[%s1 + $0x218] sm:$0xf]
    %v167 = vld [vmem:[%s1 + $0x21c] sm:$0xf]
    %v168 = vld [vmem:[%s1 + $0x220] sm:$0xf]
    %v169 = vld [vmem:[%s1 + $0x224] sm:$0xf]
    %v170 = vld [vmem:[%s1 + $0x228] sm:$0xf]
    %v171 = vld [vmem:[%s1 + $0x22c] sm:$0xf]
    %v172 = vld [vmem:[%s1 + $0x230] sm:$0xf]
    %v173 = vld [vmem:[%s1 + $0x234] sm:$0xf]
    %v174 = vld [vmem:[%s1 + $0x238] sm:$0xf]
    %v175 = vld [vmem:[%s1 + $0x23c] sm:$0xf]
    %v176 = vld [vmem:[%s1 + $0x240] sm:$0xf]
    %v177 = vld [vmem:[%s1 + $0x244] sm:$0xf]
    %v178 = vld [vmem:[%s1 + $0x248] sm:$0xf]
    %v179 = vld [vmem:[%s1 + $0x24c] sm:$0xf]
    %v180 = vld [vmem:[%s1 + $0x250] sm:$0xf]
    %v181 = vld [vmem:[%s1 + $0x254] sm:$0xf]
    %v182 = vld [vmem:[%s1 + $0x258] sm:$0xf]
    %v183 = vld [vmem:[%s1 + $0x25c] sm:$0xf]
    %v184 = vld [vmem:[%s1 + $0x260] sm:$0xf]
    %v185 = vld [vmem:[%s1 + $0x264] sm:$0xf]
    %v186 = vld [vmem:[%s1 + $0x268] sm:$0xf]
    %v187 = vld [vmem:[%s1 + $0x26c] sm:$0xf]
    %v188 = vld [vmem:[%s1 + $0x270] sm:$0xf]
    %v189 = vld [vmem:[%s1 + $0x274] sm:$0xf]
    %v190 = vld [vmem:[%s1 + $0x278] sm:$0xf]
    %v191 = vld [vmem:[%s1 + $0x27c] sm:$0xf]
    %v192 = vld [vmem:[%s1 + $0x280] sm:$0xf]
    %v193 = vld [vmem:[%s1 + $0x284] sm:$0xf]
    %v194 = vld [vmem:[%s1 + $0x288] sm:$0xf]
    %v195 = vld [vmem:[%s1 + $0x28c] sm:$0xf]
    %v196 = vld [vmem:[%s1 + $0x290] sm:$0xf]
    %v197 = vld [vmem:[%s1 + $0x294] sm:$0xf]
    %v198 = vld [vmem:[%s1 + $0x298] sm:$0xf]
    %v199 = vld [vmem:[%s1 + $0x29c] sm:$0xf]
    %v200 = vld [vmem:[%s1 + $0x2a0] sm:$0xf]
    %v201 = vld [vmem:[%s1 + $0x2a4] sm:$0xf]
    %v202 = vld [vmem:[%s1 + $0x2a8] sm:$0xf]
    %v203 = vld [vmem:[%s1 + $0x2ac] sm:$0xf]
    %v204 = vld [vmem:[%s1 + $0x2b0] sm:$0xf]
    %v205 = vld [vmem:[%s1 + $0x2b4] sm:$0xf]
    %v206 = vld [vmem:[%s1 + $0x2b8] sm:$0xf]
    %v207 = vld [vmem:[%s1 + $0x2bc] sm:$0xf]
    %v208 = vld [vmem:[%s1 + $0x2c0] sm:$0xf]
    %v209 = vld [vmem:[%s1 + $0x2c4] sm:$0xf]
    %v210 = vld [vmem:[%s1 + $0x2c8] sm:$0xf]
    %v211 = vld [vmem:[%s1 + $0x2cc] sm:$0xf]
    %v212 = vld [vmem:[%s1 + $0x2d0] sm:$0xf]
    %v213 = vld [vmem:[%s1 + $0x2d4] sm:$0xf]
    %v214 = vld [vmem:[%s1 + $0x2d8] sm:$0xf]
    %v215 = vld [vmem:[%s1 + $0x2dc] sm:$0xf]
    %v216 = vld [vmem:[%s1 + $0x2e0] sm:$0xf]
    %v217 = vld [vmem:[%s1 + $0x2e4] sm:$0xf]
    %v218 = vld [vmem:[%s1 + $0x2e8] sm:$0xf]
    %v219 = vld [vmem:[%s1 + $0x2ec] sm:$0xf]
    %v220 = vld [vmem:[%s1 + $0x2f0] sm:$0xf]
    %v221 = vld [vmem:[%s1 + $0x2f4] sm:$0xf]
    %v222 = vld [vmem:[%s1 + $0x2f8] sm:$0xf]
    %v223 = vld [vmem:[%s1 + $0x2fc] sm:$0xf]
    %v224 = vld [vmem:[%s1 + $0x300] sm:$0xf]
    %v225 = vld [vmem:[%s1 + $0x304] sm:$0xf]
    %v226 = vld [vmem:[%s1 + $0x308] sm:$0xf]
    %v227 = vld [vmem:[%s1 + $0x30c] sm:$0xf]
    %v228 = vld [vmem:[%s1 + $0x310] sm:$0xf]
    %v229 = vld [vmem:[%s1 + $0x314] sm:$0xf]
    %v230 = vld [vmem:[%s1 + $0x318] sm:$0xf]
    %v231 = vld [vmem:[%s1 + $0x31c] sm:$0xf]
    %v232 = vld [vmem:[%s1 + $0x320] sm:$0xf]
    %v233 = vld [vmem:[%s1 + $0x324] sm:$0xf]
    %v234 = vld [vmem:[%s1 + $0x328] sm:$0xf]
    %v235 = vld [vmem:[%s1 + $0x32c] sm:$0xf]
    %v236 = vld [vmem:[%s1 + $0x330] sm:$0xf]
    %v237 = vld [vmem:[%s1 + $0x334] sm:$0xf]
    %v238 = vld [vmem:[%s1 + $0x338] sm:$0xf]
    %v239 = vld [vmem:[%s1 + $0x33c] sm:$0xf]
    %v240 = vld [vmem:[%s1 + $0x340] sm:$0xf]
    %v241 = vld [vmem:[%s1 + $0x344] sm:$0xf]
    %v242 = vld [vmem:[%s1 + $0x348] sm:$0xf]
    %v243 = vld [vmem:[%s1 + $0x34c] sm:$0xf]
    %v244 = vld [vmem:[%s1 + $0x350] sm:$0xf]
    %v245 = vld [vmem:[%s1 + $0x354] sm:$0xf]
    %v246 = vld [vmem:[%s1 + $0x358] sm:$0xf]
    %v247 = vld [vmem:[%s1 + $0x35c] sm:$0xf]
    %v248 = vld [vmem:[%s1 + $0x360] sm:$0xf]
    %v249 = vld [vmem:[%s1 + $0x364] sm:$0xf]
    %v250 = vld [vmem:[%s1 + $0x368] sm:$0xf]
    %v251 = vld [vmem:[%s1 + $0x36c] sm:$0xf]
    %v252 = vld [vmem:[%s1 + $0x370] sm:$0xf]
    %v253 = vld [vmem:[%s1 + $0x374] sm:$0xf]
    %v254 = vld [vmem:[%s1 + $0x378] sm:$0xf]
    %v255 = vld [vmem:[%s1 + $0x37c] sm:$0xf]
    %v256 = vld [vmem:[%s1 + $0x380] sm:$0xf]
    %v257 = vld [vmem:[%s1 + $0x384] sm:$0xf]
    %v258 = vld [vmem:[%s1 + $0x388] sm:$0xf]
    %v259 = vld [vmem:[%s1 + $0x38c] sm:$0xf]
    %v260 = vld [vmem:[%s1 + $0x390] sm:$0xf]
    %v261 = vld [vmem:[%s1 + $0x394] sm:$0xf]
    %v262 = vld [vmem:[%s1 + $0x398] sm:$0xf]
    %v263 = vld [vmem:[%s1 + $0x39c] sm:$0xf]
    %v264 = vld [vmem:[%s1 + $0x3a0] sm:$0xf]
    %v265 = vld [vmem:[%s1 + $0x3a4] sm:$0xf]
    %v266 = vld [vmem:[%s1 + $0x3a8] sm:$0xf]
    %v267 = vld [vmem:[%s1 + $0x3ac] sm:$0xf]
    %v268 = vld [vmem:[%s1 + $0x3b0] sm:$0xf]
    %v269 = vld [vmem:[%s1 + $0x3b4] sm:$0xf]
    %v270 = vld [vmem:[%s1 + $0x3b8] sm:$0xf]
    %v271 = vld [vmem:[%s1 + $0x3bc] sm:$0xf]
    %v272 = vld [vmem:[%s1 + $0x3c0] sm:$0xf]
    %v273 = vld [vmem:[%s1 + $0x3c4] sm:$0xf]
    %v274 = vld [vmem:[%s1 + $0x3c8] sm:$0xf]
    %v275 = vld [vmem:[%s1 + $0x3cc] sm:$0xf]
    %v276 = vld [vmem:[%s1 + $0x3d0] sm:$0xf]
    %v277 = vld [vmem:[%s1 + $0x3d4] sm:$0xf]
    %v278 = vld [vmem:[%s1 + $0x3d8] sm:$0xf]
    %v279 = vld [vmem:[%s1 + $0x3dc] sm:$0xf]
    %v280 = vld [vmem:[%s1 + $0x3e0] sm:$0xf]
    %v281 = vld [vmem:[%s1 + $0x3e4] sm:$0xf]
    %v282 = vld [vmem:[%s1 + $0x3e8] sm:$0xf]
    %v283 = vld [vmem:[%s1 + $0x3ec] sm:$0xf]
    %v284 = vld [vmem:[%s1 + $0x3f0] sm:$0xf]
    %v285 = vld [vmem:[%s1 + $0x3f4] sm:$0xf]
    %v286 = vld [vmem:[%s1 + $0x3f8] sm:$0xf]
    %v287 = vld [vmem:[%s1 + $0x3fc] sm:$0xf]
    %v288 = vld [vmem:[%s1 + $0x400] sm:$0xf]
    %v289 = vld [vmem:[%s1 + $0x404] sm:$0xf]
    %v290 = vld [vmem:[%s1 + $0x408] sm:$0xf]
    %v291 = vld [vmem:[%s1 + $0x40c] sm:$0xf]
    %v292 = vld [vmem:[%s1 + $0x410] sm:$0xf]
    %v293 = vld [vmem:[%s1 + $0x414] sm:$0xf]
    %v294 = vld [vmem:[%s1 + $0x418] sm:$0xf]
    %v295 = vld [vmem:[%s1 + $0x41c] sm:$0xf]
    %v296 = vld [vmem:[%s1 + $0x420] sm:$0xf]
    %v297 = vld [vmem:[%s1 + $0x424] sm:$0xf]
    %v298 = vld [vmem:[%s1 + $0x428] sm:$0xf]
    %v299 = vld [vmem:[%s1 + $0x42c] sm:$0xf]
    %v300 = vld [vmem:[%s1 + $0x430] sm:$0xf]
    %v301 = vld [vmem:[%s1 + $0x434] sm:$0xf]
    %v302 = vld [vmem:[%s1 + $0x438] sm:$0xf]
    %v303 = vld [vmem:[%s1 + $0x43c] sm:$0xf]
    %v304 = vld [vmem:[%s1 + $0x440] sm:$0xf]
    %v305 = vld [vmem:[%s1 + $0x444] sm:$0xf]
    %v306 = vld [vmem:[%s1 + $0x448] sm:$0xf]
    %v307 = vld [vmem:[%s1 + $0x44c] sm:$0xf]
    %v308 = vld [vmem:[%s1 + $0x450] sm:$0xf]
    %v309 = vld [vmem:[%s1 + $0x454] sm:$0xf]
    %v310 = vld [vmem:[%s1 + $0x458] sm:$0xf]
    %v311 = vld [vmem:[%s1 + $0x45c] sm:$0xf]
    %v312 = vld [vmem:[%s1 + $0x460] sm:$0xf]
    %v313 = vld [vmem:[%s1 + $0x464] sm:$0xf]
    %v314 = vld [vmem:[%s1 + $0x468] sm:$0xf]
    %v315 = vld [vmem:[%s1 + $0x46c] sm:$0xf]
    %v316 = vld [vmem:[%s1 + $0x470] sm:$0xf]
    %v317 = vld [vmem:[%s1 + $0x474] sm:$0xf]
    %v318 = vld [vmem:[%s1 + $0x478] sm:$0xf]
    %v319 = vld [vmem:[%s1 + $0x47c] sm:$0xf]
    %v320 = vld [vmem:[%s1 + $0x480] sm:$0xf]
    %v321 = vld [vmem:[%s1 + $0x484] sm:$0xf]
    %v322 = vld [vmem:[%s1 + $0x488] sm:$0xf]
    %v323 = vld [vmem:[%s1 + $0x48c] sm:$0xf]
    %v324 = vld [vmem:[%s1 + $0x490] sm:$0xf]
    %v325 = vld [vmem:[%s1 + $0x494] sm:$0xf]
    %v326 = vld [vmem:[%s1 + $0x498] sm:$0xf]
    %v327 = vld [vmem:[%s1 + $0x49c] sm:$0xf]
    %v328 = vld [vmem:[%s1 + $0x4a0] sm:$0xf]
    %v329 = vld [vmem:[%s1 + $0x4a4] sm:$0xf]
    %v330 = vld [vmem:[%s1 + $0x4a8] sm:$0xf]
    %v331 = vld [vmem:[%s1 + $0x4ac] sm:$0xf]
    %v332 = vld [vmem:[%s1 + $0x4b0] sm:$0xf]
    %v333 = vld [vmem:[%s1 + $0x4b4] sm:$0xf]
    %v334 = vld [vmem:[%s1 + $0x4b8] sm:$0xf]
    %v335 = vld [vmem:[%s1 + $0x4bc] sm:$0xf]
    %v336 = vld [vmem:[%s1 + $0x4c0] sm:$0xf]
    %v337 = vld [vmem:[%s1 + $0x4c4] sm:$0xf]
    %v338 = vld [vmem:[%s1 + $0x4c8] sm:$0xf]
    %v339 = vld [vmem:[%s1 + $0x4cc] sm:$0xf]
    %v340 = vld [vmem:[%s1 + $0x4d0] sm:$0xf]
    %v341 = vld [vmem:[%s1 + $0x4d4] sm:$0xf]
    %v342 = vld [vmem:[%s1 + $0x4d8] sm:$0xf]
    %v343 = vld [vmem:[%s1 + $0x4dc] sm:$0xf]
    %v344 = vld [vmem:[%s1 + $0x4e0] sm:$0xf]
    %v345 = vld [vmem:[%s1 + $0x4e4] sm:$0xf]
    %v346 = vld [vmem:[%s1 + $0x4e8] sm:$0xf]
    %v347 = vld [vmem:[%s1 + $0x4ec] sm:$0xf]
    %v348 = vld [vmem:[%s1 + $0x4f0] sm:$0xf]
    %v349 = vld [vmem:[%s1 + $0x4f4] sm:$0xf]
    %v350 = vld [vmem:[%s1 + $0x4f8] sm:$0xf]
    %v351 = vld [vmem:[%s1 + $0x4fc] sm:$0xf]
    %v352 = vld [vmem:[%s1 + $0x500] sm:$0xf]
    %v353 = vld [vmem:[%s1 + $0x504] sm:$0xf]
    %v354 = vld [vmem:[%s1 + $0x508] sm:$0xf]
    %v355 = vld [vmem:[%s1 + $0x50c] sm:$0xf]
    %v356 = vld [vmem:[%s1 + $0x510] sm:$0xf]
    %v357 = vld [vmem:[%s1 + $0x514] sm:$0xf]
    %v358 = vld [vmem:[%s1 + $0x518] sm:$0xf]
    %v359 = vld [vmem:[%s1 + $0x51c] sm:$0xf]
    %v360 = vld [vmem:[%s1 + $0x520] sm:$0xf]
    %v361 = vld [vmem:[%s1 + $0x524] sm:$0xf]
    %v362 = vld [vmem:[%s1 + $0x528] sm:$0xf]
    %v363 = vld [vmem:[%s1 + $0x52c] sm:$0xf]
    %v364 = vld [vmem:[%s1 + $0x530] sm:$0xf]
    %v365 = vld [vmem:[%s1 + $0x534] sm:$0xf]
    %v366 = vld [vmem:[%s1 + $0x538] sm:$0xf]
    %v367 = vld [vmem:[%s1 + $0x53c] sm:$0xf]
    %v368 = vld [vmem:[%s1 + $0x540] sm:$0xf]
    %v369 = vld [vmem:[%s1 + $0x544] sm:$0xf]
    %v370 = vld [vmem:[%s1 + $0x548] sm:$0xf]
    %v371 = vld [vmem:[%s1 + $0x54c] sm:$0xf]
    %v372 = vld [vmem:[%s1 + $0x550] sm:$0xf]
    %v373 = vld [vmem:[%s1 + $0x554] sm:$0xf]
    %v374 = vld [vmem:[%s1 + $0x558] sm:$0xf]
    %v375 = vld [vmem:[%s1 + $0x55c] sm:$0xf]
    %v376 = vld [vmem:[%s1 + $0x560] sm:$0xf]
    %v377 = vld [vmem:[%s1 + $0x564] sm:$0xf]
    %v378 = vld [vmem:[%s1 + $0x568] sm:$0xf]
    %v379 = vld [vmem:[%s1 + $0x56c] sm:$0xf]
    %v380 = vld [vmem:[%s1 + $0x570] sm:$0xf]
    %v381 = vld [vmem:[%s1 + $0x574] sm:$0xf]
    %v382 = vld [vmem:[%s1 + $0x578] sm:$0xf]
    %v383 = vld [vmem:[%s1 + $0x57c] sm:$0xf]
    %v384 = vld [vmem:[%s1 + $0x580] sm:$0xf]
    %v385 = vld [vmem:[%s1 + $0x584] sm:$0xf]
    %v386 = vld [vmem:[%s1 + $0x588] sm:$0xf]
    %v387 = vld [vmem:[%s1 + $0x58c] sm:$0xf]
    %v388 = vld [vmem:[%s1 + $0x590] sm:$0xf]
    %v389 = vld [vmem:[%s1 + $0x594] sm:$0xf]
    %v390 = vld [vmem:[%s1 + $0x598] sm:$0xf]
    %v391 = vld [vmem:[%s1 + $0x59c] sm:$0xf]
    %v392 = vld [vmem:[%s1 + $0x5a0] sm:$0xf]
    %v393 = vld [vmem:[%s1 + $0x5a4] sm:$0xf]
    %v394 = vld [vmem:[%s1 + $0x5a8] sm:$0xf]
    %v395 = vld [vmem:[%s1 + $0x5ac] sm:$0xf]
    %v396 = vld [vmem:[%s1 + $0x5b0] sm:$0xf]
    %v397 = vld [vmem:[%s1 + $0x5b4] sm:$0xf]
    %v398 = vld [vmem:[%s1 + $0x5b8] sm:$0xf]
    %v399 = vld [vmem:[%s1 + $0x5bc] sm:$0xf]
    %v400 = vld [vmem:[%s1 + $0x5c0] sm:$0xf]
    %v401 = vld [vmem:[%s1 + $0x5c4] sm:$0xf]
    %v402 = vld [vmem:[%s1 + $0x5c8] sm:$0xf]
    %v403 = vld [vmem:[%s1 + $0x5cc] sm:$0xf]
    %v404 = vld [vmem:[%s1 + $0x5d0] sm:$0xf]
    %v405 = vld [vmem:[%s1 + $0x5d4] sm:$0xf]
    %v406 = vld [vmem:[%s1 + $0x5d8] sm:$0xf]
    %v407 = vld [vmem:[%s1 + $0x5dc] sm:$0xf]
    %v408 = vld [vmem:[%s1 + $0x5e0] sm:$0xf]
    %v409 = vld [vmem:[%s1 + $0x5e4] sm:$0xf]
    %v410 = vld [vmem:[%s1 + $0x5e8] sm:$0xf]
    %v411 = vld [vmem:[%s1 + $0x5ec] sm:$0xf]
    %v412 = vld [vmem:[%s1 + $0x5f0] sm:$0xf]
    %v413 = vld [vmem:[%s1 + $0x5f4] sm:$0xf]
    %v414 = vld [vmem:[%s1 + $0x5f8] sm:$0xf]
    %v415 = vld [vmem:[%s1 + $0x5fc] sm:$0xf]
    %v416 = vld [vmem:[%s1 + $0x600] sm:$0xf]
    %v417 = vld [vmem:[%s1 + $0x604] sm:$0xf]
    %v418 = vld [vmem:[%s1 + $0x608] sm:$0xf]
    %v419 = vld [vmem:[%s1 + $0x60c] sm:$0xf]
    %v420 = vld [vmem:[%s1 + $0x610] sm:$0xf]
    %v421 = vld [vmem:[%s1 + $0x614] sm:$0xf]
    %v422 = vld [vmem:[%s1 + $0x618] sm:$0xf]
    %v423 = vld [vmem:[%s1 + $0x61c] sm:$0xf]
    %v424 = vld [vmem:[%s1 + $0x620] sm:$0xf]
    %v425 = vld [vmem:[%s1 + $0x624] sm:$0xf]
    %v426 = vld [vmem:[%s1 + $0x628] sm:$0xf]
    %v427 = vld [vmem:[%s1 + $0x62c] sm:$0xf]
    %v428 = vld [vmem:[%s1 + $0x630] sm:$0xf]
    %v429 = vld [vmem:[%s1 + $0x634] sm:$0xf]
    %v430 = vld [vmem:[%s1 + $0x638] sm:$0xf]
    %v431 = vld [vmem:[%s1 + $0x63c] sm:$0xf]
    %v432 = vld [vmem:[%s1 + $0x640] sm:$0xf]
    %v433 = vld [vmem:[%s1 + $0x644] sm:$0xf]
    %v434 = vld [vmem:[%s1 + $0x648] sm:$0xf]
    %v435 = vld [vmem:[%s1 + $0x64c] sm:$0xf]
    %v436 = vld [vmem:[%s1 + $0x650] sm:$0xf]
    %v437 = vld [vmem:[%s1 + $0x654] sm:$0xf]
    %v438 = vld [vmem:[%s1 + $0x658] sm:$0xf]
    %v439 = vld [vmem:[%s1 + $0x65c] sm:$0xf]
    %v440 = vld [vmem:[%s1 + $0x660] sm:$0xf]
    %v441 = vld [vmem:[%s1 + $0x664] sm:$0xf]
    %v442 = vld [vmem:[%s1 + $0x668] sm:$0xf]
    %v443 = vld [vmem:[%s1 + $0x66c] sm:$0xf]
    %v444 = vld [vmem:[%s1 + $0x670] sm:$0xf]
    %v445 = vld [vmem:[%s1 + $0x674] sm:$0xf]
    %v446 = vld [vmem:[%s1 + $0x678] sm:$0xf]
    %v447 = vld [vmem:[%s1 + $0x67c] sm:$0xf]
    %v448 = vld [vmem:[%s1 + $0x680] sm:$0xf]
    %v449 = vld [vmem:[%s1 + $0x684] sm:$0xf]
    %v450 = vld [vmem:[%s1 + $0x688] sm:$0xf]
    %v451 = vld [vmem:[%s1 + $0x68c] sm:$0xf]
    %v452 = vld [vmem:[%s1 + $0x690] sm:$0xf]
    %v453 = vld [vmem:[%s1 + $0x694] sm:$0xf]
    %v454 = vld [vmem:[%s1 + $0x698] sm:$0xf]
    %v455 = vld [vmem:[%s1 + $0x69c] sm:$0xf]
    %v456 = vld [vmem:[%s1 + $0x6a0] sm:$0xf]
    %v457 = vld [vmem:[%s1 + $0x6a4] sm:$0xf]
    %v458 = vld [vmem:[%s1 + $0x6a8] sm:$0xf]
    %v459 = vld [vmem:[%s1 + $0x6ac] sm:$0xf]
    %v460 = vld [vmem:[%s1 + $0x6b0] sm:$0xf]
    %v461 = vld [vmem:[%s1 + $0x6b4] sm:$0xf]
    %v462 = vld [vmem:[%s1 + $0x6b8] sm:$0xf]
    %v463 = vld [vmem:[%s1 + $0x6bc] sm:$0xf]
    %v464 = vld [vmem:[%s1 + $0x6c0] sm:$0xf]
    %v465 = vld [vmem:[%s1 + $0x6c4] sm:$0xf]
    %v466 = vld [vmem:[%s1 + $0x6c8] sm:$0xf]
    %v467 = vld [vmem:[%s1 + $0x6cc] sm:$0xf]
    %v468 = vld [vmem:[%s1 + $0x6d0] sm:$0xf]
    %v469 = vld [vmem:[%s1 + $0x6d4] sm:$0xf]
    %v470 = vld [vmem:[%s1 + $0x6d8] sm:$0xf]
    %v471 = vld [vmem:[%s1 + $0x6dc] sm:$0xf]
    %v472 = vld [vmem:[%s1 + $0x6e0] sm:$0xf]
    %v473 = vld [vmem:[%s1 + $0x6e4] sm:$0xf]
    %v474 = vld [vmem:[%s1 + $0x6e8] sm:$0xf]
    %v475 = vld [vmem:[%s1 + $0x6ec] sm:$0xf]
    %v476 = vld [vmem:[%s1 + $0x6f0] sm:$0xf]
    %v477 = vld [vmem:[%s1 + $0x6f4] sm:$0xf]
    %v478 = vld [vmem:[%s1 + $0x6f8] sm:$0xf]
    %v479 = vld [vmem:[%s1 + $0x6fc] sm:$0xf]
    %v480 = vld [vmem:[%s1 + $0x700] sm:$0xf]
    %v481 = vld [vmem:[%s1 + $0x704] sm:$0xf]
    %v482 = vld [vmem:[%s1 + $0x708] sm:$0xf]
    %v483 = vld [vmem:[%s1 + $0x70c] sm:$0xf]
    %v484 = vld [vmem:[%s1 + $0x710] sm:$0xf]
    %v485 = vld [vmem:[%s1 + $0x714] sm:$0xf]
    %v486 = vld [vmem:[%s1 + $0x718] sm:$0xf]
    %v487 = vld [vmem:[%s1 + $0x71c] sm:$0xf]
    %v488 = vld [vmem:[%s1 + $0x720] sm:$0xf]
    %v489 = vld [vmem:[%s1 + $0x724] sm:$0xf]
    %v490 = vld [vmem:[%s1 + $0x728] sm:$0xf]
    %v491 = vld [vmem:[%s1 + $0x72c] sm:$0xf]
    %v492 = vld [vmem:[%s1 + $0x730] sm:$0xf]
    %v493 = vld [vmem:[%s1 + $0x734] sm:$0xf]
    %v494 = vld [vmem:[%s1 + $0x738] sm:$0xf]
    %v495 = vld [vmem:[%s1 + $0x73c] sm:$0xf]
    %v496 = vld [vmem:[%s1 + $0x740] sm:$0xf]
    %v497 = vld [vmem:[%s1 + $0x744] sm:$0xf]
    %v498 = vld [vmem:[%s1 + $0x748] sm:$0xf]
    %v499 = vld [vmem:[%s1 + $0x74c] sm:$0xf]
    %v500 = vld [vmem:[%s1 + $0x750] sm:$0xf]
    %v501 = vld [vmem:[%s1 + $0x754] sm:$0xf]
    %v502 = vld [vmem:[%s1 + $0x758] sm:$0xf]
    %v503 = vld [vmem:[%s1 + $0x75c] sm:$0xf]
    %v504 = vld [vmem:[%s1 + $0x760] sm:$0xf]
    %v505 = vld [vmem:[%s1 + $0x764] sm:$0xf]
    %v506 = vld [vmem:[%s1 + $0x768] sm:$0xf]
    %v507 = vld [vmem:[%s1 + $0x76c] sm:$0xf]
    %v508 = vld [vmem:[%s1 + $0x770] sm:$0xf]
    %v509 = vld [vmem:[%s1 + $0x774] sm:$0xf]
    %v510 = vld [vmem:[%s1 + $0x778] sm:$0xf]
    %v511 = vld [vmem:[%s1 + $0x77c] sm:$0xf]
    %v512 = vld [vmem:[%s1 + $0x780] sm:$0xf]
    %v513 = vld [vmem:[%s1 + $0x784] sm:$0xf]
    %v514 = vld [vmem:[%s1 + $0x788] sm:$0xf]
    %v515 = vld [vmem:[%s1 + $0x78c] sm:$0xf]
    %v516 = vld [vmem:[%s1 + $0x790] sm:$0xf]
    %v517 = vld [vmem:[%s1 + $0x794] sm:$0xf]
    %v518 = vld [vmem:[%s1 + $0x798] sm:$0xf]
    %v519 = vld [vmem:[%s1 + $0x79c] sm:$0xf]
    %v520 = vld [vmem:[%s1 + $0x7a0] sm:$0xf]
    %v521 = vld [vmem:[%s1 + $0x7a4] sm:$0xf]
    %v522 = vld [vmem:[%s1 + $0x7a8] sm:$0xf]
    %v523 = vld [vmem:[%s1 + $0x7ac] sm:$0xf]
    %v524 = vld [vmem:[%s1 + $0x7b0] sm:$0xf]
    %v525 = vld [vmem:[%s1 + $0x7b4] sm:$0xf]
    %v526 = vld [vmem:[%s1 + $0x7b8] sm:$0xf]
    %v527 = vld [vmem:[%s1 + $0x7bc] sm:$0xf]
    %v528 = vld [vmem:[%s1 + $0x7c0] sm:$0xf]
    %v529 = vld [vmem:[%s1 + $0x7c4] sm:$0xf]
    %v530 = vld [vmem:[%s1 + $0x7c8] sm:$0xf]
    %v531 = vld [vmem:[%s1 + $0x7cc] sm:$0xf]
    %v532 = vld [vmem:[%s1 + $0x7d0] sm:$0xf]
    %v533 = vld [vmem:[%s1 + $0x7d4] sm:$0xf]
    %v534 = vld [vmem:[%s1 + $0x7d8] sm:$0xf]
    %v535 = vld [vmem:[%s1 + $0x7dc] sm:$0xf]
    %v536 = vld [vmem:[%s1 + $0x7e0] sm:$0xf]
    %v537 = vld [vmem:[%s1 + $0x7e4] sm:$0xf]
    %v538 = vld [vmem:[%s1 + $0x7e8] sm:$0xf]
    %v539 = vld [vmem:[%s1 + $0x7ec] sm:$0xf]
    %v540 = vld [vmem:[%s1 + $0x7f0] sm:$0xf]
    %v541 = vld [vmem:[%s1 + $0x7f4] sm:$0xf]
    %v542 = vld [vmem:[%s1 + $0x7f8] sm:$0xf]
    %v543 = vld [vmem:[%s1 + $0x7fc] sm:$0xf]
    %v548 = vcombine.high %v28, %v28
    %v550 = vunpack.c.l.s4 1966171168
    %v551 = vunpack.c.0.s8 %v550
    %v552 = vlaneseq
    %v553 = vshrl.u32 %v552, 7
    %v554 = vsub.s32 %v551, %v553
    %v555 = vrot.slane %v28, %v554
    %v557 = vunpack.c.l.s4 1966171168
    %v558 = vunpack.c.0.s8 %v557
    %v559 = vlaneseq
    %v560 = vshrl.u32 %v559, 7
    %v561 = vsub.s32 %v558, %v560
    %v562 = vrot.slane %v548, %v561
    %v563 = vcombine.high %v555, %v555
    %v564 = vcombine.high %v562, %v562
    %v566 = vunpack.c.l.s4 1966171168
    %v567 = vunpack.c.0.s8 %v566
    %v568 = vlaneseq
    %v569 = vshrl.u32 %v568, 7
    %v570 = vsub.s32 %v567, %v569
    %v571 = vrot.slane %v555, %v570
    %v573 = vunpack.c.l.s4 1966171168
    %v574 = vunpack.c.0.s8 %v573
    %v575 = vlaneseq
    %v576 = vshrl.u32 %v575, 7
    %v577 = vsub.s32 %v574, %v576
    %v578 = vrot.slane %v562, %v577
    %v580 = vunpack.c.l.s4 1966171168
    %v581 = vunpack.c.0.s8 %v580
    %v582 = vlaneseq
    %v583 = vshrl.u32 %v582, 7
    %v584 = vsub.s32 %v581, %v583
    %v585 = vrot.slane %v563, %v584
    %v587 = vunpack.c.l.s4 1966171168
    %v588 = vunpack.c.0.s8 %v587
    %v589 = vlaneseq
    %v590 = vshrl.u32 %v589, 7
    %v591 = vsub.s32 %v588, %v590
    %v592 = vrot.slane %v564, %v591
    %v593 = vcombine.high %v571, %v571
    %v594 = vcombine.high %v578, %v578
    %v595 = vcombine.high %v585, %v585
    %v596 = vcombine.high %v592, %v592
    %v597 = vcombine.high %v29, %v29
    %v599 = vunpack.c.l.s4 1966171168
    %v600 = vunpack.c.0.s8 %v599
    %v601 = vlaneseq
    %v602 = vshrl.u32 %v601, 7
    %v603 = vsub.s32 %v600, %v602
    %v604 = vrot.slane %v29, %v603
    %v606 = vunpack.c.l.s4 1966171168
    %v607 = vunpack.c.0.s8 %v606
    %v608 = vlaneseq
    %v609 = vshrl.u32 %v608, 7
    %v610 = vsub.s32 %v607, %v609
    %v611 = vrot.slane %v597, %v610
    %v612 = vcombine.high %v604, %v604
    %v613 = vcombine.high %v611, %v611
    %v615 = vunpack.c.l.s4 1966171168
    %v616 = vunpack.c.0.s8 %v615
    %v617 = vlaneseq
    %v618 = vshrl.u32 %v617, 7
    %v619 = vsub.s32 %v616, %v618
    %v620 = vrot.slane %v604, %v619
    %v622 = vunpack.c.l.s4 1966171168
    %v623 = vunpack.c.0.s8 %v622
    %v624 = vlaneseq
    %v625 = vshrl.u32 %v624, 7
    %v626 = vsub.s32 %v623, %v625
    %v627 = vrot.slane %v611, %v626
    %v629 = vunpack.c.l.s4 1966171168
    %v630 = vunpack.c.0.s8 %v629
    %v631 = vlaneseq
    %v632 = vshrl.u32 %v631, 7
    %v633 = vsub.s32 %v630, %v632
    %v634 = vrot.slane %v612, %v633
    %v636 = vunpack.c.l.s4 1966171168
    %v637 = vunpack.c.0.s8 %v636
    %v638 = vlaneseq
    %v639 = vshrl.u32 %v638, 7
    %v640 = vsub.s32 %v637, %v639
    %v641 = vrot.slane %v613, %v640
    %v642 = vcombine.high %v620, %v620
    %v643 = vcombine.high %v627, %v627
    %v644 = vcombine.high %v634, %v634
    %v645 = vcombine.high %v641, %v641
    %v646 = vcombine.high %v30, %v30
    %v648 = vunpack.c.l.s4 1966171168
    %v649 = vunpack.c.0.s8 %v648
    %v650 = vlaneseq
    %v651 = vshrl.u32 %v650, 7
    %v652 = vsub.s32 %v649, %v651
    %v653 = vrot.slane %v30, %v652
    %v655 = vunpack.c.l.s4 1966171168
    %v656 = vunpack.c.0.s8 %v655
    %v657 = vlaneseq
    %v658 = vshrl.u32 %v657, 7
    %v659 = vsub.s32 %v656, %v658
    %v660 = vrot.slane %v646, %v659
    %v661 = vcombine.high %v653, %v653
    %v662 = vcombine.high %v660, %v660
    %v664 = vunpack.c.l.s4 1966171168
    %v665 = vunpack.c.0.s8 %v664
    %v666 = vlaneseq
    %v667 = vshrl.u32 %v666, 7
    %v668 = vsub.s32 %v665, %v667
    %v669 = vrot.slane %v653, %v668
    %v671 = vunpack.c.l.s4 1966171168
    %v672 = vunpack.c.0.s8 %v671
    %v673 = vlaneseq
    %v674 = vshrl.u32 %v673, 7
    %v675 = vsub.s32 %v672, %v674
    %v676 = vrot.slane %v660, %v675
    %v678 = vunpack.c.l.s4 1966171168
    %v679 = vunpack.c.0.s8 %v678
    %v680 = vlaneseq
    %v681 = vshrl.u32 %v680, 7
    %v682 = vsub.s32 %v679, %v681
    %v683 = vrot.slane %v661, %v682
    %v685 = vunpack.c.l.s4 1966171168
    %v686 = vunpack.c.0.s8 %v685
    %v687 = vlaneseq
    %v688 = vshrl.u32 %v687, 7
    %v689 = vsub.s32 %v686, %v688
    %v690 = vrot.slane %v662, %v689
    %v691 = vcombine.high %v669, %v669
    %v692 = vcombine.high %v676, %v676
    %v693 = vcombine.high %v683, %v683
    %v694 = vcombine.high %v690, %v690
    %v695 = vcombine.high %v31, %v31
    %v697 = vunpack.c.l.s4 1966171168
    %v698 = vunpack.c.0.s8 %v697
    %v699 = vlaneseq
    %v700 = vshrl.u32 %v699, 7
    %v701 = vsub.s32 %v698, %v700
    %v702 = vrot.slane %v31, %v701
    %v704 = vunpack.c.l.s4 1966171168
    %v705 = vunpack.c.0.s8 %v704
    %v706 = vlaneseq
    %v707 = vshrl.u32 %v706, 7
    %v708 = vsub.s32 %v705, %v707
    %v709 = vrot.slane %v695, %v708
    %v710 = vcombine.high %v702, %v702
    %v711 = vcombine.high %v709, %v709
    %v713 = vunpack.c.l.s4 1966171168
    %v714 = vunpack.c.0.s8 %v713
    %v715 = vlaneseq
    %v716 = vshrl.u32 %v715, 7
    %v717 = vsub.s32 %v714, %v716
    %v718 = vrot.slane %v702, %v717
    %v720 = vunpack.c.l.s4 1966171168
    %v721 = vunpack.c.0.s8 %v720
    %v722 = vlaneseq
    %v723 = vshrl.u32 %v722, 7
    %v724 = vsub.s32 %v721, %v723
    %v725 = vrot.slane %v709, %v724
    %v727 = vunpack.c.l.s4 1966171168
    %v728 = vunpack.c.0.s8 %v727
    %v729 = vlaneseq
    %v730 = vshrl.u32 %v729, 7
    %v731 = vsub.s32 %v728, %v730
    %v732 = vrot.slane %v710, %v731
    %v734 = vunpack.c.l.s4 1966171168
    %v735 = vunpack.c.0.s8 %v734
    %v736 = vlaneseq
    %v737 = vshrl.u32 %v736, 7
    %v738 = vsub.s32 %v735, %v737
    %v739 = vrot.slane %v711, %v738
    %v740 = vcombine.high %v718, %v718
    %v741 = vcombine.high %v725, %v725
    %v742 = vcombine.high %v732, %v732
    %v743 = vcombine.high %v739, %v739
    %v1288 = vunpack.c.l.b16 %v32
    %v1289 = vunpack.c.l.b16 %v33
    %v1290 = vunpack.c.l.b16 %v34
    %v1291 = vunpack.c.l.b16 %v35
    %v1292 = vunpack.c.l.b16 %v36
    %v1293 = vunpack.c.l.b16 %v37
    %v1294 = vunpack.c.l.b16 %v38
    %v1295 = vunpack.c.l.b16 %v39
    %v1296 = vunpack.c.l.b16 %v40
    %v1297 = vunpack.c.l.b16 %v41
    %v1298 = vunpack.c.l.b16 %v42
    %v1299 = vunpack.c.l.b16 %v43
    %v1300 = vunpack.c.l.b16 %v44
    %v1301 = vunpack.c.l.b16 %v45
    %v1302 = vunpack.c.l.b16 %v46
    %v1303 = vunpack.c.l.b16 %v47
    %v1304 = vunpack.c.l.b16 %v48
    %v1305 = vunpack.c.l.b16 %v49
    %v1306 = vunpack.c.l.b16 %v50
    %v1307 = vunpack.c.l.b16 %v51
    %v1308 = vunpack.c.l.b16 %v52
    %v1309 = vunpack.c.l.b16 %v53
    %v1310 = vunpack.c.l.b16 %v54
    %v1311 = vunpack.c.l.b16 %v55
    %v1312 = vunpack.c.l.b16 %v56
    %v1313 = vunpack.c.l.b16 %v57
    %v1314 = vunpack.c.l.b16 %v58
    %v1315 = vunpack.c.l.b16 %v59
    %v1316 = vunpack.c.l.b16 %v60
    %v1317 = vunpack.c.l.b16 %v61
    %v1318 = vunpack.c.l.b16 %v62
    %v1319 = vunpack.c.l.b16 %v63
    %v1320 = vunpack.c.l.b16 %v64
    %v1321 = vunpack.c.l.b16 %v65
    %v1322 = vunpack.c.l.b16 %v66
    %v1323 = vunpack.c.l.b16 %v67
    %v1324 = vunpack.c.l.b16 %v68
    %v1325 = vunpack.c.l.b16 %v69
    %v1326 = vunpack.c.l.b16 %v70
    %v1327 = vunpack.c.l.b16 %v71
    %v1328 = vunpack.c.l.b16 %v72
    %v1329 = vunpack.c.l.b16 %v73
    %v1330 = vunpack.c.l.b16 %v74
    %v1331 = vunpack.c.l.b16 %v75
    %v1332 = vunpack.c.l.b16 %v76
    %v1333 = vunpack.c.l.b16 %v77
    %v1334 = vunpack.c.l.b16 %v78
    %v1335 = vunpack.c.l.b16 %v79
    %v1336 = vunpack.c.l.b16 %v80
    %v1337 = vunpack.c.l.b16 %v81
    %v1338 = vunpack.c.l.b16 %v82
    %v1339 = vunpack.c.l.b16 %v83
    %v1340 = vunpack.c.l.b16 %v84
    %v1341 = vunpack.c.l.b16 %v85
    %v1342 = vunpack.c.l.b16 %v86
    %v1343 = vunpack.c.l.b16 %v87
    %v1344 = vunpack.c.l.b16 %v88
    %v1345 = vunpack.c.l.b16 %v89
    %v1346 = vunpack.c.l.b16 %v90
    %v1347 = vunpack.c.l.b16 %v91
    %v1348 = vunpack.c.l.b16 %v92
    %v1349 = vunpack.c.l.b16 %v93
    %v1350 = vunpack.c.l.b16 %v94
    %v1351 = vunpack.c.l.b16 %v95
    %v1352 = vunpack.c.l.b16 %v96
    %v1353 = vunpack.c.l.b16 %v97
    %v1354 = vunpack.c.l.b16 %v98
    %v1355 = vunpack.c.l.b16 %v99
    %v1356 = vunpack.c.l.b16 %v100
    %v1357 = vunpack.c.l.b16 %v101
    %v1358 = vunpack.c.l.b16 %v102
    %v1359 = vunpack.c.l.b16 %v103
    %v1360 = vunpack.c.l.b16 %v104
    %v1361 = vunpack.c.l.b16 %v105
    %v1362 = vunpack.c.l.b16 %v106
    %v1363 = vunpack.c.l.b16 %v107
    %v1364 = vunpack.c.l.b16 %v108
    %v1365 = vunpack.c.l.b16 %v109
    %v1366 = vunpack.c.l.b16 %v110
    %v1367 = vunpack.c.l.b16 %v111
    %v1368 = vunpack.c.l.b16 %v112
    %v1369 = vunpack.c.l.b16 %v113
    %v1370 = vunpack.c.l.b16 %v114
    %v1371 = vunpack.c.l.b16 %v115
    %v1372 = vunpack.c.l.b16 %v116
    %v1373 = vunpack.c.l.b16 %v117
    %v1374 = vunpack.c.l.b16 %v118
    %v1375 = vunpack.c.l.b16 %v119
    %v1376 = vunpack.c.l.b16 %v120
    %v1377 = vunpack.c.l.b16 %v121
    %v1378 = vunpack.c.l.b16 %v122
    %v1379 = vunpack.c.l.b16 %v123
    %v1380 = vunpack.c.l.b16 %v124
    %v1381 = vunpack.c.l.b16 %v125
    %v1382 = vunpack.c.l.b16 %v126
    %v1383 = vunpack.c.l.b16 %v127
    %v1384 = vunpack.c.l.b16 %v128
    %v1385 = vunpack.c.l.b16 %v129
    %v1386 = vunpack.c.l.b16 %v130
    %v1387 = vunpack.c.l.b16 %v131
    %v1388 = vunpack.c.l.b16 %v132
    %v1389 = vunpack.c.l.b16 %v133
    %v1390 = vunpack.c.l.b16 %v134
    %v1391 = vunpack.c.l.b16 %v135
    %v1392 = vunpack.c.l.b16 %v136
    %v1393 = vunpack.c.l.b16 %v137
    %v1394 = vunpack.c.l.b16 %v138
    %v1395 = vunpack.c.l.b16 %v139
    %v1396 = vunpack.c.l.b16 %v140
    %v1397 = vunpack.c.l.b16 %v141
    %v1398 = vunpack.c.l.b16 %v142
    %v1399 = vunpack.c.l.b16 %v143
    %v1400 = vunpack.c.l.b16 %v144
    %v1401 = vunpack.c.l.b16 %v145
    %v1402 = vunpack.c.l.b16 %v146
    %v1403 = vunpack.c.l.b16 %v147
    %v1404 = vunpack.c.l.b16 %v148
    %v1405 = vunpack.c.l.b16 %v149
    %v1406 = vunpack.c.l.b16 %v150
    %v1407 = vunpack.c.l.b16 %v151
    %v1408 = vunpack.c.l.b16 %v152
    %v1409 = vunpack.c.l.b16 %v153
    %v1410 = vunpack.c.l.b16 %v154
    %v1411 = vunpack.c.l.b16 %v155
    %v1412 = vunpack.c.l.b16 %v156
    %v1413 = vunpack.c.l.b16 %v157
    %v1414 = vunpack.c.l.b16 %v158
    %v1415 = vunpack.c.l.b16 %v159
    %v1416 = vunpack.c.l.b16 %v160
    %v1417 = vunpack.c.l.b16 %v161
    %v1418 = vunpack.c.l.b16 %v162
    %v1419 = vunpack.c.l.b16 %v163
    %v1420 = vunpack.c.l.b16 %v164
    %v1421 = vunpack.c.l.b16 %v165
    %v1422 = vunpack.c.l.b16 %v166
    %v1423 = vunpack.c.l.b16 %v167
    %v1424 = vunpack.c.l.b16 %v168
    %v1425 = vunpack.c.l.b16 %v169
    %v1426 = vunpack.c.l.b16 %v170
    %v1427 = vunpack.c.l.b16 %v171
    %v1428 = vunpack.c.l.b16 %v172
    %v1429 = vunpack.c.l.b16 %v173
    %v1430 = vunpack.c.l.b16 %v174
    %v1431 = vunpack.c.l.b16 %v175
    %v1432 = vunpack.c.l.b16 %v176
    %v1433 = vunpack.c.l.b16 %v177
    %v1434 = vunpack.c.l.b16 %v178
    %v1435 = vunpack.c.l.b16 %v179
    %v1436 = vunpack.c.l.b16 %v180
    %v1437 = vunpack.c.l.b16 %v181
    %v1438 = vunpack.c.l.b16 %v182
    %v1439 = vunpack.c.l.b16 %v183
    %v1440 = vunpack.c.l.b16 %v184
    %v1441 = vunpack.c.l.b16 %v185
    %v1442 = vunpack.c.l.b16 %v186
    %v1443 = vunpack.c.l.b16 %v187
    %v1444 = vunpack.c.l.b16 %v188
    %v1445 = vunpack.c.l.b16 %v189
    %v1446 = vunpack.c.l.b16 %v190
    %v1447 = vunpack.c.l.b16 %v191
    %v1448 = vunpack.c.l.b16 %v192
    %v1449 = vunpack.c.l.b16 %v193
    %v1450 = vunpack.c.l.b16 %v194
    %v1451 = vunpack.c.l.b16 %v195
    %v1452 = vunpack.c.l.b16 %v196
    %v1453 = vunpack.c.l.b16 %v197
    %v1454 = vunpack.c.l.b16 %v198
    %v1455 = vunpack.c.l.b16 %v199
    %v1456 = vunpack.c.l.b16 %v200
    %v1457 = vunpack.c.l.b16 %v201
    %v1458 = vunpack.c.l.b16 %v202
    %v1459 = vunpack.c.l.b16 %v203
    %v1460 = vunpack.c.l.b16 %v204
    %v1461 = vunpack.c.l.b16 %v205
    %v1462 = vunpack.c.l.b16 %v206
    %v1463 = vunpack.c.l.b16 %v207
    %v1464 = vunpack.c.l.b16 %v208
    %v1465 = vunpack.c.l.b16 %v209
    %v1466 = vunpack.c.l.b16 %v210
    %v1467 = vunpack.c.l.b16 %v211
    %v1468 = vunpack.c.l.b16 %v212
    %v1469 = vunpack.c.l.b16 %v213
    %v1470 = vunpack.c.l.b16 %v214
    %v1471 = vunpack.c.l.b16 %v215
    %v1472 = vunpack.c.l.b16 %v216
    %v1473 = vunpack.c.l.b16 %v217
    %v1474 = vunpack.c.l.b16 %v218
    %v1475 = vunpack.c.l.b16 %v219
    %v1476 = vunpack.c.l.b16 %v220
    %v1477 = vunpack.c.l.b16 %v221
    %v1478 = vunpack.c.l.b16 %v222
    %v1479 = vunpack.c.l.b16 %v223
    %v1480 = vunpack.c.l.b16 %v224
    %v1481 = vunpack.c.l.b16 %v225
    %v1482 = vunpack.c.l.b16 %v226
    %v1483 = vunpack.c.l.b16 %v227
    %v1484 = vunpack.c.l.b16 %v228
    %v1485 = vunpack.c.l.b16 %v229
    %v1486 = vunpack.c.l.b16 %v230
    %v1487 = vunpack.c.l.b16 %v231
    %v1488 = vunpack.c.l.b16 %v232
    %v1489 = vunpack.c.l.b16 %v233
    %v1490 = vunpack.c.l.b16 %v234
    %v1491 = vunpack.c.l.b16 %v235
    %v1492 = vunpack.c.l.b16 %v236
    %v1493 = vunpack.c.l.b16 %v237
    %v1494 = vunpack.c.l.b16 %v238
    %v1495 = vunpack.c.l.b16 %v239
    %v1496 = vunpack.c.l.b16 %v240
    %v1497 = vunpack.c.l.b16 %v241
    %v1498 = vunpack.c.l.b16 %v242
    %v1499 = vunpack.c.l.b16 %v243
    %v1500 = vunpack.c.l.b16 %v244
    %v1501 = vunpack.c.l.b16 %v245
    %v1502 = vunpack.c.l.b16 %v246
    %v1503 = vunpack.c.l.b16 %v247
    %v1504 = vunpack.c.l.b16 %v248
    %v1505 = vunpack.c.l.b16 %v249
    %v1506 = vunpack.c.l.b16 %v250
    %v1507 = vunpack.c.l.b16 %v251
    %v1508 = vunpack.c.l.b16 %v252
    %v1509 = vunpack.c.l.b16 %v253
    %v1510 = vunpack.c.l.b16 %v254
    %v1511 = vunpack.c.l.b16 %v255
    %v1512 = vunpack.c.l.b16 %v256
    %v1513 = vunpack.c.l.b16 %v257
    %v1514 = vunpack.c.l.b16 %v258
    %v1515 = vunpack.c.l.b16 %v259
    %v1516 = vunpack.c.l.b16 %v260
    %v1517 = vunpack.c.l.b16 %v261
    %v1518 = vunpack.c.l.b16 %v262
    %v1519 = vunpack.c.l.b16 %v263
    %v1520 = vunpack.c.l.b16 %v264
    %v1521 = vunpack.c.l.b16 %v265
    %v1522 = vunpack.c.l.b16 %v266
    %v1523 = vunpack.c.l.b16 %v267
    %v1524 = vunpack.c.l.b16 %v268
    %v1525 = vunpack.c.l.b16 %v269
    %v1526 = vunpack.c.l.b16 %v270
    %v1527 = vunpack.c.l.b16 %v271
    %v1528 = vunpack.c.l.b16 %v272
    %v1529 = vunpack.c.l.b16 %v273
    %v1530 = vunpack.c.l.b16 %v274
    %v1531 = vunpack.c.l.b16 %v275
    %v1532 = vunpack.c.l.b16 %v276
    %v1533 = vunpack.c.l.b16 %v277
    %v1534 = vunpack.c.l.b16 %v278
    %v1535 = vunpack.c.l.b16 %v279
    %v1536 = vunpack.c.l.b16 %v280
    %v1537 = vunpack.c.l.b16 %v281
    %v1538 = vunpack.c.l.b16 %v282
    %v1539 = vunpack.c.l.b16 %v283
    %v1540 = vunpack.c.l.b16 %v284
    %v1541 = vunpack.c.l.b16 %v285
    %v1542 = vunpack.c.l.b16 %v286
    %v1543 = vunpack.c.l.b16 %v287
    %v1544 = vunpack.c.l.b16 %v288
    %v1545 = vunpack.c.l.b16 %v289
    %v1546 = vunpack.c.l.b16 %v290
    %v1547 = vunpack.c.l.b16 %v291
    %v1548 = vunpack.c.l.b16 %v292
    %v1549 = vunpack.c.l.b16 %v293
    %v1550 = vunpack.c.l.b16 %v294
    %v1551 = vunpack.c.l.b16 %v295
    %v1552 = vunpack.c.l.b16 %v296
    %v1553 = vunpack.c.l.b16 %v297
    %v1554 = vunpack.c.l.b16 %v298
    %v1555 = vunpack.c.l.b16 %v299
    %v1556 = vunpack.c.l.b16 %v300
    %v1557 = vunpack.c.l.b16 %v301
    %v1558 = vunpack.c.l.b16 %v302
    %v1559 = vunpack.c.l.b16 %v303
    %v1560 = vunpack.c.l.b16 %v304
    %v1561 = vunpack.c.l.b16 %v305
    %v1562 = vunpack.c.l.b16 %v306
    %v1563 = vunpack.c.l.b16 %v307
    %v1564 = vunpack.c.l.b16 %v308
    %v1565 = vunpack.c.l.b16 %v309
    %v1566 = vunpack.c.l.b16 %v310
    %v1567 = vunpack.c.l.b16 %v311
    %v1568 = vunpack.c.l.b16 %v312
    %v1569 = vunpack.c.l.b16 %v313
    %v1570 = vunpack.c.l.b16 %v314
    %v1571 = vunpack.c.l.b16 %v315
    %v1572 = vunpack.c.l.b16 %v316
    %v1573 = vunpack.c.l.b16 %v317
    %v1574 = vunpack.c.l.b16 %v318
    %v1575 = vunpack.c.l.b16 %v319
    %v1576 = vunpack.c.l.b16 %v320
    %v1577 = vunpack.c.l.b16 %v321
    %v1578 = vunpack.c.l.b16 %v322
    %v1579 = vunpack.c.l.b16 %v323
    %v1580 = vunpack.c.l.b16 %v324
    %v1581 = vunpack.c.l.b16 %v325
    %v1582 = vunpack.c.l.b16 %v326
    %v1583 = vunpack.c.l.b16 %v327
    %v1584 = vunpack.c.l.b16 %v328
    %v1585 = vunpack.c.l.b16 %v329
    %v1586 = vunpack.c.l.b16 %v330
    %v1587 = vunpack.c.l.b16 %v331
    %v1588 = vunpack.c.l.b16 %v332
    %v1589 = vunpack.c.l.b16 %v333
    %v1590 = vunpack.c.l.b16 %v334
    %v1591 = vunpack.c.l.b16 %v335
    %v1592 = vunpack.c.l.b16 %v336
    %v1593 = vunpack.c.l.b16 %v337
    %v1594 = vunpack.c.l.b16 %v338
    %v1595 = vunpack.c.l.b16 %v339
    %v1596 = vunpack.c.l.b16 %v340
    %v1597 = vunpack.c.l.b16 %v341
    %v1598 = vunpack.c.l.b16 %v342
    %v1599 = vunpack.c.l.b16 %v343
    %v1600 = vunpack.c.l.b16 %v344
    %v1601 = vunpack.c.l.b16 %v345
    %v1602 = vunpack.c.l.b16 %v346
    %v1603 = vunpack.c.l.b16 %v347
    %v1604 = vunpack.c.l.b16 %v348
    %v1605 = vunpack.c.l.b16 %v349
    %v1606 = vunpack.c.l.b16 %v350
    %v1607 = vunpack.c.l.b16 %v351
    %v1608 = vunpack.c.l.b16 %v352
    %v1609 = vunpack.c.l.b16 %v353
    %v1610 = vunpack.c.l.b16 %v354
    %v1611 = vunpack.c.l.b16 %v355
    %v1612 = vunpack.c.l.b16 %v356
    %v1613 = vunpack.c.l.b16 %v357
    %v1614 = vunpack.c.l.b16 %v358
    %v1615 = vunpack.c.l.b16 %v359
    %v1616 = vunpack.c.l.b16 %v360
    %v1617 = vunpack.c.l.b16 %v361
    %v1618 = vunpack.c.l.b16 %v362
    %v1619 = vunpack.c.l.b16 %v363
    %v1620 = vunpack.c.l.b16 %v364
    %v1621 = vunpack.c.l.b16 %v365
    %v1622 = vunpack.c.l.b16 %v366
    %v1623 = vunpack.c.l.b16 %v367
    %v1624 = vunpack.c.l.b16 %v368
    %v1625 = vunpack.c.l.b16 %v369
    %v1626 = vunpack.c.l.b16 %v370
    %v1627 = vunpack.c.l.b16 %v371
    %v1628 = vunpack.c.l.b16 %v372
    %v1629 = vunpack.c.l.b16 %v373
    %v1630 = vunpack.c.l.b16 %v374
    %v1631 = vunpack.c.l.b16 %v375
    %v1632 = vunpack.c.l.b16 %v376
    %v1633 = vunpack.c.l.b16 %v377
    %v1634 = vunpack.c.l.b16 %v378
    %v1635 = vunpack.c.l.b16 %v379
    %v1636 = vunpack.c.l.b16 %v380
    %v1637 = vunpack.c.l.b16 %v381
    %v1638 = vunpack.c.l.b16 %v382
    %v1639 = vunpack.c.l.b16 %v383
    %v1640 = vunpack.c.l.b16 %v384
    %v1641 = vunpack.c.l.b16 %v385
    %v1642 = vunpack.c.l.b16 %v386
    %v1643 = vunpack.c.l.b16 %v387
    %v1644 = vunpack.c.l.b16 %v388
    %v1645 = vunpack.c.l.b16 %v389
    %v1646 = vunpack.c.l.b16 %v390
    %v1647 = vunpack.c.l.b16 %v391
    %v1648 = vunpack.c.l.b16 %v392
    %v1649 = vunpack.c.l.b16 %v393
    %v1650 = vunpack.c.l.b16 %v394
    %v1651 = vunpack.c.l.b16 %v395
    %v1652 = vunpack.c.l.b16 %v396
    %v1653 = vunpack.c.l.b16 %v397
    %v1654 = vunpack.c.l.b16 %v398
    %v1655 = vunpack.c.l.b16 %v399
    %v1656 = vunpack.c.l.b16 %v400
    %v1657 = vunpack.c.l.b16 %v401
    %v1658 = vunpack.c.l.b16 %v402
    %v1659 = vunpack.c.l.b16 %v403
    %v1660 = vunpack.c.l.b16 %v404
    %v1661 = vunpack.c.l.b16 %v405
    %v1662 = vunpack.c.l.b16 %v406
    %v1663 = vunpack.c.l.b16 %v407
    %v1664 = vunpack.c.l.b16 %v408
    %v1665 = vunpack.c.l.b16 %v409
    %v1666 = vunpack.c.l.b16 %v410
    %v1667 = vunpack.c.l.b16 %v411
    %v1668 = vunpack.c.l.b16 %v412
    %v1669 = vunpack.c.l.b16 %v413
    %v1670 = vunpack.c.l.b16 %v414
    %v1671 = vunpack.c.l.b16 %v415
    %v1672 = vunpack.c.l.b16 %v416
    %v1673 = vunpack.c.l.b16 %v417
    %v1674 = vunpack.c.l.b16 %v418
    %v1675 = vunpack.c.l.b16 %v419
    %v1676 = vunpack.c.l.b16 %v420
    %v1677 = vunpack.c.l.b16 %v421
    %v1678 = vunpack.c.l.b16 %v422
    %v1679 = vunpack.c.l.b16 %v423
    %v1680 = vunpack.c.l.b16 %v424
    %v1681 = vunpack.c.l.b16 %v425
    %v1682 = vunpack.c.l.b16 %v426
    %v1683 = vunpack.c.l.b16 %v427
    %v1684 = vunpack.c.l.b16 %v428
    %v1685 = vunpack.c.l.b16 %v429
    %v1686 = vunpack.c.l.b16 %v430
    %v1687 = vunpack.c.l.b16 %v431
    %v1688 = vunpack.c.l.b16 %v432
    %v1689 = vunpack.c.l.b16 %v433
    %v1690 = vunpack.c.l.b16 %v434
    %v1691 = vunpack.c.l.b16 %v435
    %v1692 = vunpack.c.l.b16 %v436
    %v1693 = vunpack.c.l.b16 %v437
    %v1694 = vunpack.c.l.b16 %v438
    %v1695 = vunpack.c.l.b16 %v439
    %v1696 = vunpack.c.l.b16 %v440
    %v1697 = vunpack.c.l.b16 %v441
    %v1698 = vunpack.c.l.b16 %v442
    %v1699 = vunpack.c.l.b16 %v443
    %v1700 = vunpack.c.l.b16 %v444
    %v1701 = vunpack.c.l.b16 %v445
    %v1702 = vunpack.c.l.b16 %v446
    %v1703 = vunpack.c.l.b16 %v447
    %v1704 = vunpack.c.l.b16 %v448
    %v1705 = vunpack.c.l.b16 %v449
    %v1706 = vunpack.c.l.b16 %v450
    %v1707 = vunpack.c.l.b16 %v451
    %v1708 = vunpack.c.l.b16 %v452
    %v1709 = vunpack.c.l.b16 %v453
    %v1710 = vunpack.c.l.b16 %v454
    %v1711 = vunpack.c.l.b16 %v455
    %v1712 = vunpack.c.l.b16 %v456
    %v1713 = vunpack.c.l.b16 %v457
    %v1714 = vunpack.c.l.b16 %v458
    %v1715 = vunpack.c.l.b16 %v459
    %v1716 = vunpack.c.l.b16 %v460
    %v1717 = vunpack.c.l.b16 %v461
    %v1718 = vunpack.c.l.b16 %v462
    %v1719 = vunpack.c.l.b16 %v463
    %v1720 = vunpack.c.l.b16 %v464
    %v1721 = vunpack.c.l.b16 %v465
    %v1722 = vunpack.c.l.b16 %v466
    %v1723 = vunpack.c.l.b16 %v467
    %v1724 = vunpack.c.l.b16 %v468
    %v1725 = vunpack.c.l.b16 %v469
    %v1726 = vunpack.c.l.b16 %v470
    %v1727 = vunpack.c.l.b16 %v471
    %v1728 = vunpack.c.l.b16 %v472
    %v1729 = vunpack.c.l.b16 %v473
    %v1730 = vunpack.c.l.b16 %v474
    %v1731 = vunpack.c.l.b16 %v475
    %v1732 = vunpack.c.l.b16 %v476
    %v1733 = vunpack.c.l.b16 %v477
    %v1734 = vunpack.c.l.b16 %v478
    %v1735 = vunpack.c.l.b16 %v479
    %v1736 = vunpack.c.l.b16 %v480
    %v1737 = vunpack.c.l.b16 %v481
    %v1738 = vunpack.c.l.b16 %v482
    %v1739 = vunpack.c.l.b16 %v483
    %v1740 = vunpack.c.l.b16 %v484
    %v1741 = vunpack.c.l.b16 %v485
    %v1742 = vunpack.c.l.b16 %v486
    %v1743 = vunpack.c.l.b16 %v487
    %v1744 = vunpack.c.l.b16 %v488
    %v1745 = vunpack.c.l.b16 %v489
    %v1746 = vunpack.c.l.b16 %v490
    %v1747 = vunpack.c.l.b16 %v491
    %v1748 = vunpack.c.l.b16 %v492
    %v1749 = vunpack.c.l.b16 %v493
    %v1750 = vunpack.c.l.b16 %v494
    %v1751 = vunpack.c.l.b16 %v495
    %v1752 = vunpack.c.l.b16 %v496
    %v1753 = vunpack.c.l.b16 %v497
    %v1754 = vunpack.c.l.b16 %v498
    %v1755 = vunpack.c.l.b16 %v499
    %v1756 = vunpack.c.l.b16 %v500
    %v1757 = vunpack.c.l.b16 %v501
    %v1758 = vunpack.c.l.b16 %v502
    %v1759 = vunpack.c.l.b16 %v503
    %v1760 = vunpack.c.l.b16 %v504
    %v1761 = vunpack.c.l.b16 %v505
    %v1762 = vunpack.c.l.b16 %v506
    %v1763 = vunpack.c.l.b16 %v507
    %v1764 = vunpack.c.l.b16 %v508
    %v1765 = vunpack.c.l.b16 %v509
    %v1766 = vunpack.c.l.b16 %v510
    %v1767 = vunpack.c.l.b16 %v511
    %v1768 = vunpack.c.l.b16 %v512
    %v1769 = vunpack.c.l.b16 %v513
    %v1770 = vunpack.c.l.b16 %v514
    %v1771 = vunpack.c.l.b16 %v515
    %v1772 = vunpack.c.l.b16 %v516
    %v1773 = vunpack.c.l.b16 %v517
    %v1774 = vunpack.c.l.b16 %v518
    %v1775 = vunpack.c.l.b16 %v519
    %v1776 = vunpack.c.l.b16 %v520
    %v1777 = vunpack.c.l.b16 %v521
    %v1778 = vunpack.c.l.b16 %v522
    %v1779 = vunpack.c.l.b16 %v523
    %v1780 = vunpack.c.l.b16 %v524
    %v1781 = vunpack.c.l.b16 %v525
    %v1782 = vunpack.c.l.b16 %v526
    %v1783 = vunpack.c.l.b16 %v527
    %v1784 = vunpack.c.l.b16 %v528
    %v1785 = vunpack.c.l.b16 %v529
    %v1786 = vunpack.c.l.b16 %v530
    %v1787 = vunpack.c.l.b16 %v531
    %v1788 = vunpack.c.l.b16 %v532
    %v1789 = vunpack.c.l.b16 %v533
    %v1790 = vunpack.c.l.b16 %v534
    %v1791 = vunpack.c.l.b16 %v535
    %v1792 = vunpack.c.l.b16 %v536
    %v1793 = vunpack.c.l.b16 %v537
    %v1794 = vunpack.c.l.b16 %v538
    %v1795 = vunpack.c.l.b16 %v539
    %v1796 = vunpack.c.l.b16 %v540
    %v1797 = vunpack.c.l.b16 %v541
    %v1798 = vunpack.c.l.b16 %v542
    %v1799 = vunpack.c.l.b16 %v543
    %v1800 = vpack.c.b16 %v1289, %v1288
    %v1801 = vpack.c.b16 %v1291, %v1290
    %v1802 = vpack.c.b16 %v1293, %v1292
    %v1803 = vpack.c.b16 %v1295, %v1294
    %v1804 = vpack.c.b16 %v1297, %v1296
    %v1805 = vpack.c.b16 %v1299, %v1298
    %v1806 = vpack.c.b16 %v1301, %v1300
    %v1807 = vpack.c.b16 %v1303, %v1302
    %v1808 = vpack.c.b16 %v1305, %v1304
    %v1809 = vpack.c.b16 %v1307, %v1306
    %v1810 = vpack.c.b16 %v1309, %v1308
    %v1811 = vpack.c.b16 %v1311, %v1310
    %v1812 = vpack.c.b16 %v1313, %v1312
    %v1813 = vpack.c.b16 %v1315, %v1314
    %v1814 = vpack.c.b16 %v1317, %v1316
    %v1815 = vpack.c.b16 %v1319, %v1318
    %v1816 = vpack.c.b16 %v1321, %v1320
    %v1817 = vpack.c.b16 %v1323, %v1322
    %v1818 = vpack.c.b16 %v1325, %v1324
    %v1819 = vpack.c.b16 %v1327, %v1326
    %v1820 = vpack.c.b16 %v1329, %v1328
    %v1821 = vpack.c.b16 %v1331, %v1330
    %v1822 = vpack.c.b16 %v1333, %v1332
    %v1823 = vpack.c.b16 %v1335, %v1334
    %v1824 = vpack.c.b16 %v1337, %v1336
    %v1825 = vpack.c.b16 %v1339, %v1338
    %v1826 = vpack.c.b16 %v1341, %v1340
    %v1827 = vpack.c.b16 %v1343, %v1342
    %v1828 = vpack.c.b16 %v1345, %v1344
    %v1829 = vpack.c.b16 %v1347, %v1346
    %v1830 = vpack.c.b16 %v1349, %v1348
    %v1831 = vpack.c.b16 %v1351, %v1350
    %v1832 = vpack.c.b16 %v1353, %v1352
    %v1833 = vpack.c.b16 %v1355, %v1354
    %v1834 = vpack.c.b16 %v1357, %v1356
    %v1835 = vpack.c.b16 %v1359, %v1358
    %v1836 = vpack.c.b16 %v1361, %v1360
    %v1837 = vpack.c.b16 %v1363, %v1362
    %v1838 = vpack.c.b16 %v1365, %v1364
    %v1839 = vpack.c.b16 %v1367, %v1366
    %v1840 = vpack.c.b16 %v1369, %v1368
    %v1841 = vpack.c.b16 %v1371, %v1370
    %v1842 = vpack.c.b16 %v1373, %v1372
    %v1843 = vpack.c.b16 %v1375, %v1374
    %v1844 = vpack.c.b16 %v1377, %v1376
    %v1845 = vpack.c.b16 %v1379, %v1378
    %v1846 = vpack.c.b16 %v1381, %v1380
    %v1847 = vpack.c.b16 %v1383, %v1382
    %v1848 = vpack.c.b16 %v1385, %v1384
    %v1849 = vpack.c.b16 %v1387, %v1386
    %v1850 = vpack.c.b16 %v1389, %v1388
    %v1851 = vpack.c.b16 %v1391, %v1390
    %v1852 = vpack.c.b16 %v1393, %v1392
    %v1853 = vpack.c.b16 %v1395, %v1394
    %v1854 = vpack.c.b16 %v1397, %v1396
    %v1855 = vpack.c.b16 %v1399, %v1398
    %v1856 = vpack.c.b16 %v1401, %v1400
    %v1857 = vpack.c.b16 %v1403, %v1402
    %v1858 = vpack.c.b16 %v1405, %v1404
    %v1859 = vpack.c.b16 %v1407, %v1406
    %v1860 = vpack.c.b16 %v1409, %v1408
    %v1861 = vpack.c.b16 %v1411, %v1410
    %v1862 = vpack.c.b16 %v1413, %v1412
    %v1863 = vpack.c.b16 %v1415, %v1414
    %v1864 = vpack.c.b16 %v1417, %v1416
    %v1865 = vpack.c.b16 %v1419, %v1418
    %v1866 = vpack.c.b16 %v1421, %v1420
    %v1867 = vpack.c.b16 %v1423, %v1422
    %v1868 = vpack.c.b16 %v1425, %v1424
    %v1869 = vpack.c.b16 %v1427, %v1426
    %v1870 = vpack.c.b16 %v1429, %v1428
    %v1871 = vpack.c.b16 %v1431, %v1430
    %v1872 = vpack.c.b16 %v1433, %v1432
    %v1873 = vpack.c.b16 %v1435, %v1434
    %v1874 = vpack.c.b16 %v1437, %v1436
    %v1875 = vpack.c.b16 %v1439, %v1438
    %v1876 = vpack.c.b16 %v1441, %v1440
    %v1877 = vpack.c.b16 %v1443, %v1442
    %v1878 = vpack.c.b16 %v1445, %v1444
    %v1879 = vpack.c.b16 %v1447, %v1446
    %v1880 = vpack.c.b16 %v1449, %v1448
    %v1881 = vpack.c.b16 %v1451, %v1450
    %v1882 = vpack.c.b16 %v1453, %v1452
    %v1883 = vpack.c.b16 %v1455, %v1454
    %v1884 = vpack.c.b16 %v1457, %v1456
    %v1885 = vpack.c.b16 %v1459, %v1458
    %v1886 = vpack.c.b16 %v1461, %v1460
    %v1887 = vpack.c.b16 %v1463, %v1462
    %v1888 = vpack.c.b16 %v1465, %v1464
    %v1889 = vpack.c.b16 %v1467, %v1466
    %v1890 = vpack.c.b16 %v1469, %v1468
    %v1891 = vpack.c.b16 %v1471, %v1470
    %v1892 = vpack.c.b16 %v1473, %v1472
    %v1893 = vpack.c.b16 %v1475, %v1474
    %v1894 = vpack.c.b16 %v1477, %v1476
    %v1895 = vpack.c.b16 %v1479, %v1478
    %v1896 = vpack.c.b16 %v1481, %v1480
    %v1897 = vpack.c.b16 %v1483, %v1482
    %v1898 = vpack.c.b16 %v1485, %v1484
    %v1899 = vpack.c.b16 %v1487, %v1486
    %v1900 = vpack.c.b16 %v1489, %v1488
    %v1901 = vpack.c.b16 %v1491, %v1490
    %v1902 = vpack.c.b16 %v1493, %v1492
    %v1903 = vpack.c.b16 %v1495, %v1494
    %v1904 = vpack.c.b16 %v1497, %v1496
    %v1905 = vpack.c.b16 %v1499, %v1498
    %v1906 = vpack.c.b16 %v1501, %v1500
    %v1907 = vpack.c.b16 %v1503, %v1502
    %v1908 = vpack.c.b16 %v1505, %v1504
    %v1909 = vpack.c.b16 %v1507, %v1506
    %v1910 = vpack.c.b16 %v1509, %v1508
    %v1911 = vpack.c.b16 %v1511, %v1510
    %v1912 = vpack.c.b16 %v1513, %v1512
    %v1913 = vpack.c.b16 %v1515, %v1514
    %v1914 = vpack.c.b16 %v1517, %v1516
    %v1915 = vpack.c.b16 %v1519, %v1518
    %v1916 = vpack.c.b16 %v1521, %v1520
    %v1917 = vpack.c.b16 %v1523, %v1522
    %v1918 = vpack.c.b16 %v1525, %v1524
    %v1919 = vpack.c.b16 %v1527, %v1526
    %v1920 = vpack.c.b16 %v1529, %v1528
    %v1921 = vpack.c.b16 %v1531, %v1530
    %v1922 = vpack.c.b16 %v1533, %v1532
    %v1923 = vpack.c.b16 %v1535, %v1534
    %v1924 = vpack.c.b16 %v1537, %v1536
    %v1925 = vpack.c.b16 %v1539, %v1538
    %v1926 = vpack.c.b16 %v1541, %v1540
    %v1927 = vpack.c.b16 %v1543, %v1542
    %v1928 = vpack.c.b16 %v1545, %v1544
    %v1929 = vpack.c.b16 %v1547, %v1546
    %v1930 = vpack.c.b16 %v1549, %v1548
    %v1931 = vpack.c.b16 %v1551, %v1550
    %v1932 = vpack.c.b16 %v1553, %v1552
    %v1933 = vpack.c.b16 %v1555, %v1554
    %v1934 = vpack.c.b16 %v1557, %v1556
    %v1935 = vpack.c.b16 %v1559, %v1558
    %v1936 = vpack.c.b16 %v1561, %v1560
    %v1937 = vpack.c.b16 %v1563, %v1562
    %v1938 = vpack.c.b16 %v1565, %v1564
    %v1939 = vpack.c.b16 %v1567, %v1566
    %v1940 = vpack.c.b16 %v1569, %v1568
    %v1941 = vpack.c.b16 %v1571, %v1570
    %v1942 = vpack.c.b16 %v1573, %v1572
    %v1943 = vpack.c.b16 %v1575, %v1574
    %v1944 = vpack.c.b16 %v1577, %v1576
    %v1945 = vpack.c.b16 %v1579, %v1578
    %v1946 = vpack.c.b16 %v1581, %v1580
    %v1947 = vpack.c.b16 %v1583, %v1582
    %v1948 = vpack.c.b16 %v1585, %v1584
    %v1949 = vpack.c.b16 %v1587, %v1586
    %v1950 = vpack.c.b16 %v1589, %v1588
    %v1951 = vpack.c.b16 %v1591, %v1590
    %v1952 = vpack.c.b16 %v1593, %v1592
    %v1953 = vpack.c.b16 %v1595, %v1594
    %v1954 = vpack.c.b16 %v1597, %v1596
    %v1955 = vpack.c.b16 %v1599, %v1598
    %v1956 = vpack.c.b16 %v1601, %v1600
    %v1957 = vpack.c.b16 %v1603, %v1602
    %v1958 = vpack.c.b16 %v1605, %v1604
    %v1959 = vpack.c.b16 %v1607, %v1606
    %v1960 = vpack.c.b16 %v1609, %v1608
    %v1961 = vpack.c.b16 %v1611, %v1610
    %v1962 = vpack.c.b16 %v1613, %v1612
    %v1963 = vpack.c.b16 %v1615, %v1614
    %v1964 = vpack.c.b16 %v1617, %v1616
    %v1965 = vpack.c.b16 %v1619, %v1618
    %v1966 = vpack.c.b16 %v1621, %v1620
    %v1967 = vpack.c.b16 %v1623, %v1622
    %v1968 = vpack.c.b16 %v1625, %v1624
    %v1969 = vpack.c.b16 %v1627, %v1626
    %v1970 = vpack.c.b16 %v1629, %v1628
    %v1971 = vpack.c.b16 %v1631, %v1630
    %v1972 = vpack.c.b16 %v1633, %v1632
    %v1973 = vpack.c.b16 %v1635, %v1634
    %v1974 = vpack.c.b16 %v1637, %v1636
    %v1975 = vpack.c.b16 %v1639, %v1638
    %v1976 = vpack.c.b16 %v1641, %v1640
    %v1977 = vpack.c.b16 %v1643, %v1642
    %v1978 = vpack.c.b16 %v1645, %v1644
    %v1979 = vpack.c.b16 %v1647, %v1646
    %v1980 = vpack.c.b16 %v1649, %v1648
    %v1981 = vpack.c.b16 %v1651, %v1650
    %v1982 = vpack.c.b16 %v1653, %v1652
    %v1983 = vpack.c.b16 %v1655, %v1654
    %v1984 = vpack.c.b16 %v1657, %v1656
    %v1985 = vpack.c.b16 %v1659, %v1658
    %v1986 = vpack.c.b16 %v1661, %v1660
    %v1987 = vpack.c.b16 %v1663, %v1662
    %v1988 = vpack.c.b16 %v1665, %v1664
    %v1989 = vpack.c.b16 %v1667, %v1666
    %v1990 = vpack.c.b16 %v1669, %v1668
    %v1991 = vpack.c.b16 %v1671, %v1670
    %v1992 = vpack.c.b16 %v1673, %v1672
    %v1993 = vpack.c.b16 %v1675, %v1674
    %v1994 = vpack.c.b16 %v1677, %v1676
    %v1995 = vpack.c.b16 %v1679, %v1678
    %v1996 = vpack.c.b16 %v1681, %v1680
    %v1997 = vpack.c.b16 %v1683, %v1682
    %v1998 = vpack.c.b16 %v1685, %v1684
    %v1999 = vpack.c.b16 %v1687, %v1686
    %v2000 = vpack.c.b16 %v1689, %v1688
    %v2001 = vpack.c.b16 %v1691, %v1690
    %v2002 = vpack.c.b16 %v1693, %v1692
    %v2003 = vpack.c.b16 %v1695, %v1694
    %v2004 = vpack.c.b16 %v1697, %v1696
    %v2005 = vpack.c.b16 %v1699, %v1698
    %v2006 = vpack.c.b16 %v1701, %v1700
    %v2007 = vpack.c.b16 %v1703, %v1702
    %v2008 = vpack.c.b16 %v1705, %v1704
    %v2009 = vpack.c.b16 %v1707, %v1706
    %v2010 = vpack.c.b16 %v1709, %v1708
    %v2011 = vpack.c.b16 %v1711, %v1710
    %v2012 = vpack.c.b16 %v1713, %v1712
    %v2013 = vpack.c.b16 %v1715, %v1714
    %v2014 = vpack.c.b16 %v1717, %v1716
    %v2015 = vpack.c.b16 %v1719, %v1718
    %v2016 = vpack.c.b16 %v1721, %v1720
    %v2017 = vpack.c.b16 %v1723, %v1722
    %v2018 = vpack.c.b16 %v1725, %v1724
    %v2019 = vpack.c.b16 %v1727, %v1726
    %v2020 = vpack.c.b16 %v1729, %v1728
    %v2021 = vpack.c.b16 %v1731, %v1730
    %v2022 = vpack.c.b16 %v1733, %v1732
    %v2023 = vpack.c.b16 %v1735, %v1734
    %v2024 = vpack.c.b16 %v1737, %v1736
    %v2025 = vpack.c.b16 %v1739, %v1738
    %v2026 = vpack.c.b16 %v1741, %v1740
    %v2027 = vpack.c.b16 %v1743, %v1742
    %v2028 = vpack.c.b16 %v1745, %v1744
    %v2029 = vpack.c.b16 %v1747, %v1746
    %v2030 = vpack.c.b16 %v1749, %v1748
    %v2031 = vpack.c.b16 %v1751, %v1750
    %v2032 = vpack.c.b16 %v1753, %v1752
    %v2033 = vpack.c.b16 %v1755, %v1754
    %v2034 = vpack.c.b16 %v1757, %v1756
    %v2035 = vpack.c.b16 %v1759, %v1758
    %v2036 = vpack.c.b16 %v1761, %v1760
    %v2037 = vpack.c.b16 %v1763, %v1762
    %v2038 = vpack.c.b16 %v1765, %v1764
    %v2039 = vpack.c.b16 %v1767, %v1766
    %v2040 = vpack.c.b16 %v1769, %v1768
    %v2041 = vpack.c.b16 %v1771, %v1770
    %v2042 = vpack.c.b16 %v1773, %v1772
    %v2043 = vpack.c.b16 %v1775, %v1774
    %v2044 = vpack.c.b16 %v1777, %v1776
    %v2045 = vpack.c.b16 %v1779, %v1778
    %v2046 = vpack.c.b16 %v1781, %v1780
    %v2047 = vpack.c.b16 %v1783, %v1782
    %v2048 = vpack.c.b16 %v1785, %v1784
    %v2049 = vpack.c.b16 %v1787, %v1786
    %v2050 = vpack.c.b16 %v1789, %v1788
    %v2051 = vpack.c.b16 %v1791, %v1790
    %v2052 = vpack.c.b16 %v1793, %v1792
    %v2053 = vpack.c.b16 %v1795, %v1794
    %v2054 = vpack.c.b16 %v1797, %v1796
    %v2055 = vpack.c.b16 %v1799, %v1798
    %2312 = vmatprep.subr.bf16.mxu0 0
    %2313 = vmatpush1.bf16.msra.mxu0 %v1800
    %2314 = vmatprep.subr.bf16.mxu0 0
    %2315 = vmatpush1.bf16.msra.mxu0 %v1801
    %2316 = vmatprep.subr.bf16.mxu0 0
    %2317 = vmatpush1.bf16.msra.mxu0 %v1802
    %2318 = vmatprep.subr.bf16.mxu0 0
    %2319 = vmatpush1.bf16.msra.mxu0 %v1803
    %2320 = vmatprep.subr.bf16.mxu0 0
    %2321 = vmatpush1.bf16.msra.mxu0 %v1804
    %2322 = vmatprep.subr.bf16.mxu0 0
    %2323 = vmatpush1.bf16.msra.mxu0 %v1805
    %2324 = vmatprep.subr.bf16.mxu0 0
    %2325 = vmatpush1.bf16.msra.mxu0 %v1806
    %2326 = vmatprep.subr.bf16.mxu0 0
    %2327 = vmatpush1.bf16.msra.mxu0 %v1807
    %2328 = vmatprep.subr.bf16.mxu0 0
    %2329 = vmatpush1.bf16.msra.mxu0 %v1808
    %2330 = vmatprep.subr.bf16.mxu0 0
    %2331 = vmatpush1.bf16.msra.mxu0 %v1809
    %2332 = vmatprep.subr.bf16.mxu0 0
    %2333 = vmatpush1.bf16.msra.mxu0 %v1810
    %2334 = vmatprep.subr.bf16.mxu0 0
    %2335 = vmatpush1.bf16.msra.mxu0 %v1811
    %2336 = vmatprep.subr.bf16.mxu0 0
    %2337 = vmatpush1.bf16.msra.mxu0 %v1812
    %2338 = vmatprep.subr.bf16.mxu0 0
    %2339 = vmatpush1.bf16.msra.mxu0 %v1813
    %2340 = vmatprep.subr.bf16.mxu0 0
    %2341 = vmatpush1.bf16.msra.mxu0 %v1814
    %2342 = vmatprep.subr.bf16.mxu0 0
    %2343 = vmatpush1.bf16.msra.mxu0 %v1815
    %2344 = vmatprep.mubr.bf16.mxu0 %v585
    %2345 = vmatmul.mubr.bf16.gmra.mrb[0].mxu0 %v571
    %v2346 = vpop.f32.mrb[0].mxu0
    %v2347 = vadd.f32 0.0, %v2346
    %v2348 = vpop.f32.mrb[0].mxu0
    %v2349 = vpop.f32.mrb[0].mxu0
    %v2350 = vpop.f32.mrb[0].mxu0
    %2351 = vdwg.mxu0
    %2352 = vmatprep.subr.bf16.mxu0 0
    %2353 = vmatpush1.bf16.msra.mxu0 %v1816
    %2354 = vmatprep.subr.bf16.mxu0 0
    %2355 = vmatpush1.bf16.msra.mxu0 %v1817
    %2356 = vmatprep.subr.bf16.mxu0 0
    %2357 = vmatpush1.bf16.msra.mxu0 %v1818
    %2358 = vmatprep.subr.bf16.mxu0 0
    %2359 = vmatpush1.bf16.msra.mxu0 %v1819
    %2360 = vmatprep.subr.bf16.mxu0 0
    %2361 = vmatpush1.bf16.msra.mxu0 %v1820
    %2362 = vmatprep.subr.bf16.mxu0 0
    %2363 = vmatpush1.bf16.msra.mxu0 %v1821
    %2364 = vmatprep.subr.bf16.mxu0 0
    %2365 = vmatpush1.bf16.msra.mxu0 %v1822
    %2366 = vmatprep.subr.bf16.mxu0 0
    %2367 = vmatpush1.bf16.msra.mxu0 %v1823
    %2368 = vmatprep.subr.bf16.mxu0 0
    %2369 = vmatpush1.bf16.msra.mxu0 %v1824
    %2370 = vmatprep.subr.bf16.mxu0 0
    %2371 = vmatpush1.bf16.msra.mxu0 %v1825
    %2372 = vmatprep.subr.bf16.mxu0 0
    %2373 = vmatpush1.bf16.msra.mxu0 %v1826
    %2374 = vmatprep.subr.bf16.mxu0 0
    %2375 = vmatpush1.bf16.msra.mxu0 %v1827
    %2376 = vmatprep.subr.bf16.mxu0 0
    %2377 = vmatpush1.bf16.msra.mxu0 %v1828
    %2378 = vmatprep.subr.bf16.mxu0 0
    %2379 = vmatpush1.bf16.msra.mxu0 %v1829
    %2380 = vmatprep.subr.bf16.mxu0 0
    %2381 = vmatpush1.bf16.msra.mxu0 %v1830
    %2382 = vmatprep.subr.bf16.mxu0 0
    %2383 = vmatpush1.bf16.msra.mxu0 %v1831
    %2384 = vmatprep.mubr.bf16.mxu0 %v595
    %2385 = vmatmul.mubr.bf16.gmra.mrb[0].mxu0 %v593
    %v2386 = vpop.f32.mrb[0].mxu0
    %v2387 = vadd.f32 %v2347, %v2386
    %v2388 = vpop.f32.mrb[0].mxu0
    %v2389 = vpop.f32.mrb[0].mxu0
    %v2390 = vpop.f32.mrb[0].mxu0
    %2391 = vdwg.mxu0
    %2392 = vmatprep.subr.bf16.mxu0 0
    %2393 = vmatpush1.bf16.msra.mxu0 %v1832
    %2394 = vmatprep.subr.bf16.mxu0 0
    %2395 = vmatpush1.bf16.msra.mxu0 %v1833
    %2396 = vmatprep.subr.bf16.mxu0 0
    %2397 = vmatpush1.bf16.msra.mxu0 %v1834
    %2398 = vmatprep.subr.bf16.mxu0 0
    %2399 = vmatpush1.bf16.msra.mxu0 %v1835
    %2400 = vmatprep.subr.bf16.mxu0 0
    %2401 = vmatpush1.bf16.msra.mxu0 %v1836
    %2402 = vmatprep.subr.bf16.mxu0 0
    %2403 = vmatpush1.bf16.msra.mxu0 %v1837
    %2404 = vmatprep.subr.bf16.mxu0 0
    %2405 = vmatpush1.bf16.msra.mxu0 %v1838
    %2406 = vmatprep.subr.bf16.mxu0 0
    %2407 = vmatpush1.bf16.msra.mxu0 %v1839
    %2408 = vmatprep.subr.bf16.mxu0 0
    %2409 = vmatpush1.bf16.msra.mxu0 %v1840
    %2410 = vmatprep.subr.bf16.mxu0 0
    %2411 = vmatpush1.bf16.msra.mxu0 %v1841
    %2412 = vmatprep.subr.bf16.mxu0 0
    %2413 = vmatpush1.bf16.msra.mxu0 %v1842
    %2414 = vmatprep.subr.bf16.mxu0 0
    %2415 = vmatpush1.bf16.msra.mxu0 %v1843
    %2416 = vmatprep.subr.bf16.mxu0 0
    %2417 = vmatpush1.bf16.msra.mxu0 %v1844
    %2418 = vmatprep.subr.bf16.mxu0 0
    %2419 = vmatpush1.bf16.msra.mxu0 %v1845
    %2420 = vmatprep.subr.bf16.mxu0 0
    %2421 = vmatpush1.bf16.msra.mxu0 %v1846
    %2422 = vmatprep.subr.bf16.mxu0 0
    %2423 = vmatpush1.bf16.msra.mxu0 %v1847
    %2424 = vmatprep.mubr.bf16.mxu0 %v592
    %2425 = vmatmul.mubr.bf16.gmra.mrb[0].mxu0 %v578
    %v2426 = vpop.f32.mrb[0].mxu0
    %v2427 = vadd.f32 %v2387, %v2426
    %v2428 = vpop.f32.mrb[0].mxu0
    %v2429 = vpop.f32.mrb[0].mxu0
    %v2430 = vpop.f32.mrb[0].mxu0
    %2431 = vdwg.mxu0
    %2432 = vmatprep.subr.bf16.mxu0 0
    %2433 = vmatpush1.bf16.msra.mxu0 %v1848
    %2434 = vmatprep.subr.bf16.mxu0 0
    %2435 = vmatpush1.bf16.msra.mxu0 %v1849
    %2436 = vmatprep.subr.bf16.mxu0 0
    %2437 = vmatpush1.bf16.msra.mxu0 %v1850
    %2438 = vmatprep.subr.bf16.mxu0 0
    %2439 = vmatpush1.bf16.msra.mxu0 %v1851
    %2440 = vmatprep.subr.bf16.mxu0 0
    %2441 = vmatpush1.bf16.msra.mxu0 %v1852
    %2442 = vmatprep.subr.bf16.mxu0 0
    %2443 = vmatpush1.bf16.msra.mxu0 %v1853
    %2444 = vmatprep.subr.bf16.mxu0 0
    %2445 = vmatpush1.bf16.msra.mxu0 %v1854
    %2446 = vmatprep.subr.bf16.mxu0 0
    %2447 = vmatpush1.bf16.msra.mxu0 %v1855
    %2448 = vmatprep.subr.bf16.mxu0 0
    %2449 = vmatpush1.bf16.msra.mxu0 %v1856
    %2450 = vmatprep.subr.bf16.mxu0 0
    %2451 = vmatpush1.bf16.msra.mxu0 %v1857
    %2452 = vmatprep.subr.bf16.mxu0 0
    %2453 = vmatpush1.bf16.msra.mxu0 %v1858
    %2454 = vmatprep.subr.bf16.mxu0 0
    %2455 = vmatpush1.bf16.msra.mxu0 %v1859
    %2456 = vmatprep.subr.bf16.mxu0 0
    %2457 = vmatpush1.bf16.msra.mxu0 %v1860
    %2458 = vmatprep.subr.bf16.mxu0 0
    %2459 = vmatpush1.bf16.msra.mxu0 %v1861
    %2460 = vmatprep.subr.bf16.mxu0 0
    %2461 = vmatpush1.bf16.msra.mxu0 %v1862
    %2462 = vmatprep.subr.bf16.mxu0 0
    %2463 = vmatpush1.bf16.msra.mxu0 %v1863
    %2464 = vmatprep.mubr.bf16.mxu0 %v596
    %2465 = vmatmul.mubr.bf16.gmra.mrb[0].mxu0 %v594
    %v2466 = vpop.f32.mrb[0].mxu0
    %v2467 = vadd.f32 %v2427, %v2466
    %v2468 = vpop.f32.mrb[0].mxu0
    %v2469 = vpop.f32.mrb[0].mxu0
    %v2470 = vpop.f32.mrb[0].mxu0
    %2471 = vdwg.mxu0
    %2472 = vmatprep.subr.bf16.mxu0 0
    %2473 = vmatpush1.bf16.msra.mxu0 %v1864
    %2474 = vmatprep.subr.bf16.mxu0 0
    %2475 = vmatpush1.bf16.msra.mxu0 %v1865
    %2476 = vmatprep.subr.bf16.mxu0 0
    %2477 = vmatpush1.bf16.msra.mxu0 %v1866
    %2478 = vmatprep.subr.bf16.mxu0 0
    %2479 = vmatpush1.bf16.msra.mxu0 %v1867
    %2480 = vmatprep.subr.bf16.mxu0 0
    %2481 = vmatpush1.bf16.msra.mxu0 %v1868
    %2482 = vmatprep.subr.bf16.mxu0 0
    %2483 = vmatpush1.bf16.msra.mxu0 %v1869
    %2484 = vmatprep.subr.bf16.mxu0 0
    %2485 = vmatpush1.bf16.msra.mxu0 %v1870
    %2486 = vmatprep.subr.bf16.mxu0 0
    %2487 = vmatpush1.bf16.msra.mxu0 %v1871
    %2488 = vmatprep.subr.bf16.mxu0 0
    %2489 = vmatpush1.bf16.msra.mxu0 %v1872
    %2490 = vmatprep.subr.bf16.mxu0 0
    %2491 = vmatpush1.bf16.msra.mxu0 %v1873
    %2492 = vmatprep.subr.bf16.mxu0 0
    %2493 = vmatpush1.bf16.msra.mxu0 %v1874
    %2494 = vmatprep.subr.bf16.mxu0 0
    %2495 = vmatpush1.bf16.msra.mxu0 %v1875
    %2496 = vmatprep.subr.bf16.mxu0 0
    %2497 = vmatpush1.bf16.msra.mxu0 %v1876
    %2498 = vmatprep.subr.bf16.mxu0 0
    %2499 = vmatpush1.bf16.msra.mxu0 %v1877
    %2500 = vmatprep.subr.bf16.mxu0 0
    %2501 = vmatpush1.bf16.msra.mxu0 %v1878
    %2502 = vmatprep.subr.bf16.mxu0 0
    %2503 = vmatpush1.bf16.msra.mxu0 %v1879
    %2504 = vmatprep.mubr.bf16.mxu0 %v634
    %2505 = vmatmul.mubr.bf16.gmra.mrb[0].mxu0 %v620
    %v2506 = vpop.f32.mrb[0].mxu0
    %v2507 = vadd.f32 %v2467, %v2506
    %v2508 = vpop.f32.mrb[0].mxu0
    %v2509 = vpop.f32.mrb[0].mxu0
    %v2510 = vpop.f32.mrb[0].mxu0
    %2511 = vdwg.mxu0
    %2512 = vmatprep.subr.bf16.mxu0 0
    %2513 = vmatpush1.bf16.msra.mxu0 %v1880
    %2514 = vmatprep.subr.bf16.mxu0 0
    %2515 = vmatpush1.bf16.msra.mxu0 %v1881
    %2516 = vmatprep.subr.bf16.mxu0 0
    %2517 = vmatpush1.bf16.msra.mxu0 %v1882
    %2518 = vmatprep.subr.bf16.mxu0 0
    %2519 = vmatpush1.bf16.msra.mxu0 %v1883
    %2520 = vmatprep.subr.bf16.mxu0 0
    %2521 = vmatpush1.bf16.msra.mxu0 %v1884
    %2522 = vmatprep.subr.bf16.mxu0 0
    %2523 = vmatpush1.bf16.msra.mxu0 %v1885
    %2524 = vmatprep.subr.bf16.mxu0 0
    %2525 = vmatpush1.bf16.msra.mxu0 %v1886
    %2526 = vmatprep.subr.bf16.mxu0 0
    %2527 = vmatpush1.bf16.msra.mxu0 %v1887
    %2528 = vmatprep.subr.bf16.mxu0 0
    %2529 = vmatpush1.bf16.msra.mxu0 %v1888
    %2530 = vmatprep.subr.bf16.mxu0 0
    %2531 = vmatpush1.bf16.msra.mxu0 %v1889
    %2532 = vmatprep.subr.bf16.mxu0 0
    %2533 = vmatpush1.bf16.msra.mxu0 %v1890
    %2534 = vmatprep.subr.bf16.mxu0 0
    %2535 = vmatpush1.bf16.msra.mxu0 %v1891
    %2536 = vmatprep.subr.bf16.mxu0 0
    %2537 = vmatpush1.bf16.msra.mxu0 %v1892
    %2538 = vmatprep.subr.bf16.mxu0 0
    %2539 = vmatpush1.bf16.msra.mxu0 %v1893
    %2540 = vmatprep.subr.bf16.mxu0 0
    %2541 = vmatpush1.bf16.msra.mxu0 %v1894
    %2542 = vmatprep.subr.bf16.mxu0 0
    %2543 = vmatpush1.bf16.msra.mxu0 %v1895
    %2544 = vmatprep.mubr.bf16.mxu0 %v644
    %2545 = vmatmul.mubr.bf16.gmra.mrb[0].mxu0 %v642
    %v2546 = vpop.f32.mrb[0].mxu0
    %v2547 = vadd.f32 %v2507, %v2546
    %v2548 = vpop.f32.mrb[0].mxu0
    %v2549 = vpop.f32.mrb[0].mxu0
    %v2550 = vpop.f32.mrb[0].mxu0
    %2551 = vdwg.mxu0
    %2552 = vmatprep.subr.bf16.mxu0 0
    %2553 = vmatpush1.bf16.msra.mxu0 %v1896
    %2554 = vmatprep.subr.bf16.mxu0 0
    %2555 = vmatpush1.bf16.msra.mxu0 %v1897
    %2556 = vmatprep.subr.bf16.mxu0 0
    %2557 = vmatpush1.bf16.msra.mxu0 %v1898
    %2558 = vmatprep.subr.bf16.mxu0 0
    %2559 = vmatpush1.bf16.msra.mxu0 %v1899
    %2560 = vmatprep.subr.bf16.mxu0 0
    %2561 = vmatpush1.bf16.msra.mxu0 %v1900
    %2562 = vmatprep.subr.bf16.mxu0 0
    %2563 = vmatpush1.bf16.msra.mxu0 %v1901
    %2564 = vmatprep.subr.bf16.mxu0 0
    %2565 = vmatpush1.bf16.msra.mxu0 %v1902
    %2566 = vmatprep.subr.bf16.mxu0 0
    %2567 = vmatpush1.bf16.msra.mxu0 %v1903
    %2568 = vmatprep.subr.bf16.mxu0 0
    %2569 = vmatpush1.bf16.msra.mxu0 %v1904
    %2570 = vmatprep.subr.bf16.mxu0 0
    %2571 = vmatpush1.bf16.msra.mxu0 %v1905
    %2572 = vmatprep.subr.bf16.mxu0 0
    %2573 = vmatpush1.bf16.msra.mxu0 %v1906
    %2574 = vmatprep.subr.bf16.mxu0 0
    %2575 = vmatpush1.bf16.msra.mxu0 %v1907
    %2576 = vmatprep.subr.bf16.mxu0 0
    %2577 = vmatpush1.bf16.msra.mxu0 %v1908
    %2578 = vmatprep.subr.bf16.mxu0 0
    %2579 = vmatpush1.bf16.msra.mxu0 %v1909
    %2580 = vmatprep.subr.bf16.mxu0 0
    %2581 = vmatpush1.bf16.msra.mxu0 %v1910
    %2582 = vmatprep.subr.bf16.mxu0 0
    %2583 = vmatpush1.bf16.msra.mxu0 %v1911
    %2584 = vmatprep.mubr.bf16.mxu0 %v641
    %2585 = vmatmul.mubr.bf16.gmra.mrb[0].mxu0 %v627
    %v2586 = vpop.f32.mrb[0].mxu0
    %v2587 = vadd.f32 %v2547, %v2586
    %v2588 = vpop.f32.mrb[0].mxu0
    %v2589 = vpop.f32.mrb[0].mxu0
    %v2590 = vpop.f32.mrb[0].mxu0
    %2591 = vdwg.mxu0
    %2592 = vmatprep.subr.bf16.mxu0 0
    %2593 = vmatpush1.bf16.msra.mxu0 %v1912
    %2594 = vmatprep.subr.bf16.mxu0 0
    %2595 = vmatpush1.bf16.msra.mxu0 %v1913
    %2596 = vmatprep.subr.bf16.mxu0 0
    %2597 = vmatpush1.bf16.msra.mxu0 %v1914
    %2598 = vmatprep.subr.bf16.mxu0 0
    %2599 = vmatpush1.bf16.msra.mxu0 %v1915
    %2600 = vmatprep.subr.bf16.mxu0 0
    %2601 = vmatpush1.bf16.msra.mxu0 %v1916
    %2602 = vmatprep.subr.bf16.mxu0 0
    %2603 = vmatpush1.bf16.msra.mxu0 %v1917
    %2604 = vmatprep.subr.bf16.mxu0 0
    %2605 = vmatpush1.bf16.msra.mxu0 %v1918
    %2606 = vmatprep.subr.bf16.mxu0 0
    %2607 = vmatpush1.bf16.msra.mxu0 %v1919
    %2608 = vmatprep.subr.bf16.mxu0 0
    %2609 = vmatpush1.bf16.msra.mxu0 %v1920
    %2610 = vmatprep.subr.bf16.mxu0 0
    %2611 = vmatpush1.bf16.msra.mxu0 %v1921
    %2612 = vmatprep.subr.bf16.mxu0 0
    %2613 = vmatpush1.bf16.msra.mxu0 %v1922
    %2614 = vmatprep.subr.bf16.mxu0 0
    %2615 = vmatpush1.bf16.msra.mxu0 %v1923
    %2616 = vmatprep.subr.bf16.mxu0 0
    %2617 = vmatpush1.bf16.msra.mxu0 %v1924
    %2618 = vmatprep.subr.bf16.mxu0 0
    %2619 = vmatpush1.bf16.msra.mxu0 %v1925
    %2620 = vmatprep.subr.bf16.mxu0 0
    %2621 = vmatpush1.bf16.msra.mxu0 %v1926
    %2622 = vmatprep.subr.bf16.mxu0 0
    %2623 = vmatpush1.bf16.msra.mxu0 %v1927
    %2624 = vmatprep.mubr.bf16.mxu0 %v645
    %2625 = vmatmul.mubr.bf16.gmra.mrb[0].mxu0 %v643
    %v2626 = vpop.f32.mrb[0].mxu0
    %v2627 = vadd.f32 %v2587, %v2626
    %v2628 = vpop.f32.mrb[0].mxu0
    %v2629 = vpop.f32.mrb[0].mxu0
    %v2630 = vpop.f32.mrb[0].mxu0
    %2631 = vdwg.mxu0
    %2632 = vmatprep.subr.bf16.mxu0 0
    %2633 = vmatpush1.bf16.msra.mxu0 %v1928
    %2634 = vmatprep.subr.bf16.mxu0 0
    %2635 = vmatpush1.bf16.msra.mxu0 %v1929
    %2636 = vmatprep.subr.bf16.mxu0 0
    %2637 = vmatpush1.bf16.msra.mxu0 %v1930
    %2638 = vmatprep.subr.bf16.mxu0 0
    %2639 = vmatpush1.bf16.msra.mxu0 %v1931
    %2640 = vmatprep.subr.bf16.mxu0 0
    %2641 = vmatpush1.bf16.msra.mxu0 %v1932
    %2642 = vmatprep.subr.bf16.mxu0 0
    %2643 = vmatpush1.bf16.msra.mxu0 %v1933
    %2644 = vmatprep.subr.bf16.mxu0 0
    %2645 = vmatpush1.bf16.msra.mxu0 %v1934
    %2646 = vmatprep.subr.bf16.mxu0 0
    %2647 = vmatpush1.bf16.msra.mxu0 %v1935
    %2648 = vmatprep.subr.bf16.mxu0 0
    %2649 = vmatpush1.bf16.msra.mxu0 %v1936
    %2650 = vmatprep.subr.bf16.mxu0 0
    %2651 = vmatpush1.bf16.msra.mxu0 %v1937
    %2652 = vmatprep.subr.bf16.mxu0 0
    %2653 = vmatpush1.bf16.msra.mxu0 %v1938
    %2654 = vmatprep.subr.bf16.mxu0 0
    %2655 = vmatpush1.bf16.msra.mxu0 %v1939
    %2656 = vmatprep.subr.bf16.mxu0 0
    %2657 = vmatpush1.bf16.msra.mxu0 %v1940
    %2658 = vmatprep.subr.bf16.mxu0 0
    %2659 = vmatpush1.bf16.msra.mxu0 %v1941
    %2660 = vmatprep.subr.bf16.mxu0 0
    %2661 = vmatpush1.bf16.msra.mxu0 %v1942
    %2662 = vmatprep.subr.bf16.mxu0 0
    %2663 = vmatpush1.bf16.msra.mxu0 %v1943
    %2664 = vmatprep.mubr.bf16.mxu0 %v683
    %2665 = vmatmul.mubr.bf16.gmra.mrb[0].mxu0 %v669
    %v2666 = vpop.f32.mrb[0].mxu0
    %v2667 = vadd.f32 %v2627, %v2666
    %v2668 = vpop.f32.mrb[0].mxu0
    %v2669 = vpop.f32.mrb[0].mxu0
    %v2670 = vpop.f32.mrb[0].mxu0
    %2671 = vdwg.mxu0
    %2672 = vmatprep.subr.bf16.mxu0 0
    %2673 = vmatpush1.bf16.msra.mxu0 %v1944
    %2674 = vmatprep.subr.bf16.mxu0 0
    %2675 = vmatpush1.bf16.msra.mxu0 %v1945
    %2676 = vmatprep.subr.bf16.mxu0 0
    %2677 = vmatpush1.bf16.msra.mxu0 %v1946
    %2678 = vmatprep.subr.bf16.mxu0 0
    %2679 = vmatpush1.bf16.msra.mxu0 %v1947
    %2680 = vmatprep.subr.bf16.mxu0 0
    %2681 = vmatpush1.bf16.msra.mxu0 %v1948
    %2682 = vmatprep.subr.bf16.mxu0 0
    %2683 = vmatpush1.bf16.msra.mxu0 %v1949
    %2684 = vmatprep.subr.bf16.mxu0 0
    %2685 = vmatpush1.bf16.msra.mxu0 %v1950
    %2686 = vmatprep.subr.bf16.mxu0 0
    %2687 = vmatpush1.bf16.msra.mxu0 %v1951
    %2688 = vmatprep.subr.bf16.mxu0 0
    %2689 = vmatpush1.bf16.msra.mxu0 %v1952
    %2690 = vmatprep.subr.bf16.mxu0 0
    %2691 = vmatpush1.bf16.msra.mxu0 %v1953
    %2692 = vmatprep.subr.bf16.mxu0 0
    %2693 = vmatpush1.bf16.msra.mxu0 %v1954
    %2694 = vmatprep.subr.bf16.mxu0 0
    %2695 = vmatpush1.bf16.msra.mxu0 %v1955
    %2696 = vmatprep.subr.bf16.mxu0 0
    %2697 = vmatpush1.bf16.msra.mxu0 %v1956
    %2698 = vmatprep.subr.bf16.mxu0 0
    %2699 = vmatpush1.bf16.msra.mxu0 %v1957
    %2700 = vmatprep.subr.bf16.mxu0 0
    %2701 = vmatpush1.bf16.msra.mxu0 %v1958
    %2702 = vmatprep.subr.bf16.mxu0 0
    %2703 = vmatpush1.bf16.msra.mxu0 %v1959
    %2704 = vmatprep.mubr.bf16.mxu0 %v693
    %2705 = vmatmul.mubr.bf16.gmra.mrb[0].mxu0 %v691
    %v2706 = vpop.f32.mrb[0].mxu0
    %v2707 = vadd.f32 %v2667, %v2706
    %v2708 = vpop.f32.mrb[0].mxu0
    %v2709 = vpop.f32.mrb[0].mxu0
    %v2710 = vpop.f32.mrb[0].mxu0
    %2711 = vdwg.mxu0
    %2712 = vmatprep.subr.bf16.mxu0 0
    %2713 = vmatpush1.bf16.msra.mxu0 %v1960
    %2714 = vmatprep.subr.bf16.mxu0 0
    %2715 = vmatpush1.bf16.msra.mxu0 %v1961
    %2716 = vmatprep.subr.bf16.mxu0 0
    %2717 = vmatpush1.bf16.msra.mxu0 %v1962
    %2718 = vmatprep.subr.bf16.mxu0 0
    %2719 = vmatpush1.bf16.msra.mxu0 %v1963
    %2720 = vmatprep.subr.bf16.mxu0 0
    %2721 = vmatpush1.bf16.msra.mxu0 %v1964
    %2722 = vmatprep.subr.bf16.mxu0 0
    %2723 = vmatpush1.bf16.msra.mxu0 %v1965
    %2724 = vmatprep.subr.bf16.mxu0 0
    %2725 = vmatpush1.bf16.msra.mxu0 %v1966
    %2726 = vmatprep.subr.bf16.mxu0 0
    %2727 = vmatpush1.bf16.msra.mxu0 %v1967
    %2728 = vmatprep.subr.bf16.mxu0 0
    %2729 = vmatpush1.bf16.msra.mxu0 %v1968
    %2730 = vmatprep.subr.bf16.mxu0 0
    %2731 = vmatpush1.bf16.msra.mxu0 %v1969
    %2732 = vmatprep.subr.bf16.mxu0 0
    %2733 = vmatpush1.bf16.msra.mxu0 %v1970
    %2734 = vmatprep.subr.bf16.mxu0 0
    %2735 = vmatpush1.bf16.msra.mxu0 %v1971
    %2736 = vmatprep.subr.bf16.mxu0 0
    %2737 = vmatpush1.bf16.msra.mxu0 %v1972
    %2738 = vmatprep.subr.bf16.mxu0 0
    %2739 = vmatpush1.bf16.msra.mxu0 %v1973
    %2740 = vmatprep.subr.bf16.mxu0 0
    %2741 = vmatpush1.bf16.msra.mxu0 %v1974
    %2742 = vmatprep.subr.bf16.mxu0 0
    %2743 = vmatpush1.bf16.msra.mxu0 %v1975
    %2744 = vmatprep.mubr.bf16.mxu0 %v690
    %2745 = vmatmul.mubr.bf16.gmra.mrb[0].mxu0 %v676
    %v2746 = vpop.f32.mrb[0].mxu0
    %v2747 = vadd.f32 %v2707, %v2746
    %v2748 = vpop.f32.mrb[0].mxu0
    %v2749 = vpop.f32.mrb[0].mxu0
    %v2750 = vpop.f32.mrb[0].mxu0
    %2751 = vdwg.mxu0
    %2752 = vmatprep.subr.bf16.mxu0 0
    %2753 = vmatpush1.bf16.msra.mxu0 %v1976
    %2754 = vmatprep.subr.bf16.mxu0 0
    %2755 = vmatpush1.bf16.msra.mxu0 %v1977
    %2756 = vmatprep.subr.bf16.mxu0 0
    %2757 = vmatpush1.bf16.msra.mxu0 %v1978
    %2758 = vmatprep.subr.bf16.mxu0 0
    %2759 = vmatpush1.bf16.msra.mxu0 %v1979
    %2760 = vmatprep.subr.bf16.mxu0 0
    %2761 = vmatpush1.bf16.msra.mxu0 %v1980
    %2762 = vmatprep.subr.bf16.mxu0 0
    %2763 = vmatpush1.bf16.msra.mxu0 %v1981
    %2764 = vmatprep.subr.bf16.mxu0 0
    %2765 = vmatpush1.bf16.msra.mxu0 %v1982
    %2766 = vmatprep.subr.bf16.mxu0 0
    %2767 = vmatpush1.bf16.msra.mxu0 %v1983
    %2768 = vmatprep.subr.bf16.mxu0 0
    %2769 = vmatpush1.bf16.msra.mxu0 %v1984
    %2770 = vmatprep.subr.bf16.mxu0 0
    %2771 = vmatpush1.bf16.msra.mxu0 %v1985
    %2772 = vmatprep.subr.bf16.mxu0 0
    %2773 = vmatpush1.bf16.msra.mxu0 %v1986
    %2774 = vmatprep.subr.bf16.mxu0 0
    %2775 = vmatpush1.bf16.msra.mxu0 %v1987
    %2776 = vmatprep.subr.bf16.mxu0 0
    %2777 = vmatpush1.bf16.msra.mxu0 %v1988
    %2778 = vmatprep.subr.bf16.mxu0 0
    %2779 = vmatpush1.bf16.msra.mxu0 %v1989
    %2780 = vmatprep.subr.bf16.mxu0 0
    %2781 = vmatpush1.bf16.msra.mxu0 %v1990
    %2782 = vmatprep.subr.bf16.mxu0 0
    %2783 = vmatpush1.bf16.msra.mxu0 %v1991
    %2784 = vmatprep.mubr.bf16.mxu0 %v694
    %2785 = vmatmul.mubr.bf16.gmra.mrb[0].mxu0 %v692
    %v2786 = vpop.f32.mrb[0].mxu0
    %v2787 = vadd.f32 %v2747, %v2786
    %v2788 = vpop.f32.mrb[0].mxu0
    %v2789 = vpop.f32.mrb[0].mxu0
    %v2790 = vpop.f32.mrb[0].mxu0
    %2791 = vdwg.mxu0
    %2792 = vmatprep.subr.bf16.mxu0 0
    %2793 = vmatpush1.bf16.msra.mxu0 %v1992
    %2794 = vmatprep.subr.bf16.mxu0 0
    %2795 = vmatpush1.bf16.msra.mxu0 %v1993
    %2796 = vmatprep.subr.bf16.mxu0 0
    %2797 = vmatpush1.bf16.msra.mxu0 %v1994
    %2798 = vmatprep.subr.bf16.mxu0 0
    %2799 = vmatpush1.bf16.msra.mxu0 %v1995
    %2800 = vmatprep.subr.bf16.mxu0 0
    %2801 = vmatpush1.bf16.msra.mxu0 %v1996
    %2802 = vmatprep.subr.bf16.mxu0 0
    %2803 = vmatpush1.bf16.msra.mxu0 %v1997
    %2804 = vmatprep.subr.bf16.mxu0 0
    %2805 = vmatpush1.bf16.msra.mxu0 %v1998
    %2806 = vmatprep.subr.bf16.mxu0 0
    %2807 = vmatpush1.bf16.msra.mxu0 %v1999
    %2808 = vmatprep.subr.bf16.mxu0 0
    %2809 = vmatpush1.bf16.msra.mxu0 %v2000
    %2810 = vmatprep.subr.bf16.mxu0 0
    %2811 = vmatpush1.bf16.msra.mxu0 %v2001
    %2812 = vmatprep.subr.bf16.mxu0 0
    %2813 = vmatpush1.bf16.msra.mxu0 %v2002
    %2814 = vmatprep.subr.bf16.mxu0 0
    %2815 = vmatpush1.bf16.msra.mxu0 %v2003
    %2816 = vmatprep.subr.bf16.mxu0 0
    %2817 = vmatpush1.bf16.msra.mxu0 %v2004
    %2818 = vmatprep.subr.bf16.mxu0 0
    %2819 = vmatpush1.bf16.msra.mxu0 %v2005
    %2820 = vmatprep.subr.bf16.mxu0 0
    %2821 = vmatpush1.bf16.msra.mxu0 %v2006
    %2822 = vmatprep.subr.bf16.mxu0 0
    %2823 = vmatpush1.bf16.msra.mxu0 %v2007
    %2824 = vmatprep.mubr.bf16.mxu0 %v732
    %2825 = vmatmul.mubr.bf16.gmra.mrb[0].mxu0 %v718
    %v2826 = vpop.f32.mrb[0].mxu0
    %v2827 = vadd.f32 %v2787, %v2826
    %v2828 = vpop.f32.mrb[0].mxu0
    %v2829 = vpop.f32.mrb[0].mxu0
    %v2830 = vpop.f32.mrb[0].mxu0
    %2831 = vdwg.mxu0
    %2832 = vmatprep.subr.bf16.mxu0 0
    %2833 = vmatpush1.bf16.msra.mxu0 %v2008
    %2834 = vmatprep.subr.bf16.mxu0 0
    %2835 = vmatpush1.bf16.msra.mxu0 %v2009
    %2836 = vmatprep.subr.bf16.mxu0 0
    %2837 = vmatpush1.bf16.msra.mxu0 %v2010
    %2838 = vmatprep.subr.bf16.mxu0 0
    %2839 = vmatpush1.bf16.msra.mxu0 %v2011
    %2840 = vmatprep.subr.bf16.mxu0 0
    %2841 = vmatpush1.bf16.msra.mxu0 %v2012
    %2842 = vmatprep.subr.bf16.mxu0 0
    %2843 = vmatpush1.bf16.msra.mxu0 %v2013
    %2844 = vmatprep.subr.bf16.mxu0 0
    %2845 = vmatpush1.bf16.msra.mxu0 %v2014
    %2846 = vmatprep.subr.bf16.mxu0 0
    %2847 = vmatpush1.bf16.msra.mxu0 %v2015
    %2848 = vmatprep.subr.bf16.mxu0 0
    %2849 = vmatpush1.bf16.msra.mxu0 %v2016
    %2850 = vmatprep.subr.bf16.mxu0 0
    %2851 = vmatpush1.bf16.msra.mxu0 %v2017
    %2852 = vmatprep.subr.bf16.mxu0 0
    %2853 = vmatpush1.bf16.msra.mxu0 %v2018
    %2854 = vmatprep.subr.bf16.mxu0 0
    %2855 = vmatpush1.bf16.msra.mxu0 %v2019
    %2856 = vmatprep.subr.bf16.mxu0 0
    %2857 = vmatpush1.bf16.msra.mxu0 %v2020
    %2858 = vmatprep.subr.bf16.mxu0 0
    %2859 = vmatpush1.bf16.msra.mxu0 %v2021
    %2860 = vmatprep.subr.bf16.mxu0 0
    %2861 = vmatpush1.bf16.msra.mxu0 %v2022
    %2862 = vmatprep.subr.bf16.mxu0 0
    %2863 = vmatpush1.bf16.msra.mxu0 %v2023
    %2864 = vmatprep.mubr.bf16.mxu0 %v742
    %2865 = vmatmul.mubr.bf16.gmra.mrb[0].mxu0 %v740
    %v2866 = vpop.f32.mrb[0].mxu0
    %v2867 = vadd.f32 %v2827, %v2866
    %v2868 = vpop.f32.mrb[0].mxu0
    %v2869 = vpop.f32.mrb[0].mxu0
    %v2870 = vpop.f32.mrb[0].mxu0
    %2871 = vdwg.mxu0
    %2872 = vmatprep.subr.bf16.mxu0 0
    %2873 = vmatpush1.bf16.msra.mxu0 %v2024
    %2874 = vmatprep.subr.bf16.mxu0 0
    %2875 = vmatpush1.bf16.msra.mxu0 %v2025
    %2876 = vmatprep.subr.bf16.mxu0 0
    %2877 = vmatpush1.bf16.msra.mxu0 %v2026
    %2878 = vmatprep.subr.bf16.mxu0 0
    %2879 = vmatpush1.bf16.msra.mxu0 %v2027
    %2880 = vmatprep.subr.bf16.mxu0 0
    %2881 = vmatpush1.bf16.msra.mxu0 %v2028
    %2882 = vmatprep.subr.bf16.mxu0 0
    %2883 = vmatpush1.bf16.msra.mxu0 %v2029
    %2884 = vmatprep.subr.bf16.mxu0 0
    %2885 = vmatpush1.bf16.msra.mxu0 %v2030
    %2886 = vmatprep.subr.bf16.mxu0 0
    %2887 = vmatpush1.bf16.msra.mxu0 %v2031
    %2888 = vmatprep.subr.bf16.mxu0 0
    %2889 = vmatpush1.bf16.msra.mxu0 %v2032
    %2890 = vmatprep.subr.bf16.mxu0 0
    %2891 = vmatpush1.bf16.msra.mxu0 %v2033
    %2892 = vmatprep.subr.bf16.mxu0 0
    %2893 = vmatpush1.bf16.msra.mxu0 %v2034
    %2894 = vmatprep.subr.bf16.mxu0 0
    %2895 = vmatpush1.bf16.msra.mxu0 %v2035
    %2896 = vmatprep.subr.bf16.mxu0 0
    %2897 = vmatpush1.bf16.msra.mxu0 %v2036
    %2898 = vmatprep.subr.bf16.mxu0 0
    %2899 = vmatpush1.bf16.msra.mxu0 %v2037
    %2900 = vmatprep.subr.bf16.mxu0 0
    %2901 = vmatpush1.bf16.msra.mxu0 %v2038
    %2902 = vmatprep.subr.bf16.mxu0 0
    %2903 = vmatpush1.bf16.msra.mxu0 %v2039
    %2904 = vmatprep.mubr.bf16.mxu0 %v739
    %2905 = vmatmul.mubr.bf16.gmra.mrb[0].mxu0 %v725
    %v2906 = vpop.f32.mrb[0].mxu0
    %v2907 = vadd.f32 %v2867, %v2906
    %v2908 = vpop.f32.mrb[0].mxu0
    %v2909 = vpop.f32.mrb[0].mxu0
    %v2910 = vpop.f32.mrb[0].mxu0
    %2911 = vdwg.mxu0
    %2912 = vmatprep.subr.bf16.mxu0 0
    %2913 = vmatpush1.bf16.msra.mxu0 %v2040
    %2914 = vmatprep.subr.bf16.mxu0 0
    %2915 = vmatpush1.bf16.msra.mxu0 %v2041
    %2916 = vmatprep.subr.bf16.mxu0 0
    %2917 = vmatpush1.bf16.msra.mxu0 %v2042
    %2918 = vmatprep.subr.bf16.mxu0 0
    %2919 = vmatpush1.bf16.msra.mxu0 %v2043
    %2920 = vmatprep.subr.bf16.mxu0 0
    %2921 = vmatpush1.bf16.msra.mxu0 %v2044
    %2922 = vmatprep.subr.bf16.mxu0 0
    %2923 = vmatpush1.bf16.msra.mxu0 %v2045
    %2924 = vmatprep.subr.bf16.mxu0 0
    %2925 = vmatpush1.bf16.msra.mxu0 %v2046
    %2926 = vmatprep.subr.bf16.mxu0 0
    %2927 = vmatpush1.bf16.msra.mxu0 %v2047
    %2928 = vmatprep.subr.bf16.mxu0 0
    %2929 = vmatpush1.bf16.msra.mxu0 %v2048
    %2930 = vmatprep.subr.bf16.mxu0 0
    %2931 = vmatpush1.bf16.msra.mxu0 %v2049
    %2932 = vmatprep.subr.bf16.mxu0 0
    %2933 = vmatpush1.bf16.msra.mxu0 %v2050
    %2934 = vmatprep.subr.bf16.mxu0 0
    %2935 = vmatpush1.bf16.msra.mxu0 %v2051
    %2936 = vmatprep.subr.bf16.mxu0 0
    %2937 = vmatpush1.bf16.msra.mxu0 %v2052
    %2938 = vmatprep.subr.bf16.mxu0 0
    %2939 = vmatpush1.bf16.msra.mxu0 %v2053
    %2940 = vmatprep.subr.bf16.mxu0 0
    %2941 = vmatpush1.bf16.msra.mxu0 %v2054
    %2942 = vmatprep.subr.bf16.mxu0 0
    %2943 = vmatpush1.bf16.msra.mxu0 %v2055
    %2944 = vmatprep.mubr.bf16.mxu0 %v743
    %2945 = vmatmul.mubr.bf16.gmra.mrb[0].mxu0 %v741
    %v2946 = vpop.f32.mrb[0].mxu0
    %v2947 = vadd.f32 %v2907, %v2946
    %v2948 = vpop.f32.mrb[0].mxu0
    %v2949 = vpop.f32.mrb[0].mxu0
    %v2950 = vpop.f32.mrb[0].mxu0
    %2951 = vdwg.mxu0
    %v2952 = vadd.f32 %v27, %v2947
    %2953 = vst [vmem:[#allocation2] sm:$0x3] %v2952
    // Predicated region
    $region26: #{cnn_forward.3} parent=1 // pred_check
      %p2954 = pneg %p22
    $region27: #{cnn_forward.3} parent=1 // pred_check_branch
      %2956 = sbr.rel (%p2954) target = $region29
    $region28: #{cnn_forward.3} parent=1 // pred_region
      %v2957 = vld [vmem:[#allocation2] sm:$0x3]
      %v2958 = vld [vmem:[%s2] sm:$0x1]
      %v2960 = vlaneseq
      %v2961 = vshrl.u32 %v2960, 7
      %v2962 = vsub.s32 0, %v2961
      %v2963 = vrot.slane %v2958, %v2962
      %v2965 = vadd.f32 %v2957, %v2963
      %v2966 = vmax.f32 %v2965, 0.0
      %v2967 = vld [vmem:[%s3] sm:$0xff]
      %v2968 = vld [vmem:[%s3 + $0x8] sm:$0xff]
      %v2969 = vld [vmem:[%s3 + $0x10] sm:$0xff]
      %v2970 = vld [vmem:[%s3 + $0x18] sm:$0xff]
      %v2971 = vld [vmem:[%s3 + $0x20] sm:$0xff]
      %v2972 = vld [vmem:[%s3 + $0x28] sm:$0xff]
      %v2973 = vld [vmem:[%s3 + $0x30] sm:$0xff]
      %v2974 = vld [vmem:[%s3 + $0x38] sm:$0xff]
      %v2975 = vld [vmem:[%s3 + $0x40] sm:$0xff]
      %v2976 = vld [vmem:[%s3 + $0x48] sm:$0xff]
      %v2977 = vld [vmem:[%s3 + $0x50] sm:$0xff]
      %v2978 = vld [vmem:[%s3 + $0x58] sm:$0xff]
      %v2979 = vld [vmem:[%s3 + $0x60] sm:$0xff]
      %v2980 = vld [vmem:[%s3 + $0x68] sm:$0xff]
      %v2981 = vld [vmem:[%s3 + $0x70] sm:$0xff]
      %v2982 = vld [vmem:[%s3 + $0x78] sm:$0xff]
      %v2983 = vld [vmem:[%s4] sm:$0x1]
      %v2985 = vlaneseq
      %v2986 = vshrl.u32 %v2985, 7
      %v2987 = vsub.s32 0, %v2986
      %v2988 = vrot.slane %v2983, %v2987
      %2990 = vmatprep.subr.mxu0 0.0
      %2991 = vmatpush1.msra.mxu0 %v2967
      %2992 = vmatprep.subr.mxu0 0.0
      %2993 = vmatpush1.msra.mxu0 %v2968
      %2994 = vmatprep.subr.mxu0 0.0
      %2995 = vmatpush1.msra.mxu0 %v2969
      %2996 = vmatprep.subr.mxu0 0.0
      %2997 = vmatpush1.msra.mxu0 %v2970
      %2998 = vmatprep.subr.mxu0 0.0
      %2999 = vmatpush1.msra.mxu0 %v2971
      %3000 = vmatprep.subr.mxu0 0.0
      %3001 = vmatpush1.msra.mxu0 %v2972
      %3002 = vmatprep.subr.mxu0 0.0
      %3003 = vmatpush1.msra.mxu0 %v2973
      %3004 = vmatprep.subr.mxu0 0.0
      %3005 = vmatpush1.msra.mxu0 %v2974
      %3006 = vmatprep.subr.mxu0 0.0
      %3007 = vmatpush1.msra.mxu0 %v2975
      %3008 = vmatprep.subr.mxu0 0.0
      %3009 = vmatpush1.msra.mxu0 %v2976
      %3010 = vmatprep.subr.mxu0 0.0
      %3011 = vmatpush1.msra.mxu0 %v2977
      %3012 = vmatprep.subr.mxu0 0.0
      %3013 = vmatpush1.msra.mxu0 %v2978
      %3014 = vmatprep.subr.mxu0 0.0
      %3015 = vmatpush1.msra.mxu0 %v2979
      %3016 = vmatprep.subr.mxu0 0.0
      %3017 = vmatpush1.msra.mxu0 %v2980
      %3018 = vmatprep.subr.mxu0 0.0
      %3019 = vmatpush1.msra.mxu0 %v2981
      %3020 = vmatprep.subr.mxu0 0.0
      %3021 = vmatpush1.msra.mxu0 %v2982
      %3022 = vmatprep.subr.mxu0 0.0
      %3023 = vmatpush1.msra.mxu0 0.0
      %3024 = vmatprep.subr.mxu0 0.0
      %3025 = vmatpush1.msra.mxu0 0.0
      %3026 = vmatprep.subr.mxu0 0.0
      %3027 = vmatpush1.msra.mxu0 0.0
      %3028 = vmatprep.subr.mxu0 0.0
      %3029 = vmatpush1.msra.mxu0 0.0
      %3030 = vmatprep.subr.mxu0 0.0
      %3031 = vmatpush1.msra.mxu0 0.0
      %3032 = vmatprep.subr.mxu0 0.0
      %3033 = vmatpush1.msra.mxu0 0.0
      %3034 = vmatprep.subr.mxu0 0.0
      %3035 = vmatpush1.msra.mxu0 0.0
      %3036 = vmatprep.subr.mxu0 0.0
      %3037 = vmatpush1.msra.mxu0 0.0
      %3038 = vmatprep.subr.mxu0 0.0
      %3039 = vmatpush1.msra.mxu0 0.0
      %3040 = vmatprep.subr.mxu0 0.0
      %3041 = vmatpush1.msra.mxu0 0.0
      %3042 = vmatprep.subr.mxu0 0.0
      %3043 = vmatpush1.msra.mxu0 0.0
      %3044 = vmatprep.subr.mxu0 0.0
      %3045 = vmatpush1.msra.mxu0 0.0
      %3046 = vmatprep.subr.mxu0 0.0
      %3047 = vmatpush1.msra.mxu0 0.0
      %3048 = vmatprep.subr.mxu0 0.0
      %3049 = vmatpush1.msra.mxu0 0.0
      %3050 = vmatprep.subr.mxu0 0.0
      %3051 = vmatpush1.msra.mxu0 0.0
      %3052 = vmatprep.subr.mxu0 0.0
      %3053 = vmatpush1.msra.mxu0 0.0
      %3054 = vmatprep.mubr.f32.mxu0 0.0
      %3055 = vmatmul.mubr.f32.gmra.mrb[0].mxu0 %v2966
      %v3056 = vpop.f32.mrb[0].mxu0
      %v3057 = vadd.f32 %v2988, %v3056
      %v3058 = vpop.f32.mrb[0].mxu0
      %3059 = vdwg.mxu0
      %vm3060 = vcmask 17408
      %3061 = vst.msk [vmem:[#allocation3] sm:$0x3] %vm3060, %v3057
    $region29: #{cnn_forward.3} parent=1 // pred_fallthru
      _
    // Predicated region
    $region30: #{cnn_forward.3} parent=1 // pred_check
      _
    $region31: #{cnn_forward.3} parent=1 // pred_check_branch
      %3063 = sbr.rel (0) target = $region33
    $region32: #{cnn_forward.3} parent=1 // pred_region
      %s3065 = ssub.s32 32, 32
      %3066 = vsyncadd [#allocation4], %s3065
      %s3068 = sshll.u32 [#allocation3], 4
      %s3069 = int_to_ptr.vmem [resolvable:$true] %s3068
      %3071 = dma.vmem_to_hbm [thread:$0]  %s3069, 32, %s5, [#allocation4]
    $region33: #{cnn_forward.3} parent=1 // pred_fallthru
      _
    // Predicated region
    $region34: #{cnn_forward.3} parent=1 // pred_check
      _
    $region35: #{cnn_forward.3} parent=1 // pred_check_branch
      %3073 = sbr.rel (0) target = $region37
    $region36: #{cnn_forward.3} parent=1 // pred_region
      %3074 = dma.done [#allocation4], 32
    $region37: #{cnn_forward.3} parent=1 // pred_fallthru
      _
    %3075 = vsyncpa [#allocation4], 1

</llo_original>
